<compile_context>
chip_gen: v5e
topology: v5e:2x2
jax: 0.10.0
libtpu: 0.0.40
codegen_flags: <defaults>
</compile_context>

<pallas_src>
import functools

import jax
import jax.numpy as jnp
from jax import lax
from jax.experimental import pallas as pl
from jax.experimental.pallas import tpu as pltpu


def _recurrent_am_kernel(x_ref,
                         w_ihx_hbm, w_ihr_hbm, w_hh_hbm, w_o_hbm,
                         b_ih_ref, b_hh_ref, b_o_ref, mask_ref,
                         out_ref, k_ref, q_ref,
                         w_ihx_s, w_ihr_s, w_hh_s, w_o_s,
                         gix_s, h_s, a_s, r_s,
                         *, nhead, t_steps, per_head):
    c = pl.program_id(1)                      # chunk index along the sequence
    last_chunk = pl.num_programs(1) - 1

    T = t_steps
    TB = h_s.shape[0]                         # batch-tile size
    D = r_s.shape[1]                          # d_model
    HID = 3 * D                               # GRU hidden size
    dim = D // nhead

    # ---- once per batch tile: single-buffer the constant weights in VMEM and
    #      reset the recurrent carries (r = 0, GRU hidden = 0, A = 0) ----
    @pl.when(c == 0)
    def _():
        pltpu.sync_copy(w_ihx_hbm, w_ihx_s)
        pltpu.sync_copy(w_ihr_hbm, w_ihr_s)
        pltpu.sync_copy(w_hh_hbm, w_hh_s)
        pltpu.sync_copy(w_o_hbm, w_o_s)
        h_s[...] = jnp.zeros_like(h_s)
        a_s[...] = jnp.zeros_like(a_s)
        r_s[...] = jnp.zeros_like(r_s)

    # ---- hoisted x projection for the whole chunk: one (T*TB, D) @ (D, 9D)
    #      MXU matmul (bf16 operands, f32 accumulate), b_ih folded in ----
    x_blk = x_ref[...]                                           # (T*TB, D) bf16
    gix_s[...] = (jnp.dot(x_blk, w_ihx_s[...],
                          preferred_element_type=jnp.float32)
                  + b_ih_ref[...])

    # Hoisted loop invariants (avoid per-unrolled-step broadcast / cast).
    b_hh = jnp.broadcast_to(b_hh_ref[...], (TB, 3 * HID))
    mask = None if per_head else mask_ref[...]                   # (D, D) f32

    def step(t, carry):
        r_prev = r_s[...]                                        # (TB, D)  f32
        h_prev = h_s[...]                                        # (TB, 3D) f32

        # GRU gates: gi = (x_t @ W_ih_x + b_ih)  [precomputed]  + r @ W_ih_r
        gi = (gix_s[pl.ds(t * TB, TB), :]
              + jnp.dot(r_prev.astype(jnp.bfloat16), w_ihr_s[...],
                        preferred_element_type=jnp.float32))
        gh = (jnp.dot(h_prev.astype(jnp.bfloat16), w_hh_s[...],
                      preferred_element_type=jnp.float32) + b_hh)

        i_r, i_z, i_n = gi[:, :HID], gi[:, HID:2 * HID], gi[:, 2 * HID:]
        h_r, h_z, h_n = gh[:, :HID], gh[:, HID:2 * HID], gh[:, 2 * HID:]
        reset = jax.nn.sigmoid(i_r + h_r)
        update = jax.nn.sigmoid(i_z + h_z)
        new = jnp.tanh(i_n + reset * h_n)
        h_new = new + update * (h_prev - new)                    # (TB, 3D)
        h_s[...] = h_new

        q_lin = h_new[:, :D]
        k_lin = h_new[:, D:2 * D]
        v_lin = h_new[:, 2 * D:]

        if per_head:
            # Per-head layout (dim % 128 == 0): lane-tile-aligned head split,
            # f32 norms, nhead-x smaller A update / readout.
            q_h = q_lin.reshape(TB, nhead, dim)
            k_h = k_lin.reshape(TB, nhead, dim)
            v_h = v_lin.reshape(TB, nhead, dim)
            kn_h = k_h * lax.rsqrt(jnp.sum(k_h * k_h, axis=-1, keepdims=True))
            kn_h = jnp.where(kn_h > 0, kn_h, jnp.exp(kn_h) - 1.0)   # ELU
            qn_h = q_h * lax.rsqrt(jnp.sum(q_h * q_h, axis=-1, keepdims=True))
            a_s[...] = a_s[...] + v_h[:, :, :, None] * kn_h[:, :, None, :]
            r_s[...] = jnp.sum(a_s[...] * qn_h[:, :, None, :],
                               axis=-1).reshape(TB, D)
            kn = kn_h.reshape(TB, D)
            qn = qn_h.reshape(TB, D)
        else:
            # Dense block-diagonal layout (small dim): per-head sums of
            # squares via an f32 mask matmul (no bf16 squaring), A stored as
            # a block-diagonal (TB, D, D).
            k_ss = jnp.dot(k_lin * k_lin, mask,
                           preferred_element_type=jnp.float32)
            q_ss = jnp.dot(q_lin * q_lin, mask,
                           preferred_element_type=jnp.float32)
            kn = k_lin * lax.rsqrt(k_ss)
            kn = jnp.where(kn > 0, kn, jnp.exp(kn) - 1.0)           # ELU
            qn = q_lin * lax.rsqrt(q_ss)
            a_s[...] = a_s[...] + (v_lin[:, :, None] * kn[:, None, :]) \
                * mask[None, :, :]
            r_s[...] = jnp.sum(a_s[...] * qn[:, None, :], axis=-1)

        # Last write wins: the final grid step leaves the last time step's
        # (k, q) in the (revisited) output block, flushed to HBM once.
        k_ref[...] = kn
        q_ref[...] = qn
        return carry

    lax.fori_loop(0, T, step, 0, unroll=True)

    # ---- final chunk: out = Wo(r) ----
    @pl.when(c == last_chunk)
    def _():
        out_ref[...] = (jnp.dot(r_s[...].astype(jnp.bfloat16), w_o_s[...],
                                preferred_element_type=jnp.float32)
                        + b_o_ref[...])


def _pick_chunk(s, t_max):
    t = max(1, min(s, t_max))
    while s % t:
        t -= 1
    return t


def recurrent_am(x, params, nhead, *, t_chunk=16, b_tile=None, per_head=None):
    """x: (S, B, d_model) f32.  Returns (out (B, d_model), (k, q) (B, nhead, dim))."""
    S, B, D = x.shape
    assert D % nhead == 0
    dim = D // nhead
    HID = 3 * D
    GATES = 3 * HID

    T = _pick_chunk(S, t_chunk)          # time steps per grid iteration
    nc = S // T
    TB = B if b_tile is None else b_tile
    assert B % TB == 0 and (TB == B or TB % 8 == 0)
    nb = B // TB

    if per_head is None:
        # Review caveat: per-head A only when heads are lane-tile aligned.
        per_head = (dim % 128 == 0)

    # Block-diagonal per-head mask (i, j in the same head); only used by the
    # dense path, tiny either way.
    ids = jnp.arange(D) // dim
    head_mask = (ids[:, None] == ids[None, :]).astype(jnp.float32)   # (D, D)

    # Weights as bf16 MXU operands (halves VMEM + HBM traffic); biases f32.
    w_ih = params["w_ih"].astype(jnp.bfloat16)        # (2D, 9D)
    w_ihx, w_ihr = w_ih[:D], w_ih[D:]                 # x part / r part
    w_hh = params["w_hh"].astype(jnp.bfloat16)        # (3D, 9D)
    w_o = params["w_o"].astype(jnp.bfloat16)          # (D, D)

    # Stream x as bf16, pre-arranged as (b_tile, chunk, T*TB, D) so each grid
    # step gets one contiguous lane-dense chunk (free reshape when nb == 1).
    x_r = (x.astype(jnp.bfloat16)
           .reshape(nc, T, nb, TB, D)
           .transpose(2, 0, 1, 3, 4)
           .reshape(nb, nc, T * TB, D))

    kernel = functools.partial(_recurrent_am_kernel, nhead=nhead,
                               t_steps=T, per_head=per_head)
    a_shape = (TB, nhead, dim, dim) if per_head else (TB, D, D)

    out, k_flat, q_flat = pl.pallas_call(
        kernel,
        grid=(nb, nc),
        in_specs=[
            pl.BlockSpec((None, None, T * TB, D),
                         lambda b, c: (b, c, 0, 0)),            # x chunk
            pl.BlockSpec(memory_space=pl.ANY),                  # W_ih (x part)
            pl.BlockSpec(memory_space=pl.ANY),                  # W_ih (r part)
            pl.BlockSpec(memory_space=pl.ANY),                  # W_hh
            pl.BlockSpec(memory_space=pl.ANY),                  # W_o
            pl.BlockSpec((1, GATES), lambda b, c: (0, 0)),      # b_ih
            pl.BlockSpec((1, GATES), lambda b, c: (0, 0)),      # b_hh
            pl.BlockSpec((1, D), lambda b, c: (0, 0)),          # b_o
            pl.BlockSpec((D, D), lambda b, c: (0, 0)),          # head mask
        ],
        out_specs=(
            pl.BlockSpec((TB, D), lambda b, c: (b, 0)),         # out
            pl.BlockSpec((TB, D), lambda b, c: (b, 0)),         # k (last step)
            pl.BlockSpec((TB, D), lambda b, c: (b, 0)),         # q (last step)
        ),
        out_shape=(
            jax.ShapeDtypeStruct((B, D), jnp.float32),
            jax.ShapeDtypeStruct((B, D), jnp.float32),
            jax.ShapeDtypeStruct((B, D), jnp.float32),
        ),
        scratch_shapes=[
            pltpu.VMEM((D, GATES), jnp.bfloat16),      # W_ih_x (single-buffered)
            pltpu.VMEM((D, GATES), jnp.bfloat16),      # W_ih_r
            pltpu.VMEM((HID, GATES), jnp.bfloat16),    # W_hh
            pltpu.VMEM((D, D), jnp.bfloat16),          # W_o
            pltpu.VMEM((T * TB, GATES), jnp.float32),  # hoisted x projection
            pltpu.VMEM((TB, HID), jnp.float32),        # GRU hidden carry
            pltpu.VMEM(a_shape, jnp.float32),          # attention matrix A
            pltpu.VMEM((TB, D), jnp.float32),          # recurrent readout r
        ],
        compiler_params=pltpu.CompilerParams(
            # Batch tiles are independent (2 TCs on v7x); S is inherently serial.
            dimension_semantics=("parallel", "arbitrary"),
            # Fits v7x's 64 MiB VMEM; can be raised on v5e/v6e for larger T.
            vmem_limit_bytes=56 * 1024 * 1024,
        ),
    )(x_r, w_ihx, w_ihr, w_hh, w_o,
      params["b_ih"], params["b_hh"], params["b_o"], head_mask)

    return out, (k_flat.reshape(B, nhead, dim), q_flat.reshape(B, nhead, dim))


# ----------------------- pure-JAX reference (for checking) ------------------

def reference(x, params, nhead):
    S, B, D = x.shape
    dim = D // nhead
    H = 3 * D
    w_ih, w_hh = params["w_ih"], params["w_hh"]
    b_ih, b_hh = params["b_ih"][0], params["b_hh"][0]

    def gru(x_r, h):
        gi = jnp.dot(x_r, w_ih) + b_ih
        gh = jnp.dot(h, w_hh) + b_hh
        i_r, i_z, i_n = jnp.split(gi, 3, axis=-1)
        h_r, h_z, h_n = jnp.split(gh, 3, axis=-1)
        r = jax.nn.sigmoid(i_r + h_r)
        z = jax.nn.sigmoid(i_z + h_z)
        n = jnp.tanh(i_n + r * h_n)
        return n + z * (h - n)

    def step(carry, x_i):
        h, A, r = carry
        x_r = jnp.concatenate([x_i, r], axis=-1)
        h = gru(x_r, h)
        q = h[:, :D].reshape(B, nhead, dim)
        k = h[:, D:2 * D].reshape(B, nhead, dim)
        v = h[:, 2 * D:].reshape(B, nhead, dim)
        k = k / jnp.linalg.norm(k, axis=-1, keepdims=True)
        k = jnp.where(k > 0, k, jnp.exp(k) - 1.0)          # F.elu, alpha=1
        A = A + jnp.einsum("bnq,bnv->bnvq", k, v)
        q = q / jnp.linalg.norm(q, axis=-1, keepdims=True)
        r = jnp.einsum("bnq,bnvq->bnv", q, A).reshape(B, D)
        return (h, A, r), (k, q)

    carry0 = (jnp.zeros((B, H), jnp.float32),
              jnp.zeros((B, nhead, dim, dim), jnp.float32),
              jnp.zeros((B, D), jnp.float32))
    (_, _, r), (ks, qs) = lax.scan(step, carry0, x)
    out = jnp.dot(r, params["w_o"]) + params["b_o"][0]
    return out, (ks[-1], qs[-1])


# ----------------------- deterministic parameter init -----------------------

def init_params(key, d_model):
    H = 3 * d_model
    keys = jax.random.split(key, 6)

    def uni(k, shape, bound):
        return jax.random.uniform(k, shape, jnp.float32, -bound, bound)

    gb = 1.0 / (H ** 0.5)          # PyTorch GRUCell init bound
    lb = 1.0 / (d_model ** 0.5)    # PyTorch Linear init bound
    return {
        "w_ih": uni(keys[0], (2 * d_model, 3 * H), gb),   # GRU weight_ih^T
        "w_hh": uni(keys[1], (H, 3 * H), gb),             # GRU weight_hh^T
        "b_ih": uni(keys[2], (1, 3 * H), gb),
        "b_hh": uni(keys[3], (1, 3 * H), gb),
        "w_o": uni(keys[4], (d_model, d_model), lb),      # Wo^T
        "b_o": uni(keys[5], (1, d_model), lb),
    }


if __name__ == "__main__":
    S, B, d_model, nhead = 8, 2, 32, 4

    key = jax.random.PRNGKey(0)
    k_x, k_p = jax.random.split(key)
    x = jax.random.normal(k_x, (S, B, d_model), jnp.float32)
    params = init_params(k_p, d_model)

    out, (k, q) = recurrent_am(x, params, nhead)
    jax.block_until_ready(out)

    ref_out, (ref_k, ref_q) = reference(x, params, nhead)
    # bf16 MXU operands in the kernel vs default-precision f32 reference.
    assert jnp.allclose(out, ref_out, atol=2e-2, rtol=2e-2), \
        float(jnp.max(jnp.abs(out - ref_out)))
    assert jnp.allclose(k, ref_k, atol=2e-2, rtol=2e-2)
    assert jnp.allclose(q, ref_q, atol=2e-2, rtol=2e-2)

    print("KERNEL_OK")
</pallas_src>

<mosaic_0001>
module attributes {stable_mosaic.version = 11 : i64} {
  func.func @_recurrent_am_kernel(%arg0: i32, %arg1: i32, %arg2: memref<1x1x16x32xbf16, #tpu.memory_space<vmem>>, %arg3: memref<32x288xbf16, #tpu.memory_space<any>>, %arg4: memref<32x288xbf16, #tpu.memory_space<any>>, %arg5: memref<96x288xbf16, #tpu.memory_space<any>>, %arg6: memref<32x32xbf16, #tpu.memory_space<any>>, %arg7: memref<1x288xf32, #tpu.memory_space<vmem>>, %arg8: memref<1x288xf32, #tpu.memory_space<vmem>>, %arg9: memref<1x32xf32, #tpu.memory_space<vmem>>, %arg10: memref<32x32xf32, #tpu.memory_space<vmem>>, %arg11: memref<2x32xf32, #tpu.memory_space<vmem>>, %arg12: memref<2x32xf32, #tpu.memory_space<vmem>>, %arg13: memref<2x32xf32, #tpu.memory_space<vmem>>, %arg14: memref<32x288xbf16, #tpu.memory_space<vmem>>, %arg15: memref<32x288xbf16, #tpu.memory_space<vmem>>, %arg16: memref<96x288xbf16, #tpu.memory_space<vmem>>, %arg17: memref<32x32xbf16, #tpu.memory_space<vmem>>, %arg18: memref<16x288xf32, #tpu.memory_space<vmem>>, %arg19: memref<2x96xf32, #tpu.memory_space<vmem>>, %arg20: memref<2x32x32xf32, #tpu.memory_space<vmem>>, %arg21: memref<2x32xf32, #tpu.memory_space<vmem>>) attributes {dimension_semantics = [#tpu.dimension_semantics<parallel>, #tpu.dimension_semantics<arbitrary>], iteration_bounds = array<i64: 1, 1>, scalar_prefetch = 0 : i64, scratch_operands = 8 : i64, tpu.core_type = #tpu.core_type<tc>, window_params = [{transform_indices = @transform_0, window_bounds = array<i64: 1, 1, 16, 32>}, {}, {}, {}, {}, {pipeline_mode = #tpu.pipeline_mode<synchronous>, transform_indices = @transform_5, window_bounds = array<i64: 1, 288>}, {pipeline_mode = #tpu.pipeline_mode<synchronous>, transform_indices = @transform_6, window_bounds = array<i64: 1, 288>}, {pipeline_mode = #tpu.pipeline_mode<synchronous>, transform_indices = @transform_7, window_bounds = array<i64: 1, 32>}, {pipeline_mode = #tpu.pipeline_mode<synchronous>, transform_indices = @transform_8, window_bounds = array<i64: 32, 32>}, {transform_indices = @transform_9, window_bounds = array<i64: 2, 32>}, {transform_indices = @transform_10, window_bounds = array<i64: 2, 32>}, {transform_indices = @transform_11, window_bounds = array<i64: 2, 32>}]} {
    %c0_i32 = arith.constant 0 : i32
    %0 = arith.cmpi eq, %arg1, %c0_i32 : i32
    %1 = arith.extui %0 : i1 to i32
    %c0_i32_0 = arith.constant 0 : i32
    %2 = arith.cmpi ne, %1, %c0_i32_0 : i32
    scf.if %2 {
      "tpu.region"() ({
        %616 = tpu.sem_alloc : memref<!tpu.dma_semaphore, #tpu.memory_space<semaphore_mem>>
        tpu.enqueue_dma source(%arg3 : memref<32x288xbf16, #tpu.memory_space<any>>) target(%arg14 : memref<32x288xbf16, #tpu.memory_space<vmem>>) target_semaphore(%616 : memref<!tpu.dma_semaphore, #tpu.memory_space<semaphore_mem>>)
        tpu.wait_dma2 semaphore(%616 : memref<!tpu.dma_semaphore, #tpu.memory_space<semaphore_mem>>) src(%arg3 : memref<32x288xbf16, #tpu.memory_space<any>>) dst(%arg14 : memref<32x288xbf16, #tpu.memory_space<vmem>>)
        tpu.yield
      }) : () -> ()
      "tpu.region"() ({
        %616 = tpu.sem_alloc : memref<!tpu.dma_semaphore, #tpu.memory_space<semaphore_mem>>
        tpu.enqueue_dma source(%arg4 : memref<32x288xbf16, #tpu.memory_space<any>>) target(%arg15 : memref<32x288xbf16, #tpu.memory_space<vmem>>) target_semaphore(%616 : memref<!tpu.dma_semaphore, #tpu.memory_space<semaphore_mem>>)
        tpu.wait_dma2 semaphore(%616 : memref<!tpu.dma_semaphore, #tpu.memory_space<semaphore_mem>>) src(%arg4 : memref<32x288xbf16, #tpu.memory_space<any>>) dst(%arg15 : memref<32x288xbf16, #tpu.memory_space<vmem>>)
        tpu.yield
      }) : () -> ()
      "tpu.region"() ({
        %616 = tpu.sem_alloc : memref<!tpu.dma_semaphore, #tpu.memory_space<semaphore_mem>>
        tpu.enqueue_dma source(%arg5 : memref<96x288xbf16, #tpu.memory_space<any>>) target(%arg16 : memref<96x288xbf16, #tpu.memory_space<vmem>>) target_semaphore(%616 : memref<!tpu.dma_semaphore, #tpu.memory_space<semaphore_mem>>)
        tpu.wait_dma2 semaphore(%616 : memref<!tpu.dma_semaphore, #tpu.memory_space<semaphore_mem>>) src(%arg5 : memref<96x288xbf16, #tpu.memory_space<any>>) dst(%arg16 : memref<96x288xbf16, #tpu.memory_space<vmem>>)
        tpu.yield
      }) : () -> ()
      "tpu.region"() ({
        %616 = tpu.sem_alloc : memref<!tpu.dma_semaphore, #tpu.memory_space<semaphore_mem>>
        tpu.enqueue_dma source(%arg6 : memref<32x32xbf16, #tpu.memory_space<any>>) target(%arg17 : memref<32x32xbf16, #tpu.memory_space<vmem>>) target_semaphore(%616 : memref<!tpu.dma_semaphore, #tpu.memory_space<semaphore_mem>>)
        tpu.wait_dma2 semaphore(%616 : memref<!tpu.dma_semaphore, #tpu.memory_space<semaphore_mem>>) src(%arg6 : memref<32x32xbf16, #tpu.memory_space<any>>) dst(%arg17 : memref<32x32xbf16, #tpu.memory_space<vmem>>)
        tpu.yield
      }) : () -> ()
      %cst_305 = arith.constant 0.000000e+00 : f32
      %610 = vector.broadcast %cst_305 : f32 to vector<2x96xf32>
      %c0_306 = arith.constant 0 : index
      %c0_307 = arith.constant 0 : index
      %611 = vector.load %arg19[%c0_306, %c0_307] : memref<2x96xf32, #tpu.memory_space<vmem>>, vector<2x96xf32>
      tpu.vector_store %arg19[%c0_306, %c0_307], %610 {strides = array<i32>} : memref<2x96xf32, #tpu.memory_space<vmem>>, vector<2x96xf32>,
      %cst_308 = arith.constant 0.000000e+00 : f32
      %612 = vector.broadcast %cst_308 : f32 to vector<2x32x32xf32>
      %c0_309 = arith.constant 0 : index
      %c0_310 = arith.constant 0 : index
      %c0_311 = arith.constant 0 : index
      %613 = vector.load %arg20[%c0_309, %c0_310, %c0_311] : memref<2x32x32xf32, #tpu.memory_space<vmem>>, vector<2x32x32xf32>
      tpu.vector_store %arg20[%c0_309, %c0_310, %c0_311], %612 {strides = array<i32>} : memref<2x32x32xf32, #tpu.memory_space<vmem>>, vector<2x32x32xf32>,
      %cst_312 = arith.constant 0.000000e+00 : f32
      %614 = vector.broadcast %cst_312 : f32 to vector<2x32xf32>
      %c0_313 = arith.constant 0 : index
      %c0_314 = arith.constant 0 : index
      %615 = vector.load %arg21[%c0_313, %c0_314] : memref<2x32xf32, #tpu.memory_space<vmem>>, vector<2x32xf32>
      tpu.vector_store %arg21[%c0_313, %c0_314], %614 {strides = array<i32>} : memref<2x32xf32, #tpu.memory_space<vmem>>, vector<2x32xf32>,
    } else {
    }
    %c0 = arith.constant 0 : index
    %c0_1 = arith.constant 0 : index
    %c0_2 = arith.constant 0 : index
    %c0_3 = arith.constant 0 : index
    %3 = vector.load %arg2[%c0, %c0_1, %c0_2, %c0_3] : memref<1x1x16x32xbf16, #tpu.memory_space<vmem>>, vector<1x1x16x32xbf16>
    %4 = vector.shape_cast %3 : vector<1x1x16x32xbf16> to vector<16x32xbf16>
    %c0_4 = arith.constant 0 : index
    %c0_5 = arith.constant 0 : index
    %5 = vector.load %arg14[%c0_4, %c0_5] : memref<32x288xbf16, #tpu.memory_space<vmem>>, vector<32x288xbf16>
    %cst = arith.constant dense<0.000000e+00> : vector<16x288xf32>
    %6 = tpu.matmul %4, %5, %cst {dimension_numbers = #tpu.dot_dimension_numbers<[1], [0], [0], [1], [0, 0, 1, 1], [], []>} : vector<16x32xbf16>, vector<32x288xbf16>, vector<16x288xf32> -> vector<16x288xf32>
    %c0_6 = arith.constant 0 : index
    %c0_7 = arith.constant 0 : index
    %7 = vector.load %arg7[%c0_6, %c0_7] : memref<1x288xf32, #tpu.memory_space<vmem>>, vector<1x288xf32>
    %8 = vector.broadcast %7 : vector<1x288xf32> to vector<16x288xf32>
    %9 = arith.addf %6, %8 : vector<16x288xf32>
    %c0_8 = arith.constant 0 : index
    %c0_9 = arith.constant 0 : index
    %10 = vector.load %arg18[%c0_8, %c0_9] : memref<16x288xf32, #tpu.memory_space<vmem>>, vector<16x288xf32>
    tpu.vector_store %arg18[%c0_8, %c0_9], %9 {strides = array<i32>} : memref<16x288xf32, #tpu.memory_space<vmem>>, vector<16x288xf32>,
    %c0_10 = arith.constant 0 : index
    %c0_11 = arith.constant 0 : index
    %11 = vector.load %arg8[%c0_10, %c0_11] : memref<1x288xf32, #tpu.memory_space<vmem>>, vector<1x288xf32>
    %12 = vector.shape_cast %11 : vector<1x288xf32> to vector<1x288xf32>
    %13 = vector.broadcast %12 : vector<1x288xf32> to vector<2x288xf32>
    %c0_12 = arith.constant 0 : index
    %c0_13 = arith.constant 0 : index
    %14 = vector.load %arg10[%c0_12, %c0_13] : memref<32x32xf32, #tpu.memory_space<vmem>>, vector<32x32xf32>
    %c0_i32_14 = arith.constant 0 : i32
    %c0_15 = arith.constant 0 : index
    %c0_16 = arith.constant 0 : index
    %15 = vector.load %arg21[%c0_15, %c0_16] : memref<2x32xf32, #tpu.memory_space<vmem>>, vector<2x32xf32>
    %c0_17 = arith.constant 0 : index
    %c0_18 = arith.constant 0 : index
    %16 = vector.load %arg19[%c0_17, %c0_18] : memref<2x96xf32, #tpu.memory_space<vmem>>, vector<2x96xf32>
    %c2_i32 = arith.constant 2 : i32
    %17 = arith.muli %c0_i32_14, %c2_i32 : i32
    %18 = arith.index_cast %17 : i32 to index
    %c0_19 = arith.constant 0 : index
    %19 = vector.load %arg18[%18, %c0_19] : memref<16x288xf32, #tpu.memory_space<vmem>>, vector<2x288xf32>
    %20 = arith.truncf %15 : vector<2x32xf32> to vector<2x32xbf16>
    %c0_20 = arith.constant 0 : index
    %c0_21 = arith.constant 0 : index
    %21 = vector.load %arg15[%c0_20, %c0_21] : memref<32x288xbf16, #tpu.memory_space<vmem>>, vector<32x288xbf16>
    %cst_22 = arith.constant dense<0.000000e+00> : vector<2x288xf32>
    %22 = tpu.matmul %20, %21, %cst_22 {dimension_numbers = #tpu.dot_dimension_numbers<[1], [0], [0], [1], [0, 0, 1, 1], [], []>} : vector<2x32xbf16>, vector<32x288xbf16>, vector<2x288xf32> -> vector<2x288xf32>
    %23 = arith.addf %19, %22 : vector<2x288xf32>
    %24 = arith.truncf %16 : vector<2x96xf32> to vector<2x96xbf16>
    %c0_23 = arith.constant 0 : index
    %c0_24 = arith.constant 0 : index
    %25 = vector.load %arg16[%c0_23, %c0_24] : memref<96x288xbf16, #tpu.memory_space<vmem>>, vector<96x288xbf16>
    %cst_25 = arith.constant dense<0.000000e+00> : vector<2x288xf32>
    %26 = tpu.matmul %24, %25, %cst_25 {dimension_numbers = #tpu.dot_dimension_numbers<[1], [0], [0], [1], [0, 0, 1, 1], [], []>} : vector<2x96xbf16>, vector<96x288xbf16>, vector<2x288xf32> -> vector<2x288xf32>
    %27 = arith.addf %26, %13 : vector<2x288xf32>
    %28 = vector.extract_strided_slice %23 {offsets = [0, 0], sizes = [2, 96], strides = [1, 1]} : vector<2x288xf32> to vector<2x96xf32>
    %29 = vector.extract_strided_slice %23 {offsets = [0, 96], sizes = [2, 96], strides = [1, 1]} : vector<2x288xf32> to vector<2x96xf32>
    %30 = vector.extract_strided_slice %23 {offsets = [0, 192], sizes = [2, 96], strides = [1, 1]} : vector<2x288xf32> to vector<2x96xf32>
    %31 = vector.extract_strided_slice %27 {offsets = [0, 0], sizes = [2, 96], strides = [1, 1]} : vector<2x288xf32> to vector<2x96xf32>
    %32 = vector.extract_strided_slice %27 {offsets = [0, 96], sizes = [2, 96], strides = [1, 1]} : vector<2x288xf32> to vector<2x96xf32>
    %33 = vector.extract_strided_slice %27 {offsets = [0, 192], sizes = [2, 96], strides = [1, 1]} : vector<2x288xf32> to vector<2x96xf32>
    %34 = arith.addf %28, %31 : vector<2x96xf32>
    %35 = arith.negf %34 : vector<2x96xf32>
    %36 = math.exp %35 : vector<2x96xf32>
    %cst_26 = arith.constant 1.000000e+00 : f32
    %37 = vector.broadcast %cst_26 : f32 to vector<2x96xf32>
    %38 = arith.addf %37, %36 : vector<2x96xf32>
    %39 = arith.divf %37, %38 : vector<2x96xf32>
    %40 = arith.addf %29, %32 : vector<2x96xf32>
    %41 = arith.negf %40 : vector<2x96xf32>
    %42 = math.exp %41 : vector<2x96xf32>
    %cst_27 = arith.constant 1.000000e+00 : f32
    %43 = vector.broadcast %cst_27 : f32 to vector<2x96xf32>
    %44 = arith.addf %43, %42 : vector<2x96xf32>
    %45 = arith.divf %43, %44 : vector<2x96xf32>
    %46 = arith.mulf %39, %33 : vector<2x96xf32>
    %47 = arith.addf %30, %46 : vector<2x96xf32>
    %48 = math.tanh %47 : vector<2x96xf32>
    %49 = arith.subf %16, %48 : vector<2x96xf32>
    %50 = arith.mulf %45, %49 : vector<2x96xf32>
    %51 = arith.addf %48, %50 : vector<2x96xf32>
    %c0_28 = arith.constant 0 : index
    %c0_29 = arith.constant 0 : index
    %52 = vector.load %arg19[%c0_28, %c0_29] : memref<2x96xf32, #tpu.memory_space<vmem>>, vector<2x96xf32>
    tpu.vector_store %arg19[%c0_28, %c0_29], %51 {strides = array<i32>} : memref<2x96xf32, #tpu.memory_space<vmem>>, vector<2x96xf32>,
    %53 = vector.extract_strided_slice %51 {offsets = [0, 0], sizes = [2, 32], strides = [1, 1]} : vector<2x96xf32> to vector<2x32xf32>
    %54 = vector.extract_strided_slice %51 {offsets = [0, 32], sizes = [2, 32], strides = [1, 1]} : vector<2x96xf32> to vector<2x32xf32>
    %55 = vector.extract_strided_slice %51 {offsets = [0, 64], sizes = [2, 32], strides = [1, 1]} : vector<2x96xf32> to vector<2x32xf32>
    %56 = arith.mulf %54, %54 : vector<2x32xf32>
    %cst_30 = arith.constant dense<0.000000e+00> : vector<2x32xf32>
    %57 = tpu.matmul %56, %14, %cst_30 {dimension_numbers = #tpu.dot_dimension_numbers<[1], [0], [0], [1], [0, 0, 1, 1], [], []>} : vector<2x32xf32>, vector<32x32xf32>, vector<2x32xf32> -> vector<2x32xf32>
    %58 = arith.mulf %53, %53 : vector<2x32xf32>
    %cst_31 = arith.constant dense<0.000000e+00> : vector<2x32xf32>
    %59 = tpu.matmul %58, %14, %cst_31 {dimension_numbers = #tpu.dot_dimension_numbers<[1], [0], [0], [1], [0, 0, 1, 1], [], []>} : vector<2x32xf32>, vector<32x32xf32>, vector<2x32xf32> -> vector<2x32xf32>
    %60 = math.rsqrt %57 : vector<2x32xf32>
    %61 = arith.mulf %54, %60 : vector<2x32xf32>
    %cst_32 = arith.constant 0.000000e+00 : f32
    %62 = vector.broadcast %cst_32 : f32 to vector<2x32xf32>
    %63 = arith.cmpf ogt, %61, %62 : vector<2x32xf32>
    %64 = math.exp %61 : vector<2x32xf32>
    %cst_33 = arith.constant 1.000000e+00 : f32
    %65 = vector.broadcast %cst_33 : f32 to vector<2x32xf32>
    %66 = arith.subf %64, %65 : vector<2x32xf32>
    %67 = arith.select %63, %61, %66 : vector<2x32xi1>, vector<2x32xf32>
    %68 = math.rsqrt %59 : vector<2x32xf32>
    %69 = arith.mulf %53, %68 : vector<2x32xf32>
    %c0_34 = arith.constant 0 : index
    %c0_35 = arith.constant 0 : index
    %c0_36 = arith.constant 0 : index
    %70 = vector.load %arg20[%c0_34, %c0_35, %c0_36] : memref<2x32x32xf32, #tpu.memory_space<vmem>>, vector<2x32x32xf32>
    %71 = vector.shape_cast %55 : vector<2x32xf32> to vector<2x32x1xf32>
    %72 = vector.shape_cast %67 : vector<2x32xf32> to vector<2x1x32xf32>
    %73 = vector.broadcast %71 : vector<2x32x1xf32> to vector<2x32x32xf32>
    %74 = vector.broadcast %72 : vector<2x1x32xf32> to vector<2x32x32xf32>
    %75 = arith.mulf %73, %74 : vector<2x32x32xf32>
    %76 = vector.shape_cast %14 : vector<32x32xf32> to vector<1x32x32xf32>
    %77 = vector.broadcast %76 : vector<1x32x32xf32> to vector<2x32x32xf32>
    %78 = arith.mulf %75, %77 : vector<2x32x32xf32>
    %79 = arith.addf %70, %78 : vector<2x32x32xf32>
    %c0_37 = arith.constant 0 : index
    %c0_38 = arith.constant 0 : index
    %c0_39 = arith.constant 0 : index
    %80 = vector.load %arg20[%c0_37, %c0_38, %c0_39] : memref<2x32x32xf32, #tpu.memory_space<vmem>>, vector<2x32x32xf32>
    tpu.vector_store %arg20[%c0_37, %c0_38, %c0_39], %79 {strides = array<i32>} : memref<2x32x32xf32, #tpu.memory_space<vmem>>, vector<2x32x32xf32>,
    %c0_40 = arith.constant 0 : index
    %c0_41 = arith.constant 0 : index
    %c0_42 = arith.constant 0 : index
    %81 = vector.load %arg20[%c0_40, %c0_41, %c0_42] : memref<2x32x32xf32, #tpu.memory_space<vmem>>, vector<2x32x32xf32>
    %82 = vector.shape_cast %69 : vector<2x32xf32> to vector<2x1x32xf32>
    %83 = vector.broadcast %82 : vector<2x1x32xf32> to vector<2x32x32xf32>
    %84 = arith.mulf %81, %83 : vector<2x32x32xf32>
    %cst_43 = arith.constant dense<0.000000e+00> : vector<2x32xf32>
    %85 = vector.multi_reduction <add>, %84, %cst_43 [2] : vector<2x32x32xf32> to vector<2x32xf32>
    %c0_44 = arith.constant 0 : index
    %c0_45 = arith.constant 0 : index
    %86 = vector.load %arg21[%c0_44, %c0_45] : memref<2x32xf32, #tpu.memory_space<vmem>>, vector<2x32xf32>
    tpu.vector_store %arg21[%c0_44, %c0_45], %85 {strides = array<i32>} : memref<2x32xf32, #tpu.memory_space<vmem>>, vector<2x32xf32>,
    %c0_46 = arith.constant 0 : index
    %c0_47 = arith.constant 0 : index
    %87 = vector.load %arg12[%c0_46, %c0_47] : memref<2x32xf32, #tpu.memory_space<vmem>>, vector<2x32xf32>
    tpu.vector_store %arg12[%c0_46, %c0_47], %67 {strides = array<i32>} : memref<2x32xf32, #tpu.memory_space<vmem>>, vector<2x32xf32>,
    %c0_48 = arith.constant 0 : index
    %c0_49 = arith.constant 0 : index
    %88 = vector.load %arg13[%c0_48, %c0_49] : memref<2x32xf32, #tpu.memory_space<vmem>>, vector<2x32xf32>
    tpu.vector_store %arg13[%c0_48, %c0_49], %69 {strides = array<i32>} : memref<2x32xf32, #tpu.memory_space<vmem>>, vector<2x32xf32>,
    %c1_i32 = arith.constant 1 : i32
    %c0_50 = arith.constant 0 : index
    %c0_51 = arith.constant 0 : index
    %89 = vector.load %arg21[%c0_50, %c0_51] : memref<2x32xf32, #tpu.memory_space<vmem>>, vector<2x32xf32>
    %c0_52 = arith.constant 0 : index
    %c0_53 = arith.constant 0 : index
    %90 = vector.load %arg19[%c0_52, %c0_53] : memref<2x96xf32, #tpu.memory_space<vmem>>, vector<2x96xf32>
    %c2_i32_54 = arith.constant 2 : i32
    %91 = arith.muli %c1_i32, %c2_i32_54 : i32
    %92 = arith.index_cast %91 : i32 to index
    %c0_55 = arith.constant 0 : index
    %93 = vector.load %arg18[%92, %c0_55] : memref<16x288xf32, #tpu.memory_space<vmem>>, vector<2x288xf32>
    %94 = arith.truncf %89 : vector<2x32xf32> to vector<2x32xbf16>
    %c0_56 = arith.constant 0 : index
    %c0_57 = arith.constant 0 : index
    %95 = vector.load %arg15[%c0_56, %c0_57] : memref<32x288xbf16, #tpu.memory_space<vmem>>, vector<32x288xbf16>
    %cst_58 = arith.constant dense<0.000000e+00> : vector<2x288xf32>
    %96 = tpu.matmul %94, %95, %cst_58 {dimension_numbers = #tpu.dot_dimension_numbers<[1], [0], [0], [1], [0, 0, 1, 1], [], []>} : vector<2x32xbf16>, vector<32x288xbf16>, vector<2x288xf32> -> vector<2x288xf32>
    %97 = arith.addf %93, %96 : vector<2x288xf32>
    %98 = arith.truncf %90 : vector<2x96xf32> to vector<2x96xbf16>
    %c0_59 = arith.constant 0 : index
    %c0_60 = arith.constant 0 : index
    %99 = vector.load %arg16[%c0_59, %c0_60] : memref<96x288xbf16, #tpu.memory_space<vmem>>, vector<96x288xbf16>
    %cst_61 = arith.constant dense<0.000000e+00> : vector<2x288xf32>
    %100 = tpu.matmul %98, %99, %cst_61 {dimension_numbers = #tpu.dot_dimension_numbers<[1], [0], [0], [1], [0, 0, 1, 1], [], []>} : vector<2x96xbf16>, vector<96x288xbf16>, vector<2x288xf32> -> vector<2x288xf32>
    %101 = arith.addf %100, %13 : vector<2x288xf32>
    %102 = vector.extract_strided_slice %97 {offsets = [0, 0], sizes = [2, 96], strides = [1, 1]} : vector<2x288xf32> to vector<2x96xf32>
    %103 = vector.extract_strided_slice %97 {offsets = [0, 96], sizes = [2, 96], strides = [1, 1]} : vector<2x288xf32> to vector<2x96xf32>
    %104 = vector.extract_strided_slice %97 {offsets = [0, 192], sizes = [2, 96], strides = [1, 1]} : vector<2x288xf32> to vector<2x96xf32>
    %105 = vector.extract_strided_slice %101 {offsets = [0, 0], sizes = [2, 96], strides = [1, 1]} : vector<2x288xf32> to vector<2x96xf32>
    %106 = vector.extract_strided_slice %101 {offsets = [0, 96], sizes = [2, 96], strides = [1, 1]} : vector<2x288xf32> to vector<2x96xf32>
    %107 = vector.extract_strided_slice %101 {offsets = [0, 192], sizes = [2, 96], strides = [1, 1]} : vector<2x288xf32> to vector<2x96xf32>
    %108 = arith.addf %102, %105 : vector<2x96xf32>
    %109 = arith.negf %108 : vector<2x96xf32>
    %110 = math.exp %109 : vector<2x96xf32>
    %cst_62 = arith.constant 1.000000e+00 : f32
    %111 = vector.broadcast %cst_62 : f32 to vector<2x96xf32>
    %112 = arith.addf %111, %110 : vector<2x96xf32>
    %113 = arith.divf %111, %112 : vector<2x96xf32>
    %114 = arith.addf %103, %106 : vector<2x96xf32>
    %115 = arith.negf %114 : vector<2x96xf32>
    %116 = math.exp %115 : vector<2x96xf32>
    %cst_63 = arith.constant 1.000000e+00 : f32
    %117 = vector.broadcast %cst_63 : f32 to vector<2x96xf32>
    %118 = arith.addf %117, %116 : vector<2x96xf32>
    %119 = arith.divf %117, %118 : vector<2x96xf32>
    %120 = arith.mulf %113, %107 : vector<2x96xf32>
    %121 = arith.addf %104, %120 : vector<2x96xf32>
    %122 = math.tanh %121 : vector<2x96xf32>
    %123 = arith.subf %90, %122 : vector<2x96xf32>
    %124 = arith.mulf %119, %123 : vector<2x96xf32>
    %125 = arith.addf %122, %124 : vector<2x96xf32>
    %c0_64 = arith.constant 0 : index
    %c0_65 = arith.constant 0 : index
    %126 = vector.load %arg19[%c0_64, %c0_65] : memref<2x96xf32, #tpu.memory_space<vmem>>, vector<2x96xf32>
    tpu.vector_store %arg19[%c0_64, %c0_65], %125 {strides = array<i32>} : memref<2x96xf32, #tpu.memory_space<vmem>>, vector<2x96xf32>,
    %127 = vector.extract_strided_slice %125 {offsets = [0, 0], sizes = [2, 32], strides = [1, 1]} : vector<2x96xf32> to vector<2x32xf32>
    %128 = vector.extract_strided_slice %125 {offsets = [0, 32], sizes = [2, 32], strides = [1, 1]} : vector<2x96xf32> to vector<2x32xf32>
    %129 = vector.extract_strided_slice %125 {offsets = [0, 64], sizes = [2, 32], strides = [1, 1]} : vector<2x96xf32> to vector<2x32xf32>
    %130 = arith.mulf %128, %128 : vector<2x32xf32>
    %cst_66 = arith.constant dense<0.000000e+00> : vector<2x32xf32>
    %131 = tpu.matmul %130, %14, %cst_66 {dimension_numbers = #tpu.dot_dimension_numbers<[1], [0], [0], [1], [0, 0, 1, 1], [], []>} : vector<2x32xf32>, vector<32x32xf32>, vector<2x32xf32> -> vector<2x32xf32>
    %132 = arith.mulf %127, %127 : vector<2x32xf32>
    %cst_67 = arith.constant dense<0.000000e+00> : vector<2x32xf32>
    %133 = tpu.matmul %132, %14, %cst_67 {dimension_numbers = #tpu.dot_dimension_numbers<[1], [0], [0], [1], [0, 0, 1, 1], [], []>} : vector<2x32xf32>, vector<32x32xf32>, vector<2x32xf32> -> vector<2x32xf32>
    %134 = math.rsqrt %131 : vector<2x32xf32>
    %135 = arith.mulf %128, %134 : vector<2x32xf32>
    %cst_68 = arith.constant 0.000000e+00 : f32
    %136 = vector.broadcast %cst_68 : f32 to vector<2x32xf32>
    %137 = arith.cmpf ogt, %135, %136 : vector<2x32xf32>
    %138 = math.exp %135 : vector<2x32xf32>
    %cst_69 = arith.constant 1.000000e+00 : f32
    %139 = vector.broadcast %cst_69 : f32 to vector<2x32xf32>
    %140 = arith.subf %138, %139 : vector<2x32xf32>
    %141 = arith.select %137, %135, %140 : vector<2x32xi1>, vector<2x32xf32>
    %142 = math.rsqrt %133 : vector<2x32xf32>
    %143 = arith.mulf %127, %142 : vector<2x32xf32>
    %c0_70 = arith.constant 0 : index
    %c0_71 = arith.constant 0 : index
    %c0_72 = arith.constant 0 : index
    %144 = vector.load %arg20[%c0_70, %c0_71, %c0_72] : memref<2x32x32xf32, #tpu.memory_space<vmem>>, vector<2x32x32xf32>
    %145 = vector.shape_cast %129 : vector<2x32xf32> to vector<2x32x1xf32>
    %146 = vector.shape_cast %141 : vector<2x32xf32> to vector<2x1x32xf32>
    %147 = vector.broadcast %145 : vector<2x32x1xf32> to vector<2x32x32xf32>
    %148 = vector.broadcast %146 : vector<2x1x32xf32> to vector<2x32x32xf32>
    %149 = arith.mulf %147, %148 : vector<2x32x32xf32>
    %150 = vector.shape_cast %14 : vector<32x32xf32> to vector<1x32x32xf32>
    %151 = vector.broadcast %150 : vector<1x32x32xf32> to vector<2x32x32xf32>
    %152 = arith.mulf %149, %151 : vector<2x32x32xf32>
    %153 = arith.addf %144, %152 : vector<2x32x32xf32>
    %c0_73 = arith.constant 0 : index
    %c0_74 = arith.constant 0 : index
    %c0_75 = arith.constant 0 : index
    %154 = vector.load %arg20[%c0_73, %c0_74, %c0_75] : memref<2x32x32xf32, #tpu.memory_space<vmem>>, vector<2x32x32xf32>
    tpu.vector_store %arg20[%c0_73, %c0_74, %c0_75], %153 {strides = array<i32>} : memref<2x32x32xf32, #tpu.memory_space<vmem>>, vector<2x32x32xf32>,
    %c0_76 = arith.constant 0 : index
    %c0_77 = arith.constant 0 : index
    %c0_78 = arith.constant 0 : index
    %155 = vector.load %arg20[%c0_76, %c0_77, %c0_78] : memref<2x32x32xf32, #tpu.memory_space<vmem>>, vector<2x32x32xf32>
    %156 = vector.shape_cast %143 : vector<2x32xf32> to vector<2x1x32xf32>
    %157 = vector.broadcast %156 : vector<2x1x32xf32> to vector<2x32x32xf32>
    %158 = arith.mulf %155, %157 : vector<2x32x32xf32>
    %cst_79 = arith.constant dense<0.000000e+00> : vector<2x32xf32>
    %159 = vector.multi_reduction <add>, %158, %cst_79 [2] : vector<2x32x32xf32> to vector<2x32xf32>
    %c0_80 = arith.constant 0 : index
    %c0_81 = arith.constant 0 : index
    %160 = vector.load %arg21[%c0_80, %c0_81] : memref<2x32xf32, #tpu.memory_space<vmem>>, vector<2x32xf32>
    tpu.vector_store %arg21[%c0_80, %c0_81], %159 {strides = array<i32>} : memref<2x32xf32, #tpu.memory_space<vmem>>, vector<2x32xf32>,
    %c0_82 = arith.constant 0 : index
    %c0_83 = arith.constant 0 : index
    %161 = vector.load %arg12[%c0_82, %c0_83] : memref<2x32xf32, #tpu.memory_space<vmem>>, vector<2x32xf32>
    tpu.vector_store %arg12[%c0_82, %c0_83], %141 {strides = array<i32>} : memref<2x32xf32, #tpu.memory_space<vmem>>, vector<2x32xf32>,
    %c0_84 = arith.constant 0 : index
    %c0_85 = arith.constant 0 : index
    %162 = vector.load %arg13[%c0_84, %c0_85] : memref<2x32xf32, #tpu.memory_space<vmem>>, vector<2x32xf32>
    tpu.vector_store %arg13[%c0_84, %c0_85], %143 {strides = array<i32>} : memref<2x32xf32, #tpu.memory_space<vmem>>, vector<2x32xf32>,
    %c2_i32_86 = arith.constant 2 : i32
    %c0_87 = arith.constant 0 : index
    %c0_88 = arith.constant 0 : index
    %163 = vector.load %arg21[%c0_87, %c0_88] : memref<2x32xf32, #tpu.memory_space<vmem>>, vector<2x32xf32>
    %c0_89 = arith.constant 0 : index
    %c0_90 = arith.constant 0 : index
    %164 = vector.load %arg19[%c0_89, %c0_90] : memref<2x96xf32, #tpu.memory_space<vmem>>, vector<2x96xf32>
    %c2_i32_91 = arith.constant 2 : i32
    %165 = arith.muli %c2_i32_86, %c2_i32_91 : i32
    %166 = arith.index_cast %165 : i32 to index
    %c0_92 = arith.constant 0 : index
    %167 = vector.load %arg18[%166, %c0_92] : memref<16x288xf32, #tpu.memory_space<vmem>>, vector<2x288xf32>
    %168 = arith.truncf %163 : vector<2x32xf32> to vector<2x32xbf16>
    %c0_93 = arith.constant 0 : index
    %c0_94 = arith.constant 0 : index
    %169 = vector.load %arg15[%c0_93, %c0_94] : memref<32x288xbf16, #tpu.memory_space<vmem>>, vector<32x288xbf16>
    %cst_95 = arith.constant dense<0.000000e+00> : vector<2x288xf32>
    %170 = tpu.matmul %168, %169, %cst_95 {dimension_numbers = #tpu.dot_dimension_numbers<[1], [0], [0], [1], [0, 0, 1, 1], [], []>} : vector<2x32xbf16>, vector<32x288xbf16>, vector<2x288xf32> -> vector<2x288xf32>
    %171 = arith.addf %167, %170 : vector<2x288xf32>
    %172 = arith.truncf %164 : vector<2x96xf32> to vector<2x96xbf16>
    %c0_96 = arith.constant 0 : index
    %c0_97 = arith.constant 0 : index
    %173 = vector.load %arg16[%c0_96, %c0_97] : memref<96x288xbf16, #tpu.memory_space<vmem>>, vector<96x288xbf16>
    %cst_98 = arith.constant dense<0.000000e+00> : vector<2x288xf32>
    %174 = tpu.matmul %172, %173, %cst_98 {dimension_numbers = #tpu.dot_dimension_numbers<[1], [0], [0], [1], [0, 0, 1, 1], [], []>} : vector<2x96xbf16>, vector<96x288xbf16>, vector<2x288xf32> -> vector<2x288xf32>
    %175 = arith.addf %174, %13 : vector<2x288xf32>
    %176 = vector.extract_strided_slice %171 {offsets = [0, 0], sizes = [2, 96], strides = [1, 1]} : vector<2x288xf32> to vector<2x96xf32>
    %177 = vector.extract_strided_slice %171 {offsets = [0, 96], sizes = [2, 96], strides = [1, 1]} : vector<2x288xf32> to vector<2x96xf32>
    %178 = vector.extract_strided_slice %171 {offsets = [0, 192], sizes = [2, 96], strides = [1, 1]} : vector<2x288xf32> to vector<2x96xf32>
    %179 = vector.extract_strided_slice %175 {offsets = [0, 0], sizes = [2, 96], strides = [1, 1]} : vector<2x288xf32> to vector<2x96xf32>
    %180 = vector.extract_strided_slice %175 {offsets = [0, 96], sizes = [2, 96], strides = [1, 1]} : vector<2x288xf32> to vector<2x96xf32>
    %181 = vector.extract_strided_slice %175 {offsets = [0, 192], sizes = [2, 96], strides = [1, 1]} : vector<2x288xf32> to vector<2x96xf32>
    %182 = arith.addf %176, %179 : vector<2x96xf32>
    %183 = arith.negf %182 : vector<2x96xf32>
    %184 = math.exp %183 : vector<2x96xf32>
    %cst_99 = arith.constant 1.000000e+00 : f32
    %185 = vector.broadcast %cst_99 : f32 to vector<2x96xf32>
    %186 = arith.addf %185, %184 : vector<2x96xf32>
    %187 = arith.divf %185, %186 : vector<2x96xf32>
    %188 = arith.addf %177, %180 : vector<2x96xf32>
    %189 = arith.negf %188 : vector<2x96xf32>
    %190 = math.exp %189 : vector<2x96xf32>
    %cst_100 = arith.constant 1.000000e+00 : f32
    %191 = vector.broadcast %cst_100 : f32 to vector<2x96xf32>
    %192 = arith.addf %191, %190 : vector<2x96xf32>
    %193 = arith.divf %191, %192 : vector<2x96xf32>
    %194 = arith.mulf %187, %181 : vector<2x96xf32>
    %195 = arith.addf %178, %194 : vector<2x96xf32>
    %196 = math.tanh %195 : vector<2x96xf32>
    %197 = arith.subf %164, %196 : vector<2x96xf32>
    %198 = arith.mulf %193, %197 : vector<2x96xf32>
    %199 = arith.addf %196, %198 : vector<2x96xf32>
    %c0_101 = arith.constant 0 : index
    %c0_102 = arith.constant 0 : index
    %200 = vector.load %arg19[%c0_101, %c0_102] : memref<2x96xf32, #tpu.memory_space<vmem>>, vector<2x96xf32>
    tpu.vector_store %arg19[%c0_101, %c0_102], %199 {strides = array<i32>} : memref<2x96xf32, #tpu.memory_space<vmem>>, vector<2x96xf32>,
    %201 = vector.extract_strided_slice %199 {offsets = [0, 0], sizes = [2, 32], strides = [1, 1]} : vector<2x96xf32> to vector<2x32xf32>
    %202 = vector.extract_strided_slice %199 {offsets = [0, 32], sizes = [2, 32], strides = [1, 1]} : vector<2x96xf32> to vector<2x32xf32>
    %203 = vector.extract_strided_slice %199 {offsets = [0, 64], sizes = [2, 32], strides = [1, 1]} : vector<2x96xf32> to vector<2x32xf32>
    %204 = arith.mulf %202, %202 : vector<2x32xf32>
    %cst_103 = arith.constant dense<0.000000e+00> : vector<2x32xf32>
    %205 = tpu.matmul %204, %14, %cst_103 {dimension_numbers = #tpu.dot_dimension_numbers<[1], [0], [0], [1], [0, 0, 1, 1], [], []>} : vector<2x32xf32>, vector<32x32xf32>, vector<2x32xf32> -> vector<2x32xf32>
    %206 = arith.mulf %201, %201 : vector<2x32xf32>
    %cst_104 = arith.constant dense<0.000000e+00> : vector<2x32xf32>
    %207 = tpu.matmul %206, %14, %cst_104 {dimension_numbers = #tpu.dot_dimension_numbers<[1], [0], [0], [1], [0, 0, 1, 1], [], []>} : vector<2x32xf32>, vector<32x32xf32>, vector<2x32xf32> -> vector<2x32xf32>
    %208 = math.rsqrt %205 : vector<2x32xf32>
    %209 = arith.mulf %202, %208 : vector<2x32xf32>
    %cst_105 = arith.constant 0.000000e+00 : f32
    %210 = vector.broadcast %cst_105 : f32 to vector<2x32xf32>
    %211 = arith.cmpf ogt, %209, %210 : vector<2x32xf32>
    %212 = math.exp %209 : vector<2x32xf32>
    %cst_106 = arith.constant 1.000000e+00 : f32
    %213 = vector.broadcast %cst_106 : f32 to vector<2x32xf32>
    %214 = arith.subf %212, %213 : vector<2x32xf32>
    %215 = arith.select %211, %209, %214 : vector<2x32xi1>, vector<2x32xf32>
    %216 = math.rsqrt %207 : vector<2x32xf32>
    %217 = arith.mulf %201, %216 : vector<2x32xf32>
    %c0_107 = arith.constant 0 : index
    %c0_108 = arith.constant 0 : index
    %c0_109 = arith.constant 0 : index
    %218 = vector.load %arg20[%c0_107, %c0_108, %c0_109] : memref<2x32x32xf32, #tpu.memory_space<vmem>>, vector<2x32x32xf32>
    %219 = vector.shape_cast %203 : vector<2x32xf32> to vector<2x32x1xf32>
    %220 = vector.shape_cast %215 : vector<2x32xf32> to vector<2x1x32xf32>
    %221 = vector.broadcast %219 : vector<2x32x1xf32> to vector<2x32x32xf32>
    %222 = vector.broadcast %220 : vector<2x1x32xf32> to vector<2x32x32xf32>
    %223 = arith.mulf %221, %222 : vector<2x32x32xf32>
    %224 = vector.shape_cast %14 : vector<32x32xf32> to vector<1x32x32xf32>
    %225 = vector.broadcast %224 : vector<1x32x32xf32> to vector<2x32x32xf32>
    %226 = arith.mulf %223, %225 : vector<2x32x32xf32>
    %227 = arith.addf %218, %226 : vector<2x32x32xf32>
    %c0_110 = arith.constant 0 : index
    %c0_111 = arith.constant 0 : index
    %c0_112 = arith.constant 0 : index
    %228 = vector.load %arg20[%c0_110, %c0_111, %c0_112] : memref<2x32x32xf32, #tpu.memory_space<vmem>>, vector<2x32x32xf32>
    tpu.vector_store %arg20[%c0_110, %c0_111, %c0_112], %227 {strides = array<i32>} : memref<2x32x32xf32, #tpu.memory_space<vmem>>, vector<2x32x32xf32>,
    %c0_113 = arith.constant 0 : index
    %c0_114 = arith.constant 0 : index
    %c0_115 = arith.constant 0 : index
    %229 = vector.load %arg20[%c0_113, %c0_114, %c0_115] : memref<2x32x32xf32, #tpu.memory_space<vmem>>, vector<2x32x32xf32>
    %230 = vector.shape_cast %217 : vector<2x32xf32> to vector<2x1x32xf32>
    %231 = vector.broadcast %230 : vector<2x1x32xf32> to vector<2x32x32xf32>
    %232 = arith.mulf %229, %231 : vector<2x32x32xf32>
    %cst_116 = arith.constant dense<0.000000e+00> : vector<2x32xf32>
    %233 = vector.multi_reduction <add>, %232, %cst_116 [2] : vector<2x32x32xf32> to vector<2x32xf32>
    %c0_117 = arith.constant 0 : index
    %c0_118 = arith.constant 0 : index
    %234 = vector.load %arg21[%c0_117, %c0_118] : memref<2x32xf32, #tpu.memory_space<vmem>>, vector<2x32xf32>
    tpu.vector_store %arg21[%c0_117, %c0_118], %233 {strides = array<i32>} : memref<2x32xf32, #tpu.memory_space<vmem>>, vector<2x32xf32>,
    %c0_119 = arith.constant 0 : index
    %c0_120 = arith.constant 0 : index
    %235 = vector.load %arg12[%c0_119, %c0_120] : memref<2x32xf32, #tpu.memory_space<vmem>>, vector<2x32xf32>
    tpu.vector_store %arg12[%c0_119, %c0_120], %215 {strides = array<i32>} : memref<2x32xf32, #tpu.memory_space<vmem>>, vector<2x32xf32>,
    %c0_121 = arith.constant 0 : index
    %c0_122 = arith.constant 0 : index
    %236 = vector.load %arg13[%c0_121, %c0_122] : memref<2x32xf32, #tpu.memory_space<vmem>>, vector<2x32xf32>
    tpu.vector_store %arg13[%c0_121, %c0_122], %217 {strides = array<i32>} : memref<2x32xf32, #tpu.memory_space<vmem>>, vector<2x32xf32>,
    %c3_i32 = arith.constant 3 : i32
    %c0_123 = arith.constant 0 : index
    %c0_124 = arith.constant 0 : index
    %237 = vector.load %arg21[%c0_123, %c0_124] : memref<2x32xf32, #tpu.memory_space<vmem>>, vector<2x32xf32>
    %c0_125 = arith.constant 0 : index
    %c0_126 = arith.constant 0 : index
    %238 = vector.load %arg19[%c0_125, %c0_126] : memref<2x96xf32, #tpu.memory_space<vmem>>, vector<2x96xf32>
    %c2_i32_127 = arith.constant 2 : i32
    %239 = arith.muli %c3_i32, %c2_i32_127 : i32
    %240 = arith.index_cast %239 : i32 to index
    %c0_128 = arith.constant 0 : index
    %241 = vector.load %arg18[%240, %c0_128] : memref<16x288xf32, #tpu.memory_space<vmem>>, vector<2x288xf32>
    %242 = arith.truncf %237 : vector<2x32xf32> to vector<2x32xbf16>
    %c0_129 = arith.constant 0 : index
    %c0_130 = arith.constant 0 : index
    %243 = vector.load %arg15[%c0_129, %c0_130] : memref<32x288xbf16, #tpu.memory_space<vmem>>, vector<32x288xbf16>
    %cst_131 = arith.constant dense<0.000000e+00> : vector<2x288xf32>
    %244 = tpu.matmul %242, %243, %cst_131 {dimension_numbers = #tpu.dot_dimension_numbers<[1], [0], [0], [1], [0, 0, 1, 1], [], []>} : vector<2x32xbf16>, vector<32x288xbf16>, vector<2x288xf32> -> vector<2x288xf32>
    %245 = arith.addf %241, %244 : vector<2x288xf32>
    %246 = arith.truncf %238 : vector<2x96xf32> to vector<2x96xbf16>
    %c0_132 = arith.constant 0 : index
    %c0_133 = arith.constant 0 : index
    %247 = vector.load %arg16[%c0_132, %c0_133] : memref<96x288xbf16, #tpu.memory_space<vmem>>, vector<96x288xbf16>
    %cst_134 = arith.constant dense<0.000000e+00> : vector<2x288xf32>
    %248 = tpu.matmul %246, %247, %cst_134 {dimension_numbers = #tpu.dot_dimension_numbers<[1], [0], [0], [1], [0, 0, 1, 1], [], []>} : vector<2x96xbf16>, vector<96x288xbf16>, vector<2x288xf32> -> vector<2x288xf32>
    %249 = arith.addf %248, %13 : vector<2x288xf32>
    %250 = vector.extract_strided_slice %245 {offsets = [0, 0], sizes = [2, 96], strides = [1, 1]} : vector<2x288xf32> to vector<2x96xf32>
    %251 = vector.extract_strided_slice %245 {offsets = [0, 96], sizes = [2, 96], strides = [1, 1]} : vector<2x288xf32> to vector<2x96xf32>
    %252 = vector.extract_strided_slice %245 {offsets = [0, 192], sizes = [2, 96], strides = [1, 1]} : vector<2x288xf32> to vector<2x96xf32>
    %253 = vector.extract_strided_slice %249 {offsets = [0, 0], sizes = [2, 96], strides = [1, 1]} : vector<2x288xf32> to vector<2x96xf32>
    %254 = vector.extract_strided_slice %249 {offsets = [0, 96], sizes = [2, 96], strides = [1, 1]} : vector<2x288xf32> to vector<2x96xf32>
    %255 = vector.extract_strided_slice %249 {offsets = [0, 192], sizes = [2, 96], strides = [1, 1]} : vector<2x288xf32> to vector<2x96xf32>
    %256 = arith.addf %250, %253 : vector<2x96xf32>
    %257 = arith.negf %256 : vector<2x96xf32>
    %258 = math.exp %257 : vector<2x96xf32>
    %cst_135 = arith.constant 1.000000e+00 : f32
    %259 = vector.broadcast %cst_135 : f32 to vector<2x96xf32>
    %260 = arith.addf %259, %258 : vector<2x96xf32>
    %261 = arith.divf %259, %260 : vector<2x96xf32>
    %262 = arith.addf %251, %254 : vector<2x96xf32>
    %263 = arith.negf %262 : vector<2x96xf32>
    %264 = math.exp %263 : vector<2x96xf32>
    %cst_136 = arith.constant 1.000000e+00 : f32
    %265 = vector.broadcast %cst_136 : f32 to vector<2x96xf32>
    %266 = arith.addf %265, %264 : vector<2x96xf32>
    %267 = arith.divf %265, %266 : vector<2x96xf32>
    %268 = arith.mulf %261, %255 : vector<2x96xf32>
    %269 = arith.addf %252, %268 : vector<2x96xf32>
    %270 = math.tanh %269 : vector<2x96xf32>
    %271 = arith.subf %238, %270 : vector<2x96xf32>
    %272 = arith.mulf %267, %271 : vector<2x96xf32>
    %273 = arith.addf %270, %272 : vector<2x96xf32>
    %c0_137 = arith.constant 0 : index
    %c0_138 = arith.constant 0 : index
    %274 = vector.load %arg19[%c0_137, %c0_138] : memref<2x96xf32, #tpu.memory_space<vmem>>, vector<2x96xf32>
    tpu.vector_store %arg19[%c0_137, %c0_138], %273 {strides = array<i32>} : memref<2x96xf32, #tpu.memory_space<vmem>>, vector<2x96xf32>,
    %275 = vector.extract_strided_slice %273 {offsets = [0, 0], sizes = [2, 32], strides = [1, 1]} : vector<2x96xf32> to vector<2x32xf32>
    %276 = vector.extract_strided_slice %273 {offsets = [0, 32], sizes = [2, 32], strides = [1, 1]} : vector<2x96xf32> to vector<2x32xf32>
    %277 = vector.extract_strided_slice %273 {offsets = [0, 64], sizes = [2, 32], strides = [1, 1]} : vector<2x96xf32> to vector<2x32xf32>
    %278 = arith.mulf %276, %276 : vector<2x32xf32>
    %cst_139 = arith.constant dense<0.000000e+00> : vector<2x32xf32>
    %279 = tpu.matmul %278, %14, %cst_139 {dimension_numbers = #tpu.dot_dimension_numbers<[1], [0], [0], [1], [0, 0, 1, 1], [], []>} : vector<2x32xf32>, vector<32x32xf32>, vector<2x32xf32> -> vector<2x32xf32>
    %280 = arith.mulf %275, %275 : vector<2x32xf32>
    %cst_140 = arith.constant dense<0.000000e+00> : vector<2x32xf32>
    %281 = tpu.matmul %280, %14, %cst_140 {dimension_numbers = #tpu.dot_dimension_numbers<[1], [0], [0], [1], [0, 0, 1, 1], [], []>} : vector<2x32xf32>, vector<32x32xf32>, vector<2x32xf32> -> vector<2x32xf32>
    %282 = math.rsqrt %279 : vector<2x32xf32>
    %283 = arith.mulf %276, %282 : vector<2x32xf32>
    %cst_141 = arith.constant 0.000000e+00 : f32
    %284 = vector.broadcast %cst_141 : f32 to vector<2x32xf32>
    %285 = arith.cmpf ogt, %283, %284 : vector<2x32xf32>
    %286 = math.exp %283 : vector<2x32xf32>
    %cst_142 = arith.constant 1.000000e+00 : f32
    %287 = vector.broadcast %cst_142 : f32 to vector<2x32xf32>
    %288 = arith.subf %286, %287 : vector<2x32xf32>
    %289 = arith.select %285, %283, %288 : vector<2x32xi1>, vector<2x32xf32>
    %290 = math.rsqrt %281 : vector<2x32xf32>
    %291 = arith.mulf %275, %290 : vector<2x32xf32>
    %c0_143 = arith.constant 0 : index
    %c0_144 = arith.constant 0 : index
    %c0_145 = arith.constant 0 : index
    %292 = vector.load %arg20[%c0_143, %c0_144, %c0_145] : memref<2x32x32xf32, #tpu.memory_space<vmem>>, vector<2x32x32xf32>
    %293 = vector.shape_cast %277 : vector<2x32xf32> to vector<2x32x1xf32>
    %294 = vector.shape_cast %289 : vector<2x32xf32> to vector<2x1x32xf32>
    %295 = vector.broadcast %293 : vector<2x32x1xf32> to vector<2x32x32xf32>
    %296 = vector.broadcast %294 : vector<2x1x32xf32> to vector<2x32x32xf32>
    %297 = arith.mulf %295, %296 : vector<2x32x32xf32>
    %298 = vector.shape_cast %14 : vector<32x32xf32> to vector<1x32x32xf32>
    %299 = vector.broadcast %298 : vector<1x32x32xf32> to vector<2x32x32xf32>
    %300 = arith.mulf %297, %299 : vector<2x32x32xf32>
    %301 = arith.addf %292, %300 : vector<2x32x32xf32>
    %c0_146 = arith.constant 0 : index
    %c0_147 = arith.constant 0 : index
    %c0_148 = arith.constant 0 : index
    %302 = vector.load %arg20[%c0_146, %c0_147, %c0_148] : memref<2x32x32xf32, #tpu.memory_space<vmem>>, vector<2x32x32xf32>
    tpu.vector_store %arg20[%c0_146, %c0_147, %c0_148], %301 {strides = array<i32>} : memref<2x32x32xf32, #tpu.memory_space<vmem>>, vector<2x32x32xf32>,
    %c0_149 = arith.constant 0 : index
    %c0_150 = arith.constant 0 : index
    %c0_151 = arith.constant 0 : index
    %303 = vector.load %arg20[%c0_149, %c0_150, %c0_151] : memref<2x32x32xf32, #tpu.memory_space<vmem>>, vector<2x32x32xf32>
    %304 = vector.shape_cast %291 : vector<2x32xf32> to vector<2x1x32xf32>
    %305 = vector.broadcast %304 : vector<2x1x32xf32> to vector<2x32x32xf32>
    %306 = arith.mulf %303, %305 : vector<2x32x32xf32>
    %cst_152 = arith.constant dense<0.000000e+00> : vector<2x32xf32>
    %307 = vector.multi_reduction <add>, %306, %cst_152 [2] : vector<2x32x32xf32> to vector<2x32xf32>
    %c0_153 = arith.constant 0 : index
    %c0_154 = arith.constant 0 : index
    %308 = vector.load %arg21[%c0_153, %c0_154] : memref<2x32xf32, #tpu.memory_space<vmem>>, vector<2x32xf32>
    tpu.vector_store %arg21[%c0_153, %c0_154], %307 {strides = array<i32>} : memref<2x32xf32, #tpu.memory_space<vmem>>, vector<2x32xf32>,
    %c0_155 = arith.constant 0 : index
    %c0_156 = arith.constant 0 : index
    %309 = vector.load %arg12[%c0_155, %c0_156] : memref<2x32xf32, #tpu.memory_space<vmem>>, vector<2x32xf32>
    tpu.vector_store %arg12[%c0_155, %c0_156], %289 {strides = array<i32>} : memref<2x32xf32, #tpu.memory_space<vmem>>, vector<2x32xf32>,
    %c0_157 = arith.constant 0 : index
    %c0_158 = arith.constant 0 : index
    %310 = vector.load %arg13[%c0_157, %c0_158] : memref<2x32xf32, #tpu.memory_space<vmem>>, vector<2x32xf32>
    tpu.vector_store %arg13[%c0_157, %c0_158], %291 {strides = array<i32>} : memref<2x32xf32, #tpu.memory_space<vmem>>, vector<2x32xf32>,
    %c4_i32 = arith.constant 4 : i32
    %c0_159 = arith.constant 0 : index
    %c0_160 = arith.constant 0 : index
    %311 = vector.load %arg21[%c0_159, %c0_160] : memref<2x32xf32, #tpu.memory_space<vmem>>, vector<2x32xf32>
    %c0_161 = arith.constant 0 : index
    %c0_162 = arith.constant 0 : index
    %312 = vector.load %arg19[%c0_161, %c0_162] : memref<2x96xf32, #tpu.memory_space<vmem>>, vector<2x96xf32>
    %c2_i32_163 = arith.constant 2 : i32
    %313 = arith.muli %c4_i32, %c2_i32_163 : i32
    %314 = arith.index_cast %313 : i32 to index
    %c0_164 = arith.constant 0 : index
    %315 = vector.load %arg18[%314, %c0_164] : memref<16x288xf32, #tpu.memory_space<vmem>>, vector<2x288xf32>
    %316 = arith.truncf %311 : vector<2x32xf32> to vector<2x32xbf16>
    %c0_165 = arith.constant 0 : index
    %c0_166 = arith.constant 0 : index
    %317 = vector.load %arg15[%c0_165, %c0_166] : memref<32x288xbf16, #tpu.memory_space<vmem>>, vector<32x288xbf16>
    %cst_167 = arith.constant dense<0.000000e+00> : vector<2x288xf32>
    %318 = tpu.matmul %316, %317, %cst_167 {dimension_numbers = #tpu.dot_dimension_numbers<[1], [0], [0], [1], [0, 0, 1, 1], [], []>} : vector<2x32xbf16>, vector<32x288xbf16>, vector<2x288xf32> -> vector<2x288xf32>
    %319 = arith.addf %315, %318 : vector<2x288xf32>
    %320 = arith.truncf %312 : vector<2x96xf32> to vector<2x96xbf16>
    %c0_168 = arith.constant 0 : index
    %c0_169 = arith.constant 0 : index
    %321 = vector.load %arg16[%c0_168, %c0_169] : memref<96x288xbf16, #tpu.memory_space<vmem>>, vector<96x288xbf16>
    %cst_170 = arith.constant dense<0.000000e+00> : vector<2x288xf32>
    %322 = tpu.matmul %320, %321, %cst_170 {dimension_numbers = #tpu.dot_dimension_numbers<[1], [0], [0], [1], [0, 0, 1, 1], [], []>} : vector<2x96xbf16>, vector<96x288xbf16>, vector<2x288xf32> -> vector<2x288xf32>
    %323 = arith.addf %322, %13 : vector<2x288xf32>
    %324 = vector.extract_strided_slice %319 {offsets = [0, 0], sizes = [2, 96], strides = [1, 1]} : vector<2x288xf32> to vector<2x96xf32>
    %325 = vector.extract_strided_slice %319 {offsets = [0, 96], sizes = [2, 96], strides = [1, 1]} : vector<2x288xf32> to vector<2x96xf32>
    %326 = vector.extract_strided_slice %319 {offsets = [0, 192], sizes = [2, 96], strides = [1, 1]} : vector<2x288xf32> to vector<2x96xf32>
    %327 = vector.extract_strided_slice %323 {offsets = [0, 0], sizes = [2, 96], strides = [1, 1]} : vector<2x288xf32> to vector<2x96xf32>
    %328 = vector.extract_strided_slice %323 {offsets = [0, 96], sizes = [2, 96], strides = [1, 1]} : vector<2x288xf32> to vector<2x96xf32>
    %329 = vector.extract_strided_slice %323 {offsets = [0, 192], sizes = [2, 96], strides = [1, 1]} : vector<2x288xf32> to vector<2x96xf32>
    %330 = arith.addf %324, %327 : vector<2x96xf32>
    %331 = arith.negf %330 : vector<2x96xf32>
    %332 = math.exp %331 : vector<2x96xf32>
    %cst_171 = arith.constant 1.000000e+00 : f32
    %333 = vector.broadcast %cst_171 : f32 to vector<2x96xf32>
    %334 = arith.addf %333, %332 : vector<2x96xf32>
    %335 = arith.divf %333, %334 : vector<2x96xf32>
    %336 = arith.addf %325, %328 : vector<2x96xf32>
    %337 = arith.negf %336 : vector<2x96xf32>
    %338 = math.exp %337 : vector<2x96xf32>
    %cst_172 = arith.constant 1.000000e+00 : f32
    %339 = vector.broadcast %cst_172 : f32 to vector<2x96xf32>
    %340 = arith.addf %339, %338 : vector<2x96xf32>
    %341 = arith.divf %339, %340 : vector<2x96xf32>
    %342 = arith.mulf %335, %329 : vector<2x96xf32>
    %343 = arith.addf %326, %342 : vector<2x96xf32>
    %344 = math.tanh %343 : vector<2x96xf32>
    %345 = arith.subf %312, %344 : vector<2x96xf32>
    %346 = arith.mulf %341, %345 : vector<2x96xf32>
    %347 = arith.addf %344, %346 : vector<2x96xf32>
    %c0_173 = arith.constant 0 : index
    %c0_174 = arith.constant 0 : index
    %348 = vector.load %arg19[%c0_173, %c0_174] : memref<2x96xf32, #tpu.memory_space<vmem>>, vector<2x96xf32>
    tpu.vector_store %arg19[%c0_173, %c0_174], %347 {strides = array<i32>} : memref<2x96xf32, #tpu.memory_space<vmem>>, vector<2x96xf32>,
    %349 = vector.extract_strided_slice %347 {offsets = [0, 0], sizes = [2, 32], strides = [1, 1]} : vector<2x96xf32> to vector<2x32xf32>
    %350 = vector.extract_strided_slice %347 {offsets = [0, 32], sizes = [2, 32], strides = [1, 1]} : vector<2x96xf32> to vector<2x32xf32>
    %351 = vector.extract_strided_slice %347 {offsets = [0, 64], sizes = [2, 32], strides = [1, 1]} : vector<2x96xf32> to vector<2x32xf32>
    %352 = arith.mulf %350, %350 : vector<2x32xf32>
    %cst_175 = arith.constant dense<0.000000e+00> : vector<2x32xf32>
    %353 = tpu.matmul %352, %14, %cst_175 {dimension_numbers = #tpu.dot_dimension_numbers<[1], [0], [0], [1], [0, 0, 1, 1], [], []>} : vector<2x32xf32>, vector<32x32xf32>, vector<2x32xf32> -> vector<2x32xf32>
    %354 = arith.mulf %349, %349 : vector<2x32xf32>
    %cst_176 = arith.constant dense<0.000000e+00> : vector<2x32xf32>
    %355 = tpu.matmul %354, %14, %cst_176 {dimension_numbers = #tpu.dot_dimension_numbers<[1], [0], [0], [1], [0, 0, 1, 1], [], []>} : vector<2x32xf32>, vector<32x32xf32>, vector<2x32xf32> -> vector<2x32xf32>
    %356 = math.rsqrt %353 : vector<2x32xf32>
    %357 = arith.mulf %350, %356 : vector<2x32xf32>
    %cst_177 = arith.constant 0.000000e+00 : f32
    %358 = vector.broadcast %cst_177 : f32 to vector<2x32xf32>
    %359 = arith.cmpf ogt, %357, %358 : vector<2x32xf32>
    %360 = math.exp %357 : vector<2x32xf32>
    %cst_178 = arith.constant 1.000000e+00 : f32
    %361 = vector.broadcast %cst_178 : f32 to vector<2x32xf32>
    %362 = arith.subf %360, %361 : vector<2x32xf32>
    %363 = arith.select %359, %357, %362 : vector<2x32xi1>, vector<2x32xf32>
    %364 = math.rsqrt %355 : vector<2x32xf32>
    %365 = arith.mulf %349, %364 : vector<2x32xf32>
    %c0_179 = arith.constant 0 : index
    %c0_180 = arith.constant 0 : index
    %c0_181 = arith.constant 0 : index
    %366 = vector.load %arg20[%c0_179, %c0_180, %c0_181] : memref<2x32x32xf32, #tpu.memory_space<vmem>>, vector<2x32x32xf32>
    %367 = vector.shape_cast %351 : vector<2x32xf32> to vector<2x32x1xf32>
    %368 = vector.shape_cast %363 : vector<2x32xf32> to vector<2x1x32xf32>
    %369 = vector.broadcast %367 : vector<2x32x1xf32> to vector<2x32x32xf32>
    %370 = vector.broadcast %368 : vector<2x1x32xf32> to vector<2x32x32xf32>
    %371 = arith.mulf %369, %370 : vector<2x32x32xf32>
    %372 = vector.shape_cast %14 : vector<32x32xf32> to vector<1x32x32xf32>
    %373 = vector.broadcast %372 : vector<1x32x32xf32> to vector<2x32x32xf32>
    %374 = arith.mulf %371, %373 : vector<2x32x32xf32>
    %375 = arith.addf %366, %374 : vector<2x32x32xf32>
    %c0_182 = arith.constant 0 : index
    %c0_183 = arith.constant 0 : index
    %c0_184 = arith.constant 0 : index
    %376 = vector.load %arg20[%c0_182, %c0_183, %c0_184] : memref<2x32x32xf32, #tpu.memory_space<vmem>>, vector<2x32x32xf32>
    tpu.vector_store %arg20[%c0_182, %c0_183, %c0_184], %375 {strides = array<i32>} : memref<2x32x32xf32, #tpu.memory_space<vmem>>, vector<2x32x32xf32>,
    %c0_185 = arith.constant 0 : index
    %c0_186 = arith.constant 0 : index
    %c0_187 = arith.constant 0 : index
    %377 = vector.load %arg20[%c0_185, %c0_186, %c0_187] : memref<2x32x32xf32, #tpu.memory_space<vmem>>, vector<2x32x32xf32>
    %378 = vector.shape_cast %365 : vector<2x32xf32> to vector<2x1x32xf32>
    %379 = vector.broadcast %378 : vector<2x1x32xf32> to vector<2x32x32xf32>
    %380 = arith.mulf %377, %379 : vector<2x32x32xf32>
    %cst_188 = arith.constant dense<0.000000e+00> : vector<2x32xf32>
    %381 = vector.multi_reduction <add>, %380, %cst_188 [2] : vector<2x32x32xf32> to vector<2x32xf32>
    %c0_189 = arith.constant 0 : index
    %c0_190 = arith.constant 0 : index
    %382 = vector.load %arg21[%c0_189, %c0_190] : memref<2x32xf32, #tpu.memory_space<vmem>>, vector<2x32xf32>
    tpu.vector_store %arg21[%c0_189, %c0_190], %381 {strides = array<i32>} : memref<2x32xf32, #tpu.memory_space<vmem>>, vector<2x32xf32>,
    %c0_191 = arith.constant 0 : index
    %c0_192 = arith.constant 0 : index
    %383 = vector.load %arg12[%c0_191, %c0_192] : memref<2x32xf32, #tpu.memory_space<vmem>>, vector<2x32xf32>
    tpu.vector_store %arg12[%c0_191, %c0_192], %363 {strides = array<i32>} : memref<2x32xf32, #tpu.memory_space<vmem>>, vector<2x32xf32>,
    %c0_193 = arith.constant 0 : index
    %c0_194 = arith.constant 0 : index
    %384 = vector.load %arg13[%c0_193, %c0_194] : memref<2x32xf32, #tpu.memory_space<vmem>>, vector<2x32xf32>
    tpu.vector_store %arg13[%c0_193, %c0_194], %365 {strides = array<i32>} : memref<2x32xf32, #tpu.memory_space<vmem>>, vector<2x32xf32>,
    %c5_i32 = arith.constant 5 : i32
    %c0_195 = arith.constant 0 : index
    %c0_196 = arith.constant 0 : index
    %385 = vector.load %arg21[%c0_195, %c0_196] : memref<2x32xf32, #tpu.memory_space<vmem>>, vector<2x32xf32>
    %c0_197 = arith.constant 0 : index
    %c0_198 = arith.constant 0 : index
    %386 = vector.load %arg19[%c0_197, %c0_198] : memref<2x96xf32, #tpu.memory_space<vmem>>, vector<2x96xf32>
    %c2_i32_199 = arith.constant 2 : i32
    %387 = arith.muli %c5_i32, %c2_i32_199 : i32
    %388 = arith.index_cast %387 : i32 to index
    %c0_200 = arith.constant 0 : index
    %389 = vector.load %arg18[%388, %c0_200] : memref<16x288xf32, #tpu.memory_space<vmem>>, vector<2x288xf32>
    %390 = arith.truncf %385 : vector<2x32xf32> to vector<2x32xbf16>
    %c0_201 = arith.constant 0 : index
    %c0_202 = arith.constant 0 : index
    %391 = vector.load %arg15[%c0_201, %c0_202] : memref<32x288xbf16, #tpu.memory_space<vmem>>, vector<32x288xbf16>
    %cst_203 = arith.constant dense<0.000000e+00> : vector<2x288xf32>
    %392 = tpu.matmul %390, %391, %cst_203 {dimension_numbers = #tpu.dot_dimension_numbers<[1], [0], [0], [1], [0, 0, 1, 1], [], []>} : vector<2x32xbf16>, vector<32x288xbf16>, vector<2x288xf32> -> vector<2x288xf32>
    %393 = arith.addf %389, %392 : vector<2x288xf32>
    %394 = arith.truncf %386 : vector<2x96xf32> to vector<2x96xbf16>
    %c0_204 = arith.constant 0 : index
    %c0_205 = arith.constant 0 : index
    %395 = vector.load %arg16[%c0_204, %c0_205] : memref<96x288xbf16, #tpu.memory_space<vmem>>, vector<96x288xbf16>
    %cst_206 = arith.constant dense<0.000000e+00> : vector<2x288xf32>
    %396 = tpu.matmul %394, %395, %cst_206 {dimension_numbers = #tpu.dot_dimension_numbers<[1], [0], [0], [1], [0, 0, 1, 1], [], []>} : vector<2x96xbf16>, vector<96x288xbf16>, vector<2x288xf32> -> vector<2x288xf32>
    %397 = arith.addf %396, %13 : vector<2x288xf32>
    %398 = vector.extract_strided_slice %393 {offsets = [0, 0], sizes = [2, 96], strides = [1, 1]} : vector<2x288xf32> to vector<2x96xf32>
    %399 = vector.extract_strided_slice %393 {offsets = [0, 96], sizes = [2, 96], strides = [1, 1]} : vector<2x288xf32> to vector<2x96xf32>
    %400 = vector.extract_strided_slice %393 {offsets = [0, 192], sizes = [2, 96], strides = [1, 1]} : vector<2x288xf32> to vector<2x96xf32>
    %401 = vector.extract_strided_slice %397 {offsets = [0, 0], sizes = [2, 96], strides = [1, 1]} : vector<2x288xf32> to vector<2x96xf32>
    %402 = vector.extract_strided_slice %397 {offsets = [0, 96], sizes = [2, 96], strides = [1, 1]} : vector<2x288xf32> to vector<2x96xf32>
    %403 = vector.extract_strided_slice %397 {offsets = [0, 192], sizes = [2, 96], strides = [1, 1]} : vector<2x288xf32> to vector<2x96xf32>
    %404 = arith.addf %398, %401 : vector<2x96xf32>
    %405 = arith.negf %404 : vector<2x96xf32>
    %406 = math.exp %405 : vector<2x96xf32>
    %cst_207 = arith.constant 1.000000e+00 : f32
    %407 = vector.broadcast %cst_207 : f32 to vector<2x96xf32>
    %408 = arith.addf %407, %406 : vector<2x96xf32>
    %409 = arith.divf %407, %408 : vector<2x96xf32>
    %410 = arith.addf %399, %402 : vector<2x96xf32>
    %411 = arith.negf %410 : vector<2x96xf32>
    %412 = math.exp %411 : vector<2x96xf32>
    %cst_208 = arith.constant 1.000000e+00 : f32
    %413 = vector.broadcast %cst_208 : f32 to vector<2x96xf32>
    %414 = arith.addf %413, %412 : vector<2x96xf32>
    %415 = arith.divf %413, %414 : vector<2x96xf32>
    %416 = arith.mulf %409, %403 : vector<2x96xf32>
    %417 = arith.addf %400, %416 : vector<2x96xf32>
    %418 = math.tanh %417 : vector<2x96xf32>
    %419 = arith.subf %386, %418 : vector<2x96xf32>
    %420 = arith.mulf %415, %419 : vector<2x96xf32>
    %421 = arith.addf %418, %420 : vector<2x96xf32>
    %c0_209 = arith.constant 0 : index
    %c0_210 = arith.constant 0 : index
    %422 = vector.load %arg19[%c0_209, %c0_210] : memref<2x96xf32, #tpu.memory_space<vmem>>, vector<2x96xf32>
    tpu.vector_store %arg19[%c0_209, %c0_210], %421 {strides = array<i32>} : memref<2x96xf32, #tpu.memory_space<vmem>>, vector<2x96xf32>,
    %423 = vector.extract_strided_slice %421 {offsets = [0, 0], sizes = [2, 32], strides = [1, 1]} : vector<2x96xf32> to vector<2x32xf32>
    %424 = vector.extract_strided_slice %421 {offsets = [0, 32], sizes = [2, 32], strides = [1, 1]} : vector<2x96xf32> to vector<2x32xf32>
    %425 = vector.extract_strided_slice %421 {offsets = [0, 64], sizes = [2, 32], strides = [1, 1]} : vector<2x96xf32> to vector<2x32xf32>
    %426 = arith.mulf %424, %424 : vector<2x32xf32>
    %cst_211 = arith.constant dense<0.000000e+00> : vector<2x32xf32>
    %427 = tpu.matmul %426, %14, %cst_211 {dimension_numbers = #tpu.dot_dimension_numbers<[1], [0], [0], [1], [0, 0, 1, 1], [], []>} : vector<2x32xf32>, vector<32x32xf32>, vector<2x32xf32> -> vector<2x32xf32>
    %428 = arith.mulf %423, %423 : vector<2x32xf32>
    %cst_212 = arith.constant dense<0.000000e+00> : vector<2x32xf32>
    %429 = tpu.matmul %428, %14, %cst_212 {dimension_numbers = #tpu.dot_dimension_numbers<[1], [0], [0], [1], [0, 0, 1, 1], [], []>} : vector<2x32xf32>, vector<32x32xf32>, vector<2x32xf32> -> vector<2x32xf32>
    %430 = math.rsqrt %427 : vector<2x32xf32>
    %431 = arith.mulf %424, %430 : vector<2x32xf32>
    %cst_213 = arith.constant 0.000000e+00 : f32
    %432 = vector.broadcast %cst_213 : f32 to vector<2x32xf32>
    %433 = arith.cmpf ogt, %431, %432 : vector<2x32xf32>
    %434 = math.exp %431 : vector<2x32xf32>
    %cst_214 = arith.constant 1.000000e+00 : f32
    %435 = vector.broadcast %cst_214 : f32 to vector<2x32xf32>
    %436 = arith.subf %434, %435 : vector<2x32xf32>
    %437 = arith.select %433, %431, %436 : vector<2x32xi1>, vector<2x32xf32>
    %438 = math.rsqrt %429 : vector<2x32xf32>
    %439 = arith.mulf %423, %438 : vector<2x32xf32>
    %c0_215 = arith.constant 0 : index
    %c0_216 = arith.constant 0 : index
    %c0_217 = arith.constant 0 : index
    %440 = vector.load %arg20[%c0_215, %c0_216, %c0_217] : memref<2x32x32xf32, #tpu.memory_space<vmem>>, vector<2x32x32xf32>
    %441 = vector.shape_cast %425 : vector<2x32xf32> to vector<2x32x1xf32>
    %442 = vector.shape_cast %437 : vector<2x32xf32> to vector<2x1x32xf32>
    %443 = vector.broadcast %441 : vector<2x32x1xf32> to vector<2x32x32xf32>
    %444 = vector.broadcast %442 : vector<2x1x32xf32> to vector<2x32x32xf32>
    %445 = arith.mulf %443, %444 : vector<2x32x32xf32>
    %446 = vector.shape_cast %14 : vector<32x32xf32> to vector<1x32x32xf32>
    %447 = vector.broadcast %446 : vector<1x32x32xf32> to vector<2x32x32xf32>
    %448 = arith.mulf %445, %447 : vector<2x32x32xf32>
    %449 = arith.addf %440, %448 : vector<2x32x32xf32>
    %c0_218 = arith.constant 0 : index
    %c0_219 = arith.constant 0 : index
    %c0_220 = arith.constant 0 : index
    %450 = vector.load %arg20[%c0_218, %c0_219, %c0_220] : memref<2x32x32xf32, #tpu.memory_space<vmem>>, vector<2x32x32xf32>
    tpu.vector_store %arg20[%c0_218, %c0_219, %c0_220], %449 {strides = array<i32>} : memref<2x32x32xf32, #tpu.memory_space<vmem>>, vector<2x32x32xf32>,
    %c0_221 = arith.constant 0 : index
    %c0_222 = arith.constant 0 : index
    %c0_223 = arith.constant 0 : index
    %451 = vector.load %arg20[%c0_221, %c0_222, %c0_223] : memref<2x32x32xf32, #tpu.memory_space<vmem>>, vector<2x32x32xf32>
    %452 = vector.shape_cast %439 : vector<2x32xf32> to vector<2x1x32xf32>
    %453 = vector.broadcast %452 : vector<2x1x32xf32> to vector<2x32x32xf32>
    %454 = arith.mulf %451, %453 : vector<2x32x32xf32>
    %cst_224 = arith.constant dense<0.000000e+00> : vector<2x32xf32>
    %455 = vector.multi_reduction <add>, %454, %cst_224 [2] : vector<2x32x32xf32> to vector<2x32xf32>
    %c0_225 = arith.constant 0 : index
    %c0_226 = arith.constant 0 : index
    %456 = vector.load %arg21[%c0_225, %c0_226] : memref<2x32xf32, #tpu.memory_space<vmem>>, vector<2x32xf32>
    tpu.vector_store %arg21[%c0_225, %c0_226], %455 {strides = array<i32>} : memref<2x32xf32, #tpu.memory_space<vmem>>, vector<2x32xf32>,
    %c0_227 = arith.constant 0 : index
    %c0_228 = arith.constant 0 : index
    %457 = vector.load %arg12[%c0_227, %c0_228] : memref<2x32xf32, #tpu.memory_space<vmem>>, vector<2x32xf32>
    tpu.vector_store %arg12[%c0_227, %c0_228], %437 {strides = array<i32>} : memref<2x32xf32, #tpu.memory_space<vmem>>, vector<2x32xf32>,
    %c0_229 = arith.constant 0 : index
    %c0_230 = arith.constant 0 : index
    %458 = vector.load %arg13[%c0_229, %c0_230] : memref<2x32xf32, #tpu.memory_space<vmem>>, vector<2x32xf32>
    tpu.vector_store %arg13[%c0_229, %c0_230], %439 {strides = array<i32>} : memref<2x32xf32, #tpu.memory_space<vmem>>, vector<2x32xf32>,
    %c6_i32 = arith.constant 6 : i32
    %c0_231 = arith.constant 0 : index
    %c0_232 = arith.constant 0 : index
    %459 = vector.load %arg21[%c0_231, %c0_232] : memref<2x32xf32, #tpu.memory_space<vmem>>, vector<2x32xf32>
    %c0_233 = arith.constant 0 : index
    %c0_234 = arith.constant 0 : index
    %460 = vector.load %arg19[%c0_233, %c0_234] : memref<2x96xf32, #tpu.memory_space<vmem>>, vector<2x96xf32>
    %c2_i32_235 = arith.constant 2 : i32
    %461 = arith.muli %c6_i32, %c2_i32_235 : i32
    %462 = arith.index_cast %461 : i32 to index
    %c0_236 = arith.constant 0 : index
    %463 = vector.load %arg18[%462, %c0_236] : memref<16x288xf32, #tpu.memory_space<vmem>>, vector<2x288xf32>
    %464 = arith.truncf %459 : vector<2x32xf32> to vector<2x32xbf16>
    %c0_237 = arith.constant 0 : index
    %c0_238 = arith.constant 0 : index
    %465 = vector.load %arg15[%c0_237, %c0_238] : memref<32x288xbf16, #tpu.memory_space<vmem>>, vector<32x288xbf16>
    %cst_239 = arith.constant dense<0.000000e+00> : vector<2x288xf32>
    %466 = tpu.matmul %464, %465, %cst_239 {dimension_numbers = #tpu.dot_dimension_numbers<[1], [0], [0], [1], [0, 0, 1, 1], [], []>} : vector<2x32xbf16>, vector<32x288xbf16>, vector<2x288xf32> -> vector<2x288xf32>
    %467 = arith.addf %463, %466 : vector<2x288xf32>
    %468 = arith.truncf %460 : vector<2x96xf32> to vector<2x96xbf16>
    %c0_240 = arith.constant 0 : index
    %c0_241 = arith.constant 0 : index
    %469 = vector.load %arg16[%c0_240, %c0_241] : memref<96x288xbf16, #tpu.memory_space<vmem>>, vector<96x288xbf16>
    %cst_242 = arith.constant dense<0.000000e+00> : vector<2x288xf32>
    %470 = tpu.matmul %468, %469, %cst_242 {dimension_numbers = #tpu.dot_dimension_numbers<[1], [0], [0], [1], [0, 0, 1, 1], [], []>} : vector<2x96xbf16>, vector<96x288xbf16>, vector<2x288xf32> -> vector<2x288xf32>
    %471 = arith.addf %470, %13 : vector<2x288xf32>
    %472 = vector.extract_strided_slice %467 {offsets = [0, 0], sizes = [2, 96], strides = [1, 1]} : vector<2x288xf32> to vector<2x96xf32>
    %473 = vector.extract_strided_slice %467 {offsets = [0, 96], sizes = [2, 96], strides = [1, 1]} : vector<2x288xf32> to vector<2x96xf32>
    %474 = vector.extract_strided_slice %467 {offsets = [0, 192], sizes = [2, 96], strides = [1, 1]} : vector<2x288xf32> to vector<2x96xf32>
    %475 = vector.extract_strided_slice %471 {offsets = [0, 0], sizes = [2, 96], strides = [1, 1]} : vector<2x288xf32> to vector<2x96xf32>
    %476 = vector.extract_strided_slice %471 {offsets = [0, 96], sizes = [2, 96], strides = [1, 1]} : vector<2x288xf32> to vector<2x96xf32>
    %477 = vector.extract_strided_slice %471 {offsets = [0, 192], sizes = [2, 96], strides = [1, 1]} : vector<2x288xf32> to vector<2x96xf32>
    %478 = arith.addf %472, %475 : vector<2x96xf32>
    %479 = arith.negf %478 : vector<2x96xf32>
    %480 = math.exp %479 : vector<2x96xf32>
    %cst_243 = arith.constant 1.000000e+00 : f32
    %481 = vector.broadcast %cst_243 : f32 to vector<2x96xf32>
    %482 = arith.addf %481, %480 : vector<2x96xf32>
    %483 = arith.divf %481, %482 : vector<2x96xf32>
    %484 = arith.addf %473, %476 : vector<2x96xf32>
    %485 = arith.negf %484 : vector<2x96xf32>
    %486 = math.exp %485 : vector<2x96xf32>
    %cst_244 = arith.constant 1.000000e+00 : f32
    %487 = vector.broadcast %cst_244 : f32 to vector<2x96xf32>
    %488 = arith.addf %487, %486 : vector<2x96xf32>
    %489 = arith.divf %487, %488 : vector<2x96xf32>
    %490 = arith.mulf %483, %477 : vector<2x96xf32>
    %491 = arith.addf %474, %490 : vector<2x96xf32>
    %492 = math.tanh %491 : vector<2x96xf32>
    %493 = arith.subf %460, %492 : vector<2x96xf32>
    %494 = arith.mulf %489, %493 : vector<2x96xf32>
    %495 = arith.addf %492, %494 : vector<2x96xf32>
    %c0_245 = arith.constant 0 : index
    %c0_246 = arith.constant 0 : index
    %496 = vector.load %arg19[%c0_245, %c0_246] : memref<2x96xf32, #tpu.memory_space<vmem>>, vector<2x96xf32>
    tpu.vector_store %arg19[%c0_245, %c0_246], %495 {strides = array<i32>} : memref<2x96xf32, #tpu.memory_space<vmem>>, vector<2x96xf32>,
    %497 = vector.extract_strided_slice %495 {offsets = [0, 0], sizes = [2, 32], strides = [1, 1]} : vector<2x96xf32> to vector<2x32xf32>
    %498 = vector.extract_strided_slice %495 {offsets = [0, 32], sizes = [2, 32], strides = [1, 1]} : vector<2x96xf32> to vector<2x32xf32>
    %499 = vector.extract_strided_slice %495 {offsets = [0, 64], sizes = [2, 32], strides = [1, 1]} : vector<2x96xf32> to vector<2x32xf32>
    %500 = arith.mulf %498, %498 : vector<2x32xf32>
    %cst_247 = arith.constant dense<0.000000e+00> : vector<2x32xf32>
    %501 = tpu.matmul %500, %14, %cst_247 {dimension_numbers = #tpu.dot_dimension_numbers<[1], [0], [0], [1], [0, 0, 1, 1], [], []>} : vector<2x32xf32>, vector<32x32xf32>, vector<2x32xf32> -> vector<2x32xf32>
    %502 = arith.mulf %497, %497 : vector<2x32xf32>
    %cst_248 = arith.constant dense<0.000000e+00> : vector<2x32xf32>
    %503 = tpu.matmul %502, %14, %cst_248 {dimension_numbers = #tpu.dot_dimension_numbers<[1], [0], [0], [1], [0, 0, 1, 1], [], []>} : vector<2x32xf32>, vector<32x32xf32>, vector<2x32xf32> -> vector<2x32xf32>
    %504 = math.rsqrt %501 : vector<2x32xf32>
    %505 = arith.mulf %498, %504 : vector<2x32xf32>
    %cst_249 = arith.constant 0.000000e+00 : f32
    %506 = vector.broadcast %cst_249 : f32 to vector<2x32xf32>
    %507 = arith.cmpf ogt, %505, %506 : vector<2x32xf32>
    %508 = math.exp %505 : vector<2x32xf32>
    %cst_250 = arith.constant 1.000000e+00 : f32
    %509 = vector.broadcast %cst_250 : f32 to vector<2x32xf32>
    %510 = arith.subf %508, %509 : vector<2x32xf32>
    %511 = arith.select %507, %505, %510 : vector<2x32xi1>, vector<2x32xf32>
    %512 = math.rsqrt %503 : vector<2x32xf32>
    %513 = arith.mulf %497, %512 : vector<2x32xf32>
    %c0_251 = arith.constant 0 : index
    %c0_252 = arith.constant 0 : index
    %c0_253 = arith.constant 0 : index
    %514 = vector.load %arg20[%c0_251, %c0_252, %c0_253] : memref<2x32x32xf32, #tpu.memory_space<vmem>>, vector<2x32x32xf32>
    %515 = vector.shape_cast %499 : vector<2x32xf32> to vector<2x32x1xf32>
    %516 = vector.shape_cast %511 : vector<2x32xf32> to vector<2x1x32xf32>
    %517 = vector.broadcast %515 : vector<2x32x1xf32> to vector<2x32x32xf32>
    %518 = vector.broadcast %516 : vector<2x1x32xf32> to vector<2x32x32xf32>
    %519 = arith.mulf %517, %518 : vector<2x32x32xf32>
    %520 = vector.shape_cast %14 : vector<32x32xf32> to vector<1x32x32xf32>
    %521 = vector.broadcast %520 : vector<1x32x32xf32> to vector<2x32x32xf32>
    %522 = arith.mulf %519, %521 : vector<2x32x32xf32>
    %523 = arith.addf %514, %522 : vector<2x32x32xf32>
    %c0_254 = arith.constant 0 : index
    %c0_255 = arith.constant 0 : index
    %c0_256 = arith.constant 0 : index
    %524 = vector.load %arg20[%c0_254, %c0_255, %c0_256] : memref<2x32x32xf32, #tpu.memory_space<vmem>>, vector<2x32x32xf32>
    tpu.vector_store %arg20[%c0_254, %c0_255, %c0_256], %523 {strides = array<i32>} : memref<2x32x32xf32, #tpu.memory_space<vmem>>, vector<2x32x32xf32>,
    %c0_257 = arith.constant 0 : index
    %c0_258 = arith.constant 0 : index
    %c0_259 = arith.constant 0 : index
    %525 = vector.load %arg20[%c0_257, %c0_258, %c0_259] : memref<2x32x32xf32, #tpu.memory_space<vmem>>, vector<2x32x32xf32>
    %526 = vector.shape_cast %513 : vector<2x32xf32> to vector<2x1x32xf32>
    %527 = vector.broadcast %526 : vector<2x1x32xf32> to vector<2x32x32xf32>
    %528 = arith.mulf %525, %527 : vector<2x32x32xf32>
    %cst_260 = arith.constant dense<0.000000e+00> : vector<2x32xf32>
    %529 = vector.multi_reduction <add>, %528, %cst_260 [2] : vector<2x32x32xf32> to vector<2x32xf32>
    %c0_261 = arith.constant 0 : index
    %c0_262 = arith.constant 0 : index
    %530 = vector.load %arg21[%c0_261, %c0_262] : memref<2x32xf32, #tpu.memory_space<vmem>>, vector<2x32xf32>
    tpu.vector_store %arg21[%c0_261, %c0_262], %529 {strides = array<i32>} : memref<2x32xf32, #tpu.memory_space<vmem>>, vector<2x32xf32>,
    %c0_263 = arith.constant 0 : index
    %c0_264 = arith.constant 0 : index
    %531 = vector.load %arg12[%c0_263, %c0_264] : memref<2x32xf32, #tpu.memory_space<vmem>>, vector<2x32xf32>
    tpu.vector_store %arg12[%c0_263, %c0_264], %511 {strides = array<i32>} : memref<2x32xf32, #tpu.memory_space<vmem>>, vector<2x32xf32>,
    %c0_265 = arith.constant 0 : index
    %c0_266 = arith.constant 0 : index
    %532 = vector.load %arg13[%c0_265, %c0_266] : memref<2x32xf32, #tpu.memory_space<vmem>>, vector<2x32xf32>
    tpu.vector_store %arg13[%c0_265, %c0_266], %513 {strides = array<i32>} : memref<2x32xf32, #tpu.memory_space<vmem>>, vector<2x32xf32>,
    %c7_i32 = arith.constant 7 : i32
    %c0_267 = arith.constant 0 : index
    %c0_268 = arith.constant 0 : index
    %533 = vector.load %arg21[%c0_267, %c0_268] : memref<2x32xf32, #tpu.memory_space<vmem>>, vector<2x32xf32>
    %c0_269 = arith.constant 0 : index
    %c0_270 = arith.constant 0 : index
    %534 = vector.load %arg19[%c0_269, %c0_270] : memref<2x96xf32, #tpu.memory_space<vmem>>, vector<2x96xf32>
    %c2_i32_271 = arith.constant 2 : i32
    %535 = arith.muli %c7_i32, %c2_i32_271 : i32
    %536 = arith.index_cast %535 : i32 to index
    %c0_272 = arith.constant 0 : index
    %537 = vector.load %arg18[%536, %c0_272] : memref<16x288xf32, #tpu.memory_space<vmem>>, vector<2x288xf32>
    %538 = arith.truncf %533 : vector<2x32xf32> to vector<2x32xbf16>
    %c0_273 = arith.constant 0 : index
    %c0_274 = arith.constant 0 : index
    %539 = vector.load %arg15[%c0_273, %c0_274] : memref<32x288xbf16, #tpu.memory_space<vmem>>, vector<32x288xbf16>
    %cst_275 = arith.constant dense<0.000000e+00> : vector<2x288xf32>
    %540 = tpu.matmul %538, %539, %cst_275 {dimension_numbers = #tpu.dot_dimension_numbers<[1], [0], [0], [1], [0, 0, 1, 1], [], []>} : vector<2x32xbf16>, vector<32x288xbf16>, vector<2x288xf32> -> vector<2x288xf32>
    %541 = arith.addf %537, %540 : vector<2x288xf32>
    %542 = arith.truncf %534 : vector<2x96xf32> to vector<2x96xbf16>
    %c0_276 = arith.constant 0 : index
    %c0_277 = arith.constant 0 : index
    %543 = vector.load %arg16[%c0_276, %c0_277] : memref<96x288xbf16, #tpu.memory_space<vmem>>, vector<96x288xbf16>
    %cst_278 = arith.constant dense<0.000000e+00> : vector<2x288xf32>
    %544 = tpu.matmul %542, %543, %cst_278 {dimension_numbers = #tpu.dot_dimension_numbers<[1], [0], [0], [1], [0, 0, 1, 1], [], []>} : vector<2x96xbf16>, vector<96x288xbf16>, vector<2x288xf32> -> vector<2x288xf32>
    %545 = arith.addf %544, %13 : vector<2x288xf32>
    %546 = vector.extract_strided_slice %541 {offsets = [0, 0], sizes = [2, 96], strides = [1, 1]} : vector<2x288xf32> to vector<2x96xf32>
    %547 = vector.extract_strided_slice %541 {offsets = [0, 96], sizes = [2, 96], strides = [1, 1]} : vector<2x288xf32> to vector<2x96xf32>
    %548 = vector.extract_strided_slice %541 {offsets = [0, 192], sizes = [2, 96], strides = [1, 1]} : vector<2x288xf32> to vector<2x96xf32>
    %549 = vector.extract_strided_slice %545 {offsets = [0, 0], sizes = [2, 96], strides = [1, 1]} : vector<2x288xf32> to vector<2x96xf32>
    %550 = vector.extract_strided_slice %545 {offsets = [0, 96], sizes = [2, 96], strides = [1, 1]} : vector<2x288xf32> to vector<2x96xf32>
    %551 = vector.extract_strided_slice %545 {offsets = [0, 192], sizes = [2, 96], strides = [1, 1]} : vector<2x288xf32> to vector<2x96xf32>
    %552 = arith.addf %546, %549 : vector<2x96xf32>
    %553 = arith.negf %552 : vector<2x96xf32>
    %554 = math.exp %553 : vector<2x96xf32>
    %cst_279 = arith.constant 1.000000e+00 : f32
    %555 = vector.broadcast %cst_279 : f32 to vector<2x96xf32>
    %556 = arith.addf %555, %554 : vector<2x96xf32>
    %557 = arith.divf %555, %556 : vector<2x96xf32>
    %558 = arith.addf %547, %550 : vector<2x96xf32>
    %559 = arith.negf %558 : vector<2x96xf32>
    %560 = math.exp %559 : vector<2x96xf32>
    %cst_280 = arith.constant 1.000000e+00 : f32
    %561 = vector.broadcast %cst_280 : f32 to vector<2x96xf32>
    %562 = arith.addf %561, %560 : vector<2x96xf32>
    %563 = arith.divf %561, %562 : vector<2x96xf32>
    %564 = arith.mulf %557, %551 : vector<2x96xf32>
    %565 = arith.addf %548, %564 : vector<2x96xf32>
    %566 = math.tanh %565 : vector<2x96xf32>
    %567 = arith.subf %534, %566 : vector<2x96xf32>
    %568 = arith.mulf %563, %567 : vector<2x96xf32>
    %569 = arith.addf %566, %568 : vector<2x96xf32>
    %c0_281 = arith.constant 0 : index
    %c0_282 = arith.constant 0 : index
    %570 = vector.load %arg19[%c0_281, %c0_282] : memref<2x96xf32, #tpu.memory_space<vmem>>, vector<2x96xf32>
    tpu.vector_store %arg19[%c0_281, %c0_282], %569 {strides = array<i32>} : memref<2x96xf32, #tpu.memory_space<vmem>>, vector<2x96xf32>,
    %571 = vector.extract_strided_slice %569 {offsets = [0, 0], sizes = [2, 32], strides = [1, 1]} : vector<2x96xf32> to vector<2x32xf32>
    %572 = vector.extract_strided_slice %569 {offsets = [0, 32], sizes = [2, 32], strides = [1, 1]} : vector<2x96xf32> to vector<2x32xf32>
    %573 = vector.extract_strided_slice %569 {offsets = [0, 64], sizes = [2, 32], strides = [1, 1]} : vector<2x96xf32> to vector<2x32xf32>
    %574 = arith.mulf %572, %572 : vector<2x32xf32>
    %cst_283 = arith.constant dense<0.000000e+00> : vector<2x32xf32>
    %575 = tpu.matmul %574, %14, %cst_283 {dimension_numbers = #tpu.dot_dimension_numbers<[1], [0], [0], [1], [0, 0, 1, 1], [], []>} : vector<2x32xf32>, vector<32x32xf32>, vector<2x32xf32> -> vector<2x32xf32>
    %576 = arith.mulf %571, %571 : vector<2x32xf32>
    %cst_284 = arith.constant dense<0.000000e+00> : vector<2x32xf32>
    %577 = tpu.matmul %576, %14, %cst_284 {dimension_numbers = #tpu.dot_dimension_numbers<[1], [0], [0], [1], [0, 0, 1, 1], [], []>} : vector<2x32xf32>, vector<32x32xf32>, vector<2x32xf32> -> vector<2x32xf32>
    %578 = math.rsqrt %575 : vector<2x32xf32>
    %579 = arith.mulf %572, %578 : vector<2x32xf32>
    %cst_285 = arith.constant 0.000000e+00 : f32
    %580 = vector.broadcast %cst_285 : f32 to vector<2x32xf32>
    %581 = arith.cmpf ogt, %579, %580 : vector<2x32xf32>
    %582 = math.exp %579 : vector<2x32xf32>
    %cst_286 = arith.constant 1.000000e+00 : f32
    %583 = vector.broadcast %cst_286 : f32 to vector<2x32xf32>
    %584 = arith.subf %582, %583 : vector<2x32xf32>
    %585 = arith.select %581, %579, %584 : vector<2x32xi1>, vector<2x32xf32>
    %586 = math.rsqrt %577 : vector<2x32xf32>
    %587 = arith.mulf %571, %586 : vector<2x32xf32>
    %c0_287 = arith.constant 0 : index
    %c0_288 = arith.constant 0 : index
    %c0_289 = arith.constant 0 : index
    %588 = vector.load %arg20[%c0_287, %c0_288, %c0_289] : memref<2x32x32xf32, #tpu.memory_space<vmem>>, vector<2x32x32xf32>
    %589 = vector.shape_cast %573 : vector<2x32xf32> to vector<2x32x1xf32>
    %590 = vector.shape_cast %585 : vector<2x32xf32> to vector<2x1x32xf32>
    %591 = vector.broadcast %589 : vector<2x32x1xf32> to vector<2x32x32xf32>
    %592 = vector.broadcast %590 : vector<2x1x32xf32> to vector<2x32x32xf32>
    %593 = arith.mulf %591, %592 : vector<2x32x32xf32>
    %594 = vector.shape_cast %14 : vector<32x32xf32> to vector<1x32x32xf32>
    %595 = vector.broadcast %594 : vector<1x32x32xf32> to vector<2x32x32xf32>
    %596 = arith.mulf %593, %595 : vector<2x32x32xf32>
    %597 = arith.addf %588, %596 : vector<2x32x32xf32>
    %c0_290 = arith.constant 0 : index
    %c0_291 = arith.constant 0 : index
    %c0_292 = arith.constant 0 : index
    %598 = vector.load %arg20[%c0_290, %c0_291, %c0_292] : memref<2x32x32xf32, #tpu.memory_space<vmem>>, vector<2x32x32xf32>
    tpu.vector_store %arg20[%c0_290, %c0_291, %c0_292], %597 {strides = array<i32>} : memref<2x32x32xf32, #tpu.memory_space<vmem>>, vector<2x32x32xf32>,
    %c0_293 = arith.constant 0 : index
    %c0_294 = arith.constant 0 : index
    %c0_295 = arith.constant 0 : index
    %599 = vector.load %arg20[%c0_293, %c0_294, %c0_295] : memref<2x32x32xf32, #tpu.memory_space<vmem>>, vector<2x32x32xf32>
    %600 = vector.shape_cast %587 : vector<2x32xf32> to vector<2x1x32xf32>
    %601 = vector.broadcast %600 : vector<2x1x32xf32> to vector<2x32x32xf32>
    %602 = arith.mulf %599, %601 : vector<2x32x32xf32>
    %cst_296 = arith.constant dense<0.000000e+00> : vector<2x32xf32>
    %603 = vector.multi_reduction <add>, %602, %cst_296 [2] : vector<2x32x32xf32> to vector<2x32xf32>
    %c0_297 = arith.constant 0 : index
    %c0_298 = arith.constant 0 : index
    %604 = vector.load %arg21[%c0_297, %c0_298] : memref<2x32xf32, #tpu.memory_space<vmem>>, vector<2x32xf32>
    tpu.vector_store %arg21[%c0_297, %c0_298], %603 {strides = array<i32>} : memref<2x32xf32, #tpu.memory_space<vmem>>, vector<2x32xf32>,
    %c0_299 = arith.constant 0 : index
    %c0_300 = arith.constant 0 : index
    %605 = vector.load %arg12[%c0_299, %c0_300] : memref<2x32xf32, #tpu.memory_space<vmem>>, vector<2x32xf32>
    tpu.vector_store %arg12[%c0_299, %c0_300], %585 {strides = array<i32>} : memref<2x32xf32, #tpu.memory_space<vmem>>, vector<2x32xf32>,
    %c0_301 = arith.constant 0 : index
    %c0_302 = arith.constant 0 : index
    %606 = vector.load %arg13[%c0_301, %c0_302] : memref<2x32xf32, #tpu.memory_space<vmem>>, vector<2x32xf32>
    tpu.vector_store %arg13[%c0_301, %c0_302], %587 {strides = array<i32>} : memref<2x32xf32, #tpu.memory_space<vmem>>, vector<2x32xf32>,
    %c8_i32 = arith.constant 8 : i32
    %c0_i32_303 = arith.constant 0 : i32
    %607 = arith.cmpi eq, %arg1, %c0_i32_303 : i32
    %608 = arith.extui %607 : i1 to i32
    %c0_i32_304 = arith.constant 0 : i32
    %609 = arith.cmpi ne, %608, %c0_i32_304 : i32
    scf.if %609 {
      %c0_305 = arith.constant 0 : index
      %c0_306 = arith.constant 0 : index
      %610 = vector.load %arg21[%c0_305, %c0_306] : memref<2x32xf32, #tpu.memory_space<vmem>>, vector<2x32xf32>
      %611 = arith.truncf %610 : vector<2x32xf32> to vector<2x32xbf16>
      %c0_307 = arith.constant 0 : index
      %c0_308 = arith.constant 0 : index
      %612 = vector.load %arg17[%c0_307, %c0_308] : memref<32x32xbf16, #tpu.memory_space<vmem>>, vector<32x32xbf16>
      %cst_309 = arith.constant dense<0.000000e+00> : vector<2x32xf32>
      %613 = tpu.matmul %611, %612, %cst_309 {dimension_numbers = #tpu.dot_dimension_numbers<[1], [0], [0], [1], [0, 0, 1, 1], [], []>} : vector<2x32xbf16>, vector<32x32xbf16>, vector<2x32xf32> -> vector<2x32xf32>
      %c0_310 = arith.constant 0 : index
      %c0_311 = arith.constant 0 : index
      %614 = vector.load %arg9[%c0_310, %c0_311] : memref<1x32xf32, #tpu.memory_space<vmem>>, vector<1x32xf32>
      %615 = vector.broadcast %614 : vector<1x32xf32> to vector<2x32xf32>
      %616 = arith.addf %613, %615 : vector<2x32xf32>
      %c0_312 = arith.constant 0 : index
      %c0_313 = arith.constant 0 : index
      %617 = vector.load %arg11[%c0_312, %c0_313] : memref<2x32xf32, #tpu.memory_space<vmem>>, vector<2x32xf32>
      tpu.vector_store %arg11[%c0_312, %c0_313], %616 {strides = array<i32>} : memref<2x32xf32, #tpu.memory_space<vmem>>, vector<2x32xf32>,
    } else {
    }
    return
  }
  func.func @transform_0(%arg0: i32, %arg1: i32) -> (i32, i32, i32, i32) {
    %c0_i32 = arith.constant 0 : i32
    %c0_i32_0 = arith.constant 0 : i32
    %c0_i32_1 = arith.constant 0 : i32
    return %arg0, %arg1, %c0_i32, %c0_i32_0 : i32, i32, i32, i32
  }
  func.func @transform_5(%arg0: i32, %arg1: i32) -> (i32, i32) {
    %c0_i32 = arith.constant 0 : i32
    %c0_i32_0 = arith.constant 0 : i32
    %c0_i32_1 = arith.constant 0 : i32
    return %c0_i32, %c0_i32_0 : i32, i32
  }
  func.func @transform_6(%arg0: i32, %arg1: i32) -> (i32, i32) {
    %c0_i32 = arith.constant 0 : i32
    %c0_i32_0 = arith.constant 0 : i32
    %c0_i32_1 = arith.constant 0 : i32
    return %c0_i32, %c0_i32_0 : i32, i32
  }
  func.func @transform_7(%arg0: i32, %arg1: i32) -> (i32, i32) {
    %c0_i32 = arith.constant 0 : i32
    %c0_i32_0 = arith.constant 0 : i32
    %c0_i32_1 = arith.constant 0 : i32
    return %c0_i32, %c0_i32_0 : i32, i32
  }
  func.func @transform_8(%arg0: i32, %arg1: i32) -> (i32, i32) {
    %c0_i32 = arith.constant 0 : i32
    %c0_i32_0 = arith.constant 0 : i32
    %c0_i32_1 = arith.constant 0 : i32
    return %c0_i32, %c0_i32_0 : i32, i32
  }
  func.func @transform_9(%arg0: i32, %arg1: i32) -> (i32, i32) {
    %c0_i32 = arith.constant 0 : i32
    %c0_i32_0 = arith.constant 0 : i32
    return %arg0, %c0_i32 : i32, i32
  }
  func.func @transform_10(%arg0: i32, %arg1: i32) -> (i32, i32) {
    %c0_i32 = arith.constant 0 : i32
    %c0_i32_0 = arith.constant 0 : i32
    return %arg0, %c0_i32 : i32, i32
  }
  func.func @transform_11(%arg0: i32, %arg1: i32) -> (i32, i32) {
    %c0_i32 = arith.constant 0 : i32
    %c0_i32_0 = arith.constant 0 : i32
    return %arg0, %c0_i32 : i32, i32
  }
}

</mosaic_0001>

<llo_original>
// kernel: tpu_custom_call.1
$region0: #{tpu_custom_call.1}
  #allocation0 [shape = 'u32[]', space=smem, size = 0x4, offset = 0x4, fixed_abs, tag = 'smem constant byte address 0x4 - core index']
  #allocation1 [shape = 'u32[72,128]{1,0:T(1,128)}', space=vmem, size = 0x9000, scoped, tag = 'internal scratch']
  #allocation2 [shape = 'bf16[32,288]{1,0:T(8,128)(2,1)}', space=vmem, size = 0x6000, scoped, tag = 'scratch operand']
  #allocation3 [shape = 'bf16[32,288]{1,0:T(8,128)(2,1)}', space=vmem, size = 0x6000, scoped, tag = 'scratch operand']
  #allocation4 [shape = 'bf16[96,288]{1,0:T(8,128)(2,1)}', space=vmem, size = 0x12000, scoped, tag = 'scratch operand']
  #allocation5 [shape = 'bf16[32,32]{1,0:T(8,128)(2,1)}', space=vmem, size = 0x2000, scoped, tag = 'scratch operand']
  #allocation6 [shape = 'f32[16,288]{1,0:T(8,128)}', space=vmem, size = 0x6000, scoped, tag = 'scratch operand']
  #allocation7 [shape = 'f32[2,96]{1,0:T(2,128)}', space=vmem, size = 0x400, scoped, tag = 'scratch operand']
  #allocation8 [shape = 'f32[2,32,32]{2,1,0:T(8,128)}', space=vmem, size = 0x8000, scoped, tag = 'scratch operand']
  #allocation9 [shape = 'f32[2,32]{1,0:T(2,128)}', space=vmem, size = 0x400, scoped, tag = 'scratch operand']
  #allocation21 [shape = 's32[]', space=sflag, size = 0x4, offset = 0, fixed_abs, tag = 'sflag constant byte address 0x0 - dummy sync flag']
  #allocation22 [shape = 's32[]', space=sflag, size = 0x4, offset = 0, fixed_abs, tag = 'sflag constant byte address 0x0 - dummy sync flag']
  #allocation23 [shape = 'u32[]', space=smem, size = 0x4, offset = 0x44, fixed_abs, tag = 'smem constant byte address 0x44 - assertion arg 0']
  #allocation24 [shape = 'u32[]', space=smem, size = 0x4, offset = 0x48, fixed_abs, tag = 'smem constant byte address 0x48 - assertion arg 1']
  #allocation26 [shape = 's32[]', space=sflag, size = 0x4, offset = 0, fixed_abs, tag = 'sflag constant byte address 0x0 - dummy sync flag']
  #allocation27 [shape = 's32[]', space=sflag, size = 0x4, offset = 0, fixed_abs, tag = 'sflag constant byte address 0x0 - dummy sync flag']
  #allocation29 [shape = 's32[]', space=sflag, size = 0x4, offset = 0, fixed_abs, tag = 'sflag constant byte address 0x0 - dummy sync flag']
  #allocation30 [shape = 's32[]', space=sflag, size = 0x4, offset = 0, fixed_abs, tag = 'sflag constant byte address 0x0 - dummy sync flag']
  #allocation32 [shape = 's32[]', space=sflag, size = 0x4, offset = 0, fixed_abs, tag = 'sflag constant byte address 0x0 - dummy sync flag']
  #allocation33 [shape = 's32[]', space=sflag, size = 0x4, offset = 0, fixed_abs, tag = 'sflag constant byte address 0x0 - dummy sync flag']
  %s0 = inlined_call_operand.hbm [shape: bf16[1,1,16,32], index: 0, kind: input, shape index: {}]
  %s1 = inlined_call_operand.hbm [shape: bf16[32,288], index: 1, kind: input, shape index: {}]
  %s2 = inlined_call_operand.hbm [shape: bf16[32,288], index: 2, kind: input, shape index: {}]
  %s3 = inlined_call_operand.hbm [shape: bf16[96,288], index: 3, kind: input, shape index: {}]
  %s4 = inlined_call_operand.hbm [shape: bf16[32,32], index: 4, kind: input, shape index: {}]
  %s5 = inlined_call_operand.vmem [shape: f32[1,288], index: 5, kind: input, shape index: {}]
  %s6 = inlined_call_operand.hbm [shape: f32[1,288], index: 6, kind: input, shape index: {}]
  %s7 = inlined_call_operand.vmem [shape: f32[1,32], index: 7, kind: input, shape index: {}]
  %s8 = inlined_call_operand.hbm [shape: f32[32,32], index: 8, kind: input, shape index: {}]
  %s9 = inlined_call_operand.hbm [shape: f32[2,32], index: 9, kind: output, shape index: {0}]
  %s10 = inlined_call_operand.hbm [shape: f32[2,32], index: 10, kind: output, shape index: {1}]
  %s11 = inlined_call_operand.hbm [shape: f32[2,32], index: 11, kind: output, shape index: {2}]
  %12 = xla_tuple %s9, %s10, %s11
  %s13 = sld [smem:[#allocation0]]
  $region86: #{tpu_custom_call.1} parent=0
    _
  %s15 = ssub.s32 1, %s13
  %s16 = scalar_select 0, %s15, %s13
  $region1: #{tpu_custom_call.1} parent=0
    #allocation10 [shape = 'u8[4096]{0}', space=vmem, size = 0x1000, scoped, tag = 'input window, operand 0, single buffered']
    #allocation11 [shape = 's32[1]{0}', space=sflag, size = 0x4, scoped, tag = 'scoped memory for tpu_custom_call.1']
    #allocation12 [shape = 's32[1]{0}', space=sflag, size = 0x4, scoped, tag = 'scoped memory for tpu_custom_call.1']
    #allocation13 [shape = 'u8[1536]{0}', space=vmem, size = 0x800, scoped, tag = 'input window, operand 6, single buffered']
    #allocation14 [shape = 's32[1]{0}', space=sflag, size = 0x4, scoped, tag = 'scoped memory for tpu_custom_call.1']
    #allocation15 [shape = 'u8[16384]{0}', space=vmem, size = 0x4000, scoped, tag = 'input window, operand 8, single buffered']
    #allocation16 [shape = 'u8[1024]{0}', space=vmem, size = 0x400, scoped, tag = 'output window, operand 0, single buffered']
    #allocation17 [shape = 'u8[1024]{0}', space=vmem, size = 0x400, scoped, tag = 'output window, operand 1, single buffered']
    #allocation18 [shape = 's32[1]{0}', space=sflag, size = 0x4, scoped, tag = 'scoped memory for tpu_custom_call.1']
    #allocation19 [shape = 'u8[1024]{0}', space=vmem, size = 0x400, scoped, tag = 'output window, operand 2, single buffered']
    %17 = vsyncpa [#allocation11], 0
    %18 = vsyncpa [#allocation14], 0
    %19 = vsyncpa [#allocation12], 0
    %20 = vsyncpa [#allocation18], 0
    // Predicated region
    $region2: #{tpu_custom_call.1} parent=1 // pred_check
      _
    $region3: #{tpu_custom_call.1} parent=1 // pred_check_branch
      %22 = sbr.rel (0) target = $region5
    $region4: #{tpu_custom_call.1} parent=1 // pred_region
      %24 = vsyncadd [#allocation11], 0
      %s25 = sshll.u32 %s0, 4
      %s26 = int_to_ptr.hbm [resolvable:$true] %s25
      %s27 = sshll.u32 [#allocation10], 4
      %s28 = int_to_ptr.vmem [resolvable:$true] %s27
      %33 = dma.hbm_to_vmem [thread:$0]  %s26, 128, %s28, [#allocation11], 64, 64, 4
    $region5: #{tpu_custom_call.1} parent=1 // pred_fallthru
      _
    // Predicated region
    $region6: #{tpu_custom_call.1} parent=1 // pred_check
      _
    $region7: #{tpu_custom_call.1} parent=1 // pred_check_branch
      %35 = sbr.rel (0) target = $region9
    $region8: #{tpu_custom_call.1} parent=1 // pred_region
      _
    $region9: #{tpu_custom_call.1} parent=1 // pred_fallthru
      _
    // Predicated region
    $region10: #{tpu_custom_call.1} parent=1 // pred_check
      _
    $region11: #{tpu_custom_call.1} parent=1 // pred_check_branch
      %37 = sbr.rel (0) target = $region13
    $region12: #{tpu_custom_call.1} parent=1 // pred_region
      %39 = vsyncadd [#allocation14], 0
      %s41 = sshll.u32 %s6, 4
      %s42 = int_to_ptr.hbm [resolvable:$true] %s41
      %s43 = sshll.u32 [#allocation13], 4
      %s44 = int_to_ptr.vmem [resolvable:$true] %s43
      %46 = dma.hbm_to_vmem [thread:$0]  %s42, 48, %s44, [#allocation14]
    $region13: #{tpu_custom_call.1} parent=1 // pred_fallthru
      _
    // Predicated region
    $region14: #{tpu_custom_call.1} parent=1 // pred_check
      _
    $region15: #{tpu_custom_call.1} parent=1 // pred_check_branch
      %48 = sbr.rel (0) target = $region17
    $region16: #{tpu_custom_call.1} parent=1 // pred_region
      _
    $region17: #{tpu_custom_call.1} parent=1 // pred_fallthru
      _
    // Predicated region
    $region18: #{tpu_custom_call.1} parent=1 // pred_check
      _
    $region19: #{tpu_custom_call.1} parent=1 // pred_check_branch
      %50 = sbr.rel (0) target = $region21
    $region20: #{tpu_custom_call.1} parent=1 // pred_region
      %52 = vsyncadd [#allocation14], 0
      %s53 = sshll.u32 %s8, 4
      %s54 = int_to_ptr.hbm [resolvable:$true] %s53
      %s55 = sshll.u32 [#allocation15], 4
      %s56 = int_to_ptr.vmem [resolvable:$true] %s55
      %61 = dma.hbm_to_vmem [thread:$0]  %s54, 512, %s56, [#allocation14], 128, 128, 8
    $region21: #{tpu_custom_call.1} parent=1 // pred_fallthru
      _
    // Predicated region
    $region22: #{tpu_custom_call.1} parent=1 // pred_check
      _
    $region23: #{tpu_custom_call.1} parent=1 // pred_check_branch
      %63 = sbr.rel (0) target = $region25
    $region24: #{tpu_custom_call.1} parent=1 // pred_region
      %65 = dma.done [#allocation11], 128
    $region25: #{tpu_custom_call.1} parent=1 // pred_fallthru
      _
    // Predicated region
    $region26: #{tpu_custom_call.1} parent=1 // pred_check
      _
    $region27: #{tpu_custom_call.1} parent=1 // pred_check_branch
      %67 = sbr.rel (0) target = $region29
    $region28: #{tpu_custom_call.1} parent=1 // pred_region
      %69 = dma.done [#allocation14], 48
    $region29: #{tpu_custom_call.1} parent=1 // pred_fallthru
      _
    // Predicated region
    $region30: #{tpu_custom_call.1} parent=1 // pred_check
      _
    $region31: #{tpu_custom_call.1} parent=1 // pred_check_branch
      %71 = sbr.rel (0) target = $region33
    $region32: #{tpu_custom_call.1} parent=1 // pred_region
      %73 = dma.done [#allocation14], 512
    $region33: #{tpu_custom_call.1} parent=1 // pred_fallthru
      _
    %p75 = scmp.eq.s32.totalorder 0, 0
    // Predicated region
    $region34: #{tpu_custom_call.1} parent=1 // pred_check
      %p76 = pneg %p75
    $region35: #{tpu_custom_call.1} parent=1 // pred_check_branch
      %78 = sbr.rel (%p76) target = $region37
    $region36: #{tpu_custom_call.1} parent=1 // pred_region
      $region38: #{tpu_custom_call.1} parent=36
        #allocation20 [shape = 's32[1]{0}', space=sflag, size = 0x4, scoped, tag = 'scoped memory for tpu_custom_call.1']
        // Predicated region
        $region39: #{tpu_custom_call.1} parent=38 // pred_check
          _
        $region40: #{tpu_custom_call.1} parent=38 // pred_check_branch
          %80 = sbr.rel target = $region42
        $region41: #{tpu_custom_call.1} parent=38 // pred_region
          %81 = sst [smem:[#allocation23]] [#allocation22]
          %82 = sst [smem:[#allocation24]] [#allocation21]
        $region42: #{tpu_custom_call.1} parent=38 // pred_fallthru
          _
        %84 = shalt.err (0)
        %s86 = sshll.u32 %s1, 4
        %s87 = int_to_ptr.hbm [resolvable:$true] %s86
        %s88 = sshll.u32 [#allocation2], 4
        %s89 = int_to_ptr.vmem [resolvable:$true] %s88
        %91 = dma.hbm_to_vmem [thread:$0]  %s87, 768, %s89, [#allocation20]
        %s92 = smul.u32 4, 4
        %s93 = smul.u32 %s92, 3
        %s94 = sshll.u32 %s93, 4
        %95 = dma.done [#allocation20], %s94
      $region43: #{tpu_custom_call.1} parent=36
        #allocation25 [shape = 's32[1]{0}', space=sflag, size = 0x4, scoped, tag = 'scoped memory for tpu_custom_call.1']
        // Predicated region
        $region44: #{tpu_custom_call.1} parent=43 // pred_check
          _
        $region45: #{tpu_custom_call.1} parent=43 // pred_check_branch
          %97 = sbr.rel target = $region47
        $region46: #{tpu_custom_call.1} parent=43 // pred_region
          %98 = sst [smem:[#allocation23]] [#allocation27]
          %99 = sst [smem:[#allocation24]] [#allocation26]
        $region47: #{tpu_custom_call.1} parent=43 // pred_fallthru
          _
        %101 = shalt.err (0)
        %s103 = sshll.u32 %s2, 4
        %s104 = int_to_ptr.hbm [resolvable:$true] %s103
        %s105 = sshll.u32 [#allocation3], 4
        %s106 = int_to_ptr.vmem [resolvable:$true] %s105
        %108 = dma.hbm_to_vmem [thread:$0]  %s104, 768, %s106, [#allocation25]
        %s109 = smul.u32 4, 4
        %s110 = smul.u32 %s109, 3
        %s111 = sshll.u32 %s110, 4
        %112 = dma.done [#allocation25], %s111
      $region48: #{tpu_custom_call.1} parent=36
        #allocation28 [shape = 's32[1]{0}', space=sflag, size = 0x4, scoped, tag = 'scoped memory for tpu_custom_call.1']
        // Predicated region
        $region49: #{tpu_custom_call.1} parent=48 // pred_check
          _
        $region50: #{tpu_custom_call.1} parent=48 // pred_check_branch
          %114 = sbr.rel target = $region52
        $region51: #{tpu_custom_call.1} parent=48 // pred_region
          %115 = sst [smem:[#allocation23]] [#allocation30]
          %116 = sst [smem:[#allocation24]] [#allocation29]
        $region52: #{tpu_custom_call.1} parent=48 // pred_fallthru
          _
        %118 = shalt.err (0)
        %s120 = sshll.u32 %s3, 4
        %s121 = int_to_ptr.hbm [resolvable:$true] %s120
        %s122 = sshll.u32 [#allocation4], 4
        %s123 = int_to_ptr.vmem [resolvable:$true] %s122
        %125 = dma.hbm_to_vmem [thread:$0]  %s121, 2304, %s123, [#allocation28]
        %s126 = smul.u32 4, 12
        %s127 = smul.u32 %s126, 3
        %s128 = sshll.u32 %s127, 4
        %129 = dma.done [#allocation28], %s128
      $region53: #{tpu_custom_call.1} parent=36
        #allocation31 [shape = 's32[1]{0}', space=sflag, size = 0x4, scoped, tag = 'scoped memory for tpu_custom_call.1']
        // Predicated region
        $region54: #{tpu_custom_call.1} parent=53 // pred_check
          _
        $region55: #{tpu_custom_call.1} parent=53 // pred_check_branch
          %131 = sbr.rel target = $region57
        $region56: #{tpu_custom_call.1} parent=53 // pred_region
          %132 = sst [smem:[#allocation23]] [#allocation33]
          %133 = sst [smem:[#allocation24]] [#allocation32]
        $region57: #{tpu_custom_call.1} parent=53 // pred_fallthru
          _
        %135 = shalt.err (0)
        %s137 = sshll.u32 %s4, 4
        %s138 = int_to_ptr.hbm [resolvable:$true] %s137
        %s139 = sshll.u32 [#allocation5], 4
        %s140 = int_to_ptr.vmem [resolvable:$true] %s139
        %142 = dma.hbm_to_vmem [thread:$0]  %s138, 256, %s140, [#allocation31]
        %s143 = smul.u32 4, 4
        %s144 = smul.u32 %s143, 1
        %s145 = sshll.u32 %s144, 4
        %146 = dma.done [#allocation31], %s145
      %vm147 = vcmask 779264
      %148 = vst.msk [vmem:[#allocation7] sm:$0x3] %vm147, 0.0
      %vm149 = vcmask 261120
      %150 = vst.msk [vmem:[#allocation8] sm:$0xff] %vm149, 0.0
      %151 = vst.msk [vmem:[#allocation8 + $0x8] sm:$0xff] %vm149, 0.0
      %152 = vst.msk [vmem:[#allocation8 + $0x10] sm:$0xff] %vm149, 0.0
      %153 = vst.msk [vmem:[#allocation8 + $0x18] sm:$0xff] %vm149, 0.0
      %154 = vst.msk [vmem:[#allocation8 + $0x20] sm:$0xff] %vm149, 0.0
      %155 = vst.msk [vmem:[#allocation8 + $0x28] sm:$0xff] %vm149, 0.0
      %156 = vst.msk [vmem:[#allocation8 + $0x30] sm:$0xff] %vm149, 0.0
      %157 = vst.msk [vmem:[#allocation8 + $0x38] sm:$0xff] %vm149, 0.0
      %vm158 = vcmask 254976
      %159 = vst.msk [vmem:[#allocation9] sm:$0x3] %vm158, 0.0
    $region37: #{tpu_custom_call.1} parent=1 // pred_fallthru
      _
    %v160 = vld [vmem:[#allocation10] sm:$0xf]
    %v161 = vld [vmem:[#allocation10 + $0x4] sm:$0xf]
    %v162 = vld [vmem:[#allocation2] sm:$0xff]
    %v163 = vld [vmem:[#allocation2 + $0x8] sm:$0xf]
    %v164 = vld [vmem:[#allocation2 + $0xc] sm:$0xff]
    %v165 = vld [vmem:[#allocation2 + $0x14] sm:$0xf]
    %v166 = vld [vmem:[#allocation2 + $0x18] sm:$0xff]
    %v167 = vld [vmem:[#allocation2 + $0x20] sm:$0xf]
    %v168 = vld [vmem:[#allocation2 + $0x24] sm:$0xff]
    %v169 = vld [vmem:[#allocation2 + $0x2c] sm:$0xf]
    %v170 = vld [vmem:[%s5] sm:$0x7]
    %v172 = vperm.slane %v170, 0
    %v173 = vperm.slane %v170, 1
    %v174 = vperm.slane %v170, 2
    %v180 = vunpack.c.l.b16 %v160
    %v181 = vunpack.c.l.b16 %v161
    %v182 = vpack.c.b16 %v181, %v180
    %v191 = vunpack.c.l.b16 %v162
    %v192 = vunpack.c.h.b16 %v162
    %v193 = vunpack.c.l.b16 %v163
    %v194 = vunpack.c.l.b16 %v164
    %v195 = vunpack.c.h.b16 %v164
    %v196 = vunpack.c.l.b16 %v165
    %v197 = vunpack.c.l.b16 %v166
    %v198 = vunpack.c.h.b16 %v166
    %v199 = vunpack.c.l.b16 %v167
    %v200 = vunpack.c.l.b16 %v168
    %v201 = vunpack.c.h.b16 %v168
    %v202 = vunpack.c.l.b16 %v169
    %v203 = vpack.c.b16 %v194, %v191
    %v204 = vpack.c.b16 %v195, %v192
    %v205 = vpack.c.b16 %v196, %v193
    %v206 = vpack.c.b16 %v200, %v197
    %v207 = vpack.c.b16 %v201, %v198
    %v208 = vpack.c.b16 %v202, %v199
    %vm215 = vcmask 261120
    %v217 = vsel %vm215, %v182, 0
    %219 = vmatpush.bf16.msra.mxu0 0
    %220 = vmatpush.bf16.msra.mxu0 0
    %221 = vmatpush.bf16.msra.mxu0 0
    %222 = vmatpush.bf16.msra.mxu0 0
    %223 = vmatpush.bf16.msra.mxu0 0
    %224 = vmatpush.bf16.msra.mxu0 0
    %225 = vmatpush.bf16.msra.mxu0 %v206
    %226 = vmatpush.bf16.msra.mxu0 %v203
    %227 = vmatmul.bf16.gmra.mxu0 %v217
    %v228 = vpop.f32.mrf.mxu0
    %v229 = vadd.f32 %v172, %v228
    %v230 = vpop.f32.mrf.mxu0
    %v231 = vadd.f32 %v172, %v230
    %232 = vdwg.mxu0
    %233 = vmatpush.bf16.msra.mxu0 0
    %234 = vmatpush.bf16.msra.mxu0 0
    %235 = vmatpush.bf16.msra.mxu0 0
    %236 = vmatpush.bf16.msra.mxu0 0
    %237 = vmatpush.bf16.msra.mxu0 0
    %238 = vmatpush.bf16.msra.mxu0 0
    %239 = vmatpush.bf16.msra.mxu0 %v207
    %240 = vmatpush.bf16.msra.mxu0 %v204
    %241 = vmatmul.bf16.gmra.mxu0 %v217
    %v242 = vpop.f32.mrf.mxu0
    %v243 = vadd.f32 %v173, %v242
    %v244 = vpop.f32.mrf.mxu0
    %v245 = vadd.f32 %v173, %v244
    %246 = vdwg.mxu0
    %247 = vmatpush.bf16.msra.mxu0 0
    %248 = vmatpush.bf16.msra.mxu0 0
    %249 = vmatpush.bf16.msra.mxu0 0
    %250 = vmatpush.bf16.msra.mxu0 0
    %251 = vmatpush.bf16.msra.mxu0 0
    %252 = vmatpush.bf16.msra.mxu0 0
    %253 = vmatpush.bf16.msra.mxu0 %v208
    %254 = vmatpush.bf16.msra.mxu0 %v205
    %255 = vmatmul.bf16.gmra.mxu0 %v217
    %v256 = vpop.f32.mrf.mxu0
    %v257 = vadd.f32 %v174, %v256
    %v258 = vpop.f32.mrf.mxu0
    %v259 = vadd.f32 %v174, %v258
    %260 = vdwg.mxu0
    %261 = vst [vmem:[#allocation6] sm:$0xff] %v229
    %262 = vst [vmem:[#allocation6 + $0x8] sm:$0xff] %v243
    %263 = vst.msk [vmem:[#allocation6 + $0x10] sm:$0xff] %vm215, %v257
    %264 = vst [vmem:[#allocation6 + $0x18] sm:$0xff] %v231
    %265 = vst [vmem:[#allocation6 + $0x20] sm:$0xff] %v245
    %266 = vst.msk [vmem:[#allocation6 + $0x28] sm:$0xff] %vm215, %v259
    %v267 = vld [vmem:[#allocation13] sm:$0x7]
    %v269 = vperm.slane %v267, 0
    %v270 = vperm.slane %v267, 1
    %v271 = vperm.slane %v267, 2
    %v275 = vld [vmem:[#allocation15] sm:$0xff]
    %v276 = vld [vmem:[#allocation15 + $0x8] sm:$0xff]
    %v277 = vld [vmem:[#allocation15 + $0x10] sm:$0xff]
    %v278 = vld [vmem:[#allocation15 + $0x18] sm:$0xff]
    %v279 = vld [vmem:[#allocation9] sm:$0x3]
    %v280 = vld [vmem:[#allocation7] sm:$0x3]
    %v281 = vld [vmem:[#allocation6] sm:$0x3]
    %v282 = vld [vmem:[#allocation6 + $0x8] sm:$0x3]
    %v283 = vld [vmem:[#allocation6 + $0x10] sm:$0x3]
    %v284 = vpack.c.bf16 %v279, %v279
    %v285 = vld [vmem:[#allocation3] sm:$0xff]
    %v286 = vld [vmem:[#allocation3 + $0x8] sm:$0xf]
    %v287 = vld [vmem:[#allocation3 + $0xc] sm:$0xff]
    %v288 = vld [vmem:[#allocation3 + $0x14] sm:$0xf]
    %v289 = vld [vmem:[#allocation3 + $0x18] sm:$0xff]
    %v290 = vld [vmem:[#allocation3 + $0x20] sm:$0xf]
    %v291 = vld [vmem:[#allocation3 + $0x24] sm:$0xff]
    %v292 = vld [vmem:[#allocation3 + $0x2c] sm:$0xf]
    %v301 = vunpack.c.l.b16 %v285
    %v302 = vunpack.c.h.b16 %v285
    %v303 = vunpack.c.l.b16 %v286
    %v304 = vunpack.c.l.b16 %v287
    %v305 = vunpack.c.h.b16 %v287
    %v306 = vunpack.c.l.b16 %v288
    %v307 = vunpack.c.l.b16 %v289
    %v308 = vunpack.c.h.b16 %v289
    %v309 = vunpack.c.l.b16 %v290
    %v310 = vunpack.c.l.b16 %v291
    %v311 = vunpack.c.h.b16 %v291
    %v312 = vunpack.c.l.b16 %v292
    %v313 = vpack.c.b16 %v304, %v301
    %v314 = vpack.c.b16 %v305, %v302
    %v315 = vpack.c.b16 %v306, %v303
    %v316 = vpack.c.b16 %v310, %v307
    %v317 = vpack.c.b16 %v311, %v308
    %v318 = vpack.c.b16 %v312, %v309
    %v326 = vsel %vm215, %v284, 0
    %328 = vmatpush.bf16.msra.mxu0 0
    %329 = vmatpush.bf16.msra.mxu0 0
    %330 = vmatpush.bf16.msra.mxu0 0
    %331 = vmatpush.bf16.msra.mxu0 0
    %332 = vmatpush.bf16.msra.mxu0 0
    %333 = vmatpush.bf16.msra.mxu0 0
    %334 = vmatpush.bf16.msra.mxu0 %v316
    %335 = vmatpush.bf16.msra.mxu0 %v313
    %336 = vmatmul.bf16.gmra.mxu0 %v326
    %v337 = vpop.f32.mrf.mxu0
    %v338 = vadd.f32 0.0, %v337
    %v339 = vpop.f32.mrf.mxu0
    %340 = vdwg.mxu0
    %341 = vmatpush.bf16.msra.mxu0 0
    %342 = vmatpush.bf16.msra.mxu0 0
    %343 = vmatpush.bf16.msra.mxu0 0
    %344 = vmatpush.bf16.msra.mxu0 0
    %345 = vmatpush.bf16.msra.mxu0 0
    %346 = vmatpush.bf16.msra.mxu0 0
    %347 = vmatpush.bf16.msra.mxu0 %v317
    %348 = vmatpush.bf16.msra.mxu0 %v314
    %349 = vmatmul.bf16.gmra.mxu0 %v326
    %v350 = vpop.f32.mrf.mxu0
    %v351 = vadd.f32 0.0, %v350
    %v352 = vpop.f32.mrf.mxu0
    %353 = vdwg.mxu0
    %354 = vmatpush.bf16.msra.mxu0 0
    %355 = vmatpush.bf16.msra.mxu0 0
    %356 = vmatpush.bf16.msra.mxu0 0
    %357 = vmatpush.bf16.msra.mxu0 0
    %358 = vmatpush.bf16.msra.mxu0 0
    %359 = vmatpush.bf16.msra.mxu0 0
    %360 = vmatpush.bf16.msra.mxu0 %v318
    %361 = vmatpush.bf16.msra.mxu0 %v315
    %362 = vmatmul.bf16.gmra.mxu0 %v326
    %v363 = vpop.f32.mrf.mxu0
    %v364 = vadd.f32 0.0, %v363
    %v365 = vpop.f32.mrf.mxu0
    %366 = vdwg.mxu0
    %v367 = vadd.f32 %v281, %v338
    %v368 = vadd.f32 %v282, %v351
    %v369 = vadd.f32 %v283, %v364
    %v370 = vpack.c.bf16 %v280, %v280
    %v371 = vld [vmem:[#allocation4] sm:$0xff]
    %v372 = vld [vmem:[#allocation4 + $0x8] sm:$0xf]
    %v373 = vld [vmem:[#allocation4 + $0xc] sm:$0xff]
    %v374 = vld [vmem:[#allocation4 + $0x14] sm:$0xf]
    %v375 = vld [vmem:[#allocation4 + $0x18] sm:$0xff]
    %v376 = vld [vmem:[#allocation4 + $0x20] sm:$0xf]
    %v377 = vld [vmem:[#allocation4 + $0x24] sm:$0xff]
    %v378 = vld [vmem:[#allocation4 + $0x2c] sm:$0xf]
    %v379 = vld [vmem:[#allocation4 + $0x30] sm:$0xff]
    %v380 = vld [vmem:[#allocation4 + $0x38] sm:$0xf]
    %v381 = vld [vmem:[#allocation4 + $0x3c] sm:$0xff]
    %v382 = vld [vmem:[#allocation4 + $0x44] sm:$0xf]
    %v383 = vld [vmem:[#allocation4 + $0x48] sm:$0xff]
    %v384 = vld [vmem:[#allocation4 + $0x50] sm:$0xf]
    %v385 = vld [vmem:[#allocation4 + $0x54] sm:$0xff]
    %v386 = vld [vmem:[#allocation4 + $0x5c] sm:$0xf]
    %v387 = vld [vmem:[#allocation4 + $0x60] sm:$0xff]
    %v388 = vld [vmem:[#allocation4 + $0x68] sm:$0xf]
    %v389 = vld [vmem:[#allocation4 + $0x6c] sm:$0xff]
    %v390 = vld [vmem:[#allocation4 + $0x74] sm:$0xf]
    %v391 = vld [vmem:[#allocation4 + $0x78] sm:$0xff]
    %v392 = vld [vmem:[#allocation4 + $0x80] sm:$0xf]
    %v393 = vld [vmem:[#allocation4 + $0x84] sm:$0xff]
    %v394 = vld [vmem:[#allocation4 + $0x8c] sm:$0xf]
    %v419 = vunpack.c.l.b16 %v371
    %v420 = vunpack.c.h.b16 %v371
    %v421 = vunpack.c.l.b16 %v372
    %v422 = vunpack.c.l.b16 %v373
    %v423 = vunpack.c.h.b16 %v373
    %v424 = vunpack.c.l.b16 %v374
    %v425 = vunpack.c.l.b16 %v375
    %v426 = vunpack.c.h.b16 %v375
    %v427 = vunpack.c.l.b16 %v376
    %v428 = vunpack.c.l.b16 %v377
    %v429 = vunpack.c.h.b16 %v377
    %v430 = vunpack.c.l.b16 %v378
    %v431 = vunpack.c.l.b16 %v379
    %v432 = vunpack.c.h.b16 %v379
    %v433 = vunpack.c.l.b16 %v380
    %v434 = vunpack.c.l.b16 %v381
    %v435 = vunpack.c.h.b16 %v381
    %v436 = vunpack.c.l.b16 %v382
    %v437 = vunpack.c.l.b16 %v383
    %v438 = vunpack.c.h.b16 %v383
    %v439 = vunpack.c.l.b16 %v384
    %v440 = vunpack.c.l.b16 %v385
    %v441 = vunpack.c.h.b16 %v385
    %v442 = vunpack.c.l.b16 %v386
    %v443 = vunpack.c.l.b16 %v387
    %v444 = vunpack.c.h.b16 %v387
    %v445 = vunpack.c.l.b16 %v388
    %v446 = vunpack.c.l.b16 %v389
    %v447 = vunpack.c.h.b16 %v389
    %v448 = vunpack.c.l.b16 %v390
    %v449 = vunpack.c.l.b16 %v391
    %v450 = vunpack.c.h.b16 %v391
    %v451 = vunpack.c.l.b16 %v392
    %v452 = vunpack.c.l.b16 %v393
    %v453 = vunpack.c.h.b16 %v393
    %v454 = vunpack.c.l.b16 %v394
    %v455 = vpack.c.b16 %v422, %v419
    %v456 = vpack.c.b16 %v423, %v420
    %v457 = vpack.c.b16 %v424, %v421
    %v458 = vpack.c.b16 %v428, %v425
    %v459 = vpack.c.b16 %v429, %v426
    %v460 = vpack.c.b16 %v430, %v427
    %v461 = vpack.c.b16 %v434, %v431
    %v462 = vpack.c.b16 %v435, %v432
    %v463 = vpack.c.b16 %v436, %v433
    %v464 = vpack.c.b16 %v440, %v437
    %v465 = vpack.c.b16 %v441, %v438
    %v466 = vpack.c.b16 %v442, %v439
    %v467 = vpack.c.b16 %v446, %v443
    %v468 = vpack.c.b16 %v447, %v444
    %v469 = vpack.c.b16 %v448, %v445
    %v470 = vpack.c.b16 %v452, %v449
    %v471 = vpack.c.b16 %v453, %v450
    %v472 = vpack.c.b16 %v454, %v451
    %vm491 = vcmask 785408
    %v493 = vsel %vm491, %v370, 0
    %495 = vmatpush.bf16.msra.mxu0 0
    %496 = vmatpush.bf16.msra.mxu0 0
    %497 = vmatpush.bf16.msra.mxu0 %v470
    %498 = vmatpush.bf16.msra.mxu0 %v467
    %499 = vmatpush.bf16.msra.mxu0 %v464
    %500 = vmatpush.bf16.msra.mxu0 %v461
    %501 = vmatpush.bf16.msra.mxu0 %v458
    %502 = vmatpush.bf16.msra.mxu0 %v455
    %503 = vmatmul.bf16.gmra.mxu0 %v493
    %v504 = vpop.f32.mrf.mxu0
    %v505 = vadd.f32 %v269, %v504
    %v506 = vpop.f32.mrf.mxu0
    %507 = vdwg.mxu0
    %508 = vmatpush.bf16.msra.mxu0 0
    %509 = vmatpush.bf16.msra.mxu0 0
    %510 = vmatpush.bf16.msra.mxu0 %v471
    %511 = vmatpush.bf16.msra.mxu0 %v468
    %512 = vmatpush.bf16.msra.mxu0 %v465
    %513 = vmatpush.bf16.msra.mxu0 %v462
    %514 = vmatpush.bf16.msra.mxu0 %v459
    %515 = vmatpush.bf16.msra.mxu0 %v456
    %516 = vmatmul.bf16.gmra.mxu0 %v493
    %v517 = vpop.f32.mrf.mxu0
    %v518 = vadd.f32 %v270, %v517
    %v519 = vpop.f32.mrf.mxu0
    %520 = vdwg.mxu0
    %521 = vmatpush.bf16.msra.mxu0 0
    %522 = vmatpush.bf16.msra.mxu0 0
    %523 = vmatpush.bf16.msra.mxu0 %v472
    %524 = vmatpush.bf16.msra.mxu0 %v469
    %525 = vmatpush.bf16.msra.mxu0 %v466
    %526 = vmatpush.bf16.msra.mxu0 %v463
    %527 = vmatpush.bf16.msra.mxu0 %v460
    %528 = vmatpush.bf16.msra.mxu0 %v457
    %529 = vmatmul.bf16.gmra.mxu0 %v493
    %v530 = vpop.f32.mrf.mxu0
    %v531 = vadd.f32 %v271, %v530
    %v532 = vpop.f32.mrf.mxu0
    %533 = vdwg.mxu0
    %v534 = vadd.f32 %v367, %v505
    %v535 = vxor.u32 %v534, 2147483648
    %v536 = vmul.f32 %v535, 1.442695
    %v537 = vpow.pop %v536
    %v538 = vadd.f32 %v537, 1.0
    %v539 = vrcp.pop %v538
    %v540 = vmul.f32 %v538, %v539
    %v541 = vsub.f32 1.0, %v540
    %v542 = vmul.f32 %v539, %v541
    %v543 = vadd.f32 %v539, %v542
    %vm544 = vweird.f32 %v538
    %vm545 = vweird.f32 %v539
    %vm546 = vmor %vm544, %vm545
    %v547 = vsel %vm546, %v539, %v543
    %v548 = vand.u32 2147483647, %v538
    %vm549 = vcmp.eq.f32.partialorder %v548, 8.507059e+37
    %v550 = vand.u32 %v538, 2147483648
    %v551 = vor.u32 1.1754944e-38, %v550
    %v552 = vsel %vm549, %v551, %v547
    %v553 = vmul.f32 1.0, %v552
    %v554 = vadd.f32 %v368, %v518
    %v555 = vxor.u32 %v554, 2147483648
    %v556 = vmul.f32 %v555, 1.442695
    %v557 = vpow.pop %v556
    %v558 = vadd.f32 %v557, 1.0
    %v559 = vrcp.pop %v558
    %v560 = vmul.f32 %v558, %v559
    %v561 = vsub.f32 1.0, %v560
    %v562 = vmul.f32 %v559, %v561
    %v563 = vadd.f32 %v559, %v562
    %vm564 = vweird.f32 %v558
    %vm565 = vweird.f32 %v559
    %vm566 = vmor %vm564, %vm565
    %v567 = vsel %vm566, %v559, %v563
    %v568 = vand.u32 2147483647, %v558
    %vm569 = vcmp.eq.f32.partialorder %v568, 8.507059e+37
    %v570 = vand.u32 %v558, 2147483648
    %v571 = vor.u32 1.1754944e-38, %v570
    %v572 = vsel %vm569, %v571, %v567
    %v573 = vmul.f32 1.0, %v572
    %576 = vrot.lane.b32.xlu0 %v518, 64
    %v577 = vpop.permute.xlu0 %576
    %578 = vrot.lane.b32.xlu0 %v531, 64
    %v579 = vpop.permute.xlu0 %578
    %vm580 = vcmask 523264
    %v581 = vsel %vm580, %v577, %v579
    %v583 = vmul.f32 %v553, %v581
    %585 = vrot.lane.b32.xlu0 %v583, 64
    %v586 = vpop.permute.xlu0 %585
    %v588 = vadd.f32 %v368, %v586
    %v589 = vadd.f32 %v369, %v586
    %v590 = vtanh.pop %v588
    %v591 = vtanh.pop %v589
    %594 = vrot.lane.b32.xlu0 %v590, 64
    %v595 = vpop.permute.xlu0 %594
    %596 = vrot.lane.b32.xlu0 %v591, 64
    %v597 = vpop.permute.xlu0 %596
    %v598 = vsel %vm580, %v595, %v597
    %v600 = vsub.f32 %v280, %v598
    %602 = vrot.lane.b32.xlu0 %v600, 96
    %v603 = vpop.permute.xlu0 %602
    %v605 = vmul.f32 %v553, %v603
    %v606 = vmul.f32 %v573, %v603
    %609 = vrot.lane.b32.xlu0 %v605, 96
    %v610 = vpop.permute.xlu0 %609
    %611 = vrot.lane.b32.xlu0 %v606, 96
    %v612 = vpop.permute.xlu0 %611
    %v613 = vsel %vm491, %v610, %v612
    %v616 = vadd.f32 %v590, %v613
    %v617 = vadd.f32 %v591, %v612
    %620 = vrot.lane.b32.xlu0 %v616, 64
    %v621 = vpop.permute.xlu0 %620
    %622 = vrot.lane.b32.xlu0 %v617, 64
    %v623 = vpop.permute.xlu0 %622
    %v624 = vsel %vm580, %v621, %v623
    %vm626 = vcmask 779264
    %627 = vst.msk [vmem:[#allocation7] sm:$0x3] %vm626, %v624
    %v628 = vmul.f32 %v616, %v616
    %630 = vrot.lane.b32.xlu0 %v628, 32
    %v631 = vpop.permute.xlu0 %630
    %v632 = vsel %vm215, %v631, 0
    %634 = vmatpush.msra.mxu0 0.0
    %635 = vmatpush.msra.mxu0 0.0
    %636 = vmatpush.msra.mxu0 0.0
    %637 = vmatpush.msra.mxu0 0.0
    %638 = vmatpush.msra.mxu0 0.0
    %639 = vmatpush.msra.mxu0 0.0
    %640 = vmatpush.msra.mxu0 0.0
    %641 = vmatpush.msra.mxu0 0.0
    %642 = vmatpush.msra.mxu0 0.0
    %643 = vmatpush.msra.mxu0 0.0
    %644 = vmatpush.msra.mxu0 0.0
    %645 = vmatpush.msra.mxu0 0.0
    %646 = vmatpush.msra.mxu0 %v278
    %647 = vmatpush.msra.mxu0 %v277
    %648 = vmatpush.msra.mxu0 %v276
    %649 = vmatpush.msra.mxu0 %v275
    %650 = vmatmul.f32.gmra.mxu0 %v632
    %v651 = vpop.f32.mrf.mxu0
    %v652 = vadd.f32 0.0, %v651
    %653 = vdwg.mxu0
    %654 = vrot.lane.b32.xlu0 %v628, 64
    %v655 = vpop.permute.xlu0 %654
    %v656 = vsel %vm215, %v655, 0
    %658 = vmatpush.msra.mxu0 0.0
    %659 = vmatpush.msra.mxu0 0.0
    %660 = vmatpush.msra.mxu0 0.0
    %661 = vmatpush.msra.mxu0 0.0
    %662 = vmatpush.msra.mxu0 0.0
    %663 = vmatpush.msra.mxu0 0.0
    %664 = vmatpush.msra.mxu0 0.0
    %665 = vmatpush.msra.mxu0 0.0
    %666 = vmatpush.msra.mxu0 0.0
    %667 = vmatpush.msra.mxu0 0.0
    %668 = vmatpush.msra.mxu0 0.0
    %669 = vmatpush.msra.mxu0 0.0
    %670 = vmatpush.msra.mxu0 %v278
    %671 = vmatpush.msra.mxu0 %v277
    %672 = vmatpush.msra.mxu0 %v276
    %673 = vmatpush.msra.mxu0 %v275
    %674 = vmatmul.f32.gmra.mxu0 %v656
    %v675 = vpop.f32.mrf.mxu0
    %v676 = vadd.f32 0.0, %v675
    %677 = vdwg.mxu0
    %v678 = vrsqrt.pop %v652
    %v679 = vmul.f32 %v678, %v652
    %v680 = vmul.f32 %v679, %v678
    %v681 = vmul.f32 0.5, %v680
    %v682 = vsub.f32 1.5, %v681
    %v683 = vmul.f32 %v678, %v682
    %vm684 = vweird.f32 %v652
    %vm685 = vweird.f32 %v678
    %vm686 = vmor %vm684, %vm685
    %v687 = vsel %vm686, %v678, %v683
    %689 = vrot.lane.b32.xlu0 %v687, 96
    %v690 = vpop.permute.xlu0 %689
    %v692 = vmul.f32 %v616, %v690
    %vm693 = vcmp.gt.f32.partialorder %v692, 0.0
    %v694 = vmul.f32 %v692, 1.442695
    %v695 = vpow.pop %v694
    %v696 = vsub.f32 %v695, 1.0
    %v697 = vsel %vm693, %v692, %v696
    %v698 = vrsqrt.pop %v676
    %v699 = vmul.f32 %v698, %v676
    %v700 = vmul.f32 %v699, %v698
    %v701 = vmul.f32 0.5, %v700
    %v702 = vsub.f32 1.5, %v701
    %v703 = vmul.f32 %v698, %v702
    %vm704 = vweird.f32 %v676
    %vm705 = vweird.f32 %v698
    %vm706 = vmor %vm704, %vm705
    %v707 = vsel %vm706, %v698, %v703
    %709 = vrot.lane.b32.xlu0 %v707, 64
    %v710 = vpop.permute.xlu0 %709
    %v712 = vmul.f32 %v616, %v710
    %v713 = vld [vmem:[#allocation8] sm:$0xff]
    %v714 = vld [vmem:[#allocation8 + $0x8] sm:$0xff]
    %v715 = vld [vmem:[#allocation8 + $0x10] sm:$0xff]
    %v716 = vld [vmem:[#allocation8 + $0x18] sm:$0xff]
    %v717 = vld [vmem:[#allocation8 + $0x20] sm:$0xff]
    %v718 = vld [vmem:[#allocation8 + $0x28] sm:$0xff]
    %v719 = vld [vmem:[#allocation8 + $0x30] sm:$0xff]
    %v720 = vld [vmem:[#allocation8 + $0x38] sm:$0xff]
    %v721 = vperm.slane %v617, 0
    %v722 = vlaneseq
    %v723 = vshrl.u32 %v722, 7
    %725 = vset.pattern.permute.xlu0 %v723
    %726 = vperm.xlu0 %725, %v721
    %v727 = vpop.permute.xlu0 %726
    %v728 = vlaneseq
    %v729 = vshrl.u32 %v728, 7
    %v730 = vadd.s32 %v729, 8
    %731 = vset.pattern.permute.xlu0 %v730
    %732 = vperm.xlu0 %731, %v721
    %v733 = vpop.permute.xlu0 %732
    %v734 = vlaneseq
    %v735 = vshrl.u32 %v734, 7
    %v736 = vadd.s32 %v735, 16
    %737 = vset.pattern.permute.xlu0 %v736
    %738 = vperm.xlu0 %737, %v721
    %v739 = vpop.permute.xlu0 %738
    %v740 = vlaneseq
    %v741 = vshrl.u32 %v740, 7
    %v742 = vadd.s32 %v741, 24
    %743 = vset.pattern.permute.xlu0 %v742
    %744 = vperm.xlu0 %743, %v721
    %v745 = vpop.permute.xlu0 %744
    %v746 = vperm.slane %v617, 1
    %v747 = vlaneseq
    %v748 = vshrl.u32 %v747, 7
    %750 = vset.pattern.permute.xlu0 %v748
    %751 = vperm.xlu0 %750, %v746
    %v752 = vpop.permute.xlu0 %751
    %v753 = vlaneseq
    %v754 = vshrl.u32 %v753, 7
    %v755 = vadd.s32 %v754, 8
    %756 = vset.pattern.permute.xlu0 %v755
    %757 = vperm.xlu0 %756, %v746
    %v758 = vpop.permute.xlu0 %757
    %v759 = vlaneseq
    %v760 = vshrl.u32 %v759, 7
    %v761 = vadd.s32 %v760, 16
    %762 = vset.pattern.permute.xlu0 %v761
    %763 = vperm.xlu0 %762, %v746
    %v764 = vpop.permute.xlu0 %763
    %v765 = vlaneseq
    %v766 = vshrl.u32 %v765, 7
    %v767 = vadd.s32 %v766, 24
    %768 = vset.pattern.permute.xlu0 %v767
    %769 = vperm.xlu0 %768, %v746
    %v770 = vpop.permute.xlu0 %769
    %v772 = vrot.slane %v697, 1
    %v773 = vperm.slane %v697, 0
    %v774 = vperm.slane %v772, 0
    %v777 = vmul.f32 %v727, %v773
    %v778 = vmul.f32 %v733, %v773
    %v779 = vmul.f32 %v739, %v773
    %v780 = vmul.f32 %v745, %v773
    %v781 = vmul.f32 %v752, %v774
    %v782 = vmul.f32 %v758, %v774
    %v783 = vmul.f32 %v764, %v774
    %v784 = vmul.f32 %v770, %v774
    %789 = vrot.lane.b32.xlu0 %v275, 96
    %v790 = vpop.permute.xlu0 %789
    %791 = vrot.lane.b32.xlu0 %v276, 96
    %v792 = vpop.permute.xlu0 %791
    %793 = vrot.lane.b32.xlu0 %v277, 96
    %v794 = vpop.permute.xlu0 %793
    %795 = vrot.lane.b32.xlu0 %v278, 96
    %v796 = vpop.permute.xlu0 %795
    %v801 = vmul.f32 %v777, %v790
    %v802 = vmul.f32 %v778, %v792
    %v803 = vmul.f32 %v779, %v794
    %v804 = vmul.f32 %v780, %v796
    %v805 = vmul.f32 %v781, %v790
    %v806 = vmul.f32 %v782, %v792
    %v807 = vmul.f32 %v783, %v794
    %v808 = vmul.f32 %v784, %v796
    %817 = vrot.lane.b32.xlu0 %v801, 32
    %v818 = vpop.permute.xlu0 %817
    %819 = vrot.lane.b32.xlu0 %v802, 32
    %v820 = vpop.permute.xlu0 %819
    %821 = vrot.lane.b32.xlu0 %v803, 32
    %v822 = vpop.permute.xlu0 %821
    %823 = vrot.lane.b32.xlu0 %v804, 32
    %v824 = vpop.permute.xlu0 %823
    %825 = vrot.lane.b32.xlu0 %v805, 32
    %v826 = vpop.permute.xlu0 %825
    %827 = vrot.lane.b32.xlu0 %v806, 32
    %v828 = vpop.permute.xlu0 %827
    %829 = vrot.lane.b32.xlu0 %v807, 32
    %v830 = vpop.permute.xlu0 %829
    %831 = vrot.lane.b32.xlu0 %v808, 32
    %v832 = vpop.permute.xlu0 %831
    %v841 = vadd.f32 %v713, %v818
    %v842 = vadd.f32 %v714, %v820
    %v843 = vadd.f32 %v715, %v822
    %v844 = vadd.f32 %v716, %v824
    %v845 = vadd.f32 %v717, %v826
    %v846 = vadd.f32 %v718, %v828
    %v847 = vadd.f32 %v719, %v830
    %v848 = vadd.f32 %v720, %v832
    %849 = vst.msk [vmem:[#allocation8] sm:$0xff] %vm215, %v841
    %850 = vst.msk [vmem:[#allocation8 + $0x8] sm:$0xff] %vm215, %v842
    %851 = vst.msk [vmem:[#allocation8 + $0x10] sm:$0xff] %vm215, %v843
    %852 = vst.msk [vmem:[#allocation8 + $0x18] sm:$0xff] %vm215, %v844
    %853 = vst.msk [vmem:[#allocation8 + $0x20] sm:$0xff] %vm215, %v845
    %854 = vst.msk [vmem:[#allocation8 + $0x28] sm:$0xff] %vm215, %v846
    %855 = vst.msk [vmem:[#allocation8 + $0x30] sm:$0xff] %vm215, %v847
    %856 = vst.msk [vmem:[#allocation8 + $0x38] sm:$0xff] %vm215, %v848
    %v857 = vld [vmem:[#allocation8] sm:$0xff]
    %v858 = vld [vmem:[#allocation8 + $0x8] sm:$0xff]
    %v859 = vld [vmem:[#allocation8 + $0x10] sm:$0xff]
    %v860 = vld [vmem:[#allocation8 + $0x18] sm:$0xff]
    %v861 = vld [vmem:[#allocation8 + $0x20] sm:$0xff]
    %v862 = vld [vmem:[#allocation8 + $0x28] sm:$0xff]
    %v863 = vld [vmem:[#allocation8 + $0x30] sm:$0xff]
    %v864 = vld [vmem:[#allocation8 + $0x38] sm:$0xff]
    %v866 = vrot.slane %v712, 1
    %v867 = vperm.slane %v712, 0
    %v868 = vperm.slane %v866, 0
    %869 = vrot.lane.b32.xlu0 %v867, 64
    %v870 = vpop.permute.xlu0 %869
    %871 = vrot.lane.b32.xlu0 %v868, 64
    %v872 = vpop.permute.xlu0 %871
    %v875 = vmul.f32 %v857, %v870
    %v876 = vmul.f32 %v858, %v870
    %v877 = vmul.f32 %v859, %v870
    %v878 = vmul.f32 %v860, %v870
    %v879 = vmul.f32 %v861, %v872
    %v880 = vmul.f32 %v862, %v872
    %v881 = vmul.f32 %v863, %v872
    %v882 = vmul.f32 %v864, %v872
    %v883 = vsel %vm215, %v875, 0.0
    %884 = vadd.xlane.f32.xlu0 %v883
    %v885 = vpop.xlane.xlu0 %884
    %v886 = vsel %vm215, %v876, 0.0
    %887 = vadd.xlane.f32.xlu0 %v886
    %v888 = vpop.xlane.xlu0 %887
    %v889 = vsel %vm215, %v877, 0.0
    %890 = vadd.xlane.f32.xlu0 %v889
    %v891 = vpop.xlane.xlu0 %890
    %v892 = vsel %vm215, %v878, 0.0
    %893 = vadd.xlane.f32.xlu0 %v892
    %v894 = vpop.xlane.xlu0 %893
    %v895 = vsel %vm215, %v879, 0.0
    %896 = vadd.xlane.f32.xlu0 %v895
    %v897 = vpop.xlane.xlu0 %896
    %v898 = vsel %vm215, %v880, 0.0
    %899 = vadd.xlane.f32.xlu0 %v898
    %v900 = vpop.xlane.xlu0 %899
    %v901 = vsel %vm215, %v881, 0.0
    %902 = vadd.xlane.f32.xlu0 %v901
    %v903 = vpop.xlane.xlu0 %902
    %v904 = vsel %vm215, %v882, 0.0
    %905 = vadd.xlane.f32.xlu0 %v904
    %v906 = vpop.xlane.xlu0 %905
    %v915 = vlaneseq
    %v916 = vand.u32 %v915, 127
    %v917 = vperm.slane %v885, %v916
    %v918 = vadd.s32 %v916, 4294967288
    %v919 = vperm.slane %v888, %v918
    %vm920 = vcmask 130112
    %v921 = vsel %vm920, %v919, %v917
    %v922 = vadd.s32 %v916, 4294967280
    %v923 = vperm.slane %v891, %v922
    %vm924 = vcmask 195712
    %v925 = vsel %vm924, %v923, %v921
    %v926 = vadd.s32 %v916, 4294967272
    %v927 = vperm.slane %v894, %v926
    %vm928 = vcmask 261312
    %v929 = vsel %vm928, %v927, %v925
    %v930 = vperm.slane %v897, %v916
    %v931 = vperm.slane %v900, %v918
    %v932 = vsel %vm920, %v931, %v930
    %v933 = vperm.slane %v903, %v922
    %v934 = vsel %vm924, %v933, %v932
    %v935 = vperm.slane %v906, %v926
    %v936 = vsel %vm928, %v935, %v934
    %vm937 = vcmask 1041409
    %v938 = vsel %vm937, %v936, %v929
    %vm940 = vcmask 254976
    %941 = vst.msk [vmem:[#allocation9] sm:$0x3] %vm940, %v938
    %942 = vrot.lane.b32.xlu0 %v697, 32
    %v943 = vpop.permute.xlu0 %942
    %945 = vst.msk [vmem:[#allocation17] sm:$0x3] %vm940, %v943
    %946 = vrot.lane.b32.xlu0 %v712, 64
    %v947 = vpop.permute.xlu0 %946
    %949 = vst.msk [vmem:[#allocation19] sm:$0x3] %vm940, %v947
    %v950 = vld [vmem:[#allocation9] sm:$0x3]
    %v951 = vld [vmem:[#allocation7] sm:$0x3]
    %v952 = vld [vmem:[#allocation6] sm:$0xc]
    %v953 = vld [vmem:[#allocation6 + $0x8] sm:$0xc]
    %v954 = vld [vmem:[#allocation6 + $0x10] sm:$0xc]
    %v955 = vpack.c.bf16 %v950, %v950
    %v956 = vld [vmem:[#allocation3] sm:$0xff]
    %v957 = vld [vmem:[#allocation3 + $0x8] sm:$0xf]
    %v958 = vld [vmem:[#allocation3 + $0xc] sm:$0xff]
    %v959 = vld [vmem:[#allocation3 + $0x14] sm:$0xf]
    %v960 = vld [vmem:[#allocation3 + $0x18] sm:$0xff]
    %v961 = vld [vmem:[#allocation3 + $0x20] sm:$0xf]
    %v962 = vld [vmem:[#allocation3 + $0x24] sm:$0xff]
    %v963 = vld [vmem:[#allocation3 + $0x2c] sm:$0xf]
    %v972 = vunpack.c.l.b16 %v956
    %v973 = vunpack.c.h.b16 %v956
    %v974 = vunpack.c.l.b16 %v957
    %v975 = vunpack.c.l.b16 %v958
    %v976 = vunpack.c.h.b16 %v958
    %v977 = vunpack.c.l.b16 %v959
    %v978 = vunpack.c.l.b16 %v960
    %v979 = vunpack.c.h.b16 %v960
    %v980 = vunpack.c.l.b16 %v961
    %v981 = vunpack.c.l.b16 %v962
    %v982 = vunpack.c.h.b16 %v962
    %v983 = vunpack.c.l.b16 %v963
    %v984 = vpack.c.b16 %v975, %v972
    %v985 = vpack.c.b16 %v976, %v973
    %v986 = vpack.c.b16 %v977, %v974
    %v987 = vpack.c.b16 %v981, %v978
    %v988 = vpack.c.b16 %v982, %v979
    %v989 = vpack.c.b16 %v983, %v980
    %v997 = vsel %vm215, %v955, 0
    %999 = vmatpush.bf16.msra.mxu0 0
    %1000 = vmatpush.bf16.msra.mxu0 0
    %1001 = vmatpush.bf16.msra.mxu0 0
    %1002 = vmatpush.bf16.msra.mxu0 0
    %1003 = vmatpush.bf16.msra.mxu0 0
    %1004 = vmatpush.bf16.msra.mxu0 0
    %1005 = vmatpush.bf16.msra.mxu0 %v987
    %1006 = vmatpush.bf16.msra.mxu0 %v984
    %1007 = vmatmul.bf16.gmra.mxu0 %v997
    %v1008 = vpop.f32.mrf.mxu0
    %v1009 = vadd.f32 0.0, %v1008
    %v1010 = vpop.f32.mrf.mxu0
    %1011 = vdwg.mxu0
    %1012 = vmatpush.bf16.msra.mxu0 0
    %1013 = vmatpush.bf16.msra.mxu0 0
    %1014 = vmatpush.bf16.msra.mxu0 0
    %1015 = vmatpush.bf16.msra.mxu0 0
    %1016 = vmatpush.bf16.msra.mxu0 0
    %1017 = vmatpush.bf16.msra.mxu0 0
    %1018 = vmatpush.bf16.msra.mxu0 %v988
    %1019 = vmatpush.bf16.msra.mxu0 %v985
    %1020 = vmatmul.bf16.gmra.mxu0 %v997
    %v1021 = vpop.f32.mrf.mxu0
    %v1022 = vadd.f32 0.0, %v1021
    %v1023 = vpop.f32.mrf.mxu0
    %1024 = vdwg.mxu0
    %1025 = vmatpush.bf16.msra.mxu0 0
    %1026 = vmatpush.bf16.msra.mxu0 0
    %1027 = vmatpush.bf16.msra.mxu0 0
    %1028 = vmatpush.bf16.msra.mxu0 0
    %1029 = vmatpush.bf16.msra.mxu0 0
    %1030 = vmatpush.bf16.msra.mxu0 0
    %1031 = vmatpush.bf16.msra.mxu0 %v989
    %1032 = vmatpush.bf16.msra.mxu0 %v986
    %1033 = vmatmul.bf16.gmra.mxu0 %v997
    %v1034 = vpop.f32.mrf.mxu0
    %v1035 = vadd.f32 0.0, %v1034
    %v1036 = vpop.f32.mrf.mxu0
    %1037 = vdwg.mxu0
    %v1041 = vrot.slane %v1009, 6
    %v1042 = vrot.slane %v1022, 6
    %v1043 = vrot.slane %v1035, 6
    %v1047 = vadd.f32 %v952, %v1041
    %v1048 = vadd.f32 %v953, %v1042
    %v1049 = vadd.f32 %v954, %v1043
    %v1050 = vpack.c.bf16 %v951, %v951
    %v1051 = vld [vmem:[#allocation4] sm:$0xff]
    %v1052 = vld [vmem:[#allocation4 + $0x8] sm:$0xf]
    %v1053 = vld [vmem:[#allocation4 + $0xc] sm:$0xff]
    %v1054 = vld [vmem:[#allocation4 + $0x14] sm:$0xf]
    %v1055 = vld [vmem:[#allocation4 + $0x18] sm:$0xff]
    %v1056 = vld [vmem:[#allocation4 + $0x20] sm:$0xf]
    %v1057 = vld [vmem:[#allocation4 + $0x24] sm:$0xff]
    %v1058 = vld [vmem:[#allocation4 + $0x2c] sm:$0xf]
    %v1059 = vld [vmem:[#allocation4 + $0x30] sm:$0xff]
    %v1060 = vld [vmem:[#allocation4 + $0x38] sm:$0xf]
    %v1061 = vld [vmem:[#allocation4 + $0x3c] sm:$0xff]
    %v1062 = vld [vmem:[#allocation4 + $0x44] sm:$0xf]
    %v1063 = vld [vmem:[#allocation4 + $0x48] sm:$0xff]
    %v1064 = vld [vmem:[#allocation4 + $0x50] sm:$0xf]
    %v1065 = vld [vmem:[#allocation4 + $0x54] sm:$0xff]
    %v1066 = vld [vmem:[#allocation4 + $0x5c] sm:$0xf]
    %v1067 = vld [vmem:[#allocation4 + $0x60] sm:$0xff]
    %v1068 = vld [vmem:[#allocation4 + $0x68] sm:$0xf]
    %v1069 = vld [vmem:[#allocation4 + $0x6c] sm:$0xff]
    %v1070 = vld [vmem:[#allocation4 + $0x74] sm:$0xf]
    %v1071 = vld [vmem:[#allocation4 + $0x78] sm:$0xff]
    %v1072 = vld [vmem:[#allocation4 + $0x80] sm:$0xf]
    %v1073 = vld [vmem:[#allocation4 + $0x84] sm:$0xff]
    %v1074 = vld [vmem:[#allocation4 + $0x8c] sm:$0xf]
    %v1099 = vunpack.c.l.b16 %v1051
    %v1100 = vunpack.c.h.b16 %v1051
    %v1101 = vunpack.c.l.b16 %v1052
    %v1102 = vunpack.c.l.b16 %v1053
    %v1103 = vunpack.c.h.b16 %v1053
    %v1104 = vunpack.c.l.b16 %v1054
    %v1105 = vunpack.c.l.b16 %v1055
    %v1106 = vunpack.c.h.b16 %v1055
    %v1107 = vunpack.c.l.b16 %v1056
    %v1108 = vunpack.c.l.b16 %v1057
    %v1109 = vunpack.c.h.b16 %v1057
    %v1110 = vunpack.c.l.b16 %v1058
    %v1111 = vunpack.c.l.b16 %v1059
    %v1112 = vunpack.c.h.b16 %v1059
    %v1113 = vunpack.c.l.b16 %v1060
    %v1114 = vunpack.c.l.b16 %v1061
    %v1115 = vunpack.c.h.b16 %v1061
    %v1116 = vunpack.c.l.b16 %v1062
    %v1117 = vunpack.c.l.b16 %v1063
    %v1118 = vunpack.c.h.b16 %v1063
    %v1119 = vunpack.c.l.b16 %v1064
    %v1120 = vunpack.c.l.b16 %v1065
    %v1121 = vunpack.c.h.b16 %v1065
    %v1122 = vunpack.c.l.b16 %v1066
    %v1123 = vunpack.c.l.b16 %v1067
    %v1124 = vunpack.c.h.b16 %v1067
    %v1125 = vunpack.c.l.b16 %v1068
    %v1126 = vunpack.c.l.b16 %v1069
    %v1127 = vunpack.c.h.b16 %v1069
    %v1128 = vunpack.c.l.b16 %v1070
    %v1129 = vunpack.c.l.b16 %v1071
    %v1130 = vunpack.c.h.b16 %v1071
    %v1131 = vunpack.c.l.b16 %v1072
    %v1132 = vunpack.c.l.b16 %v1073
    %v1133 = vunpack.c.h.b16 %v1073
    %v1134 = vunpack.c.l.b16 %v1074
    %v1135 = vpack.c.b16 %v1102, %v1099
    %v1136 = vpack.c.b16 %v1103, %v1100
    %v1137 = vpack.c.b16 %v1104, %v1101
    %v1138 = vpack.c.b16 %v1108, %v1105
    %v1139 = vpack.c.b16 %v1109, %v1106
    %v1140 = vpack.c.b16 %v1110, %v1107
    %v1141 = vpack.c.b16 %v1114, %v1111
    %v1142 = vpack.c.b16 %v1115, %v1112
    %v1143 = vpack.c.b16 %v1116, %v1113
    %v1144 = vpack.c.b16 %v1120, %v1117
    %v1145 = vpack.c.b16 %v1121, %v1118
    %v1146 = vpack.c.b16 %v1122, %v1119
    %v1147 = vpack.c.b16 %v1126, %v1123
    %v1148 = vpack.c.b16 %v1127, %v1124
    %v1149 = vpack.c.b16 %v1128, %v1125
    %v1150 = vpack.c.b16 %v1132, %v1129
    %v1151 = vpack.c.b16 %v1133, %v1130
    %v1152 = vpack.c.b16 %v1134, %v1131
    %v1172 = vsel %vm491, %v1050, 0
    %1174 = vmatpush.bf16.msra.mxu0 0
    %1175 = vmatpush.bf16.msra.mxu0 0
    %1176 = vmatpush.bf16.msra.mxu0 %v1150
    %1177 = vmatpush.bf16.msra.mxu0 %v1147
    %1178 = vmatpush.bf16.msra.mxu0 %v1144
    %1179 = vmatpush.bf16.msra.mxu0 %v1141
    %1180 = vmatpush.bf16.msra.mxu0 %v1138
    %1181 = vmatpush.bf16.msra.mxu0 %v1135
    %1182 = vmatmul.bf16.gmra.mxu0 %v1172
    %v1183 = vpop.f32.mrf.mxu0
    %v1184 = vadd.f32 %v269, %v1183
    %v1185 = vpop.f32.mrf.mxu0
    %1186 = vdwg.mxu0
    %1187 = vmatpush.bf16.msra.mxu0 0
    %1188 = vmatpush.bf16.msra.mxu0 0
    %1189 = vmatpush.bf16.msra.mxu0 %v1151
    %1190 = vmatpush.bf16.msra.mxu0 %v1148
    %1191 = vmatpush.bf16.msra.mxu0 %v1145
    %1192 = vmatpush.bf16.msra.mxu0 %v1142
    %1193 = vmatpush.bf16.msra.mxu0 %v1139
    %1194 = vmatpush.bf16.msra.mxu0 %v1136
    %1195 = vmatmul.bf16.gmra.mxu0 %v1172
    %v1196 = vpop.f32.mrf.mxu0
    %v1197 = vadd.f32 %v270, %v1196
    %v1198 = vpop.f32.mrf.mxu0
    %1199 = vdwg.mxu0
    %1200 = vmatpush.bf16.msra.mxu0 0
    %1201 = vmatpush.bf16.msra.mxu0 0
    %1202 = vmatpush.bf16.msra.mxu0 %v1152
    %1203 = vmatpush.bf16.msra.mxu0 %v1149
    %1204 = vmatpush.bf16.msra.mxu0 %v1146
    %1205 = vmatpush.bf16.msra.mxu0 %v1143
    %1206 = vmatpush.bf16.msra.mxu0 %v1140
    %1207 = vmatpush.bf16.msra.mxu0 %v1137
    %1208 = vmatmul.bf16.gmra.mxu0 %v1172
    %v1209 = vpop.f32.mrf.mxu0
    %v1210 = vadd.f32 %v271, %v1209
    %v1211 = vpop.f32.mrf.mxu0
    %1212 = vdwg.mxu0
    %v1214 = vrot.slane %v1184, 6
    %v1216 = vadd.f32 %v1047, %v1214
    %v1217 = vxor.u32 %v1216, 2147483648
    %v1218 = vmul.f32 %v1217, 1.442695
    %v1219 = vpow.pop %v1218
    %v1220 = vadd.f32 %v1219, 1.0
    %v1221 = vrcp.pop %v1220
    %v1222 = vmul.f32 %v1220, %v1221
    %v1223 = vsub.f32 1.0, %v1222
    %v1224 = vmul.f32 %v1221, %v1223
    %v1225 = vadd.f32 %v1221, %v1224
    %vm1226 = vweird.f32 %v1220
    %vm1227 = vweird.f32 %v1221
    %vm1228 = vmor %vm1226, %vm1227
    %v1229 = vsel %vm1228, %v1221, %v1225
    %v1230 = vand.u32 2147483647, %v1220
    %vm1231 = vcmp.eq.f32.partialorder %v1230, 8.507059e+37
    %v1232 = vand.u32 %v1220, 2147483648
    %v1233 = vor.u32 1.1754944e-38, %v1232
    %v1234 = vsel %vm1231, %v1233, %v1229
    %v1235 = vmul.f32 1.0, %v1234
    %v1237 = vrot.slane %v1197, 6
    %v1239 = vadd.f32 %v1048, %v1237
    %v1240 = vxor.u32 %v1239, 2147483648
    %v1241 = vmul.f32 %v1240, 1.442695
    %v1242 = vpow.pop %v1241
    %v1243 = vadd.f32 %v1242, 1.0
    %v1244 = vrcp.pop %v1243
    %v1245 = vmul.f32 %v1243, %v1244
    %v1246 = vsub.f32 1.0, %v1245
    %v1247 = vmul.f32 %v1244, %v1246
    %v1248 = vadd.f32 %v1244, %v1247
    %vm1249 = vweird.f32 %v1243
    %vm1250 = vweird.f32 %v1244
    %vm1251 = vmor %vm1249, %vm1250
    %v1252 = vsel %vm1251, %v1244, %v1248
    %v1253 = vand.u32 2147483647, %v1243
    %vm1254 = vcmp.eq.f32.partialorder %v1253, 8.507059e+37
    %v1255 = vand.u32 %v1243, 2147483648
    %v1256 = vor.u32 1.1754944e-38, %v1255
    %v1257 = vsel %vm1254, %v1256, %v1252
    %v1258 = vmul.f32 1.0, %v1257
    %v1260 = vrot.slane %v1210, 6
    %1261 = vrot.lane.b32.xlu0 %v1237, 64
    %v1262 = vpop.permute.xlu0 %1261
    %1263 = vrot.lane.b32.xlu0 %v1260, 64
    %v1264 = vpop.permute.xlu0 %1263
    %v1265 = vsel %vm580, %v1262, %v1264
    %v1267 = vmul.f32 %v1235, %v1265
    %1269 = vrot.lane.b32.xlu0 %v1267, 64
    %v1270 = vpop.permute.xlu0 %1269
    %v1272 = vadd.f32 %v1048, %v1270
    %v1273 = vadd.f32 %v1049, %v1270
    %v1274 = vtanh.pop %v1272
    %v1275 = vtanh.pop %v1273
    %v1278 = vrot.slane %v1274, 2
    %v1279 = vrot.slane %v1275, 2
    %1280 = vrot.lane.b32.xlu0 %v1278, 64
    %v1281 = vpop.permute.xlu0 %1280
    %1282 = vrot.lane.b32.xlu0 %v1279, 64
    %v1283 = vpop.permute.xlu0 %1282
    %v1284 = vsel %vm580, %v1281, %v1283
    %v1286 = vsub.f32 %v951, %v1284
    %v1288 = vrot.slane %v1286, 6
    %1289 = vrot.lane.b32.xlu0 %v1288, 96
    %v1290 = vpop.permute.xlu0 %1289
    %v1292 = vmul.f32 %v1235, %v1290
    %v1293 = vmul.f32 %v1258, %v1290
    %1296 = vrot.lane.b32.xlu0 %v1292, 96
    %v1297 = vpop.permute.xlu0 %1296
    %1298 = vrot.lane.b32.xlu0 %v1293, 96
    %v1299 = vpop.permute.xlu0 %1298
    %v1300 = vsel %vm491, %v1297, %v1299
    %v1303 = vadd.f32 %v1274, %v1300
    %v1304 = vadd.f32 %v1275, %v1299
    %1307 = vrot.lane.b32.xlu0 %v1303, 64
    %v1308 = vpop.permute.xlu0 %1307
    %1309 = vrot.lane.b32.xlu0 %v1304, 64
    %v1310 = vpop.permute.xlu0 %1309
    %v1311 = vsel %vm580, %v1308, %v1310
    %vm1313 = vcmask 781314
    %1314 = vst.msk [vmem:[#allocation7 - $0x2] sm:$0xc] %vm1313, %v1311
    %v1315 = vmul.f32 %v1303, %v1303
    %v1317 = vrot.slane %v1315, 2
    %1318 = vrot.lane.b32.xlu0 %v1317, 32
    %v1319 = vpop.permute.xlu0 %1318
    %v1320 = vsel %vm215, %v1319, 0
    %1322 = vmatpush.msra.mxu0 0.0
    %1323 = vmatpush.msra.mxu0 0.0
    %1324 = vmatpush.msra.mxu0 0.0
    %1325 = vmatpush.msra.mxu0 0.0
    %1326 = vmatpush.msra.mxu0 0.0
    %1327 = vmatpush.msra.mxu0 0.0
    %1328 = vmatpush.msra.mxu0 0.0
    %1329 = vmatpush.msra.mxu0 0.0
    %1330 = vmatpush.msra.mxu0 0.0
    %1331 = vmatpush.msra.mxu0 0.0
    %1332 = vmatpush.msra.mxu0 0.0
    %1333 = vmatpush.msra.mxu0 0.0
    %1334 = vmatpush.msra.mxu0 %v278
    %1335 = vmatpush.msra.mxu0 %v277
    %1336 = vmatpush.msra.mxu0 %v276
    %1337 = vmatpush.msra.mxu0 %v275
    %1338 = vmatmul.f32.gmra.mxu0 %v1320
    %v1339 = vpop.f32.mrf.mxu0
    %v1340 = vadd.f32 0.0, %v1339
    %1341 = vdwg.mxu0
    %1342 = vrot.lane.b32.xlu0 %v1317, 64
    %v1343 = vpop.permute.xlu0 %1342
    %v1344 = vsel %vm215, %v1343, 0
    %1346 = vmatpush.msra.mxu0 0.0
    %1347 = vmatpush.msra.mxu0 0.0
    %1348 = vmatpush.msra.mxu0 0.0
    %1349 = vmatpush.msra.mxu0 0.0
    %1350 = vmatpush.msra.mxu0 0.0
    %1351 = vmatpush.msra.mxu0 0.0
    %1352 = vmatpush.msra.mxu0 0.0
    %1353 = vmatpush.msra.mxu0 0.0
    %1354 = vmatpush.msra.mxu0 0.0
    %1355 = vmatpush.msra.mxu0 0.0
    %1356 = vmatpush.msra.mxu0 0.0
    %1357 = vmatpush.msra.mxu0 0.0
    %1358 = vmatpush.msra.mxu0 %v278
    %1359 = vmatpush.msra.mxu0 %v277
    %1360 = vmatpush.msra.mxu0 %v276
    %1361 = vmatpush.msra.mxu0 %v275
    %1362 = vmatmul.f32.gmra.mxu0 %v1344
    %v1363 = vpop.f32.mrf.mxu0
    %v1364 = vadd.f32 0.0, %v1363
    %1365 = vdwg.mxu0
    %v1366 = vrsqrt.pop %v1340
    %v1367 = vmul.f32 %v1366, %v1340
    %v1368 = vmul.f32 %v1367, %v1366
    %v1369 = vmul.f32 0.5, %v1368
    %v1370 = vsub.f32 1.5, %v1369
    %v1371 = vmul.f32 %v1366, %v1370
    %vm1372 = vweird.f32 %v1340
    %vm1373 = vweird.f32 %v1366
    %vm1374 = vmor %vm1372, %vm1373
    %v1375 = vsel %vm1374, %v1366, %v1371
    %v1377 = vrot.slane %v1375, 6
    %1378 = vrot.lane.b32.xlu0 %v1377, 96
    %v1379 = vpop.permute.xlu0 %1378
    %v1381 = vmul.f32 %v1303, %v1379
    %vm1382 = vcmp.gt.f32.partialorder %v1381, 0.0
    %v1383 = vmul.f32 %v1381, 1.442695
    %v1384 = vpow.pop %v1383
    %v1385 = vsub.f32 %v1384, 1.0
    %v1386 = vsel %vm1382, %v1381, %v1385
    %v1387 = vrsqrt.pop %v1364
    %v1388 = vmul.f32 %v1387, %v1364
    %v1389 = vmul.f32 %v1388, %v1387
    %v1390 = vmul.f32 0.5, %v1389
    %v1391 = vsub.f32 1.5, %v1390
    %v1392 = vmul.f32 %v1387, %v1391
    %vm1393 = vweird.f32 %v1364
    %vm1394 = vweird.f32 %v1387
    %vm1395 = vmor %vm1393, %vm1394
    %v1396 = vsel %vm1395, %v1387, %v1392
    %v1398 = vrot.slane %v1396, 6
    %1399 = vrot.lane.b32.xlu0 %v1398, 64
    %v1400 = vpop.permute.xlu0 %1399
    %v1402 = vmul.f32 %v1303, %v1400
    %v1403 = vld [vmem:[#allocation8] sm:$0xff]
    %v1404 = vld [vmem:[#allocation8 + $0x8] sm:$0xff]
    %v1405 = vld [vmem:[#allocation8 + $0x10] sm:$0xff]
    %v1406 = vld [vmem:[#allocation8 + $0x18] sm:$0xff]
    %v1407 = vld [vmem:[#allocation8 + $0x20] sm:$0xff]
    %v1408 = vld [vmem:[#allocation8 + $0x28] sm:$0xff]
    %v1409 = vld [vmem:[#allocation8 + $0x30] sm:$0xff]
    %v1410 = vld [vmem:[#allocation8 + $0x38] sm:$0xff]
    %v1411 = vperm.slane %v1304, 2
    %v1412 = vlaneseq
    %v1413 = vshrl.u32 %v1412, 7
    %1415 = vset.pattern.permute.xlu0 %v1413
    %1416 = vperm.xlu0 %1415, %v1411
    %v1417 = vpop.permute.xlu0 %1416
    %v1418 = vlaneseq
    %v1419 = vshrl.u32 %v1418, 7
    %v1420 = vadd.s32 %v1419, 8
    %1421 = vset.pattern.permute.xlu0 %v1420
    %1422 = vperm.xlu0 %1421, %v1411
    %v1423 = vpop.permute.xlu0 %1422
    %v1424 = vlaneseq
    %v1425 = vshrl.u32 %v1424, 7
    %v1426 = vadd.s32 %v1425, 16
    %1427 = vset.pattern.permute.xlu0 %v1426
    %1428 = vperm.xlu0 %1427, %v1411
    %v1429 = vpop.permute.xlu0 %1428
    %v1430 = vlaneseq
    %v1431 = vshrl.u32 %v1430, 7
    %v1432 = vadd.s32 %v1431, 24
    %1433 = vset.pattern.permute.xlu0 %v1432
    %1434 = vperm.xlu0 %1433, %v1411
    %v1435 = vpop.permute.xlu0 %1434
    %v1436 = vperm.slane %v1304, 3
    %v1437 = vlaneseq
    %v1438 = vshrl.u32 %v1437, 7
    %1440 = vset.pattern.permute.xlu0 %v1438
    %1441 = vperm.xlu0 %1440, %v1436
    %v1442 = vpop.permute.xlu0 %1441
    %v1443 = vlaneseq
    %v1444 = vshrl.u32 %v1443, 7
    %v1445 = vadd.s32 %v1444, 8
    %1446 = vset.pattern.permute.xlu0 %v1445
    %1447 = vperm.xlu0 %1446, %v1436
    %v1448 = vpop.permute.xlu0 %1447
    %v1449 = vlaneseq
    %v1450 = vshrl.u32 %v1449, 7
    %v1451 = vadd.s32 %v1450, 16
    %1452 = vset.pattern.permute.xlu0 %v1451
    %1453 = vperm.xlu0 %1452, %v1436
    %v1454 = vpop.permute.xlu0 %1453
    %v1455 = vlaneseq
    %v1456 = vshrl.u32 %v1455, 7
    %v1457 = vadd.s32 %v1456, 24
    %1458 = vset.pattern.permute.xlu0 %v1457
    %1459 = vperm.xlu0 %1458, %v1436
    %v1460 = vpop.permute.xlu0 %1459
    %1462 = vst [vmem:[#allocation1] sm:$0xff] %v1386
    %s1463 = scalar_lea.vmem [#allocation1], 2
    %v1464 = vld [vmem:[%s1463] ss:$9 sm:$0xff]
    %s1465 = scalar_lea.vmem [#allocation1], 3
    %v1466 = vld [vmem:[%s1465] ss:$9 sm:$0xff]
    %v1467 = vperm.slane %v1464, 0
    %v1468 = vperm.slane %v1466, 0
    %v1471 = vmul.f32 %v1417, %v1467
    %v1472 = vmul.f32 %v1423, %v1467
    %v1473 = vmul.f32 %v1429, %v1467
    %v1474 = vmul.f32 %v1435, %v1467
    %v1475 = vmul.f32 %v1442, %v1468
    %v1476 = vmul.f32 %v1448, %v1468
    %v1477 = vmul.f32 %v1454, %v1468
    %v1478 = vmul.f32 %v1460, %v1468
    %v1479 = vmul.f32 %v1471, %v790
    %v1480 = vmul.f32 %v1472, %v792
    %v1481 = vmul.f32 %v1473, %v794
    %v1482 = vmul.f32 %v1474, %v796
    %v1483 = vmul.f32 %v1475, %v790
    %v1484 = vmul.f32 %v1476, %v792
    %v1485 = vmul.f32 %v1477, %v794
    %v1486 = vmul.f32 %v1478, %v796
    %1495 = vrot.lane.b32.xlu0 %v1479, 32
    %v1496 = vpop.permute.xlu0 %1495
    %1497 = vrot.lane.b32.xlu0 %v1480, 32
    %v1498 = vpop.permute.xlu0 %1497
    %1499 = vrot.lane.b32.xlu0 %v1481, 32
    %v1500 = vpop.permute.xlu0 %1499
    %1501 = vrot.lane.b32.xlu0 %v1482, 32
    %v1502 = vpop.permute.xlu0 %1501
    %1503 = vrot.lane.b32.xlu0 %v1483, 32
    %v1504 = vpop.permute.xlu0 %1503
    %1505 = vrot.lane.b32.xlu0 %v1484, 32
    %v1506 = vpop.permute.xlu0 %1505
    %1507 = vrot.lane.b32.xlu0 %v1485, 32
    %v1508 = vpop.permute.xlu0 %1507
    %1509 = vrot.lane.b32.xlu0 %v1486, 32
    %v1510 = vpop.permute.xlu0 %1509
    %v1519 = vadd.f32 %v1403, %v1496
    %v1520 = vadd.f32 %v1404, %v1498
    %v1521 = vadd.f32 %v1405, %v1500
    %v1522 = vadd.f32 %v1406, %v1502
    %v1523 = vadd.f32 %v1407, %v1504
    %v1524 = vadd.f32 %v1408, %v1506
    %v1525 = vadd.f32 %v1409, %v1508
    %v1526 = vadd.f32 %v1410, %v1510
    %1527 = vst.msk [vmem:[#allocation8] sm:$0xff] %vm215, %v1519
    %1528 = vst.msk [vmem:[#allocation8 + $0x8] sm:$0xff] %vm215, %v1520
    %1529 = vst.msk [vmem:[#allocation8 + $0x10] sm:$0xff] %vm215, %v1521
    %1530 = vst.msk [vmem:[#allocation8 + $0x18] sm:$0xff] %vm215, %v1522
    %1531 = vst.msk [vmem:[#allocation8 + $0x20] sm:$0xff] %vm215, %v1523
    %1532 = vst.msk [vmem:[#allocation8 + $0x28] sm:$0xff] %vm215, %v1524
    %1533 = vst.msk [vmem:[#allocation8 + $0x30] sm:$0xff] %vm215, %v1525
    %1534 = vst.msk [vmem:[#allocation8 + $0x38] sm:$0xff] %vm215, %v1526
    %v1535 = vld [vmem:[#allocation8] sm:$0xff]
    %v1536 = vld [vmem:[#allocation8 + $0x8] sm:$0xff]
    %v1537 = vld [vmem:[#allocation8 + $0x10] sm:$0xff]
    %v1538 = vld [vmem:[#allocation8 + $0x18] sm:$0xff]
    %v1539 = vld [vmem:[#allocation8 + $0x20] sm:$0xff]
    %v1540 = vld [vmem:[#allocation8 + $0x28] sm:$0xff]
    %v1541 = vld [vmem:[#allocation8 + $0x30] sm:$0xff]
    %v1542 = vld [vmem:[#allocation8 + $0x38] sm:$0xff]
    %1544 = vst [vmem:[#allocation1] sm:$0xff] %v1402
    %s1545 = scalar_lea.vmem [#allocation1], 2
    %v1546 = vld [vmem:[%s1545] ss:$9 sm:$0xff]
    %s1547 = scalar_lea.vmem [#allocation1], 3
    %v1548 = vld [vmem:[%s1547] ss:$9 sm:$0xff]
    %v1549 = vperm.slane %v1546, 0
    %v1550 = vperm.slane %v1548, 0
    %1551 = vrot.lane.b32.xlu0 %v1549, 64
    %v1552 = vpop.permute.xlu0 %1551
    %1553 = vrot.lane.b32.xlu0 %v1550, 64
    %v1554 = vpop.permute.xlu0 %1553
    %v1557 = vmul.f32 %v1535, %v1552
    %v1558 = vmul.f32 %v1536, %v1552
    %v1559 = vmul.f32 %v1537, %v1552
    %v1560 = vmul.f32 %v1538, %v1552
    %v1561 = vmul.f32 %v1539, %v1554
    %v1562 = vmul.f32 %v1540, %v1554
    %v1563 = vmul.f32 %v1541, %v1554
    %v1564 = vmul.f32 %v1542, %v1554
    %v1565 = vsel %vm215, %v1557, 0.0
    %1566 = vadd.xlane.f32.xlu0 %v1565
    %v1567 = vpop.xlane.xlu0 %1566
    %v1568 = vsel %vm215, %v1558, 0.0
    %1569 = vadd.xlane.f32.xlu0 %v1568
    %v1570 = vpop.xlane.xlu0 %1569
    %v1571 = vsel %vm215, %v1559, 0.0
    %1572 = vadd.xlane.f32.xlu0 %v1571
    %v1573 = vpop.xlane.xlu0 %1572
    %v1574 = vsel %vm215, %v1560, 0.0
    %1575 = vadd.xlane.f32.xlu0 %v1574
    %v1576 = vpop.xlane.xlu0 %1575
    %v1577 = vsel %vm215, %v1561, 0.0
    %1578 = vadd.xlane.f32.xlu0 %v1577
    %v1579 = vpop.xlane.xlu0 %1578
    %v1580 = vsel %vm215, %v1562, 0.0
    %1581 = vadd.xlane.f32.xlu0 %v1580
    %v1582 = vpop.xlane.xlu0 %1581
    %v1583 = vsel %vm215, %v1563, 0.0
    %1584 = vadd.xlane.f32.xlu0 %v1583
    %v1585 = vpop.xlane.xlu0 %1584
    %v1586 = vsel %vm215, %v1564, 0.0
    %1587 = vadd.xlane.f32.xlu0 %v1586
    %v1588 = vpop.xlane.xlu0 %1587
    %v1597 = vperm.slane %v1567, %v916
    %v1598 = vperm.slane %v1570, %v918
    %v1599 = vsel %vm920, %v1598, %v1597
    %v1600 = vperm.slane %v1573, %v922
    %v1601 = vsel %vm924, %v1600, %v1599
    %v1602 = vperm.slane %v1576, %v926
    %v1603 = vsel %vm928, %v1602, %v1601
    %v1604 = vperm.slane %v1579, %v916
    %v1605 = vperm.slane %v1582, %v918
    %v1606 = vsel %vm920, %v1605, %v1604
    %v1607 = vperm.slane %v1585, %v922
    %v1608 = vsel %vm924, %v1607, %v1606
    %v1609 = vperm.slane %v1588, %v926
    %v1610 = vsel %vm928, %v1609, %v1608
    %v1611 = vsel %vm937, %v1610, %v1603
    %1613 = vst.msk [vmem:[#allocation9] sm:$0x3] %vm940, %v1611
    %1614 = vrot.lane.b32.xlu0 %v1386, 32
    %v1615 = vpop.permute.xlu0 %1614
    %vm1617 = vcmask 257026
    %1618 = vst.msk [vmem:[#allocation17 - $0x2] sm:$0xc] %vm1617, %v1615
    %1619 = vrot.lane.b32.xlu0 %v1402, 64
    %v1620 = vpop.permute.xlu0 %1619
    %1622 = vst.msk [vmem:[#allocation19 - $0x2] sm:$0xc] %vm1617, %v1620
    %v1623 = vld [vmem:[#allocation9] sm:$0x3]
    %v1624 = vld [vmem:[#allocation7] sm:$0x3]
    %v1625 = vld [vmem:[#allocation6] sm:$0x30]
    %v1626 = vld [vmem:[#allocation6 + $0x8] sm:$0x30]
    %v1627 = vld [vmem:[#allocation6 + $0x10] sm:$0x30]
    %v1628 = vpack.c.bf16 %v1623, %v1623
    %v1629 = vld [vmem:[#allocation3] sm:$0xff]
    %v1630 = vld [vmem:[#allocation3 + $0x8] sm:$0xf]
    %v1631 = vld [vmem:[#allocation3 + $0xc] sm:$0xff]
    %v1632 = vld [vmem:[#allocation3 + $0x14] sm:$0xf]
    %v1633 = vld [vmem:[#allocation3 + $0x18] sm:$0xff]
    %v1634 = vld [vmem:[#allocation3 + $0x20] sm:$0xf]
    %v1635 = vld [vmem:[#allocation3 + $0x24] sm:$0xff]
    %v1636 = vld [vmem:[#allocation3 + $0x2c] sm:$0xf]
    %v1645 = vunpack.c.l.b16 %v1629
    %v1646 = vunpack.c.h.b16 %v1629
    %v1647 = vunpack.c.l.b16 %v1630
    %v1648 = vunpack.c.l.b16 %v1631
    %v1649 = vunpack.c.h.b16 %v1631
    %v1650 = vunpack.c.l.b16 %v1632
    %v1651 = vunpack.c.l.b16 %v1633
    %v1652 = vunpack.c.h.b16 %v1633
    %v1653 = vunpack.c.l.b16 %v1634
    %v1654 = vunpack.c.l.b16 %v1635
    %v1655 = vunpack.c.h.b16 %v1635
    %v1656 = vunpack.c.l.b16 %v1636
    %v1657 = vpack.c.b16 %v1648, %v1645
    %v1658 = vpack.c.b16 %v1649, %v1646
    %v1659 = vpack.c.b16 %v1650, %v1647
    %v1660 = vpack.c.b16 %v1654, %v1651
    %v1661 = vpack.c.b16 %v1655, %v1652
    %v1662 = vpack.c.b16 %v1656, %v1653
    %v1670 = vsel %vm215, %v1628, 0
    %1672 = vmatpush.bf16.msra.mxu0 0
    %1673 = vmatpush.bf16.msra.mxu0 0
    %1674 = vmatpush.bf16.msra.mxu0 0
    %1675 = vmatpush.bf16.msra.mxu0 0
    %1676 = vmatpush.bf16.msra.mxu0 0
    %1677 = vmatpush.bf16.msra.mxu0 0
    %1678 = vmatpush.bf16.msra.mxu0 %v1660
    %1679 = vmatpush.bf16.msra.mxu0 %v1657
    %1680 = vmatmul.bf16.gmra.mxu0 %v1670
    %v1681 = vpop.f32.mrf.mxu0
    %v1682 = vadd.f32 0.0, %v1681
    %v1683 = vpop.f32.mrf.mxu0
    %1684 = vdwg.mxu0
    %1685 = vmatpush.bf16.msra.mxu0 0
    %1686 = vmatpush.bf16.msra.mxu0 0
    %1687 = vmatpush.bf16.msra.mxu0 0
    %1688 = vmatpush.bf16.msra.mxu0 0
    %1689 = vmatpush.bf16.msra.mxu0 0
    %1690 = vmatpush.bf16.msra.mxu0 0
    %1691 = vmatpush.bf16.msra.mxu0 %v1661
    %1692 = vmatpush.bf16.msra.mxu0 %v1658
    %1693 = vmatmul.bf16.gmra.mxu0 %v1670
    %v1694 = vpop.f32.mrf.mxu0
    %v1695 = vadd.f32 0.0, %v1694
    %v1696 = vpop.f32.mrf.mxu0
    %1697 = vdwg.mxu0
    %1698 = vmatpush.bf16.msra.mxu0 0
    %1699 = vmatpush.bf16.msra.mxu0 0
    %1700 = vmatpush.bf16.msra.mxu0 0
    %1701 = vmatpush.bf16.msra.mxu0 0
    %1702 = vmatpush.bf16.msra.mxu0 0
    %1703 = vmatpush.bf16.msra.mxu0 0
    %1704 = vmatpush.bf16.msra.mxu0 %v1662
    %1705 = vmatpush.bf16.msra.mxu0 %v1659
    %1706 = vmatmul.bf16.gmra.mxu0 %v1670
    %v1707 = vpop.f32.mrf.mxu0
    %v1708 = vadd.f32 0.0, %v1707
    %v1709 = vpop.f32.mrf.mxu0
    %1710 = vdwg.mxu0
    %v1714 = vrot.slane %v1682, 4
    %v1715 = vrot.slane %v1695, 4
    %v1716 = vrot.slane %v1708, 4
    %v1720 = vadd.f32 %v1625, %v1714
    %v1721 = vadd.f32 %v1626, %v1715
    %v1722 = vadd.f32 %v1627, %v1716
    %v1723 = vpack.c.bf16 %v1624, %v1624
    %v1724 = vld [vmem:[#allocation4] sm:$0xff]
    %v1725 = vld [vmem:[#allocation4 + $0x8] sm:$0xf]
    %v1726 = vld [vmem:[#allocation4 + $0xc] sm:$0xff]
    %v1727 = vld [vmem:[#allocation4 + $0x14] sm:$0xf]
    %v1728 = vld [vmem:[#allocation4 + $0x18] sm:$0xff]
    %v1729 = vld [vmem:[#allocation4 + $0x20] sm:$0xf]
    %v1730 = vld [vmem:[#allocation4 + $0x24] sm:$0xff]
    %v1731 = vld [vmem:[#allocation4 + $0x2c] sm:$0xf]
    %v1732 = vld [vmem:[#allocation4 + $0x30] sm:$0xff]
    %v1733 = vld [vmem:[#allocation4 + $0x38] sm:$0xf]
    %v1734 = vld [vmem:[#allocation4 + $0x3c] sm:$0xff]
    %v1735 = vld [vmem:[#allocation4 + $0x44] sm:$0xf]
    %v1736 = vld [vmem:[#allocation4 + $0x48] sm:$0xff]
    %v1737 = vld [vmem:[#allocation4 + $0x50] sm:$0xf]
    %v1738 = vld [vmem:[#allocation4 + $0x54] sm:$0xff]
    %v1739 = vld [vmem:[#allocation4 + $0x5c] sm:$0xf]
    %v1740 = vld [vmem:[#allocation4 + $0x60] sm:$0xff]
    %v1741 = vld [vmem:[#allocation4 + $0x68] sm:$0xf]
    %v1742 = vld [vmem:[#allocation4 + $0x6c] sm:$0xff]
    %v1743 = vld [vmem:[#allocation4 + $0x74] sm:$0xf]
    %v1744 = vld [vmem:[#allocation4 + $0x78] sm:$0xff]
    %v1745 = vld [vmem:[#allocation4 + $0x80] sm:$0xf]
    %v1746 = vld [vmem:[#allocation4 + $0x84] sm:$0xff]
    %v1747 = vld [vmem:[#allocation4 + $0x8c] sm:$0xf]
    %v1772 = vunpack.c.l.b16 %v1724
    %v1773 = vunpack.c.h.b16 %v1724
    %v1774 = vunpack.c.l.b16 %v1725
    %v1775 = vunpack.c.l.b16 %v1726
    %v1776 = vunpack.c.h.b16 %v1726
    %v1777 = vunpack.c.l.b16 %v1727
    %v1778 = vunpack.c.l.b16 %v1728
    %v1779 = vunpack.c.h.b16 %v1728
    %v1780 = vunpack.c.l.b16 %v1729
    %v1781 = vunpack.c.l.b16 %v1730
    %v1782 = vunpack.c.h.b16 %v1730
    %v1783 = vunpack.c.l.b16 %v1731
    %v1784 = vunpack.c.l.b16 %v1732
    %v1785 = vunpack.c.h.b16 %v1732
    %v1786 = vunpack.c.l.b16 %v1733
    %v1787 = vunpack.c.l.b16 %v1734
    %v1788 = vunpack.c.h.b16 %v1734
    %v1789 = vunpack.c.l.b16 %v1735
    %v1790 = vunpack.c.l.b16 %v1736
    %v1791 = vunpack.c.h.b16 %v1736
    %v1792 = vunpack.c.l.b16 %v1737
    %v1793 = vunpack.c.l.b16 %v1738
    %v1794 = vunpack.c.h.b16 %v1738
    %v1795 = vunpack.c.l.b16 %v1739
    %v1796 = vunpack.c.l.b16 %v1740
    %v1797 = vunpack.c.h.b16 %v1740
    %v1798 = vunpack.c.l.b16 %v1741
    %v1799 = vunpack.c.l.b16 %v1742
    %v1800 = vunpack.c.h.b16 %v1742
    %v1801 = vunpack.c.l.b16 %v1743
    %v1802 = vunpack.c.l.b16 %v1744
    %v1803 = vunpack.c.h.b16 %v1744
    %v1804 = vunpack.c.l.b16 %v1745
    %v1805 = vunpack.c.l.b16 %v1746
    %v1806 = vunpack.c.h.b16 %v1746
    %v1807 = vunpack.c.l.b16 %v1747
    %v1808 = vpack.c.b16 %v1775, %v1772
    %v1809 = vpack.c.b16 %v1776, %v1773
    %v1810 = vpack.c.b16 %v1777, %v1774
    %v1811 = vpack.c.b16 %v1781, %v1778
    %v1812 = vpack.c.b16 %v1782, %v1779
    %v1813 = vpack.c.b16 %v1783, %v1780
    %v1814 = vpack.c.b16 %v1787, %v1784
    %v1815 = vpack.c.b16 %v1788, %v1785
    %v1816 = vpack.c.b16 %v1789, %v1786
    %v1817 = vpack.c.b16 %v1793, %v1790
    %v1818 = vpack.c.b16 %v1794, %v1791
    %v1819 = vpack.c.b16 %v1795, %v1792
    %v1820 = vpack.c.b16 %v1799, %v1796
    %v1821 = vpack.c.b16 %v1800, %v1797
    %v1822 = vpack.c.b16 %v1801, %v1798
    %v1823 = vpack.c.b16 %v1805, %v1802
    %v1824 = vpack.c.b16 %v1806, %v1803
    %v1825 = vpack.c.b16 %v1807, %v1804
    %v1845 = vsel %vm491, %v1723, 0
    %1847 = vmatpush.bf16.msra.mxu0 0
    %1848 = vmatpush.bf16.msra.mxu0 0
    %1849 = vmatpush.bf16.msra.mxu0 %v1823
    %1850 = vmatpush.bf16.msra.mxu0 %v1820
    %1851 = vmatpush.bf16.msra.mxu0 %v1817
    %1852 = vmatpush.bf16.msra.mxu0 %v1814
    %1853 = vmatpush.bf16.msra.mxu0 %v1811
    %1854 = vmatpush.bf16.msra.mxu0 %v1808
    %1855 = vmatmul.bf16.gmra.mxu0 %v1845
    %v1856 = vpop.f32.mrf.mxu0
    %v1857 = vadd.f32 %v269, %v1856
    %v1858 = vpop.f32.mrf.mxu0
    %1859 = vdwg.mxu0
    %1860 = vmatpush.bf16.msra.mxu0 0
    %1861 = vmatpush.bf16.msra.mxu0 0
    %1862 = vmatpush.bf16.msra.mxu0 %v1824
    %1863 = vmatpush.bf16.msra.mxu0 %v1821
    %1864 = vmatpush.bf16.msra.mxu0 %v1818
    %1865 = vmatpush.bf16.msra.mxu0 %v1815
    %1866 = vmatpush.bf16.msra.mxu0 %v1812
    %1867 = vmatpush.bf16.msra.mxu0 %v1809
    %1868 = vmatmul.bf16.gmra.mxu0 %v1845
    %v1869 = vpop.f32.mrf.mxu0
    %v1870 = vadd.f32 %v270, %v1869
    %v1871 = vpop.f32.mrf.mxu0
    %1872 = vdwg.mxu0
    %1873 = vmatpush.bf16.msra.mxu0 0
    %1874 = vmatpush.bf16.msra.mxu0 0
    %1875 = vmatpush.bf16.msra.mxu0 %v1825
    %1876 = vmatpush.bf16.msra.mxu0 %v1822
    %1877 = vmatpush.bf16.msra.mxu0 %v1819
    %1878 = vmatpush.bf16.msra.mxu0 %v1816
    %1879 = vmatpush.bf16.msra.mxu0 %v1813
    %1880 = vmatpush.bf16.msra.mxu0 %v1810
    %1881 = vmatmul.bf16.gmra.mxu0 %v1845
    %v1882 = vpop.f32.mrf.mxu0
    %v1883 = vadd.f32 %v271, %v1882
    %v1884 = vpop.f32.mrf.mxu0
    %1885 = vdwg.mxu0
    %v1887 = vrot.slane %v1857, 4
    %v1889 = vadd.f32 %v1720, %v1887
    %v1890 = vxor.u32 %v1889, 2147483648
    %v1891 = vmul.f32 %v1890, 1.442695
    %v1892 = vpow.pop %v1891
    %v1893 = vadd.f32 %v1892, 1.0
    %v1894 = vrcp.pop %v1893
    %v1895 = vmul.f32 %v1893, %v1894
    %v1896 = vsub.f32 1.0, %v1895
    %v1897 = vmul.f32 %v1894, %v1896
    %v1898 = vadd.f32 %v1894, %v1897
    %vm1899 = vweird.f32 %v1893
    %vm1900 = vweird.f32 %v1894
    %vm1901 = vmor %vm1899, %vm1900
    %v1902 = vsel %vm1901, %v1894, %v1898
    %v1903 = vand.u32 2147483647, %v1893
    %vm1904 = vcmp.eq.f32.partialorder %v1903, 8.507059e+37
    %v1905 = vand.u32 %v1893, 2147483648
    %v1906 = vor.u32 1.1754944e-38, %v1905
    %v1907 = vsel %vm1904, %v1906, %v1902
    %v1908 = vmul.f32 1.0, %v1907
    %v1910 = vrot.slane %v1870, 4
    %v1912 = vadd.f32 %v1721, %v1910
    %v1913 = vxor.u32 %v1912, 2147483648
    %v1914 = vmul.f32 %v1913, 1.442695
    %v1915 = vpow.pop %v1914
    %v1916 = vadd.f32 %v1915, 1.0
    %v1917 = vrcp.pop %v1916
    %v1918 = vmul.f32 %v1916, %v1917
    %v1919 = vsub.f32 1.0, %v1918
    %v1920 = vmul.f32 %v1917, %v1919
    %v1921 = vadd.f32 %v1917, %v1920
    %vm1922 = vweird.f32 %v1916
    %vm1923 = vweird.f32 %v1917
    %vm1924 = vmor %vm1922, %vm1923
    %v1925 = vsel %vm1924, %v1917, %v1921
    %v1926 = vand.u32 2147483647, %v1916
    %vm1927 = vcmp.eq.f32.partialorder %v1926, 8.507059e+37
    %v1928 = vand.u32 %v1916, 2147483648
    %v1929 = vor.u32 1.1754944e-38, %v1928
    %v1930 = vsel %vm1927, %v1929, %v1925
    %v1931 = vmul.f32 1.0, %v1930
    %v1933 = vrot.slane %v1883, 4
    %1934 = vrot.lane.b32.xlu0 %v1910, 64
    %v1935 = vpop.permute.xlu0 %1934
    %1936 = vrot.lane.b32.xlu0 %v1933, 64
    %v1937 = vpop.permute.xlu0 %1936
    %v1938 = vsel %vm580, %v1935, %v1937
    %v1940 = vmul.f32 %v1908, %v1938
    %1942 = vrot.lane.b32.xlu0 %v1940, 64
    %v1943 = vpop.permute.xlu0 %1942
    %v1945 = vadd.f32 %v1721, %v1943
    %v1946 = vadd.f32 %v1722, %v1943
    %v1947 = vtanh.pop %v1945
    %v1948 = vtanh.pop %v1946
    %v1951 = vrot.slane %v1947, 4
    %v1952 = vrot.slane %v1948, 4
    %1953 = vrot.lane.b32.xlu0 %v1951, 64
    %v1954 = vpop.permute.xlu0 %1953
    %1955 = vrot.lane.b32.xlu0 %v1952, 64
    %v1956 = vpop.permute.xlu0 %1955
    %v1957 = vsel %vm580, %v1954, %v1956
    %v1959 = vsub.f32 %v1624, %v1957
    %v1961 = vrot.slane %v1959, 4
    %1962 = vrot.lane.b32.xlu0 %v1961, 96
    %v1963 = vpop.permute.xlu0 %1962
    %v1965 = vmul.f32 %v1908, %v1963
    %v1966 = vmul.f32 %v1931, %v1963
    %1969 = vrot.lane.b32.xlu0 %v1965, 96
    %v1970 = vpop.permute.xlu0 %1969
    %1971 = vrot.lane.b32.xlu0 %v1966, 96
    %v1972 = vpop.permute.xlu0 %1971
    %v1973 = vsel %vm491, %v1970, %v1972
    %v1976 = vadd.f32 %v1947, %v1973
    %v1977 = vadd.f32 %v1948, %v1972
    %1980 = vrot.lane.b32.xlu0 %v1976, 64
    %v1981 = vpop.permute.xlu0 %1980
    %1982 = vrot.lane.b32.xlu0 %v1977, 64
    %v1983 = vpop.permute.xlu0 %1982
    %v1984 = vsel %vm580, %v1981, %v1983
    %vm1986 = vcmask 783364
    %1987 = vst.msk [vmem:[#allocation7 - $0x4] sm:$0x30] %vm1986, %v1984
    %v1988 = vmul.f32 %v1976, %v1976
    %v1990 = vrot.slane %v1988, 4
    %1991 = vrot.lane.b32.xlu0 %v1990, 32
    %v1992 = vpop.permute.xlu0 %1991
    %v1993 = vsel %vm215, %v1992, 0
    %1995 = vmatpush.msra.mxu0 0.0
    %1996 = vmatpush.msra.mxu0 0.0
    %1997 = vmatpush.msra.mxu0 0.0
    %1998 = vmatpush.msra.mxu0 0.0
    %1999 = vmatpush.msra.mxu0 0.0
    %2000 = vmatpush.msra.mxu0 0.0
    %2001 = vmatpush.msra.mxu0 0.0
    %2002 = vmatpush.msra.mxu0 0.0
    %2003 = vmatpush.msra.mxu0 0.0
    %2004 = vmatpush.msra.mxu0 0.0
    %2005 = vmatpush.msra.mxu0 0.0
    %2006 = vmatpush.msra.mxu0 0.0
    %2007 = vmatpush.msra.mxu0 %v278
    %2008 = vmatpush.msra.mxu0 %v277
    %2009 = vmatpush.msra.mxu0 %v276
    %2010 = vmatpush.msra.mxu0 %v275
    %2011 = vmatmul.f32.gmra.mxu0 %v1993
    %v2012 = vpop.f32.mrf.mxu0
    %v2013 = vadd.f32 0.0, %v2012
    %2014 = vdwg.mxu0
    %2015 = vrot.lane.b32.xlu0 %v1990, 64
    %v2016 = vpop.permute.xlu0 %2015
    %v2017 = vsel %vm215, %v2016, 0
    %2019 = vmatpush.msra.mxu0 0.0
    %2020 = vmatpush.msra.mxu0 0.0
    %2021 = vmatpush.msra.mxu0 0.0
    %2022 = vmatpush.msra.mxu0 0.0
    %2023 = vmatpush.msra.mxu0 0.0
    %2024 = vmatpush.msra.mxu0 0.0
    %2025 = vmatpush.msra.mxu0 0.0
    %2026 = vmatpush.msra.mxu0 0.0
    %2027 = vmatpush.msra.mxu0 0.0
    %2028 = vmatpush.msra.mxu0 0.0
    %2029 = vmatpush.msra.mxu0 0.0
    %2030 = vmatpush.msra.mxu0 0.0
    %2031 = vmatpush.msra.mxu0 %v278
    %2032 = vmatpush.msra.mxu0 %v277
    %2033 = vmatpush.msra.mxu0 %v276
    %2034 = vmatpush.msra.mxu0 %v275
    %2035 = vmatmul.f32.gmra.mxu0 %v2017
    %v2036 = vpop.f32.mrf.mxu0
    %v2037 = vadd.f32 0.0, %v2036
    %2038 = vdwg.mxu0
    %v2039 = vrsqrt.pop %v2013
    %v2040 = vmul.f32 %v2039, %v2013
    %v2041 = vmul.f32 %v2040, %v2039
    %v2042 = vmul.f32 0.5, %v2041
    %v2043 = vsub.f32 1.5, %v2042
    %v2044 = vmul.f32 %v2039, %v2043
    %vm2045 = vweird.f32 %v2013
    %vm2046 = vweird.f32 %v2039
    %vm2047 = vmor %vm2045, %vm2046
    %v2048 = vsel %vm2047, %v2039, %v2044
    %v2050 = vrot.slane %v2048, 4
    %2051 = vrot.lane.b32.xlu0 %v2050, 96
    %v2052 = vpop.permute.xlu0 %2051
    %v2054 = vmul.f32 %v1976, %v2052
    %vm2055 = vcmp.gt.f32.partialorder %v2054, 0.0
    %v2056 = vmul.f32 %v2054, 1.442695
    %v2057 = vpow.pop %v2056
    %v2058 = vsub.f32 %v2057, 1.0
    %v2059 = vsel %vm2055, %v2054, %v2058
    %v2060 = vrsqrt.pop %v2037
    %v2061 = vmul.f32 %v2060, %v2037
    %v2062 = vmul.f32 %v2061, %v2060
    %v2063 = vmul.f32 0.5, %v2062
    %v2064 = vsub.f32 1.5, %v2063
    %v2065 = vmul.f32 %v2060, %v2064
    %vm2066 = vweird.f32 %v2037
    %vm2067 = vweird.f32 %v2060
    %vm2068 = vmor %vm2066, %vm2067
    %v2069 = vsel %vm2068, %v2060, %v2065
    %v2071 = vrot.slane %v2069, 4
    %2072 = vrot.lane.b32.xlu0 %v2071, 64
    %v2073 = vpop.permute.xlu0 %2072
    %v2075 = vmul.f32 %v1976, %v2073
    %v2076 = vld [vmem:[#allocation8] sm:$0xff]
    %v2077 = vld [vmem:[#allocation8 + $0x8] sm:$0xff]
    %v2078 = vld [vmem:[#allocation8 + $0x10] sm:$0xff]
    %v2079 = vld [vmem:[#allocation8 + $0x18] sm:$0xff]
    %v2080 = vld [vmem:[#allocation8 + $0x20] sm:$0xff]
    %v2081 = vld [vmem:[#allocation8 + $0x28] sm:$0xff]
    %v2082 = vld [vmem:[#allocation8 + $0x30] sm:$0xff]
    %v2083 = vld [vmem:[#allocation8 + $0x38] sm:$0xff]
    %v2084 = vperm.slane %v1977, 4
    %v2085 = vlaneseq
    %v2086 = vshrl.u32 %v2085, 7
    %2088 = vset.pattern.permute.xlu0 %v2086
    %2089 = vperm.xlu0 %2088, %v2084
    %v2090 = vpop.permute.xlu0 %2089
    %v2091 = vlaneseq
    %v2092 = vshrl.u32 %v2091, 7
    %v2093 = vadd.s32 %v2092, 8
    %2094 = vset.pattern.permute.xlu0 %v2093
    %2095 = vperm.xlu0 %2094, %v2084
    %v2096 = vpop.permute.xlu0 %2095
    %v2097 = vlaneseq
    %v2098 = vshrl.u32 %v2097, 7
    %v2099 = vadd.s32 %v2098, 16
    %2100 = vset.pattern.permute.xlu0 %v2099
    %2101 = vperm.xlu0 %2100, %v2084
    %v2102 = vpop.permute.xlu0 %2101
    %v2103 = vlaneseq
    %v2104 = vshrl.u32 %v2103, 7
    %v2105 = vadd.s32 %v2104, 24
    %2106 = vset.pattern.permute.xlu0 %v2105
    %2107 = vperm.xlu0 %2106, %v2084
    %v2108 = vpop.permute.xlu0 %2107
    %v2109 = vperm.slane %v1977, 5
    %v2110 = vlaneseq
    %v2111 = vshrl.u32 %v2110, 7
    %2113 = vset.pattern.permute.xlu0 %v2111
    %2114 = vperm.xlu0 %2113, %v2109
    %v2115 = vpop.permute.xlu0 %2114
    %v2116 = vlaneseq
    %v2117 = vshrl.u32 %v2116, 7
    %v2118 = vadd.s32 %v2117, 8
    %2119 = vset.pattern.permute.xlu0 %v2118
    %2120 = vperm.xlu0 %2119, %v2109
    %v2121 = vpop.permute.xlu0 %2120
    %v2122 = vlaneseq
    %v2123 = vshrl.u32 %v2122, 7
    %v2124 = vadd.s32 %v2123, 16
    %2125 = vset.pattern.permute.xlu0 %v2124
    %2126 = vperm.xlu0 %2125, %v2109
    %v2127 = vpop.permute.xlu0 %2126
    %v2128 = vlaneseq
    %v2129 = vshrl.u32 %v2128, 7
    %v2130 = vadd.s32 %v2129, 24
    %2131 = vset.pattern.permute.xlu0 %v2130
    %2132 = vperm.xlu0 %2131, %v2109
    %v2133 = vpop.permute.xlu0 %2132
    %2135 = vst [vmem:[#allocation1] sm:$0xff] %v2059
    %s2136 = scalar_lea.vmem [#allocation1], 4
    %v2137 = vld [vmem:[%s2136] ss:$9 sm:$0xff]
    %s2138 = scalar_lea.vmem [#allocation1], 5
    %v2139 = vld [vmem:[%s2138] ss:$9 sm:$0xff]
    %v2140 = vperm.slane %v2137, 0
    %v2141 = vperm.slane %v2139, 0
    %v2144 = vmul.f32 %v2090, %v2140
    %v2145 = vmul.f32 %v2096, %v2140
    %v2146 = vmul.f32 %v2102, %v2140
    %v2147 = vmul.f32 %v2108, %v2140
    %v2148 = vmul.f32 %v2115, %v2141
    %v2149 = vmul.f32 %v2121, %v2141
    %v2150 = vmul.f32 %v2127, %v2141
    %v2151 = vmul.f32 %v2133, %v2141
    %v2152 = vmul.f32 %v2144, %v790
    %v2153 = vmul.f32 %v2145, %v792
    %v2154 = vmul.f32 %v2146, %v794
    %v2155 = vmul.f32 %v2147, %v796
    %v2156 = vmul.f32 %v2148, %v790
    %v2157 = vmul.f32 %v2149, %v792
    %v2158 = vmul.f32 %v2150, %v794
    %v2159 = vmul.f32 %v2151, %v796
    %2168 = vrot.lane.b32.xlu0 %v2152, 32
    %v2169 = vpop.permute.xlu0 %2168
    %2170 = vrot.lane.b32.xlu0 %v2153, 32
    %v2171 = vpop.permute.xlu0 %2170
    %2172 = vrot.lane.b32.xlu0 %v2154, 32
    %v2173 = vpop.permute.xlu0 %2172
    %2174 = vrot.lane.b32.xlu0 %v2155, 32
    %v2175 = vpop.permute.xlu0 %2174
    %2176 = vrot.lane.b32.xlu0 %v2156, 32
    %v2177 = vpop.permute.xlu0 %2176
    %2178 = vrot.lane.b32.xlu0 %v2157, 32
    %v2179 = vpop.permute.xlu0 %2178
    %2180 = vrot.lane.b32.xlu0 %v2158, 32
    %v2181 = vpop.permute.xlu0 %2180
    %2182 = vrot.lane.b32.xlu0 %v2159, 32
    %v2183 = vpop.permute.xlu0 %2182
    %v2192 = vadd.f32 %v2076, %v2169
    %v2193 = vadd.f32 %v2077, %v2171
    %v2194 = vadd.f32 %v2078, %v2173
    %v2195 = vadd.f32 %v2079, %v2175
    %v2196 = vadd.f32 %v2080, %v2177
    %v2197 = vadd.f32 %v2081, %v2179
    %v2198 = vadd.f32 %v2082, %v2181
    %v2199 = vadd.f32 %v2083, %v2183
    %2200 = vst.msk [vmem:[#allocation8] sm:$0xff] %vm215, %v2192
    %2201 = vst.msk [vmem:[#allocation8 + $0x8] sm:$0xff] %vm215, %v2193
    %2202 = vst.msk [vmem:[#allocation8 + $0x10] sm:$0xff] %vm215, %v2194
    %2203 = vst.msk [vmem:[#allocation8 + $0x18] sm:$0xff] %vm215, %v2195
    %2204 = vst.msk [vmem:[#allocation8 + $0x20] sm:$0xff] %vm215, %v2196
    %2205 = vst.msk [vmem:[#allocation8 + $0x28] sm:$0xff] %vm215, %v2197
    %2206 = vst.msk [vmem:[#allocation8 + $0x30] sm:$0xff] %vm215, %v2198
    %2207 = vst.msk [vmem:[#allocation8 + $0x38] sm:$0xff] %vm215, %v2199
    %v2208 = vld [vmem:[#allocation8] sm:$0xff]
    %v2209 = vld [vmem:[#allocation8 + $0x8] sm:$0xff]
    %v2210 = vld [vmem:[#allocation8 + $0x10] sm:$0xff]
    %v2211 = vld [vmem:[#allocation8 + $0x18] sm:$0xff]
    %v2212 = vld [vmem:[#allocation8 + $0x20] sm:$0xff]
    %v2213 = vld [vmem:[#allocation8 + $0x28] sm:$0xff]
    %v2214 = vld [vmem:[#allocation8 + $0x30] sm:$0xff]
    %v2215 = vld [vmem:[#allocation8 + $0x38] sm:$0xff]
    %2217 = vst [vmem:[#allocation1] sm:$0xff] %v2075
    %s2218 = scalar_lea.vmem [#allocation1], 4
    %v2219 = vld [vmem:[%s2218] ss:$9 sm:$0xff]
    %s2220 = scalar_lea.vmem [#allocation1], 5
    %v2221 = vld [vmem:[%s2220] ss:$9 sm:$0xff]
    %v2222 = vperm.slane %v2219, 0
    %v2223 = vperm.slane %v2221, 0
    %2224 = vrot.lane.b32.xlu0 %v2222, 64
    %v2225 = vpop.permute.xlu0 %2224
    %2226 = vrot.lane.b32.xlu0 %v2223, 64
    %v2227 = vpop.permute.xlu0 %2226
    %v2230 = vmul.f32 %v2208, %v2225
    %v2231 = vmul.f32 %v2209, %v2225
    %v2232 = vmul.f32 %v2210, %v2225
    %v2233 = vmul.f32 %v2211, %v2225
    %v2234 = vmul.f32 %v2212, %v2227
    %v2235 = vmul.f32 %v2213, %v2227
    %v2236 = vmul.f32 %v2214, %v2227
    %v2237 = vmul.f32 %v2215, %v2227
    %v2238 = vsel %vm215, %v2230, 0.0
    %2239 = vadd.xlane.f32.xlu0 %v2238
    %v2240 = vpop.xlane.xlu0 %2239
    %v2241 = vsel %vm215, %v2231, 0.0
    %2242 = vadd.xlane.f32.xlu0 %v2241
    %v2243 = vpop.xlane.xlu0 %2242
    %v2244 = vsel %vm215, %v2232, 0.0
    %2245 = vadd.xlane.f32.xlu0 %v2244
    %v2246 = vpop.xlane.xlu0 %2245
    %v2247 = vsel %vm215, %v2233, 0.0
    %2248 = vadd.xlane.f32.xlu0 %v2247
    %v2249 = vpop.xlane.xlu0 %2248
    %v2250 = vsel %vm215, %v2234, 0.0
    %2251 = vadd.xlane.f32.xlu0 %v2250
    %v2252 = vpop.xlane.xlu0 %2251
    %v2253 = vsel %vm215, %v2235, 0.0
    %2254 = vadd.xlane.f32.xlu0 %v2253
    %v2255 = vpop.xlane.xlu0 %2254
    %v2256 = vsel %vm215, %v2236, 0.0
    %2257 = vadd.xlane.f32.xlu0 %v2256
    %v2258 = vpop.xlane.xlu0 %2257
    %v2259 = vsel %vm215, %v2237, 0.0
    %2260 = vadd.xlane.f32.xlu0 %v2259
    %v2261 = vpop.xlane.xlu0 %2260
    %v2270 = vperm.slane %v2240, %v916
    %v2271 = vperm.slane %v2243, %v918
    %v2272 = vsel %vm920, %v2271, %v2270
    %v2273 = vperm.slane %v2246, %v922
    %v2274 = vsel %vm924, %v2273, %v2272
    %v2275 = vperm.slane %v2249, %v926
    %v2276 = vsel %vm928, %v2275, %v2274
    %v2277 = vperm.slane %v2252, %v916
    %v2278 = vperm.slane %v2255, %v918
    %v2279 = vsel %vm920, %v2278, %v2277
    %v2280 = vperm.slane %v2258, %v922
    %v2281 = vsel %vm924, %v2280, %v2279
    %v2282 = vperm.slane %v2261, %v926
    %v2283 = vsel %vm928, %v2282, %v2281
    %v2284 = vsel %vm937, %v2283, %v2276
    %2286 = vst.msk [vmem:[#allocation9] sm:$0x3] %vm940, %v2284
    %2287 = vrot.lane.b32.xlu0 %v2059, 32
    %v2288 = vpop.permute.xlu0 %2287
    %vm2290 = vcmask 259076
    %2291 = vst.msk [vmem:[#allocation17 - $0x4] sm:$0x30] %vm2290, %v2288
    %2292 = vrot.lane.b32.xlu0 %v2075, 64
    %v2293 = vpop.permute.xlu0 %2292
    %2295 = vst.msk [vmem:[#allocation19 - $0x4] sm:$0x30] %vm2290, %v2293
    %v2296 = vld [vmem:[#allocation9] sm:$0x3]
    %v2297 = vld [vmem:[#allocation7] sm:$0x3]
    %v2298 = vld [vmem:[#allocation6] sm:$0xc0]
    %v2299 = vld [vmem:[#allocation6 + $0x8] sm:$0xc0]
    %v2300 = vld [vmem:[#allocation6 + $0x10] sm:$0xc0]
    %v2301 = vpack.c.bf16 %v2296, %v2296
    %v2302 = vld [vmem:[#allocation3] sm:$0xff]
    %v2303 = vld [vmem:[#allocation3 + $0x8] sm:$0xf]
    %v2304 = vld [vmem:[#allocation3 + $0xc] sm:$0xff]
    %v2305 = vld [vmem:[#allocation3 + $0x14] sm:$0xf]
    %v2306 = vld [vmem:[#allocation3 + $0x18] sm:$0xff]
    %v2307 = vld [vmem:[#allocation3 + $0x20] sm:$0xf]
    %v2308 = vld [vmem:[#allocation3 + $0x24] sm:$0xff]
    %v2309 = vld [vmem:[#allocation3 + $0x2c] sm:$0xf]
    %v2318 = vunpack.c.l.b16 %v2302
    %v2319 = vunpack.c.h.b16 %v2302
    %v2320 = vunpack.c.l.b16 %v2303
    %v2321 = vunpack.c.l.b16 %v2304
    %v2322 = vunpack.c.h.b16 %v2304
    %v2323 = vunpack.c.l.b16 %v2305
    %v2324 = vunpack.c.l.b16 %v2306
    %v2325 = vunpack.c.h.b16 %v2306
    %v2326 = vunpack.c.l.b16 %v2307
    %v2327 = vunpack.c.l.b16 %v2308
    %v2328 = vunpack.c.h.b16 %v2308
    %v2329 = vunpack.c.l.b16 %v2309
    %v2330 = vpack.c.b16 %v2321, %v2318
    %v2331 = vpack.c.b16 %v2322, %v2319
    %v2332 = vpack.c.b16 %v2323, %v2320
    %v2333 = vpack.c.b16 %v2327, %v2324
    %v2334 = vpack.c.b16 %v2328, %v2325
    %v2335 = vpack.c.b16 %v2329, %v2326
    %v2343 = vsel %vm215, %v2301, 0
    %2345 = vmatpush.bf16.msra.mxu0 0
    %2346 = vmatpush.bf16.msra.mxu0 0
    %2347 = vmatpush.bf16.msra.mxu0 0
    %2348 = vmatpush.bf16.msra.mxu0 0
    %2349 = vmatpush.bf16.msra.mxu0 0
    %2350 = vmatpush.bf16.msra.mxu0 0
    %2351 = vmatpush.bf16.msra.mxu0 %v2333
    %2352 = vmatpush.bf16.msra.mxu0 %v2330
    %2353 = vmatmul.bf16.gmra.mxu0 %v2343
    %v2354 = vpop.f32.mrf.mxu0
    %v2355 = vadd.f32 0.0, %v2354
    %v2356 = vpop.f32.mrf.mxu0
    %2357 = vdwg.mxu0
    %2358 = vmatpush.bf16.msra.mxu0 0
    %2359 = vmatpush.bf16.msra.mxu0 0
    %2360 = vmatpush.bf16.msra.mxu0 0
    %2361 = vmatpush.bf16.msra.mxu0 0
    %2362 = vmatpush.bf16.msra.mxu0 0
    %2363 = vmatpush.bf16.msra.mxu0 0
    %2364 = vmatpush.bf16.msra.mxu0 %v2334
    %2365 = vmatpush.bf16.msra.mxu0 %v2331
    %2366 = vmatmul.bf16.gmra.mxu0 %v2343
    %v2367 = vpop.f32.mrf.mxu0
    %v2368 = vadd.f32 0.0, %v2367
    %v2369 = vpop.f32.mrf.mxu0
    %2370 = vdwg.mxu0
    %2371 = vmatpush.bf16.msra.mxu0 0
    %2372 = vmatpush.bf16.msra.mxu0 0
    %2373 = vmatpush.bf16.msra.mxu0 0
    %2374 = vmatpush.bf16.msra.mxu0 0
    %2375 = vmatpush.bf16.msra.mxu0 0
    %2376 = vmatpush.bf16.msra.mxu0 0
    %2377 = vmatpush.bf16.msra.mxu0 %v2335
    %2378 = vmatpush.bf16.msra.mxu0 %v2332
    %2379 = vmatmul.bf16.gmra.mxu0 %v2343
    %v2380 = vpop.f32.mrf.mxu0
    %v2381 = vadd.f32 0.0, %v2380
    %v2382 = vpop.f32.mrf.mxu0
    %2383 = vdwg.mxu0
    %v2387 = vrot.slane %v2355, 2
    %v2388 = vrot.slane %v2368, 2
    %v2389 = vrot.slane %v2381, 2
    %v2393 = vadd.f32 %v2298, %v2387
    %v2394 = vadd.f32 %v2299, %v2388
    %v2395 = vadd.f32 %v2300, %v2389
    %v2396 = vpack.c.bf16 %v2297, %v2297
    %v2397 = vld [vmem:[#allocation4] sm:$0xff]
    %v2398 = vld [vmem:[#allocation4 + $0x8] sm:$0xf]
    %v2399 = vld [vmem:[#allocation4 + $0xc] sm:$0xff]
    %v2400 = vld [vmem:[#allocation4 + $0x14] sm:$0xf]
    %v2401 = vld [vmem:[#allocation4 + $0x18] sm:$0xff]
    %v2402 = vld [vmem:[#allocation4 + $0x20] sm:$0xf]
    %v2403 = vld [vmem:[#allocation4 + $0x24] sm:$0xff]
    %v2404 = vld [vmem:[#allocation4 + $0x2c] sm:$0xf]
    %v2405 = vld [vmem:[#allocation4 + $0x30] sm:$0xff]
    %v2406 = vld [vmem:[#allocation4 + $0x38] sm:$0xf]
    %v2407 = vld [vmem:[#allocation4 + $0x3c] sm:$0xff]
    %v2408 = vld [vmem:[#allocation4 + $0x44] sm:$0xf]
    %v2409 = vld [vmem:[#allocation4 + $0x48] sm:$0xff]
    %v2410 = vld [vmem:[#allocation4 + $0x50] sm:$0xf]
    %v2411 = vld [vmem:[#allocation4 + $0x54] sm:$0xff]
    %v2412 = vld [vmem:[#allocation4 + $0x5c] sm:$0xf]
    %v2413 = vld [vmem:[#allocation4 + $0x60] sm:$0xff]
    %v2414 = vld [vmem:[#allocation4 + $0x68] sm:$0xf]
    %v2415 = vld [vmem:[#allocation4 + $0x6c] sm:$0xff]
    %v2416 = vld [vmem:[#allocation4 + $0x74] sm:$0xf]
    %v2417 = vld [vmem:[#allocation4 + $0x78] sm:$0xff]
    %v2418 = vld [vmem:[#allocation4 + $0x80] sm:$0xf]
    %v2419 = vld [vmem:[#allocation4 + $0x84] sm:$0xff]
    %v2420 = vld [vmem:[#allocation4 + $0x8c] sm:$0xf]
    %v2445 = vunpack.c.l.b16 %v2397
    %v2446 = vunpack.c.h.b16 %v2397
    %v2447 = vunpack.c.l.b16 %v2398
    %v2448 = vunpack.c.l.b16 %v2399
    %v2449 = vunpack.c.h.b16 %v2399
    %v2450 = vunpack.c.l.b16 %v2400
    %v2451 = vunpack.c.l.b16 %v2401
    %v2452 = vunpack.c.h.b16 %v2401
    %v2453 = vunpack.c.l.b16 %v2402
    %v2454 = vunpack.c.l.b16 %v2403
    %v2455 = vunpack.c.h.b16 %v2403
    %v2456 = vunpack.c.l.b16 %v2404
    %v2457 = vunpack.c.l.b16 %v2405
    %v2458 = vunpack.c.h.b16 %v2405
    %v2459 = vunpack.c.l.b16 %v2406
    %v2460 = vunpack.c.l.b16 %v2407
    %v2461 = vunpack.c.h.b16 %v2407
    %v2462 = vunpack.c.l.b16 %v2408
    %v2463 = vunpack.c.l.b16 %v2409
    %v2464 = vunpack.c.h.b16 %v2409
    %v2465 = vunpack.c.l.b16 %v2410
    %v2466 = vunpack.c.l.b16 %v2411
    %v2467 = vunpack.c.h.b16 %v2411
    %v2468 = vunpack.c.l.b16 %v2412
    %v2469 = vunpack.c.l.b16 %v2413
    %v2470 = vunpack.c.h.b16 %v2413
    %v2471 = vunpack.c.l.b16 %v2414
    %v2472 = vunpack.c.l.b16 %v2415
    %v2473 = vunpack.c.h.b16 %v2415
    %v2474 = vunpack.c.l.b16 %v2416
    %v2475 = vunpack.c.l.b16 %v2417
    %v2476 = vunpack.c.h.b16 %v2417
    %v2477 = vunpack.c.l.b16 %v2418
    %v2478 = vunpack.c.l.b16 %v2419
    %v2479 = vunpack.c.h.b16 %v2419
    %v2480 = vunpack.c.l.b16 %v2420
    %v2481 = vpack.c.b16 %v2448, %v2445
    %v2482 = vpack.c.b16 %v2449, %v2446
    %v2483 = vpack.c.b16 %v2450, %v2447
    %v2484 = vpack.c.b16 %v2454, %v2451
    %v2485 = vpack.c.b16 %v2455, %v2452
    %v2486 = vpack.c.b16 %v2456, %v2453
    %v2487 = vpack.c.b16 %v2460, %v2457
    %v2488 = vpack.c.b16 %v2461, %v2458
    %v2489 = vpack.c.b16 %v2462, %v2459
    %v2490 = vpack.c.b16 %v2466, %v2463
    %v2491 = vpack.c.b16 %v2467, %v2464
    %v2492 = vpack.c.b16 %v2468, %v2465
    %v2493 = vpack.c.b16 %v2472, %v2469
    %v2494 = vpack.c.b16 %v2473, %v2470
    %v2495 = vpack.c.b16 %v2474, %v2471
    %v2496 = vpack.c.b16 %v2478, %v2475
    %v2497 = vpack.c.b16 %v2479, %v2476
    %v2498 = vpack.c.b16 %v2480, %v2477
    %v2518 = vsel %vm491, %v2396, 0
    %2520 = vmatpush.bf16.msra.mxu0 0
    %2521 = vmatpush.bf16.msra.mxu0 0
    %2522 = vmatpush.bf16.msra.mxu0 %v2496
    %2523 = vmatpush.bf16.msra.mxu0 %v2493
    %2524 = vmatpush.bf16.msra.mxu0 %v2490
    %2525 = vmatpush.bf16.msra.mxu0 %v2487
    %2526 = vmatpush.bf16.msra.mxu0 %v2484
    %2527 = vmatpush.bf16.msra.mxu0 %v2481
    %2528 = vmatmul.bf16.gmra.mxu0 %v2518
    %v2529 = vpop.f32.mrf.mxu0
    %v2530 = vadd.f32 %v269, %v2529
    %v2531 = vpop.f32.mrf.mxu0
    %2532 = vdwg.mxu0
    %2533 = vmatpush.bf16.msra.mxu0 0
    %2534 = vmatpush.bf16.msra.mxu0 0
    %2535 = vmatpush.bf16.msra.mxu0 %v2497
    %2536 = vmatpush.bf16.msra.mxu0 %v2494
    %2537 = vmatpush.bf16.msra.mxu0 %v2491
    %2538 = vmatpush.bf16.msra.mxu0 %v2488
    %2539 = vmatpush.bf16.msra.mxu0 %v2485
    %2540 = vmatpush.bf16.msra.mxu0 %v2482
    %2541 = vmatmul.bf16.gmra.mxu0 %v2518
    %v2542 = vpop.f32.mrf.mxu0
    %v2543 = vadd.f32 %v270, %v2542
    %v2544 = vpop.f32.mrf.mxu0
    %2545 = vdwg.mxu0
    %2546 = vmatpush.bf16.msra.mxu0 0
    %2547 = vmatpush.bf16.msra.mxu0 0
    %2548 = vmatpush.bf16.msra.mxu0 %v2498
    %2549 = vmatpush.bf16.msra.mxu0 %v2495
    %2550 = vmatpush.bf16.msra.mxu0 %v2492
    %2551 = vmatpush.bf16.msra.mxu0 %v2489
    %2552 = vmatpush.bf16.msra.mxu0 %v2486
    %2553 = vmatpush.bf16.msra.mxu0 %v2483
    %2554 = vmatmul.bf16.gmra.mxu0 %v2518
    %v2555 = vpop.f32.mrf.mxu0
    %v2556 = vadd.f32 %v271, %v2555
    %v2557 = vpop.f32.mrf.mxu0
    %2558 = vdwg.mxu0
    %v2560 = vrot.slane %v2530, 2
    %v2562 = vadd.f32 %v2393, %v2560
    %v2563 = vxor.u32 %v2562, 2147483648
    %v2564 = vmul.f32 %v2563, 1.442695
    %v2565 = vpow.pop %v2564
    %v2566 = vadd.f32 %v2565, 1.0
    %v2567 = vrcp.pop %v2566
    %v2568 = vmul.f32 %v2566, %v2567
    %v2569 = vsub.f32 1.0, %v2568
    %v2570 = vmul.f32 %v2567, %v2569
    %v2571 = vadd.f32 %v2567, %v2570
    %vm2572 = vweird.f32 %v2566
    %vm2573 = vweird.f32 %v2567
    %vm2574 = vmor %vm2572, %vm2573
    %v2575 = vsel %vm2574, %v2567, %v2571
    %v2576 = vand.u32 2147483647, %v2566
    %vm2577 = vcmp.eq.f32.partialorder %v2576, 8.507059e+37
    %v2578 = vand.u32 %v2566, 2147483648
    %v2579 = vor.u32 1.1754944e-38, %v2578
    %v2580 = vsel %vm2577, %v2579, %v2575
    %v2581 = vmul.f32 1.0, %v2580
    %v2583 = vrot.slane %v2543, 2
    %v2585 = vadd.f32 %v2394, %v2583
    %v2586 = vxor.u32 %v2585, 2147483648
    %v2587 = vmul.f32 %v2586, 1.442695
    %v2588 = vpow.pop %v2587
    %v2589 = vadd.f32 %v2588, 1.0
    %v2590 = vrcp.pop %v2589
    %v2591 = vmul.f32 %v2589, %v2590
    %v2592 = vsub.f32 1.0, %v2591
    %v2593 = vmul.f32 %v2590, %v2592
    %v2594 = vadd.f32 %v2590, %v2593
    %vm2595 = vweird.f32 %v2589
    %vm2596 = vweird.f32 %v2590
    %vm2597 = vmor %vm2595, %vm2596
    %v2598 = vsel %vm2597, %v2590, %v2594
    %v2599 = vand.u32 2147483647, %v2589
    %vm2600 = vcmp.eq.f32.partialorder %v2599, 8.507059e+37
    %v2601 = vand.u32 %v2589, 2147483648
    %v2602 = vor.u32 1.1754944e-38, %v2601
    %v2603 = vsel %vm2600, %v2602, %v2598
    %v2604 = vmul.f32 1.0, %v2603
    %v2606 = vrot.slane %v2556, 2
    %2607 = vrot.lane.b32.xlu0 %v2583, 64
    %v2608 = vpop.permute.xlu0 %2607
    %2609 = vrot.lane.b32.xlu0 %v2606, 64
    %v2610 = vpop.permute.xlu0 %2609
    %v2611 = vsel %vm580, %v2608, %v2610
    %v2613 = vmul.f32 %v2581, %v2611
    %2615 = vrot.lane.b32.xlu0 %v2613, 64
    %v2616 = vpop.permute.xlu0 %2615
    %v2618 = vadd.f32 %v2394, %v2616
    %v2619 = vadd.f32 %v2395, %v2616
    %v2620 = vtanh.pop %v2618
    %v2621 = vtanh.pop %v2619
    %v2624 = vrot.slane %v2620, 6
    %v2625 = vrot.slane %v2621, 6
    %2626 = vrot.lane.b32.xlu0 %v2624, 64
    %v2627 = vpop.permute.xlu0 %2626
    %2628 = vrot.lane.b32.xlu0 %v2625, 64
    %v2629 = vpop.permute.xlu0 %2628
    %v2630 = vsel %vm580, %v2627, %v2629
    %v2632 = vsub.f32 %v2297, %v2630
    %v2634 = vrot.slane %v2632, 2
    %2635 = vrot.lane.b32.xlu0 %v2634, 96
    %v2636 = vpop.permute.xlu0 %2635
    %v2638 = vmul.f32 %v2581, %v2636
    %v2639 = vmul.f32 %v2604, %v2636
    %2642 = vrot.lane.b32.xlu0 %v2638, 96
    %v2643 = vpop.permute.xlu0 %2642
    %2644 = vrot.lane.b32.xlu0 %v2639, 96
    %v2645 = vpop.permute.xlu0 %2644
    %v2646 = vsel %vm491, %v2643, %v2645
    %v2649 = vadd.f32 %v2620, %v2646
    %v2650 = vadd.f32 %v2621, %v2645
    %2653 = vrot.lane.b32.xlu0 %v2649, 64
    %v2654 = vpop.permute.xlu0 %2653
    %2655 = vrot.lane.b32.xlu0 %v2650, 64
    %v2656 = vpop.permute.xlu0 %2655
    %v2657 = vsel %vm580, %v2654, %v2656
    %vm2659 = vcmask 785414
    %2660 = vst.msk [vmem:[#allocation7 - $0x6] sm:$0xc0] %vm2659, %v2657
    %v2661 = vmul.f32 %v2649, %v2649
    %v2663 = vrot.slane %v2661, 6
    %2664 = vrot.lane.b32.xlu0 %v2663, 32
    %v2665 = vpop.permute.xlu0 %2664
    %v2666 = vsel %vm215, %v2665, 0
    %2668 = vmatpush.msra.mxu0 0.0
    %2669 = vmatpush.msra.mxu0 0.0
    %2670 = vmatpush.msra.mxu0 0.0
    %2671 = vmatpush.msra.mxu0 0.0
    %2672 = vmatpush.msra.mxu0 0.0
    %2673 = vmatpush.msra.mxu0 0.0
    %2674 = vmatpush.msra.mxu0 0.0
    %2675 = vmatpush.msra.mxu0 0.0
    %2676 = vmatpush.msra.mxu0 0.0
    %2677 = vmatpush.msra.mxu0 0.0
    %2678 = vmatpush.msra.mxu0 0.0
    %2679 = vmatpush.msra.mxu0 0.0
    %2680 = vmatpush.msra.mxu0 %v278
    %2681 = vmatpush.msra.mxu0 %v277
    %2682 = vmatpush.msra.mxu0 %v276
    %2683 = vmatpush.msra.mxu0 %v275
    %2684 = vmatmul.f32.gmra.mxu0 %v2666
    %v2685 = vpop.f32.mrf.mxu0
    %v2686 = vadd.f32 0.0, %v2685
    %2687 = vdwg.mxu0
    %2688 = vrot.lane.b32.xlu0 %v2663, 64
    %v2689 = vpop.permute.xlu0 %2688
    %v2690 = vsel %vm215, %v2689, 0
    %2692 = vmatpush.msra.mxu0 0.0
    %2693 = vmatpush.msra.mxu0 0.0
    %2694 = vmatpush.msra.mxu0 0.0
    %2695 = vmatpush.msra.mxu0 0.0
    %2696 = vmatpush.msra.mxu0 0.0
    %2697 = vmatpush.msra.mxu0 0.0
    %2698 = vmatpush.msra.mxu0 0.0
    %2699 = vmatpush.msra.mxu0 0.0
    %2700 = vmatpush.msra.mxu0 0.0
    %2701 = vmatpush.msra.mxu0 0.0
    %2702 = vmatpush.msra.mxu0 0.0
    %2703 = vmatpush.msra.mxu0 0.0
    %2704 = vmatpush.msra.mxu0 %v278
    %2705 = vmatpush.msra.mxu0 %v277
    %2706 = vmatpush.msra.mxu0 %v276
    %2707 = vmatpush.msra.mxu0 %v275
    %2708 = vmatmul.f32.gmra.mxu0 %v2690
    %v2709 = vpop.f32.mrf.mxu0
    %v2710 = vadd.f32 0.0, %v2709
    %2711 = vdwg.mxu0
    %v2712 = vrsqrt.pop %v2686
    %v2713 = vmul.f32 %v2712, %v2686
    %v2714 = vmul.f32 %v2713, %v2712
    %v2715 = vmul.f32 0.5, %v2714
    %v2716 = vsub.f32 1.5, %v2715
    %v2717 = vmul.f32 %v2712, %v2716
    %vm2718 = vweird.f32 %v2686
    %vm2719 = vweird.f32 %v2712
    %vm2720 = vmor %vm2718, %vm2719
    %v2721 = vsel %vm2720, %v2712, %v2717
    %v2723 = vrot.slane %v2721, 2
    %2724 = vrot.lane.b32.xlu0 %v2723, 96
    %v2725 = vpop.permute.xlu0 %2724
    %v2727 = vmul.f32 %v2649, %v2725
    %vm2728 = vcmp.gt.f32.partialorder %v2727, 0.0
    %v2729 = vmul.f32 %v2727, 1.442695
    %v2730 = vpow.pop %v2729
    %v2731 = vsub.f32 %v2730, 1.0
    %v2732 = vsel %vm2728, %v2727, %v2731
    %v2733 = vrsqrt.pop %v2710
    %v2734 = vmul.f32 %v2733, %v2710
    %v2735 = vmul.f32 %v2734, %v2733
    %v2736 = vmul.f32 0.5, %v2735
    %v2737 = vsub.f32 1.5, %v2736
    %v2738 = vmul.f32 %v2733, %v2737
    %vm2739 = vweird.f32 %v2710
    %vm2740 = vweird.f32 %v2733
    %vm2741 = vmor %vm2739, %vm2740
    %v2742 = vsel %vm2741, %v2733, %v2738
    %v2744 = vrot.slane %v2742, 2
    %2745 = vrot.lane.b32.xlu0 %v2744, 64
    %v2746 = vpop.permute.xlu0 %2745
    %v2748 = vmul.f32 %v2649, %v2746
    %v2749 = vld [vmem:[#allocation8] sm:$0xff]
    %v2750 = vld [vmem:[#allocation8 + $0x8] sm:$0xff]
    %v2751 = vld [vmem:[#allocation8 + $0x10] sm:$0xff]
    %v2752 = vld [vmem:[#allocation8 + $0x18] sm:$0xff]
    %v2753 = vld [vmem:[#allocation8 + $0x20] sm:$0xff]
    %v2754 = vld [vmem:[#allocation8 + $0x28] sm:$0xff]
    %v2755 = vld [vmem:[#allocation8 + $0x30] sm:$0xff]
    %v2756 = vld [vmem:[#allocation8 + $0x38] sm:$0xff]
    %v2757 = vperm.slane %v2650, 6
    %v2758 = vlaneseq
    %v2759 = vshrl.u32 %v2758, 7
    %2761 = vset.pattern.permute.xlu0 %v2759
    %2762 = vperm.xlu0 %2761, %v2757
    %v2763 = vpop.permute.xlu0 %2762
    %v2764 = vlaneseq
    %v2765 = vshrl.u32 %v2764, 7
    %v2766 = vadd.s32 %v2765, 8
    %2767 = vset.pattern.permute.xlu0 %v2766
    %2768 = vperm.xlu0 %2767, %v2757
    %v2769 = vpop.permute.xlu0 %2768
    %v2770 = vlaneseq
    %v2771 = vshrl.u32 %v2770, 7
    %v2772 = vadd.s32 %v2771, 16
    %2773 = vset.pattern.permute.xlu0 %v2772
    %2774 = vperm.xlu0 %2773, %v2757
    %v2775 = vpop.permute.xlu0 %2774
    %v2776 = vlaneseq
    %v2777 = vshrl.u32 %v2776, 7
    %v2778 = vadd.s32 %v2777, 24
    %2779 = vset.pattern.permute.xlu0 %v2778
    %2780 = vperm.xlu0 %2779, %v2757
    %v2781 = vpop.permute.xlu0 %2780
    %v2782 = vperm.slane %v2650, 7
    %v2783 = vlaneseq
    %v2784 = vshrl.u32 %v2783, 7
    %2786 = vset.pattern.permute.xlu0 %v2784
    %2787 = vperm.xlu0 %2786, %v2782
    %v2788 = vpop.permute.xlu0 %2787
    %v2789 = vlaneseq
    %v2790 = vshrl.u32 %v2789, 7
    %v2791 = vadd.s32 %v2790, 8
    %2792 = vset.pattern.permute.xlu0 %v2791
    %2793 = vperm.xlu0 %2792, %v2782
    %v2794 = vpop.permute.xlu0 %2793
    %v2795 = vlaneseq
    %v2796 = vshrl.u32 %v2795, 7
    %v2797 = vadd.s32 %v2796, 16
    %2798 = vset.pattern.permute.xlu0 %v2797
    %2799 = vperm.xlu0 %2798, %v2782
    %v2800 = vpop.permute.xlu0 %2799
    %v2801 = vlaneseq
    %v2802 = vshrl.u32 %v2801, 7
    %v2803 = vadd.s32 %v2802, 24
    %2804 = vset.pattern.permute.xlu0 %v2803
    %2805 = vperm.xlu0 %2804, %v2782
    %v2806 = vpop.permute.xlu0 %2805
    %2808 = vst [vmem:[#allocation1] sm:$0xff] %v2732
    %s2809 = scalar_lea.vmem [#allocation1], 6
    %v2810 = vld [vmem:[%s2809] ss:$9 sm:$0xff]
    %s2811 = scalar_lea.vmem [#allocation1], 7
    %v2812 = vld [vmem:[%s2811] ss:$9 sm:$0xff]
    %v2813 = vperm.slane %v2810, 0
    %v2814 = vperm.slane %v2812, 0
    %v2817 = vmul.f32 %v2763, %v2813
    %v2818 = vmul.f32 %v2769, %v2813
    %v2819 = vmul.f32 %v2775, %v2813
    %v2820 = vmul.f32 %v2781, %v2813
    %v2821 = vmul.f32 %v2788, %v2814
    %v2822 = vmul.f32 %v2794, %v2814
    %v2823 = vmul.f32 %v2800, %v2814
    %v2824 = vmul.f32 %v2806, %v2814
    %v2825 = vmul.f32 %v2817, %v790
    %v2826 = vmul.f32 %v2818, %v792
    %v2827 = vmul.f32 %v2819, %v794
    %v2828 = vmul.f32 %v2820, %v796
    %v2829 = vmul.f32 %v2821, %v790
    %v2830 = vmul.f32 %v2822, %v792
    %v2831 = vmul.f32 %v2823, %v794
    %v2832 = vmul.f32 %v2824, %v796
    %2841 = vrot.lane.b32.xlu0 %v2825, 32
    %v2842 = vpop.permute.xlu0 %2841
    %2843 = vrot.lane.b32.xlu0 %v2826, 32
    %v2844 = vpop.permute.xlu0 %2843
    %2845 = vrot.lane.b32.xlu0 %v2827, 32
    %v2846 = vpop.permute.xlu0 %2845
    %2847 = vrot.lane.b32.xlu0 %v2828, 32
    %v2848 = vpop.permute.xlu0 %2847
    %2849 = vrot.lane.b32.xlu0 %v2829, 32
    %v2850 = vpop.permute.xlu0 %2849
    %2851 = vrot.lane.b32.xlu0 %v2830, 32
    %v2852 = vpop.permute.xlu0 %2851
    %2853 = vrot.lane.b32.xlu0 %v2831, 32
    %v2854 = vpop.permute.xlu0 %2853
    %2855 = vrot.lane.b32.xlu0 %v2832, 32
    %v2856 = vpop.permute.xlu0 %2855
    %v2865 = vadd.f32 %v2749, %v2842
    %v2866 = vadd.f32 %v2750, %v2844
    %v2867 = vadd.f32 %v2751, %v2846
    %v2868 = vadd.f32 %v2752, %v2848
    %v2869 = vadd.f32 %v2753, %v2850
    %v2870 = vadd.f32 %v2754, %v2852
    %v2871 = vadd.f32 %v2755, %v2854
    %v2872 = vadd.f32 %v2756, %v2856
    %2873 = vst.msk [vmem:[#allocation8] sm:$0xff] %vm215, %v2865
    %2874 = vst.msk [vmem:[#allocation8 + $0x8] sm:$0xff] %vm215, %v2866
    %2875 = vst.msk [vmem:[#allocation8 + $0x10] sm:$0xff] %vm215, %v2867
    %2876 = vst.msk [vmem:[#allocation8 + $0x18] sm:$0xff] %vm215, %v2868
    %2877 = vst.msk [vmem:[#allocation8 + $0x20] sm:$0xff] %vm215, %v2869
    %2878 = vst.msk [vmem:[#allocation8 + $0x28] sm:$0xff] %vm215, %v2870
    %2879 = vst.msk [vmem:[#allocation8 + $0x30] sm:$0xff] %vm215, %v2871
    %2880 = vst.msk [vmem:[#allocation8 + $0x38] sm:$0xff] %vm215, %v2872
    %v2881 = vld [vmem:[#allocation8] sm:$0xff]
    %v2882 = vld [vmem:[#allocation8 + $0x8] sm:$0xff]
    %v2883 = vld [vmem:[#allocation8 + $0x10] sm:$0xff]
    %v2884 = vld [vmem:[#allocation8 + $0x18] sm:$0xff]
    %v2885 = vld [vmem:[#allocation8 + $0x20] sm:$0xff]
    %v2886 = vld [vmem:[#allocation8 + $0x28] sm:$0xff]
    %v2887 = vld [vmem:[#allocation8 + $0x30] sm:$0xff]
    %v2888 = vld [vmem:[#allocation8 + $0x38] sm:$0xff]
    %2890 = vst [vmem:[#allocation1] sm:$0xff] %v2748
    %s2891 = scalar_lea.vmem [#allocation1], 6
    %v2892 = vld [vmem:[%s2891] ss:$9 sm:$0xff]
    %s2893 = scalar_lea.vmem [#allocation1], 7
    %v2894 = vld [vmem:[%s2893] ss:$9 sm:$0xff]
    %v2895 = vperm.slane %v2892, 0
    %v2896 = vperm.slane %v2894, 0
    %2897 = vrot.lane.b32.xlu0 %v2895, 64
    %v2898 = vpop.permute.xlu0 %2897
    %2899 = vrot.lane.b32.xlu0 %v2896, 64
    %v2900 = vpop.permute.xlu0 %2899
    %v2903 = vmul.f32 %v2881, %v2898
    %v2904 = vmul.f32 %v2882, %v2898
    %v2905 = vmul.f32 %v2883, %v2898
    %v2906 = vmul.f32 %v2884, %v2898
    %v2907 = vmul.f32 %v2885, %v2900
    %v2908 = vmul.f32 %v2886, %v2900
    %v2909 = vmul.f32 %v2887, %v2900
    %v2910 = vmul.f32 %v2888, %v2900
    %v2911 = vsel %vm215, %v2903, 0.0
    %2912 = vadd.xlane.f32.xlu0 %v2911
    %v2913 = vpop.xlane.xlu0 %2912
    %v2914 = vsel %vm215, %v2904, 0.0
    %2915 = vadd.xlane.f32.xlu0 %v2914
    %v2916 = vpop.xlane.xlu0 %2915
    %v2917 = vsel %vm215, %v2905, 0.0
    %2918 = vadd.xlane.f32.xlu0 %v2917
    %v2919 = vpop.xlane.xlu0 %2918
    %v2920 = vsel %vm215, %v2906, 0.0
    %2921 = vadd.xlane.f32.xlu0 %v2920
    %v2922 = vpop.xlane.xlu0 %2921
    %v2923 = vsel %vm215, %v2907, 0.0
    %2924 = vadd.xlane.f32.xlu0 %v2923
    %v2925 = vpop.xlane.xlu0 %2924
    %v2926 = vsel %vm215, %v2908, 0.0
    %2927 = vadd.xlane.f32.xlu0 %v2926
    %v2928 = vpop.xlane.xlu0 %2927
    %v2929 = vsel %vm215, %v2909, 0.0
    %2930 = vadd.xlane.f32.xlu0 %v2929
    %v2931 = vpop.xlane.xlu0 %2930
    %v2932 = vsel %vm215, %v2910, 0.0
    %2933 = vadd.xlane.f32.xlu0 %v2932
    %v2934 = vpop.xlane.xlu0 %2933
    %v2943 = vperm.slane %v2913, %v916
    %v2944 = vperm.slane %v2916, %v918
    %v2945 = vsel %vm920, %v2944, %v2943
    %v2946 = vperm.slane %v2919, %v922
    %v2947 = vsel %vm924, %v2946, %v2945
    %v2948 = vperm.slane %v2922, %v926
    %v2949 = vsel %vm928, %v2948, %v2947
    %v2950 = vperm.slane %v2925, %v916
    %v2951 = vperm.slane %v2928, %v918
    %v2952 = vsel %vm920, %v2951, %v2950
    %v2953 = vperm.slane %v2931, %v922
    %v2954 = vsel %vm924, %v2953, %v2952
    %v2955 = vperm.slane %v2934, %v926
    %v2956 = vsel %vm928, %v2955, %v2954
    %v2957 = vsel %vm937, %v2956, %v2949
    %2959 = vst.msk [vmem:[#allocation9] sm:$0x3] %vm940, %v2957
    %2960 = vrot.lane.b32.xlu0 %v2732, 32
    %v2961 = vpop.permute.xlu0 %2960
    %vm2963 = vcmask 261126
    %2964 = vst.msk [vmem:[#allocation17 - $0x6] sm:$0xc0] %vm2963, %v2961
    %2965 = vrot.lane.b32.xlu0 %v2748, 64
    %v2966 = vpop.permute.xlu0 %2965
    %2968 = vst.msk [vmem:[#allocation19 - $0x6] sm:$0xc0] %vm2963, %v2966
    %v2969 = vld [vmem:[#allocation9] sm:$0x3]
    %v2970 = vld [vmem:[#allocation7] sm:$0x3]
    %v2971 = vld [vmem:[#allocation6 + $0x18] sm:$0x3]
    %v2972 = vld [vmem:[#allocation6 + $0x20] sm:$0x3]
    %v2973 = vld [vmem:[#allocation6 + $0x28] sm:$0x3]
    %v2974 = vpack.c.bf16 %v2969, %v2969
    %v2975 = vld [vmem:[#allocation3] sm:$0xff]
    %v2976 = vld [vmem:[#allocation3 + $0x8] sm:$0xf]
    %v2977 = vld [vmem:[#allocation3 + $0xc] sm:$0xff]
    %v2978 = vld [vmem:[#allocation3 + $0x14] sm:$0xf]
    %v2979 = vld [vmem:[#allocation3 + $0x18] sm:$0xff]
    %v2980 = vld [vmem:[#allocation3 + $0x20] sm:$0xf]
    %v2981 = vld [vmem:[#allocation3 + $0x24] sm:$0xff]
    %v2982 = vld [vmem:[#allocation3 + $0x2c] sm:$0xf]
    %v2991 = vunpack.c.l.b16 %v2975
    %v2992 = vunpack.c.h.b16 %v2975
    %v2993 = vunpack.c.l.b16 %v2976
    %v2994 = vunpack.c.l.b16 %v2977
    %v2995 = vunpack.c.h.b16 %v2977
    %v2996 = vunpack.c.l.b16 %v2978
    %v2997 = vunpack.c.l.b16 %v2979
    %v2998 = vunpack.c.h.b16 %v2979
    %v2999 = vunpack.c.l.b16 %v2980
    %v3000 = vunpack.c.l.b16 %v2981
    %v3001 = vunpack.c.h.b16 %v2981
    %v3002 = vunpack.c.l.b16 %v2982
    %v3003 = vpack.c.b16 %v2994, %v2991
    %v3004 = vpack.c.b16 %v2995, %v2992
    %v3005 = vpack.c.b16 %v2996, %v2993
    %v3006 = vpack.c.b16 %v3000, %v2997
    %v3007 = vpack.c.b16 %v3001, %v2998
    %v3008 = vpack.c.b16 %v3002, %v2999
    %v3016 = vsel %vm215, %v2974, 0
    %3018 = vmatpush.bf16.msra.mxu0 0
    %3019 = vmatpush.bf16.msra.mxu0 0
    %3020 = vmatpush.bf16.msra.mxu0 0
    %3021 = vmatpush.bf16.msra.mxu0 0
    %3022 = vmatpush.bf16.msra.mxu0 0
    %3023 = vmatpush.bf16.msra.mxu0 0
    %3024 = vmatpush.bf16.msra.mxu0 %v3006
    %3025 = vmatpush.bf16.msra.mxu0 %v3003
    %3026 = vmatmul.bf16.gmra.mxu0 %v3016
    %v3027 = vpop.f32.mrf.mxu0
    %v3028 = vadd.f32 0.0, %v3027
    %v3029 = vpop.f32.mrf.mxu0
    %3030 = vdwg.mxu0
    %3031 = vmatpush.bf16.msra.mxu0 0
    %3032 = vmatpush.bf16.msra.mxu0 0
    %3033 = vmatpush.bf16.msra.mxu0 0
    %3034 = vmatpush.bf16.msra.mxu0 0
    %3035 = vmatpush.bf16.msra.mxu0 0
    %3036 = vmatpush.bf16.msra.mxu0 0
    %3037 = vmatpush.bf16.msra.mxu0 %v3007
    %3038 = vmatpush.bf16.msra.mxu0 %v3004
    %3039 = vmatmul.bf16.gmra.mxu0 %v3016
    %v3040 = vpop.f32.mrf.mxu0
    %v3041 = vadd.f32 0.0, %v3040
    %v3042 = vpop.f32.mrf.mxu0
    %3043 = vdwg.mxu0
    %3044 = vmatpush.bf16.msra.mxu0 0
    %3045 = vmatpush.bf16.msra.mxu0 0
    %3046 = vmatpush.bf16.msra.mxu0 0
    %3047 = vmatpush.bf16.msra.mxu0 0
    %3048 = vmatpush.bf16.msra.mxu0 0
    %3049 = vmatpush.bf16.msra.mxu0 0
    %3050 = vmatpush.bf16.msra.mxu0 %v3008
    %3051 = vmatpush.bf16.msra.mxu0 %v3005
    %3052 = vmatmul.bf16.gmra.mxu0 %v3016
    %v3053 = vpop.f32.mrf.mxu0
    %v3054 = vadd.f32 0.0, %v3053
    %v3055 = vpop.f32.mrf.mxu0
    %3056 = vdwg.mxu0
    %v3057 = vadd.f32 %v2971, %v3028
    %v3058 = vadd.f32 %v2972, %v3041
    %v3059 = vadd.f32 %v2973, %v3054
    %v3060 = vpack.c.bf16 %v2970, %v2970
    %v3061 = vld [vmem:[#allocation4] sm:$0xff]
    %v3062 = vld [vmem:[#allocation4 + $0x8] sm:$0xf]
    %v3063 = vld [vmem:[#allocation4 + $0xc] sm:$0xff]
    %v3064 = vld [vmem:[#allocation4 + $0x14] sm:$0xf]
    %v3065 = vld [vmem:[#allocation4 + $0x18] sm:$0xff]
    %v3066 = vld [vmem:[#allocation4 + $0x20] sm:$0xf]
    %v3067 = vld [vmem:[#allocation4 + $0x24] sm:$0xff]
    %v3068 = vld [vmem:[#allocation4 + $0x2c] sm:$0xf]
    %v3069 = vld [vmem:[#allocation4 + $0x30] sm:$0xff]
    %v3070 = vld [vmem:[#allocation4 + $0x38] sm:$0xf]
    %v3071 = vld [vmem:[#allocation4 + $0x3c] sm:$0xff]
    %v3072 = vld [vmem:[#allocation4 + $0x44] sm:$0xf]
    %v3073 = vld [vmem:[#allocation4 + $0x48] sm:$0xff]
    %v3074 = vld [vmem:[#allocation4 + $0x50] sm:$0xf]
    %v3075 = vld [vmem:[#allocation4 + $0x54] sm:$0xff]
    %v3076 = vld [vmem:[#allocation4 + $0x5c] sm:$0xf]
    %v3077 = vld [vmem:[#allocation4 + $0x60] sm:$0xff]
    %v3078 = vld [vmem:[#allocation4 + $0x68] sm:$0xf]
    %v3079 = vld [vmem:[#allocation4 + $0x6c] sm:$0xff]
    %v3080 = vld [vmem:[#allocation4 + $0x74] sm:$0xf]
    %v3081 = vld [vmem:[#allocation4 + $0x78] sm:$0xff]
    %v3082 = vld [vmem:[#allocation4 + $0x80] sm:$0xf]
    %v3083 = vld [vmem:[#allocation4 + $0x84] sm:$0xff]
    %v3084 = vld [vmem:[#allocation4 + $0x8c] sm:$0xf]
    %v3109 = vunpack.c.l.b16 %v3061
    %v3110 = vunpack.c.h.b16 %v3061
    %v3111 = vunpack.c.l.b16 %v3062
    %v3112 = vunpack.c.l.b16 %v3063
    %v3113 = vunpack.c.h.b16 %v3063
    %v3114 = vunpack.c.l.b16 %v3064
    %v3115 = vunpack.c.l.b16 %v3065
    %v3116 = vunpack.c.h.b16 %v3065
    %v3117 = vunpack.c.l.b16 %v3066
    %v3118 = vunpack.c.l.b16 %v3067
    %v3119 = vunpack.c.h.b16 %v3067
    %v3120 = vunpack.c.l.b16 %v3068
    %v3121 = vunpack.c.l.b16 %v3069
    %v3122 = vunpack.c.h.b16 %v3069
    %v3123 = vunpack.c.l.b16 %v3070
    %v3124 = vunpack.c.l.b16 %v3071
    %v3125 = vunpack.c.h.b16 %v3071
    %v3126 = vunpack.c.l.b16 %v3072
    %v3127 = vunpack.c.l.b16 %v3073
    %v3128 = vunpack.c.h.b16 %v3073
    %v3129 = vunpack.c.l.b16 %v3074
    %v3130 = vunpack.c.l.b16 %v3075
    %v3131 = vunpack.c.h.b16 %v3075
    %v3132 = vunpack.c.l.b16 %v3076
    %v3133 = vunpack.c.l.b16 %v3077
    %v3134 = vunpack.c.h.b16 %v3077
    %v3135 = vunpack.c.l.b16 %v3078
    %v3136 = vunpack.c.l.b16 %v3079
    %v3137 = vunpack.c.h.b16 %v3079
    %v3138 = vunpack.c.l.b16 %v3080
    %v3139 = vunpack.c.l.b16 %v3081
    %v3140 = vunpack.c.h.b16 %v3081
    %v3141 = vunpack.c.l.b16 %v3082
    %v3142 = vunpack.c.l.b16 %v3083
    %v3143 = vunpack.c.h.b16 %v3083
    %v3144 = vunpack.c.l.b16 %v3084
    %v3145 = vpack.c.b16 %v3112, %v3109
    %v3146 = vpack.c.b16 %v3113, %v3110
    %v3147 = vpack.c.b16 %v3114, %v3111
    %v3148 = vpack.c.b16 %v3118, %v3115
    %v3149 = vpack.c.b16 %v3119, %v3116
    %v3150 = vpack.c.b16 %v3120, %v3117
    %v3151 = vpack.c.b16 %v3124, %v3121
    %v3152 = vpack.c.b16 %v3125, %v3122
    %v3153 = vpack.c.b16 %v3126, %v3123
    %v3154 = vpack.c.b16 %v3130, %v3127
    %v3155 = vpack.c.b16 %v3131, %v3128
    %v3156 = vpack.c.b16 %v3132, %v3129
    %v3157 = vpack.c.b16 %v3136, %v3133
    %v3158 = vpack.c.b16 %v3137, %v3134
    %v3159 = vpack.c.b16 %v3138, %v3135
    %v3160 = vpack.c.b16 %v3142, %v3139
    %v3161 = vpack.c.b16 %v3143, %v3140
    %v3162 = vpack.c.b16 %v3144, %v3141
    %v3182 = vsel %vm491, %v3060, 0
    %3184 = vmatpush.bf16.msra.mxu0 0
    %3185 = vmatpush.bf16.msra.mxu0 0
    %3186 = vmatpush.bf16.msra.mxu0 %v3160
    %3187 = vmatpush.bf16.msra.mxu0 %v3157
    %3188 = vmatpush.bf16.msra.mxu0 %v3154
    %3189 = vmatpush.bf16.msra.mxu0 %v3151
    %3190 = vmatpush.bf16.msra.mxu0 %v3148
    %3191 = vmatpush.bf16.msra.mxu0 %v3145
    %3192 = vmatmul.bf16.gmra.mxu0 %v3182
    %v3193 = vpop.f32.mrf.mxu0
    %v3194 = vadd.f32 %v269, %v3193
    %v3195 = vpop.f32.mrf.mxu0
    %3196 = vdwg.mxu0
    %3197 = vmatpush.bf16.msra.mxu0 0
    %3198 = vmatpush.bf16.msra.mxu0 0
    %3199 = vmatpush.bf16.msra.mxu0 %v3161
    %3200 = vmatpush.bf16.msra.mxu0 %v3158
    %3201 = vmatpush.bf16.msra.mxu0 %v3155
    %3202 = vmatpush.bf16.msra.mxu0 %v3152
    %3203 = vmatpush.bf16.msra.mxu0 %v3149
    %3204 = vmatpush.bf16.msra.mxu0 %v3146
    %3205 = vmatmul.bf16.gmra.mxu0 %v3182
    %v3206 = vpop.f32.mrf.mxu0
    %v3207 = vadd.f32 %v270, %v3206
    %v3208 = vpop.f32.mrf.mxu0
    %3209 = vdwg.mxu0
    %3210 = vmatpush.bf16.msra.mxu0 0
    %3211 = vmatpush.bf16.msra.mxu0 0
    %3212 = vmatpush.bf16.msra.mxu0 %v3162
    %3213 = vmatpush.bf16.msra.mxu0 %v3159
    %3214 = vmatpush.bf16.msra.mxu0 %v3156
    %3215 = vmatpush.bf16.msra.mxu0 %v3153
    %3216 = vmatpush.bf16.msra.mxu0 %v3150
    %3217 = vmatpush.bf16.msra.mxu0 %v3147
    %3218 = vmatmul.bf16.gmra.mxu0 %v3182
    %v3219 = vpop.f32.mrf.mxu0
    %v3220 = vadd.f32 %v271, %v3219
    %v3221 = vpop.f32.mrf.mxu0
    %3222 = vdwg.mxu0
    %v3223 = vadd.f32 %v3057, %v3194
    %v3224 = vxor.u32 %v3223, 2147483648
    %v3225 = vmul.f32 %v3224, 1.442695
    %v3226 = vpow.pop %v3225
    %v3227 = vadd.f32 %v3226, 1.0
    %v3228 = vrcp.pop %v3227
    %v3229 = vmul.f32 %v3227, %v3228
    %v3230 = vsub.f32 1.0, %v3229
    %v3231 = vmul.f32 %v3228, %v3230
    %v3232 = vadd.f32 %v3228, %v3231
    %vm3233 = vweird.f32 %v3227
    %vm3234 = vweird.f32 %v3228
    %vm3235 = vmor %vm3233, %vm3234
    %v3236 = vsel %vm3235, %v3228, %v3232
    %v3237 = vand.u32 2147483647, %v3227
    %vm3238 = vcmp.eq.f32.partialorder %v3237, 8.507059e+37
    %v3239 = vand.u32 %v3227, 2147483648
    %v3240 = vor.u32 1.1754944e-38, %v3239
    %v3241 = vsel %vm3238, %v3240, %v3236
    %v3242 = vmul.f32 1.0, %v3241
    %v3243 = vadd.f32 %v3058, %v3207
    %v3244 = vxor.u32 %v3243, 2147483648
    %v3245 = vmul.f32 %v3244, 1.442695
    %v3246 = vpow.pop %v3245
    %v3247 = vadd.f32 %v3246, 1.0
    %v3248 = vrcp.pop %v3247
    %v3249 = vmul.f32 %v3247, %v3248
    %v3250 = vsub.f32 1.0, %v3249
    %v3251 = vmul.f32 %v3248, %v3250
    %v3252 = vadd.f32 %v3248, %v3251
    %vm3253 = vweird.f32 %v3247
    %vm3254 = vweird.f32 %v3248
    %vm3255 = vmor %vm3253, %vm3254
    %v3256 = vsel %vm3255, %v3248, %v3252
    %v3257 = vand.u32 2147483647, %v3247
    %vm3258 = vcmp.eq.f32.partialorder %v3257, 8.507059e+37
    %v3259 = vand.u32 %v3247, 2147483648
    %v3260 = vor.u32 1.1754944e-38, %v3259
    %v3261 = vsel %vm3258, %v3260, %v3256
    %v3262 = vmul.f32 1.0, %v3261
    %3265 = vrot.lane.b32.xlu0 %v3207, 64
    %v3266 = vpop.permute.xlu0 %3265
    %3267 = vrot.lane.b32.xlu0 %v3220, 64
    %v3268 = vpop.permute.xlu0 %3267
    %v3269 = vsel %vm580, %v3266, %v3268
    %v3271 = vmul.f32 %v3242, %v3269
    %3273 = vrot.lane.b32.xlu0 %v3271, 64
    %v3274 = vpop.permute.xlu0 %3273
    %v3276 = vadd.f32 %v3058, %v3274
    %v3277 = vadd.f32 %v3059, %v3274
    %v3278 = vtanh.pop %v3276
    %v3279 = vtanh.pop %v3277
    %3282 = vrot.lane.b32.xlu0 %v3278, 64
    %v3283 = vpop.permute.xlu0 %3282
    %3284 = vrot.lane.b32.xlu0 %v3279, 64
    %v3285 = vpop.permute.xlu0 %3284
    %v3286 = vsel %vm580, %v3283, %v3285
    %v3288 = vsub.f32 %v2970, %v3286
    %3290 = vrot.lane.b32.xlu0 %v3288, 96
    %v3291 = vpop.permute.xlu0 %3290
    %v3293 = vmul.f32 %v3242, %v3291
    %v3294 = vmul.f32 %v3262, %v3291
    %3297 = vrot.lane.b32.xlu0 %v3293, 96
    %v3298 = vpop.permute.xlu0 %3297
    %3299 = vrot.lane.b32.xlu0 %v3294, 96
    %v3300 = vpop.permute.xlu0 %3299
    %v3301 = vsel %vm491, %v3298, %v3300
    %v3304 = vadd.f32 %v3278, %v3301
    %v3305 = vadd.f32 %v3279, %v3300
    %3308 = vrot.lane.b32.xlu0 %v3304, 64
    %v3309 = vpop.permute.xlu0 %3308
    %3310 = vrot.lane.b32.xlu0 %v3305, 64
    %v3311 = vpop.permute.xlu0 %3310
    %v3312 = vsel %vm580, %v3309, %v3311
    %3314 = vst.msk [vmem:[#allocation7] sm:$0x3] %vm626, %v3312
    %v3315 = vmul.f32 %v3304, %v3304
    %3317 = vrot.lane.b32.xlu0 %v3315, 32
    %v3318 = vpop.permute.xlu0 %3317
    %v3319 = vsel %vm215, %v3318, 0
    %3321 = vmatpush.msra.mxu0 0.0
    %3322 = vmatpush.msra.mxu0 0.0
    %3323 = vmatpush.msra.mxu0 0.0
    %3324 = vmatpush.msra.mxu0 0.0
    %3325 = vmatpush.msra.mxu0 0.0
    %3326 = vmatpush.msra.mxu0 0.0
    %3327 = vmatpush.msra.mxu0 0.0
    %3328 = vmatpush.msra.mxu0 0.0
    %3329 = vmatpush.msra.mxu0 0.0
    %3330 = vmatpush.msra.mxu0 0.0
    %3331 = vmatpush.msra.mxu0 0.0
    %3332 = vmatpush.msra.mxu0 0.0
    %3333 = vmatpush.msra.mxu0 %v278
    %3334 = vmatpush.msra.mxu0 %v277
    %3335 = vmatpush.msra.mxu0 %v276
    %3336 = vmatpush.msra.mxu0 %v275
    %3337 = vmatmul.f32.gmra.mxu0 %v3319
    %v3338 = vpop.f32.mrf.mxu0
    %v3339 = vadd.f32 0.0, %v3338
    %3340 = vdwg.mxu0
    %3341 = vrot.lane.b32.xlu0 %v3315, 64
    %v3342 = vpop.permute.xlu0 %3341
    %v3343 = vsel %vm215, %v3342, 0
    %3345 = vmatpush.msra.mxu0 0.0
    %3346 = vmatpush.msra.mxu0 0.0
    %3347 = vmatpush.msra.mxu0 0.0
    %3348 = vmatpush.msra.mxu0 0.0
    %3349 = vmatpush.msra.mxu0 0.0
    %3350 = vmatpush.msra.mxu0 0.0
    %3351 = vmatpush.msra.mxu0 0.0
    %3352 = vmatpush.msra.mxu0 0.0
    %3353 = vmatpush.msra.mxu0 0.0
    %3354 = vmatpush.msra.mxu0 0.0
    %3355 = vmatpush.msra.mxu0 0.0
    %3356 = vmatpush.msra.mxu0 0.0
    %3357 = vmatpush.msra.mxu0 %v278
    %3358 = vmatpush.msra.mxu0 %v277
    %3359 = vmatpush.msra.mxu0 %v276
    %3360 = vmatpush.msra.mxu0 %v275
    %3361 = vmatmul.f32.gmra.mxu0 %v3343
    %v3362 = vpop.f32.mrf.mxu0
    %v3363 = vadd.f32 0.0, %v3362
    %3364 = vdwg.mxu0
    %v3365 = vrsqrt.pop %v3339
    %v3366 = vmul.f32 %v3365, %v3339
    %v3367 = vmul.f32 %v3366, %v3365
    %v3368 = vmul.f32 0.5, %v3367
    %v3369 = vsub.f32 1.5, %v3368
    %v3370 = vmul.f32 %v3365, %v3369
    %vm3371 = vweird.f32 %v3339
    %vm3372 = vweird.f32 %v3365
    %vm3373 = vmor %vm3371, %vm3372
    %v3374 = vsel %vm3373, %v3365, %v3370
    %3376 = vrot.lane.b32.xlu0 %v3374, 96
    %v3377 = vpop.permute.xlu0 %3376
    %v3379 = vmul.f32 %v3304, %v3377
    %vm3380 = vcmp.gt.f32.partialorder %v3379, 0.0
    %v3381 = vmul.f32 %v3379, 1.442695
    %v3382 = vpow.pop %v3381
    %v3383 = vsub.f32 %v3382, 1.0
    %v3384 = vsel %vm3380, %v3379, %v3383
    %v3385 = vrsqrt.pop %v3363
    %v3386 = vmul.f32 %v3385, %v3363
    %v3387 = vmul.f32 %v3386, %v3385
    %v3388 = vmul.f32 0.5, %v3387
    %v3389 = vsub.f32 1.5, %v3388
    %v3390 = vmul.f32 %v3385, %v3389
    %vm3391 = vweird.f32 %v3363
    %vm3392 = vweird.f32 %v3385
    %vm3393 = vmor %vm3391, %vm3392
    %v3394 = vsel %vm3393, %v3385, %v3390
    %3396 = vrot.lane.b32.xlu0 %v3394, 64
    %v3397 = vpop.permute.xlu0 %3396
    %v3399 = vmul.f32 %v3304, %v3397
    %v3400 = vld [vmem:[#allocation8] sm:$0xff]
    %v3401 = vld [vmem:[#allocation8 + $0x8] sm:$0xff]
    %v3402 = vld [vmem:[#allocation8 + $0x10] sm:$0xff]
    %v3403 = vld [vmem:[#allocation8 + $0x18] sm:$0xff]
    %v3404 = vld [vmem:[#allocation8 + $0x20] sm:$0xff]
    %v3405 = vld [vmem:[#allocation8 + $0x28] sm:$0xff]
    %v3406 = vld [vmem:[#allocation8 + $0x30] sm:$0xff]
    %v3407 = vld [vmem:[#allocation8 + $0x38] sm:$0xff]
    %v3408 = vperm.slane %v3305, 0
    %v3409 = vlaneseq
    %v3410 = vshrl.u32 %v3409, 7
    %3412 = vset.pattern.permute.xlu0 %v3410
    %3413 = vperm.xlu0 %3412, %v3408
    %v3414 = vpop.permute.xlu0 %3413
    %v3415 = vlaneseq
    %v3416 = vshrl.u32 %v3415, 7
    %v3417 = vadd.s32 %v3416, 8
    %3418 = vset.pattern.permute.xlu0 %v3417
    %3419 = vperm.xlu0 %3418, %v3408
    %v3420 = vpop.permute.xlu0 %3419
    %v3421 = vlaneseq
    %v3422 = vshrl.u32 %v3421, 7
    %v3423 = vadd.s32 %v3422, 16
    %3424 = vset.pattern.permute.xlu0 %v3423
    %3425 = vperm.xlu0 %3424, %v3408
    %v3426 = vpop.permute.xlu0 %3425
    %v3427 = vlaneseq
    %v3428 = vshrl.u32 %v3427, 7
    %v3429 = vadd.s32 %v3428, 24
    %3430 = vset.pattern.permute.xlu0 %v3429
    %3431 = vperm.xlu0 %3430, %v3408
    %v3432 = vpop.permute.xlu0 %3431
    %v3433 = vperm.slane %v3305, 1
    %v3434 = vlaneseq
    %v3435 = vshrl.u32 %v3434, 7
    %3437 = vset.pattern.permute.xlu0 %v3435
    %3438 = vperm.xlu0 %3437, %v3433
    %v3439 = vpop.permute.xlu0 %3438
    %v3440 = vlaneseq
    %v3441 = vshrl.u32 %v3440, 7
    %v3442 = vadd.s32 %v3441, 8
    %3443 = vset.pattern.permute.xlu0 %v3442
    %3444 = vperm.xlu0 %3443, %v3433
    %v3445 = vpop.permute.xlu0 %3444
    %v3446 = vlaneseq
    %v3447 = vshrl.u32 %v3446, 7
    %v3448 = vadd.s32 %v3447, 16
    %3449 = vset.pattern.permute.xlu0 %v3448
    %3450 = vperm.xlu0 %3449, %v3433
    %v3451 = vpop.permute.xlu0 %3450
    %v3452 = vlaneseq
    %v3453 = vshrl.u32 %v3452, 7
    %v3454 = vadd.s32 %v3453, 24
    %3455 = vset.pattern.permute.xlu0 %v3454
    %3456 = vperm.xlu0 %3455, %v3433
    %v3457 = vpop.permute.xlu0 %3456
    %v3459 = vrot.slane %v3384, 1
    %v3460 = vperm.slane %v3384, 0
    %v3461 = vperm.slane %v3459, 0
    %v3464 = vmul.f32 %v3414, %v3460
    %v3465 = vmul.f32 %v3420, %v3460
    %v3466 = vmul.f32 %v3426, %v3460
    %v3467 = vmul.f32 %v3432, %v3460
    %v3468 = vmul.f32 %v3439, %v3461
    %v3469 = vmul.f32 %v3445, %v3461
    %v3470 = vmul.f32 %v3451, %v3461
    %v3471 = vmul.f32 %v3457, %v3461
    %v3472 = vmul.f32 %v3464, %v790
    %v3473 = vmul.f32 %v3465, %v792
    %v3474 = vmul.f32 %v3466, %v794
    %v3475 = vmul.f32 %v3467, %v796
    %v3476 = vmul.f32 %v3468, %v790
    %v3477 = vmul.f32 %v3469, %v792
    %v3478 = vmul.f32 %v3470, %v794
    %v3479 = vmul.f32 %v3471, %v796
    %3488 = vrot.lane.b32.xlu0 %v3472, 32
    %v3489 = vpop.permute.xlu0 %3488
    %3490 = vrot.lane.b32.xlu0 %v3473, 32
    %v3491 = vpop.permute.xlu0 %3490
    %3492 = vrot.lane.b32.xlu0 %v3474, 32
    %v3493 = vpop.permute.xlu0 %3492
    %3494 = vrot.lane.b32.xlu0 %v3475, 32
    %v3495 = vpop.permute.xlu0 %3494
    %3496 = vrot.lane.b32.xlu0 %v3476, 32
    %v3497 = vpop.permute.xlu0 %3496
    %3498 = vrot.lane.b32.xlu0 %v3477, 32
    %v3499 = vpop.permute.xlu0 %3498
    %3500 = vrot.lane.b32.xlu0 %v3478, 32
    %v3501 = vpop.permute.xlu0 %3500
    %3502 = vrot.lane.b32.xlu0 %v3479, 32
    %v3503 = vpop.permute.xlu0 %3502
    %v3512 = vadd.f32 %v3400, %v3489
    %v3513 = vadd.f32 %v3401, %v3491
    %v3514 = vadd.f32 %v3402, %v3493
    %v3515 = vadd.f32 %v3403, %v3495
    %v3516 = vadd.f32 %v3404, %v3497
    %v3517 = vadd.f32 %v3405, %v3499
    %v3518 = vadd.f32 %v3406, %v3501
    %v3519 = vadd.f32 %v3407, %v3503
    %3520 = vst.msk [vmem:[#allocation8] sm:$0xff] %vm215, %v3512
    %3521 = vst.msk [vmem:[#allocation8 + $0x8] sm:$0xff] %vm215, %v3513
    %3522 = vst.msk [vmem:[#allocation8 + $0x10] sm:$0xff] %vm215, %v3514
    %3523 = vst.msk [vmem:[#allocation8 + $0x18] sm:$0xff] %vm215, %v3515
    %3524 = vst.msk [vmem:[#allocation8 + $0x20] sm:$0xff] %vm215, %v3516
    %3525 = vst.msk [vmem:[#allocation8 + $0x28] sm:$0xff] %vm215, %v3517
    %3526 = vst.msk [vmem:[#allocation8 + $0x30] sm:$0xff] %vm215, %v3518
    %3527 = vst.msk [vmem:[#allocation8 + $0x38] sm:$0xff] %vm215, %v3519
    %v3528 = vld [vmem:[#allocation8] sm:$0xff]
    %v3529 = vld [vmem:[#allocation8 + $0x8] sm:$0xff]
    %v3530 = vld [vmem:[#allocation8 + $0x10] sm:$0xff]
    %v3531 = vld [vmem:[#allocation8 + $0x18] sm:$0xff]
    %v3532 = vld [vmem:[#allocation8 + $0x20] sm:$0xff]
    %v3533 = vld [vmem:[#allocation8 + $0x28] sm:$0xff]
    %v3534 = vld [vmem:[#allocation8 + $0x30] sm:$0xff]
    %v3535 = vld [vmem:[#allocation8 + $0x38] sm:$0xff]
    %v3537 = vrot.slane %v3399, 1
    %v3538 = vperm.slane %v3399, 0
    %v3539 = vperm.slane %v3537, 0
    %3540 = vrot.lane.b32.xlu0 %v3538, 64
    %v3541 = vpop.permute.xlu0 %3540
    %3542 = vrot.lane.b32.xlu0 %v3539, 64
    %v3543 = vpop.permute.xlu0 %3542
    %v3546 = vmul.f32 %v3528, %v3541
    %v3547 = vmul.f32 %v3529, %v3541
    %v3548 = vmul.f32 %v3530, %v3541
    %v3549 = vmul.f32 %v3531, %v3541
    %v3550 = vmul.f32 %v3532, %v3543
    %v3551 = vmul.f32 %v3533, %v3543
    %v3552 = vmul.f32 %v3534, %v3543
    %v3553 = vmul.f32 %v3535, %v3543
    %v3554 = vsel %vm215, %v3546, 0.0
    %3555 = vadd.xlane.f32.xlu0 %v3554
    %v3556 = vpop.xlane.xlu0 %3555
    %v3557 = vsel %vm215, %v3547, 0.0
    %3558 = vadd.xlane.f32.xlu0 %v3557
    %v3559 = vpop.xlane.xlu0 %3558
    %v3560 = vsel %vm215, %v3548, 0.0
    %3561 = vadd.xlane.f32.xlu0 %v3560
    %v3562 = vpop.xlane.xlu0 %3561
    %v3563 = vsel %vm215, %v3549, 0.0
    %3564 = vadd.xlane.f32.xlu0 %v3563
    %v3565 = vpop.xlane.xlu0 %3564
    %v3566 = vsel %vm215, %v3550, 0.0
    %3567 = vadd.xlane.f32.xlu0 %v3566
    %v3568 = vpop.xlane.xlu0 %3567
    %v3569 = vsel %vm215, %v3551, 0.0
    %3570 = vadd.xlane.f32.xlu0 %v3569
    %v3571 = vpop.xlane.xlu0 %3570
    %v3572 = vsel %vm215, %v3552, 0.0
    %3573 = vadd.xlane.f32.xlu0 %v3572
    %v3574 = vpop.xlane.xlu0 %3573
    %v3575 = vsel %vm215, %v3553, 0.0
    %3576 = vadd.xlane.f32.xlu0 %v3575
    %v3577 = vpop.xlane.xlu0 %3576
    %v3586 = vperm.slane %v3556, %v916
    %v3587 = vperm.slane %v3559, %v918
    %v3588 = vsel %vm920, %v3587, %v3586
    %v3589 = vperm.slane %v3562, %v922
    %v3590 = vsel %vm924, %v3589, %v3588
    %v3591 = vperm.slane %v3565, %v926
    %v3592 = vsel %vm928, %v3591, %v3590
    %v3593 = vperm.slane %v3568, %v916
    %v3594 = vperm.slane %v3571, %v918
    %v3595 = vsel %vm920, %v3594, %v3593
    %v3596 = vperm.slane %v3574, %v922
    %v3597 = vsel %vm924, %v3596, %v3595
    %v3598 = vperm.slane %v3577, %v926
    %v3599 = vsel %vm928, %v3598, %v3597
    %v3600 = vsel %vm937, %v3599, %v3592
    %3602 = vst.msk [vmem:[#allocation9] sm:$0x3] %vm940, %v3600
    %3603 = vrot.lane.b32.xlu0 %v3384, 32
    %v3604 = vpop.permute.xlu0 %3603
    %3606 = vst.msk [vmem:[#allocation17] sm:$0x3] %vm940, %v3604
    %3607 = vrot.lane.b32.xlu0 %v3399, 64
    %v3608 = vpop.permute.xlu0 %3607
    %3610 = vst.msk [vmem:[#allocation19] sm:$0x3] %vm940, %v3608
    %v3611 = vld [vmem:[#allocation9] sm:$0x3]
    %v3612 = vld [vmem:[#allocation7] sm:$0x3]
    %v3613 = vld [vmem:[#allocation6 + $0x18] sm:$0xc]
    %v3614 = vld [vmem:[#allocation6 + $0x20] sm:$0xc]
    %v3615 = vld [vmem:[#allocation6 + $0x28] sm:$0xc]
    %v3616 = vpack.c.bf16 %v3611, %v3611
    %v3617 = vld [vmem:[#allocation3] sm:$0xff]
    %v3618 = vld [vmem:[#allocation3 + $0x8] sm:$0xf]
    %v3619 = vld [vmem:[#allocation3 + $0xc] sm:$0xff]
    %v3620 = vld [vmem:[#allocation3 + $0x14] sm:$0xf]
    %v3621 = vld [vmem:[#allocation3 + $0x18] sm:$0xff]
    %v3622 = vld [vmem:[#allocation3 + $0x20] sm:$0xf]
    %v3623 = vld [vmem:[#allocation3 + $0x24] sm:$0xff]
    %v3624 = vld [vmem:[#allocation3 + $0x2c] sm:$0xf]
    %v3633 = vunpack.c.l.b16 %v3617
    %v3634 = vunpack.c.h.b16 %v3617
    %v3635 = vunpack.c.l.b16 %v3618
    %v3636 = vunpack.c.l.b16 %v3619
    %v3637 = vunpack.c.h.b16 %v3619
    %v3638 = vunpack.c.l.b16 %v3620
    %v3639 = vunpack.c.l.b16 %v3621
    %v3640 = vunpack.c.h.b16 %v3621
    %v3641 = vunpack.c.l.b16 %v3622
    %v3642 = vunpack.c.l.b16 %v3623
    %v3643 = vunpack.c.h.b16 %v3623
    %v3644 = vunpack.c.l.b16 %v3624
    %v3645 = vpack.c.b16 %v3636, %v3633
    %v3646 = vpack.c.b16 %v3637, %v3634
    %v3647 = vpack.c.b16 %v3638, %v3635
    %v3648 = vpack.c.b16 %v3642, %v3639
    %v3649 = vpack.c.b16 %v3643, %v3640
    %v3650 = vpack.c.b16 %v3644, %v3641
    %v3658 = vsel %vm215, %v3616, 0
    %3660 = vmatpush.bf16.msra.mxu0 0
    %3661 = vmatpush.bf16.msra.mxu0 0
    %3662 = vmatpush.bf16.msra.mxu0 0
    %3663 = vmatpush.bf16.msra.mxu0 0
    %3664 = vmatpush.bf16.msra.mxu0 0
    %3665 = vmatpush.bf16.msra.mxu0 0
    %3666 = vmatpush.bf16.msra.mxu0 %v3648
    %3667 = vmatpush.bf16.msra.mxu0 %v3645
    %3668 = vmatmul.bf16.gmra.mxu0 %v3658
    %v3669 = vpop.f32.mrf.mxu0
    %v3670 = vadd.f32 0.0, %v3669
    %v3671 = vpop.f32.mrf.mxu0
    %3672 = vdwg.mxu0
    %3673 = vmatpush.bf16.msra.mxu0 0
    %3674 = vmatpush.bf16.msra.mxu0 0
    %3675 = vmatpush.bf16.msra.mxu0 0
    %3676 = vmatpush.bf16.msra.mxu0 0
    %3677 = vmatpush.bf16.msra.mxu0 0
    %3678 = vmatpush.bf16.msra.mxu0 0
    %3679 = vmatpush.bf16.msra.mxu0 %v3649
    %3680 = vmatpush.bf16.msra.mxu0 %v3646
    %3681 = vmatmul.bf16.gmra.mxu0 %v3658
    %v3682 = vpop.f32.mrf.mxu0
    %v3683 = vadd.f32 0.0, %v3682
    %v3684 = vpop.f32.mrf.mxu0
    %3685 = vdwg.mxu0
    %3686 = vmatpush.bf16.msra.mxu0 0
    %3687 = vmatpush.bf16.msra.mxu0 0
    %3688 = vmatpush.bf16.msra.mxu0 0
    %3689 = vmatpush.bf16.msra.mxu0 0
    %3690 = vmatpush.bf16.msra.mxu0 0
    %3691 = vmatpush.bf16.msra.mxu0 0
    %3692 = vmatpush.bf16.msra.mxu0 %v3650
    %3693 = vmatpush.bf16.msra.mxu0 %v3647
    %3694 = vmatmul.bf16.gmra.mxu0 %v3658
    %v3695 = vpop.f32.mrf.mxu0
    %v3696 = vadd.f32 0.0, %v3695
    %v3697 = vpop.f32.mrf.mxu0
    %3698 = vdwg.mxu0
    %v3702 = vrot.slane %v3670, 6
    %v3703 = vrot.slane %v3683, 6
    %v3704 = vrot.slane %v3696, 6
    %v3708 = vadd.f32 %v3613, %v3702
    %v3709 = vadd.f32 %v3614, %v3703
    %v3710 = vadd.f32 %v3615, %v3704
    %v3711 = vpack.c.bf16 %v3612, %v3612
    %v3712 = vld [vmem:[#allocation4] sm:$0xff]
    %v3713 = vld [vmem:[#allocation4 + $0x8] sm:$0xf]
    %v3714 = vld [vmem:[#allocation4 + $0xc] sm:$0xff]
    %v3715 = vld [vmem:[#allocation4 + $0x14] sm:$0xf]
    %v3716 = vld [vmem:[#allocation4 + $0x18] sm:$0xff]
    %v3717 = vld [vmem:[#allocation4 + $0x20] sm:$0xf]
    %v3718 = vld [vmem:[#allocation4 + $0x24] sm:$0xff]
    %v3719 = vld [vmem:[#allocation4 + $0x2c] sm:$0xf]
    %v3720 = vld [vmem:[#allocation4 + $0x30] sm:$0xff]
    %v3721 = vld [vmem:[#allocation4 + $0x38] sm:$0xf]
    %v3722 = vld [vmem:[#allocation4 + $0x3c] sm:$0xff]
    %v3723 = vld [vmem:[#allocation4 + $0x44] sm:$0xf]
    %v3724 = vld [vmem:[#allocation4 + $0x48] sm:$0xff]
    %v3725 = vld [vmem:[#allocation4 + $0x50] sm:$0xf]
    %v3726 = vld [vmem:[#allocation4 + $0x54] sm:$0xff]
    %v3727 = vld [vmem:[#allocation4 + $0x5c] sm:$0xf]
    %v3728 = vld [vmem:[#allocation4 + $0x60] sm:$0xff]
    %v3729 = vld [vmem:[#allocation4 + $0x68] sm:$0xf]
    %v3730 = vld [vmem:[#allocation4 + $0x6c] sm:$0xff]
    %v3731 = vld [vmem:[#allocation4 + $0x74] sm:$0xf]
    %v3732 = vld [vmem:[#allocation4 + $0x78] sm:$0xff]
    %v3733 = vld [vmem:[#allocation4 + $0x80] sm:$0xf]
    %v3734 = vld [vmem:[#allocation4 + $0x84] sm:$0xff]
    %v3735 = vld [vmem:[#allocation4 + $0x8c] sm:$0xf]
    %v3760 = vunpack.c.l.b16 %v3712
    %v3761 = vunpack.c.h.b16 %v3712
    %v3762 = vunpack.c.l.b16 %v3713
    %v3763 = vunpack.c.l.b16 %v3714
    %v3764 = vunpack.c.h.b16 %v3714
    %v3765 = vunpack.c.l.b16 %v3715
    %v3766 = vunpack.c.l.b16 %v3716
    %v3767 = vunpack.c.h.b16 %v3716
    %v3768 = vunpack.c.l.b16 %v3717
    %v3769 = vunpack.c.l.b16 %v3718
    %v3770 = vunpack.c.h.b16 %v3718
    %v3771 = vunpack.c.l.b16 %v3719
    %v3772 = vunpack.c.l.b16 %v3720
    %v3773 = vunpack.c.h.b16 %v3720
    %v3774 = vunpack.c.l.b16 %v3721
    %v3775 = vunpack.c.l.b16 %v3722
    %v3776 = vunpack.c.h.b16 %v3722
    %v3777 = vunpack.c.l.b16 %v3723
    %v3778 = vunpack.c.l.b16 %v3724
    %v3779 = vunpack.c.h.b16 %v3724
    %v3780 = vunpack.c.l.b16 %v3725
    %v3781 = vunpack.c.l.b16 %v3726
    %v3782 = vunpack.c.h.b16 %v3726
    %v3783 = vunpack.c.l.b16 %v3727
    %v3784 = vunpack.c.l.b16 %v3728
    %v3785 = vunpack.c.h.b16 %v3728
    %v3786 = vunpack.c.l.b16 %v3729
    %v3787 = vunpack.c.l.b16 %v3730
    %v3788 = vunpack.c.h.b16 %v3730
    %v3789 = vunpack.c.l.b16 %v3731
    %v3790 = vunpack.c.l.b16 %v3732
    %v3791 = vunpack.c.h.b16 %v3732
    %v3792 = vunpack.c.l.b16 %v3733
    %v3793 = vunpack.c.l.b16 %v3734
    %v3794 = vunpack.c.h.b16 %v3734
    %v3795 = vunpack.c.l.b16 %v3735
    %v3796 = vpack.c.b16 %v3763, %v3760
    %v3797 = vpack.c.b16 %v3764, %v3761
    %v3798 = vpack.c.b16 %v3765, %v3762
    %v3799 = vpack.c.b16 %v3769, %v3766
    %v3800 = vpack.c.b16 %v3770, %v3767
    %v3801 = vpack.c.b16 %v3771, %v3768
    %v3802 = vpack.c.b16 %v3775, %v3772
    %v3803 = vpack.c.b16 %v3776, %v3773
    %v3804 = vpack.c.b16 %v3777, %v3774
    %v3805 = vpack.c.b16 %v3781, %v3778
    %v3806 = vpack.c.b16 %v3782, %v3779
    %v3807 = vpack.c.b16 %v3783, %v3780
    %v3808 = vpack.c.b16 %v3787, %v3784
    %v3809 = vpack.c.b16 %v3788, %v3785
    %v3810 = vpack.c.b16 %v3789, %v3786
    %v3811 = vpack.c.b16 %v3793, %v3790
    %v3812 = vpack.c.b16 %v3794, %v3791
    %v3813 = vpack.c.b16 %v3795, %v3792
    %v3833 = vsel %vm491, %v3711, 0
    %3835 = vmatpush.bf16.msra.mxu0 0
    %3836 = vmatpush.bf16.msra.mxu0 0
    %3837 = vmatpush.bf16.msra.mxu0 %v3811
    %3838 = vmatpush.bf16.msra.mxu0 %v3808
    %3839 = vmatpush.bf16.msra.mxu0 %v3805
    %3840 = vmatpush.bf16.msra.mxu0 %v3802
    %3841 = vmatpush.bf16.msra.mxu0 %v3799
    %3842 = vmatpush.bf16.msra.mxu0 %v3796
    %3843 = vmatmul.bf16.gmra.mxu0 %v3833
    %v3844 = vpop.f32.mrf.mxu0
    %v3845 = vadd.f32 %v269, %v3844
    %v3846 = vpop.f32.mrf.mxu0
    %3847 = vdwg.mxu0
    %3848 = vmatpush.bf16.msra.mxu0 0
    %3849 = vmatpush.bf16.msra.mxu0 0
    %3850 = vmatpush.bf16.msra.mxu0 %v3812
    %3851 = vmatpush.bf16.msra.mxu0 %v3809
    %3852 = vmatpush.bf16.msra.mxu0 %v3806
    %3853 = vmatpush.bf16.msra.mxu0 %v3803
    %3854 = vmatpush.bf16.msra.mxu0 %v3800
    %3855 = vmatpush.bf16.msra.mxu0 %v3797
    %3856 = vmatmul.bf16.gmra.mxu0 %v3833
    %v3857 = vpop.f32.mrf.mxu0
    %v3858 = vadd.f32 %v270, %v3857
    %v3859 = vpop.f32.mrf.mxu0
    %3860 = vdwg.mxu0
    %3861 = vmatpush.bf16.msra.mxu0 0
    %3862 = vmatpush.bf16.msra.mxu0 0
    %3863 = vmatpush.bf16.msra.mxu0 %v3813
    %3864 = vmatpush.bf16.msra.mxu0 %v3810
    %3865 = vmatpush.bf16.msra.mxu0 %v3807
    %3866 = vmatpush.bf16.msra.mxu0 %v3804
    %3867 = vmatpush.bf16.msra.mxu0 %v3801
    %3868 = vmatpush.bf16.msra.mxu0 %v3798
    %3869 = vmatmul.bf16.gmra.mxu0 %v3833
    %v3870 = vpop.f32.mrf.mxu0
    %v3871 = vadd.f32 %v271, %v3870
    %v3872 = vpop.f32.mrf.mxu0
    %3873 = vdwg.mxu0
    %v3875 = vrot.slane %v3845, 6
    %v3877 = vadd.f32 %v3708, %v3875
    %v3878 = vxor.u32 %v3877, 2147483648
    %v3879 = vmul.f32 %v3878, 1.442695
    %v3880 = vpow.pop %v3879
    %v3881 = vadd.f32 %v3880, 1.0
    %v3882 = vrcp.pop %v3881
    %v3883 = vmul.f32 %v3881, %v3882
    %v3884 = vsub.f32 1.0, %v3883
    %v3885 = vmul.f32 %v3882, %v3884
    %v3886 = vadd.f32 %v3882, %v3885
    %vm3887 = vweird.f32 %v3881
    %vm3888 = vweird.f32 %v3882
    %vm3889 = vmor %vm3887, %vm3888
    %v3890 = vsel %vm3889, %v3882, %v3886
    %v3891 = vand.u32 2147483647, %v3881
    %vm3892 = vcmp.eq.f32.partialorder %v3891, 8.507059e+37
    %v3893 = vand.u32 %v3881, 2147483648
    %v3894 = vor.u32 1.1754944e-38, %v3893
    %v3895 = vsel %vm3892, %v3894, %v3890
    %v3896 = vmul.f32 1.0, %v3895
    %v3898 = vrot.slane %v3858, 6
    %v3900 = vadd.f32 %v3709, %v3898
    %v3901 = vxor.u32 %v3900, 2147483648
    %v3902 = vmul.f32 %v3901, 1.442695
    %v3903 = vpow.pop %v3902
    %v3904 = vadd.f32 %v3903, 1.0
    %v3905 = vrcp.pop %v3904
    %v3906 = vmul.f32 %v3904, %v3905
    %v3907 = vsub.f32 1.0, %v3906
    %v3908 = vmul.f32 %v3905, %v3907
    %v3909 = vadd.f32 %v3905, %v3908
    %vm3910 = vweird.f32 %v3904
    %vm3911 = vweird.f32 %v3905
    %vm3912 = vmor %vm3910, %vm3911
    %v3913 = vsel %vm3912, %v3905, %v3909
    %v3914 = vand.u32 2147483647, %v3904
    %vm3915 = vcmp.eq.f32.partialorder %v3914, 8.507059e+37
    %v3916 = vand.u32 %v3904, 2147483648
    %v3917 = vor.u32 1.1754944e-38, %v3916
    %v3918 = vsel %vm3915, %v3917, %v3913
    %v3919 = vmul.f32 1.0, %v3918
    %v3921 = vrot.slane %v3871, 6
    %3922 = vrot.lane.b32.xlu0 %v3898, 64
    %v3923 = vpop.permute.xlu0 %3922
    %3924 = vrot.lane.b32.xlu0 %v3921, 64
    %v3925 = vpop.permute.xlu0 %3924
    %v3926 = vsel %vm580, %v3923, %v3925
    %v3928 = vmul.f32 %v3896, %v3926
    %3930 = vrot.lane.b32.xlu0 %v3928, 64
    %v3931 = vpop.permute.xlu0 %3930
    %v3933 = vadd.f32 %v3709, %v3931
    %v3934 = vadd.f32 %v3710, %v3931
    %v3935 = vtanh.pop %v3933
    %v3936 = vtanh.pop %v3934
    %v3939 = vrot.slane %v3935, 2
    %v3940 = vrot.slane %v3936, 2
    %3941 = vrot.lane.b32.xlu0 %v3939, 64
    %v3942 = vpop.permute.xlu0 %3941
    %3943 = vrot.lane.b32.xlu0 %v3940, 64
    %v3944 = vpop.permute.xlu0 %3943
    %v3945 = vsel %vm580, %v3942, %v3944
    %v3947 = vsub.f32 %v3612, %v3945
    %v3949 = vrot.slane %v3947, 6
    %3950 = vrot.lane.b32.xlu0 %v3949, 96
    %v3951 = vpop.permute.xlu0 %3950
    %v3953 = vmul.f32 %v3896, %v3951
    %v3954 = vmul.f32 %v3919, %v3951
    %3957 = vrot.lane.b32.xlu0 %v3953, 96
    %v3958 = vpop.permute.xlu0 %3957
    %3959 = vrot.lane.b32.xlu0 %v3954, 96
    %v3960 = vpop.permute.xlu0 %3959
    %v3961 = vsel %vm491, %v3958, %v3960
    %v3964 = vadd.f32 %v3935, %v3961
    %v3965 = vadd.f32 %v3936, %v3960
    %3968 = vrot.lane.b32.xlu0 %v3964, 64
    %v3969 = vpop.permute.xlu0 %3968
    %3970 = vrot.lane.b32.xlu0 %v3965, 64
    %v3971 = vpop.permute.xlu0 %3970
    %v3972 = vsel %vm580, %v3969, %v3971
    %3974 = vst.msk [vmem:[#allocation7 - $0x2] sm:$0xc] %vm1313, %v3972
    %v3975 = vmul.f32 %v3964, %v3964
    %v3977 = vrot.slane %v3975, 2
    %3978 = vrot.lane.b32.xlu0 %v3977, 32
    %v3979 = vpop.permute.xlu0 %3978
    %v3980 = vsel %vm215, %v3979, 0
    %3982 = vmatpush.msra.mxu0 0.0
    %3983 = vmatpush.msra.mxu0 0.0
    %3984 = vmatpush.msra.mxu0 0.0
    %3985 = vmatpush.msra.mxu0 0.0
    %3986 = vmatpush.msra.mxu0 0.0
    %3987 = vmatpush.msra.mxu0 0.0
    %3988 = vmatpush.msra.mxu0 0.0
    %3989 = vmatpush.msra.mxu0 0.0
    %3990 = vmatpush.msra.mxu0 0.0
    %3991 = vmatpush.msra.mxu0 0.0
    %3992 = vmatpush.msra.mxu0 0.0
    %3993 = vmatpush.msra.mxu0 0.0
    %3994 = vmatpush.msra.mxu0 %v278
    %3995 = vmatpush.msra.mxu0 %v277
    %3996 = vmatpush.msra.mxu0 %v276
    %3997 = vmatpush.msra.mxu0 %v275
    %3998 = vmatmul.f32.gmra.mxu0 %v3980
    %v3999 = vpop.f32.mrf.mxu0
    %v4000 = vadd.f32 0.0, %v3999
    %4001 = vdwg.mxu0
    %4002 = vrot.lane.b32.xlu0 %v3977, 64
    %v4003 = vpop.permute.xlu0 %4002
    %v4004 = vsel %vm215, %v4003, 0
    %4006 = vmatpush.msra.mxu0 0.0
    %4007 = vmatpush.msra.mxu0 0.0
    %4008 = vmatpush.msra.mxu0 0.0
    %4009 = vmatpush.msra.mxu0 0.0
    %4010 = vmatpush.msra.mxu0 0.0
    %4011 = vmatpush.msra.mxu0 0.0
    %4012 = vmatpush.msra.mxu0 0.0
    %4013 = vmatpush.msra.mxu0 0.0
    %4014 = vmatpush.msra.mxu0 0.0
    %4015 = vmatpush.msra.mxu0 0.0
    %4016 = vmatpush.msra.mxu0 0.0
    %4017 = vmatpush.msra.mxu0 0.0
    %4018 = vmatpush.msra.mxu0 %v278
    %4019 = vmatpush.msra.mxu0 %v277
    %4020 = vmatpush.msra.mxu0 %v276
    %4021 = vmatpush.msra.mxu0 %v275
    %4022 = vmatmul.f32.gmra.mxu0 %v4004
    %v4023 = vpop.f32.mrf.mxu0
    %v4024 = vadd.f32 0.0, %v4023
    %4025 = vdwg.mxu0
    %v4026 = vrsqrt.pop %v4000
    %v4027 = vmul.f32 %v4026, %v4000
    %v4028 = vmul.f32 %v4027, %v4026
    %v4029 = vmul.f32 0.5, %v4028
    %v4030 = vsub.f32 1.5, %v4029
    %v4031 = vmul.f32 %v4026, %v4030
    %vm4032 = vweird.f32 %v4000
    %vm4033 = vweird.f32 %v4026
    %vm4034 = vmor %vm4032, %vm4033
    %v4035 = vsel %vm4034, %v4026, %v4031
    %v4037 = vrot.slane %v4035, 6
    %4038 = vrot.lane.b32.xlu0 %v4037, 96
    %v4039 = vpop.permute.xlu0 %4038
    %v4041 = vmul.f32 %v3964, %v4039
    %vm4042 = vcmp.gt.f32.partialorder %v4041, 0.0
    %v4043 = vmul.f32 %v4041, 1.442695
    %v4044 = vpow.pop %v4043
    %v4045 = vsub.f32 %v4044, 1.0
    %v4046 = vsel %vm4042, %v4041, %v4045
    %v4047 = vrsqrt.pop %v4024
    %v4048 = vmul.f32 %v4047, %v4024
    %v4049 = vmul.f32 %v4048, %v4047
    %v4050 = vmul.f32 0.5, %v4049
    %v4051 = vsub.f32 1.5, %v4050
    %v4052 = vmul.f32 %v4047, %v4051
    %vm4053 = vweird.f32 %v4024
    %vm4054 = vweird.f32 %v4047
    %vm4055 = vmor %vm4053, %vm4054
    %v4056 = vsel %vm4055, %v4047, %v4052
    %v4058 = vrot.slane %v4056, 6
    %4059 = vrot.lane.b32.xlu0 %v4058, 64
    %v4060 = vpop.permute.xlu0 %4059
    %v4062 = vmul.f32 %v3964, %v4060
    %v4063 = vld [vmem:[#allocation8] sm:$0xff]
    %v4064 = vld [vmem:[#allocation8 + $0x8] sm:$0xff]
    %v4065 = vld [vmem:[#allocation8 + $0x10] sm:$0xff]
    %v4066 = vld [vmem:[#allocation8 + $0x18] sm:$0xff]
    %v4067 = vld [vmem:[#allocation8 + $0x20] sm:$0xff]
    %v4068 = vld [vmem:[#allocation8 + $0x28] sm:$0xff]
    %v4069 = vld [vmem:[#allocation8 + $0x30] sm:$0xff]
    %v4070 = vld [vmem:[#allocation8 + $0x38] sm:$0xff]
    %v4071 = vperm.slane %v3965, 2
    %v4072 = vlaneseq
    %v4073 = vshrl.u32 %v4072, 7
    %4075 = vset.pattern.permute.xlu0 %v4073
    %4076 = vperm.xlu0 %4075, %v4071
    %v4077 = vpop.permute.xlu0 %4076
    %v4078 = vlaneseq
    %v4079 = vshrl.u32 %v4078, 7
    %v4080 = vadd.s32 %v4079, 8
    %4081 = vset.pattern.permute.xlu0 %v4080
    %4082 = vperm.xlu0 %4081, %v4071
    %v4083 = vpop.permute.xlu0 %4082
    %v4084 = vlaneseq
    %v4085 = vshrl.u32 %v4084, 7
    %v4086 = vadd.s32 %v4085, 16
    %4087 = vset.pattern.permute.xlu0 %v4086
    %4088 = vperm.xlu0 %4087, %v4071
    %v4089 = vpop.permute.xlu0 %4088
    %v4090 = vlaneseq
    %v4091 = vshrl.u32 %v4090, 7
    %v4092 = vadd.s32 %v4091, 24
    %4093 = vset.pattern.permute.xlu0 %v4092
    %4094 = vperm.xlu0 %4093, %v4071
    %v4095 = vpop.permute.xlu0 %4094
    %v4096 = vperm.slane %v3965, 3
    %v4097 = vlaneseq
    %v4098 = vshrl.u32 %v4097, 7
    %4100 = vset.pattern.permute.xlu0 %v4098
    %4101 = vperm.xlu0 %4100, %v4096
    %v4102 = vpop.permute.xlu0 %4101
    %v4103 = vlaneseq
    %v4104 = vshrl.u32 %v4103, 7
    %v4105 = vadd.s32 %v4104, 8
    %4106 = vset.pattern.permute.xlu0 %v4105
    %4107 = vperm.xlu0 %4106, %v4096
    %v4108 = vpop.permute.xlu0 %4107
    %v4109 = vlaneseq
    %v4110 = vshrl.u32 %v4109, 7
    %v4111 = vadd.s32 %v4110, 16
    %4112 = vset.pattern.permute.xlu0 %v4111
    %4113 = vperm.xlu0 %4112, %v4096
    %v4114 = vpop.permute.xlu0 %4113
    %v4115 = vlaneseq
    %v4116 = vshrl.u32 %v4115, 7
    %v4117 = vadd.s32 %v4116, 24
    %4118 = vset.pattern.permute.xlu0 %v4117
    %4119 = vperm.xlu0 %4118, %v4096
    %v4120 = vpop.permute.xlu0 %4119
    %4122 = vst [vmem:[#allocation1] sm:$0xff] %v4046
    %s4123 = scalar_lea.vmem [#allocation1], 2
    %v4124 = vld [vmem:[%s4123] ss:$9 sm:$0xff]
    %s4125 = scalar_lea.vmem [#allocation1], 3
    %v4126 = vld [vmem:[%s4125] ss:$9 sm:$0xff]
    %v4127 = vperm.slane %v4124, 0
    %v4128 = vperm.slane %v4126, 0
    %v4131 = vmul.f32 %v4077, %v4127
    %v4132 = vmul.f32 %v4083, %v4127
    %v4133 = vmul.f32 %v4089, %v4127
    %v4134 = vmul.f32 %v4095, %v4127
    %v4135 = vmul.f32 %v4102, %v4128
    %v4136 = vmul.f32 %v4108, %v4128
    %v4137 = vmul.f32 %v4114, %v4128
    %v4138 = vmul.f32 %v4120, %v4128
    %v4139 = vmul.f32 %v4131, %v790
    %v4140 = vmul.f32 %v4132, %v792
    %v4141 = vmul.f32 %v4133, %v794
    %v4142 = vmul.f32 %v4134, %v796
    %v4143 = vmul.f32 %v4135, %v790
    %v4144 = vmul.f32 %v4136, %v792
    %v4145 = vmul.f32 %v4137, %v794
    %v4146 = vmul.f32 %v4138, %v796
    %4155 = vrot.lane.b32.xlu0 %v4139, 32
    %v4156 = vpop.permute.xlu0 %4155
    %4157 = vrot.lane.b32.xlu0 %v4140, 32
    %v4158 = vpop.permute.xlu0 %4157
    %4159 = vrot.lane.b32.xlu0 %v4141, 32
    %v4160 = vpop.permute.xlu0 %4159
    %4161 = vrot.lane.b32.xlu0 %v4142, 32
    %v4162 = vpop.permute.xlu0 %4161
    %4163 = vrot.lane.b32.xlu0 %v4143, 32
    %v4164 = vpop.permute.xlu0 %4163
    %4165 = vrot.lane.b32.xlu0 %v4144, 32
    %v4166 = vpop.permute.xlu0 %4165
    %4167 = vrot.lane.b32.xlu0 %v4145, 32
    %v4168 = vpop.permute.xlu0 %4167
    %4169 = vrot.lane.b32.xlu0 %v4146, 32
    %v4170 = vpop.permute.xlu0 %4169
    %v4179 = vadd.f32 %v4063, %v4156
    %v4180 = vadd.f32 %v4064, %v4158
    %v4181 = vadd.f32 %v4065, %v4160
    %v4182 = vadd.f32 %v4066, %v4162
    %v4183 = vadd.f32 %v4067, %v4164
    %v4184 = vadd.f32 %v4068, %v4166
    %v4185 = vadd.f32 %v4069, %v4168
    %v4186 = vadd.f32 %v4070, %v4170
    %4187 = vst.msk [vmem:[#allocation8] sm:$0xff] %vm215, %v4179
    %4188 = vst.msk [vmem:[#allocation8 + $0x8] sm:$0xff] %vm215, %v4180
    %4189 = vst.msk [vmem:[#allocation8 + $0x10] sm:$0xff] %vm215, %v4181
    %4190 = vst.msk [vmem:[#allocation8 + $0x18] sm:$0xff] %vm215, %v4182
    %4191 = vst.msk [vmem:[#allocation8 + $0x20] sm:$0xff] %vm215, %v4183
    %4192 = vst.msk [vmem:[#allocation8 + $0x28] sm:$0xff] %vm215, %v4184
    %4193 = vst.msk [vmem:[#allocation8 + $0x30] sm:$0xff] %vm215, %v4185
    %4194 = vst.msk [vmem:[#allocation8 + $0x38] sm:$0xff] %vm215, %v4186
    %v4195 = vld [vmem:[#allocation8] sm:$0xff]
    %v4196 = vld [vmem:[#allocation8 + $0x8] sm:$0xff]
    %v4197 = vld [vmem:[#allocation8 + $0x10] sm:$0xff]
    %v4198 = vld [vmem:[#allocation8 + $0x18] sm:$0xff]
    %v4199 = vld [vmem:[#allocation8 + $0x20] sm:$0xff]
    %v4200 = vld [vmem:[#allocation8 + $0x28] sm:$0xff]
    %v4201 = vld [vmem:[#allocation8 + $0x30] sm:$0xff]
    %v4202 = vld [vmem:[#allocation8 + $0x38] sm:$0xff]
    %4204 = vst [vmem:[#allocation1] sm:$0xff] %v4062
    %s4205 = scalar_lea.vmem [#allocation1], 2
    %v4206 = vld [vmem:[%s4205] ss:$9 sm:$0xff]
    %s4207 = scalar_lea.vmem [#allocation1], 3
    %v4208 = vld [vmem:[%s4207] ss:$9 sm:$0xff]
    %v4209 = vperm.slane %v4206, 0
    %v4210 = vperm.slane %v4208, 0
    %4211 = vrot.lane.b32.xlu0 %v4209, 64
    %v4212 = vpop.permute.xlu0 %4211
    %4213 = vrot.lane.b32.xlu0 %v4210, 64
    %v4214 = vpop.permute.xlu0 %4213
    %v4217 = vmul.f32 %v4195, %v4212
    %v4218 = vmul.f32 %v4196, %v4212
    %v4219 = vmul.f32 %v4197, %v4212
    %v4220 = vmul.f32 %v4198, %v4212
    %v4221 = vmul.f32 %v4199, %v4214
    %v4222 = vmul.f32 %v4200, %v4214
    %v4223 = vmul.f32 %v4201, %v4214
    %v4224 = vmul.f32 %v4202, %v4214
    %v4225 = vsel %vm215, %v4217, 0.0
    %4226 = vadd.xlane.f32.xlu0 %v4225
    %v4227 = vpop.xlane.xlu0 %4226
    %v4228 = vsel %vm215, %v4218, 0.0
    %4229 = vadd.xlane.f32.xlu0 %v4228
    %v4230 = vpop.xlane.xlu0 %4229
    %v4231 = vsel %vm215, %v4219, 0.0
    %4232 = vadd.xlane.f32.xlu0 %v4231
    %v4233 = vpop.xlane.xlu0 %4232
    %v4234 = vsel %vm215, %v4220, 0.0
    %4235 = vadd.xlane.f32.xlu0 %v4234
    %v4236 = vpop.xlane.xlu0 %4235
    %v4237 = vsel %vm215, %v4221, 0.0
    %4238 = vadd.xlane.f32.xlu0 %v4237
    %v4239 = vpop.xlane.xlu0 %4238
    %v4240 = vsel %vm215, %v4222, 0.0
    %4241 = vadd.xlane.f32.xlu0 %v4240
    %v4242 = vpop.xlane.xlu0 %4241
    %v4243 = vsel %vm215, %v4223, 0.0
    %4244 = vadd.xlane.f32.xlu0 %v4243
    %v4245 = vpop.xlane.xlu0 %4244
    %v4246 = vsel %vm215, %v4224, 0.0
    %4247 = vadd.xlane.f32.xlu0 %v4246
    %v4248 = vpop.xlane.xlu0 %4247
    %v4257 = vperm.slane %v4227, %v916
    %v4258 = vperm.slane %v4230, %v918
    %v4259 = vsel %vm920, %v4258, %v4257
    %v4260 = vperm.slane %v4233, %v922
    %v4261 = vsel %vm924, %v4260, %v4259
    %v4262 = vperm.slane %v4236, %v926
    %v4263 = vsel %vm928, %v4262, %v4261
    %v4264 = vperm.slane %v4239, %v916
    %v4265 = vperm.slane %v4242, %v918
    %v4266 = vsel %vm920, %v4265, %v4264
    %v4267 = vperm.slane %v4245, %v922
    %v4268 = vsel %vm924, %v4267, %v4266
    %v4269 = vperm.slane %v4248, %v926
    %v4270 = vsel %vm928, %v4269, %v4268
    %v4271 = vsel %vm937, %v4270, %v4263
    %4273 = vst.msk [vmem:[#allocation9] sm:$0x3] %vm940, %v4271
    %4274 = vrot.lane.b32.xlu0 %v4046, 32
    %v4275 = vpop.permute.xlu0 %4274
    %4277 = vst.msk [vmem:[#allocation17 - $0x2] sm:$0xc] %vm1617, %v4275
    %4278 = vrot.lane.b32.xlu0 %v4062, 64
    %v4279 = vpop.permute.xlu0 %4278
    %4281 = vst.msk [vmem:[#allocation19 - $0x2] sm:$0xc] %vm1617, %v4279
    %v4282 = vld [vmem:[#allocation9] sm:$0x3]
    %v4283 = vld [vmem:[#allocation7] sm:$0x3]
    %v4284 = vld [vmem:[#allocation6 + $0x18] sm:$0x30]
    %v4285 = vld [vmem:[#allocation6 + $0x20] sm:$0x30]
    %v4286 = vld [vmem:[#allocation6 + $0x28] sm:$0x30]
    %v4287 = vpack.c.bf16 %v4282, %v4282
    %v4288 = vld [vmem:[#allocation3] sm:$0xff]
    %v4289 = vld [vmem:[#allocation3 + $0x8] sm:$0xf]
    %v4290 = vld [vmem:[#allocation3 + $0xc] sm:$0xff]
    %v4291 = vld [vmem:[#allocation3 + $0x14] sm:$0xf]
    %v4292 = vld [vmem:[#allocation3 + $0x18] sm:$0xff]
    %v4293 = vld [vmem:[#allocation3 + $0x20] sm:$0xf]
    %v4294 = vld [vmem:[#allocation3 + $0x24] sm:$0xff]
    %v4295 = vld [vmem:[#allocation3 + $0x2c] sm:$0xf]
    %v4304 = vunpack.c.l.b16 %v4288
    %v4305 = vunpack.c.h.b16 %v4288
    %v4306 = vunpack.c.l.b16 %v4289
    %v4307 = vunpack.c.l.b16 %v4290
    %v4308 = vunpack.c.h.b16 %v4290
    %v4309 = vunpack.c.l.b16 %v4291
    %v4310 = vunpack.c.l.b16 %v4292
    %v4311 = vunpack.c.h.b16 %v4292
    %v4312 = vunpack.c.l.b16 %v4293
    %v4313 = vunpack.c.l.b16 %v4294
    %v4314 = vunpack.c.h.b16 %v4294
    %v4315 = vunpack.c.l.b16 %v4295
    %v4316 = vpack.c.b16 %v4307, %v4304
    %v4317 = vpack.c.b16 %v4308, %v4305
    %v4318 = vpack.c.b16 %v4309, %v4306
    %v4319 = vpack.c.b16 %v4313, %v4310
    %v4320 = vpack.c.b16 %v4314, %v4311
    %v4321 = vpack.c.b16 %v4315, %v4312
    %v4329 = vsel %vm215, %v4287, 0
    %4331 = vmatpush.bf16.msra.mxu0 0
    %4332 = vmatpush.bf16.msra.mxu0 0
    %4333 = vmatpush.bf16.msra.mxu0 0
    %4334 = vmatpush.bf16.msra.mxu0 0
    %4335 = vmatpush.bf16.msra.mxu0 0
    %4336 = vmatpush.bf16.msra.mxu0 0
    %4337 = vmatpush.bf16.msra.mxu0 %v4319
    %4338 = vmatpush.bf16.msra.mxu0 %v4316
    %4339 = vmatmul.bf16.gmra.mxu0 %v4329
    %v4340 = vpop.f32.mrf.mxu0
    %v4341 = vadd.f32 0.0, %v4340
    %v4342 = vpop.f32.mrf.mxu0
    %4343 = vdwg.mxu0
    %4344 = vmatpush.bf16.msra.mxu0 0
    %4345 = vmatpush.bf16.msra.mxu0 0
    %4346 = vmatpush.bf16.msra.mxu0 0
    %4347 = vmatpush.bf16.msra.mxu0 0
    %4348 = vmatpush.bf16.msra.mxu0 0
    %4349 = vmatpush.bf16.msra.mxu0 0
    %4350 = vmatpush.bf16.msra.mxu0 %v4320
    %4351 = vmatpush.bf16.msra.mxu0 %v4317
    %4352 = vmatmul.bf16.gmra.mxu0 %v4329
    %v4353 = vpop.f32.mrf.mxu0
    %v4354 = vadd.f32 0.0, %v4353
    %v4355 = vpop.f32.mrf.mxu0
    %4356 = vdwg.mxu0
    %4357 = vmatpush.bf16.msra.mxu0 0
    %4358 = vmatpush.bf16.msra.mxu0 0
    %4359 = vmatpush.bf16.msra.mxu0 0
    %4360 = vmatpush.bf16.msra.mxu0 0
    %4361 = vmatpush.bf16.msra.mxu0 0
    %4362 = vmatpush.bf16.msra.mxu0 0
    %4363 = vmatpush.bf16.msra.mxu0 %v4321
    %4364 = vmatpush.bf16.msra.mxu0 %v4318
    %4365 = vmatmul.bf16.gmra.mxu0 %v4329
    %v4366 = vpop.f32.mrf.mxu0
    %v4367 = vadd.f32 0.0, %v4366
    %v4368 = vpop.f32.mrf.mxu0
    %4369 = vdwg.mxu0
    %v4373 = vrot.slane %v4341, 4
    %v4374 = vrot.slane %v4354, 4
    %v4375 = vrot.slane %v4367, 4
    %v4379 = vadd.f32 %v4284, %v4373
    %v4380 = vadd.f32 %v4285, %v4374
    %v4381 = vadd.f32 %v4286, %v4375
    %v4382 = vpack.c.bf16 %v4283, %v4283
    %v4383 = vld [vmem:[#allocation4] sm:$0xff]
    %v4384 = vld [vmem:[#allocation4 + $0x8] sm:$0xf]
    %v4385 = vld [vmem:[#allocation4 + $0xc] sm:$0xff]
    %v4386 = vld [vmem:[#allocation4 + $0x14] sm:$0xf]
    %v4387 = vld [vmem:[#allocation4 + $0x18] sm:$0xff]
    %v4388 = vld [vmem:[#allocation4 + $0x20] sm:$0xf]
    %v4389 = vld [vmem:[#allocation4 + $0x24] sm:$0xff]
    %v4390 = vld [vmem:[#allocation4 + $0x2c] sm:$0xf]
    %v4391 = vld [vmem:[#allocation4 + $0x30] sm:$0xff]
    %v4392 = vld [vmem:[#allocation4 + $0x38] sm:$0xf]
    %v4393 = vld [vmem:[#allocation4 + $0x3c] sm:$0xff]
    %v4394 = vld [vmem:[#allocation4 + $0x44] sm:$0xf]
    %v4395 = vld [vmem:[#allocation4 + $0x48] sm:$0xff]
    %v4396 = vld [vmem:[#allocation4 + $0x50] sm:$0xf]
    %v4397 = vld [vmem:[#allocation4 + $0x54] sm:$0xff]
    %v4398 = vld [vmem:[#allocation4 + $0x5c] sm:$0xf]
    %v4399 = vld [vmem:[#allocation4 + $0x60] sm:$0xff]
    %v4400 = vld [vmem:[#allocation4 + $0x68] sm:$0xf]
    %v4401 = vld [vmem:[#allocation4 + $0x6c] sm:$0xff]
    %v4402 = vld [vmem:[#allocation4 + $0x74] sm:$0xf]
    %v4403 = vld [vmem:[#allocation4 + $0x78] sm:$0xff]
    %v4404 = vld [vmem:[#allocation4 + $0x80] sm:$0xf]
    %v4405 = vld [vmem:[#allocation4 + $0x84] sm:$0xff]
    %v4406 = vld [vmem:[#allocation4 + $0x8c] sm:$0xf]
    %v4431 = vunpack.c.l.b16 %v4383
    %v4432 = vunpack.c.h.b16 %v4383
    %v4433 = vunpack.c.l.b16 %v4384
    %v4434 = vunpack.c.l.b16 %v4385
    %v4435 = vunpack.c.h.b16 %v4385
    %v4436 = vunpack.c.l.b16 %v4386
    %v4437 = vunpack.c.l.b16 %v4387
    %v4438 = vunpack.c.h.b16 %v4387
    %v4439 = vunpack.c.l.b16 %v4388
    %v4440 = vunpack.c.l.b16 %v4389
    %v4441 = vunpack.c.h.b16 %v4389
    %v4442 = vunpack.c.l.b16 %v4390
    %v4443 = vunpack.c.l.b16 %v4391
    %v4444 = vunpack.c.h.b16 %v4391
    %v4445 = vunpack.c.l.b16 %v4392
    %v4446 = vunpack.c.l.b16 %v4393
    %v4447 = vunpack.c.h.b16 %v4393
    %v4448 = vunpack.c.l.b16 %v4394
    %v4449 = vunpack.c.l.b16 %v4395
    %v4450 = vunpack.c.h.b16 %v4395
    %v4451 = vunpack.c.l.b16 %v4396
    %v4452 = vunpack.c.l.b16 %v4397
    %v4453 = vunpack.c.h.b16 %v4397
    %v4454 = vunpack.c.l.b16 %v4398
    %v4455 = vunpack.c.l.b16 %v4399
    %v4456 = vunpack.c.h.b16 %v4399
    %v4457 = vunpack.c.l.b16 %v4400
    %v4458 = vunpack.c.l.b16 %v4401
    %v4459 = vunpack.c.h.b16 %v4401
    %v4460 = vunpack.c.l.b16 %v4402
    %v4461 = vunpack.c.l.b16 %v4403
    %v4462 = vunpack.c.h.b16 %v4403
    %v4463 = vunpack.c.l.b16 %v4404
    %v4464 = vunpack.c.l.b16 %v4405
    %v4465 = vunpack.c.h.b16 %v4405
    %v4466 = vunpack.c.l.b16 %v4406
    %v4467 = vpack.c.b16 %v4434, %v4431
    %v4468 = vpack.c.b16 %v4435, %v4432
    %v4469 = vpack.c.b16 %v4436, %v4433
    %v4470 = vpack.c.b16 %v4440, %v4437
    %v4471 = vpack.c.b16 %v4441, %v4438
    %v4472 = vpack.c.b16 %v4442, %v4439
    %v4473 = vpack.c.b16 %v4446, %v4443
    %v4474 = vpack.c.b16 %v4447, %v4444
    %v4475 = vpack.c.b16 %v4448, %v4445
    %v4476 = vpack.c.b16 %v4452, %v4449
    %v4477 = vpack.c.b16 %v4453, %v4450
    %v4478 = vpack.c.b16 %v4454, %v4451
    %v4479 = vpack.c.b16 %v4458, %v4455
    %v4480 = vpack.c.b16 %v4459, %v4456
    %v4481 = vpack.c.b16 %v4460, %v4457
    %v4482 = vpack.c.b16 %v4464, %v4461
    %v4483 = vpack.c.b16 %v4465, %v4462
    %v4484 = vpack.c.b16 %v4466, %v4463
    %v4504 = vsel %vm491, %v4382, 0
    %4506 = vmatpush.bf16.msra.mxu0 0
    %4507 = vmatpush.bf16.msra.mxu0 0
    %4508 = vmatpush.bf16.msra.mxu0 %v4482
    %4509 = vmatpush.bf16.msra.mxu0 %v4479
    %4510 = vmatpush.bf16.msra.mxu0 %v4476
    %4511 = vmatpush.bf16.msra.mxu0 %v4473
    %4512 = vmatpush.bf16.msra.mxu0 %v4470
    %4513 = vmatpush.bf16.msra.mxu0 %v4467
    %4514 = vmatmul.bf16.gmra.mxu0 %v4504
    %v4515 = vpop.f32.mrf.mxu0
    %v4516 = vadd.f32 %v269, %v4515
    %v4517 = vpop.f32.mrf.mxu0
    %4518 = vdwg.mxu0
    %4519 = vmatpush.bf16.msra.mxu0 0
    %4520 = vmatpush.bf16.msra.mxu0 0
    %4521 = vmatpush.bf16.msra.mxu0 %v4483
    %4522 = vmatpush.bf16.msra.mxu0 %v4480
    %4523 = vmatpush.bf16.msra.mxu0 %v4477
    %4524 = vmatpush.bf16.msra.mxu0 %v4474
    %4525 = vmatpush.bf16.msra.mxu0 %v4471
    %4526 = vmatpush.bf16.msra.mxu0 %v4468
    %4527 = vmatmul.bf16.gmra.mxu0 %v4504
    %v4528 = vpop.f32.mrf.mxu0
    %v4529 = vadd.f32 %v270, %v4528
    %v4530 = vpop.f32.mrf.mxu0
    %4531 = vdwg.mxu0
    %4532 = vmatpush.bf16.msra.mxu0 0
    %4533 = vmatpush.bf16.msra.mxu0 0
    %4534 = vmatpush.bf16.msra.mxu0 %v4484
    %4535 = vmatpush.bf16.msra.mxu0 %v4481
    %4536 = vmatpush.bf16.msra.mxu0 %v4478
    %4537 = vmatpush.bf16.msra.mxu0 %v4475
    %4538 = vmatpush.bf16.msra.mxu0 %v4472
    %4539 = vmatpush.bf16.msra.mxu0 %v4469
    %4540 = vmatmul.bf16.gmra.mxu0 %v4504
    %v4541 = vpop.f32.mrf.mxu0
    %v4542 = vadd.f32 %v271, %v4541
    %v4543 = vpop.f32.mrf.mxu0
    %4544 = vdwg.mxu0
    %v4546 = vrot.slane %v4516, 4
    %v4548 = vadd.f32 %v4379, %v4546
    %v4549 = vxor.u32 %v4548, 2147483648
    %v4550 = vmul.f32 %v4549, 1.442695
    %v4551 = vpow.pop %v4550
    %v4552 = vadd.f32 %v4551, 1.0
    %v4553 = vrcp.pop %v4552
    %v4554 = vmul.f32 %v4552, %v4553
    %v4555 = vsub.f32 1.0, %v4554
    %v4556 = vmul.f32 %v4553, %v4555
    %v4557 = vadd.f32 %v4553, %v4556
    %vm4558 = vweird.f32 %v4552
    %vm4559 = vweird.f32 %v4553
    %vm4560 = vmor %vm4558, %vm4559
    %v4561 = vsel %vm4560, %v4553, %v4557
    %v4562 = vand.u32 2147483647, %v4552
    %vm4563 = vcmp.eq.f32.partialorder %v4562, 8.507059e+37
    %v4564 = vand.u32 %v4552, 2147483648
    %v4565 = vor.u32 1.1754944e-38, %v4564
    %v4566 = vsel %vm4563, %v4565, %v4561
    %v4567 = vmul.f32 1.0, %v4566
    %v4569 = vrot.slane %v4529, 4
    %v4571 = vadd.f32 %v4380, %v4569
    %v4572 = vxor.u32 %v4571, 2147483648
    %v4573 = vmul.f32 %v4572, 1.442695
    %v4574 = vpow.pop %v4573
    %v4575 = vadd.f32 %v4574, 1.0
    %v4576 = vrcp.pop %v4575
    %v4577 = vmul.f32 %v4575, %v4576
    %v4578 = vsub.f32 1.0, %v4577
    %v4579 = vmul.f32 %v4576, %v4578
    %v4580 = vadd.f32 %v4576, %v4579
    %vm4581 = vweird.f32 %v4575
    %vm4582 = vweird.f32 %v4576
    %vm4583 = vmor %vm4581, %vm4582
    %v4584 = vsel %vm4583, %v4576, %v4580
    %v4585 = vand.u32 2147483647, %v4575
    %vm4586 = vcmp.eq.f32.partialorder %v4585, 8.507059e+37
    %v4587 = vand.u32 %v4575, 2147483648
    %v4588 = vor.u32 1.1754944e-38, %v4587
    %v4589 = vsel %vm4586, %v4588, %v4584
    %v4590 = vmul.f32 1.0, %v4589
    %v4592 = vrot.slane %v4542, 4
    %4593 = vrot.lane.b32.xlu0 %v4569, 64
    %v4594 = vpop.permute.xlu0 %4593
    %4595 = vrot.lane.b32.xlu0 %v4592, 64
    %v4596 = vpop.permute.xlu0 %4595
    %v4597 = vsel %vm580, %v4594, %v4596
    %v4599 = vmul.f32 %v4567, %v4597
    %4601 = vrot.lane.b32.xlu0 %v4599, 64
    %v4602 = vpop.permute.xlu0 %4601
    %v4604 = vadd.f32 %v4380, %v4602
    %v4605 = vadd.f32 %v4381, %v4602
    %v4606 = vtanh.pop %v4604
    %v4607 = vtanh.pop %v4605
    %v4610 = vrot.slane %v4606, 4
    %v4611 = vrot.slane %v4607, 4
    %4612 = vrot.lane.b32.xlu0 %v4610, 64
    %v4613 = vpop.permute.xlu0 %4612
    %4614 = vrot.lane.b32.xlu0 %v4611, 64
    %v4615 = vpop.permute.xlu0 %4614
    %v4616 = vsel %vm580, %v4613, %v4615
    %v4618 = vsub.f32 %v4283, %v4616
    %v4620 = vrot.slane %v4618, 4
    %4621 = vrot.lane.b32.xlu0 %v4620, 96
    %v4622 = vpop.permute.xlu0 %4621
    %v4624 = vmul.f32 %v4567, %v4622
    %v4625 = vmul.f32 %v4590, %v4622
    %4628 = vrot.lane.b32.xlu0 %v4624, 96
    %v4629 = vpop.permute.xlu0 %4628
    %4630 = vrot.lane.b32.xlu0 %v4625, 96
    %v4631 = vpop.permute.xlu0 %4630
    %v4632 = vsel %vm491, %v4629, %v4631
    %v4635 = vadd.f32 %v4606, %v4632
    %v4636 = vadd.f32 %v4607, %v4631
    %4639 = vrot.lane.b32.xlu0 %v4635, 64
    %v4640 = vpop.permute.xlu0 %4639
    %4641 = vrot.lane.b32.xlu0 %v4636, 64
    %v4642 = vpop.permute.xlu0 %4641
    %v4643 = vsel %vm580, %v4640, %v4642
    %4645 = vst.msk [vmem:[#allocation7 - $0x4] sm:$0x30] %vm1986, %v4643
    %v4646 = vmul.f32 %v4635, %v4635
    %v4648 = vrot.slane %v4646, 4
    %4649 = vrot.lane.b32.xlu0 %v4648, 32
    %v4650 = vpop.permute.xlu0 %4649
    %v4651 = vsel %vm215, %v4650, 0
    %4653 = vmatpush.msra.mxu0 0.0
    %4654 = vmatpush.msra.mxu0 0.0
    %4655 = vmatpush.msra.mxu0 0.0
    %4656 = vmatpush.msra.mxu0 0.0
    %4657 = vmatpush.msra.mxu0 0.0
    %4658 = vmatpush.msra.mxu0 0.0
    %4659 = vmatpush.msra.mxu0 0.0
    %4660 = vmatpush.msra.mxu0 0.0
    %4661 = vmatpush.msra.mxu0 0.0
    %4662 = vmatpush.msra.mxu0 0.0
    %4663 = vmatpush.msra.mxu0 0.0
    %4664 = vmatpush.msra.mxu0 0.0
    %4665 = vmatpush.msra.mxu0 %v278
    %4666 = vmatpush.msra.mxu0 %v277
    %4667 = vmatpush.msra.mxu0 %v276
    %4668 = vmatpush.msra.mxu0 %v275
    %4669 = vmatmul.f32.gmra.mxu0 %v4651
    %v4670 = vpop.f32.mrf.mxu0
    %v4671 = vadd.f32 0.0, %v4670
    %4672 = vdwg.mxu0
    %4673 = vrot.lane.b32.xlu0 %v4648, 64
    %v4674 = vpop.permute.xlu0 %4673
    %v4675 = vsel %vm215, %v4674, 0
    %4677 = vmatpush.msra.mxu0 0.0
    %4678 = vmatpush.msra.mxu0 0.0
    %4679 = vmatpush.msra.mxu0 0.0
    %4680 = vmatpush.msra.mxu0 0.0
    %4681 = vmatpush.msra.mxu0 0.0
    %4682 = vmatpush.msra.mxu0 0.0
    %4683 = vmatpush.msra.mxu0 0.0
    %4684 = vmatpush.msra.mxu0 0.0
    %4685 = vmatpush.msra.mxu0 0.0
    %4686 = vmatpush.msra.mxu0 0.0
    %4687 = vmatpush.msra.mxu0 0.0
    %4688 = vmatpush.msra.mxu0 0.0
    %4689 = vmatpush.msra.mxu0 %v278
    %4690 = vmatpush.msra.mxu0 %v277
    %4691 = vmatpush.msra.mxu0 %v276
    %4692 = vmatpush.msra.mxu0 %v275
    %4693 = vmatmul.f32.gmra.mxu0 %v4675
    %v4694 = vpop.f32.mrf.mxu0
    %v4695 = vadd.f32 0.0, %v4694
    %4696 = vdwg.mxu0
    %v4697 = vrsqrt.pop %v4671
    %v4698 = vmul.f32 %v4697, %v4671
    %v4699 = vmul.f32 %v4698, %v4697
    %v4700 = vmul.f32 0.5, %v4699
    %v4701 = vsub.f32 1.5, %v4700
    %v4702 = vmul.f32 %v4697, %v4701
    %vm4703 = vweird.f32 %v4671
    %vm4704 = vweird.f32 %v4697
    %vm4705 = vmor %vm4703, %vm4704
    %v4706 = vsel %vm4705, %v4697, %v4702
    %v4708 = vrot.slane %v4706, 4
    %4709 = vrot.lane.b32.xlu0 %v4708, 96
    %v4710 = vpop.permute.xlu0 %4709
    %v4712 = vmul.f32 %v4635, %v4710
    %vm4713 = vcmp.gt.f32.partialorder %v4712, 0.0
    %v4714 = vmul.f32 %v4712, 1.442695
    %v4715 = vpow.pop %v4714
    %v4716 = vsub.f32 %v4715, 1.0
    %v4717 = vsel %vm4713, %v4712, %v4716
    %v4718 = vrsqrt.pop %v4695
    %v4719 = vmul.f32 %v4718, %v4695
    %v4720 = vmul.f32 %v4719, %v4718
    %v4721 = vmul.f32 0.5, %v4720
    %v4722 = vsub.f32 1.5, %v4721
    %v4723 = vmul.f32 %v4718, %v4722
    %vm4724 = vweird.f32 %v4695
    %vm4725 = vweird.f32 %v4718
    %vm4726 = vmor %vm4724, %vm4725
    %v4727 = vsel %vm4726, %v4718, %v4723
    %v4729 = vrot.slane %v4727, 4
    %4730 = vrot.lane.b32.xlu0 %v4729, 64
    %v4731 = vpop.permute.xlu0 %4730
    %v4733 = vmul.f32 %v4635, %v4731
    %v4734 = vld [vmem:[#allocation8] sm:$0xff]
    %v4735 = vld [vmem:[#allocation8 + $0x8] sm:$0xff]
    %v4736 = vld [vmem:[#allocation8 + $0x10] sm:$0xff]
    %v4737 = vld [vmem:[#allocation8 + $0x18] sm:$0xff]
    %v4738 = vld [vmem:[#allocation8 + $0x20] sm:$0xff]
    %v4739 = vld [vmem:[#allocation8 + $0x28] sm:$0xff]
    %v4740 = vld [vmem:[#allocation8 + $0x30] sm:$0xff]
    %v4741 = vld [vmem:[#allocation8 + $0x38] sm:$0xff]
    %v4742 = vperm.slane %v4636, 4
    %v4743 = vlaneseq
    %v4744 = vshrl.u32 %v4743, 7
    %4746 = vset.pattern.permute.xlu0 %v4744
    %4747 = vperm.xlu0 %4746, %v4742
    %v4748 = vpop.permute.xlu0 %4747
    %v4749 = vlaneseq
    %v4750 = vshrl.u32 %v4749, 7
    %v4751 = vadd.s32 %v4750, 8
    %4752 = vset.pattern.permute.xlu0 %v4751
    %4753 = vperm.xlu0 %4752, %v4742
    %v4754 = vpop.permute.xlu0 %4753
    %v4755 = vlaneseq
    %v4756 = vshrl.u32 %v4755, 7
    %v4757 = vadd.s32 %v4756, 16
    %4758 = vset.pattern.permute.xlu0 %v4757
    %4759 = vperm.xlu0 %4758, %v4742
    %v4760 = vpop.permute.xlu0 %4759
    %v4761 = vlaneseq
    %v4762 = vshrl.u32 %v4761, 7
    %v4763 = vadd.s32 %v4762, 24
    %4764 = vset.pattern.permute.xlu0 %v4763
    %4765 = vperm.xlu0 %4764, %v4742
    %v4766 = vpop.permute.xlu0 %4765
    %v4767 = vperm.slane %v4636, 5
    %v4768 = vlaneseq
    %v4769 = vshrl.u32 %v4768, 7
    %4771 = vset.pattern.permute.xlu0 %v4769
    %4772 = vperm.xlu0 %4771, %v4767
    %v4773 = vpop.permute.xlu0 %4772
    %v4774 = vlaneseq
    %v4775 = vshrl.u32 %v4774, 7
    %v4776 = vadd.s32 %v4775, 8
    %4777 = vset.pattern.permute.xlu0 %v4776
    %4778 = vperm.xlu0 %4777, %v4767
    %v4779 = vpop.permute.xlu0 %4778
    %v4780 = vlaneseq
    %v4781 = vshrl.u32 %v4780, 7
    %v4782 = vadd.s32 %v4781, 16
    %4783 = vset.pattern.permute.xlu0 %v4782
    %4784 = vperm.xlu0 %4783, %v4767
    %v4785 = vpop.permute.xlu0 %4784
    %v4786 = vlaneseq
    %v4787 = vshrl.u32 %v4786, 7
    %v4788 = vadd.s32 %v4787, 24
    %4789 = vset.pattern.permute.xlu0 %v4788
    %4790 = vperm.xlu0 %4789, %v4767
    %v4791 = vpop.permute.xlu0 %4790
    %4793 = vst [vmem:[#allocation1] sm:$0xff] %v4717
    %s4794 = scalar_lea.vmem [#allocation1], 4
    %v4795 = vld [vmem:[%s4794] ss:$9 sm:$0xff]
    %s4796 = scalar_lea.vmem [#allocation1], 5
    %v4797 = vld [vmem:[%s4796] ss:$9 sm:$0xff]
    %v4798 = vperm.slane %v4795, 0
    %v4799 = vperm.slane %v4797, 0
    %v4802 = vmul.f32 %v4748, %v4798
    %v4803 = vmul.f32 %v4754, %v4798
    %v4804 = vmul.f32 %v4760, %v4798
    %v4805 = vmul.f32 %v4766, %v4798
    %v4806 = vmul.f32 %v4773, %v4799
    %v4807 = vmul.f32 %v4779, %v4799
    %v4808 = vmul.f32 %v4785, %v4799
    %v4809 = vmul.f32 %v4791, %v4799
    %v4810 = vmul.f32 %v4802, %v790
    %v4811 = vmul.f32 %v4803, %v792
    %v4812 = vmul.f32 %v4804, %v794
    %v4813 = vmul.f32 %v4805, %v796
    %v4814 = vmul.f32 %v4806, %v790
    %v4815 = vmul.f32 %v4807, %v792
    %v4816 = vmul.f32 %v4808, %v794
    %v4817 = vmul.f32 %v4809, %v796
    %4826 = vrot.lane.b32.xlu0 %v4810, 32
    %v4827 = vpop.permute.xlu0 %4826
    %4828 = vrot.lane.b32.xlu0 %v4811, 32
    %v4829 = vpop.permute.xlu0 %4828
    %4830 = vrot.lane.b32.xlu0 %v4812, 32
    %v4831 = vpop.permute.xlu0 %4830
    %4832 = vrot.lane.b32.xlu0 %v4813, 32
    %v4833 = vpop.permute.xlu0 %4832
    %4834 = vrot.lane.b32.xlu0 %v4814, 32
    %v4835 = vpop.permute.xlu0 %4834
    %4836 = vrot.lane.b32.xlu0 %v4815, 32
    %v4837 = vpop.permute.xlu0 %4836
    %4838 = vrot.lane.b32.xlu0 %v4816, 32
    %v4839 = vpop.permute.xlu0 %4838
    %4840 = vrot.lane.b32.xlu0 %v4817, 32
    %v4841 = vpop.permute.xlu0 %4840
    %v4850 = vadd.f32 %v4734, %v4827
    %v4851 = vadd.f32 %v4735, %v4829
    %v4852 = vadd.f32 %v4736, %v4831
    %v4853 = vadd.f32 %v4737, %v4833
    %v4854 = vadd.f32 %v4738, %v4835
    %v4855 = vadd.f32 %v4739, %v4837
    %v4856 = vadd.f32 %v4740, %v4839
    %v4857 = vadd.f32 %v4741, %v4841
    %4858 = vst.msk [vmem:[#allocation8] sm:$0xff] %vm215, %v4850
    %4859 = vst.msk [vmem:[#allocation8 + $0x8] sm:$0xff] %vm215, %v4851
    %4860 = vst.msk [vmem:[#allocation8 + $0x10] sm:$0xff] %vm215, %v4852
    %4861 = vst.msk [vmem:[#allocation8 + $0x18] sm:$0xff] %vm215, %v4853
    %4862 = vst.msk [vmem:[#allocation8 + $0x20] sm:$0xff] %vm215, %v4854
    %4863 = vst.msk [vmem:[#allocation8 + $0x28] sm:$0xff] %vm215, %v4855
    %4864 = vst.msk [vmem:[#allocation8 + $0x30] sm:$0xff] %vm215, %v4856
    %4865 = vst.msk [vmem:[#allocation8 + $0x38] sm:$0xff] %vm215, %v4857
    %v4866 = vld [vmem:[#allocation8] sm:$0xff]
    %v4867 = vld [vmem:[#allocation8 + $0x8] sm:$0xff]
    %v4868 = vld [vmem:[#allocation8 + $0x10] sm:$0xff]
    %v4869 = vld [vmem:[#allocation8 + $0x18] sm:$0xff]
    %v4870 = vld [vmem:[#allocation8 + $0x20] sm:$0xff]
    %v4871 = vld [vmem:[#allocation8 + $0x28] sm:$0xff]
    %v4872 = vld [vmem:[#allocation8 + $0x30] sm:$0xff]
    %v4873 = vld [vmem:[#allocation8 + $0x38] sm:$0xff]
    %4875 = vst [vmem:[#allocation1] sm:$0xff] %v4733
    %s4876 = scalar_lea.vmem [#allocation1], 4
    %v4877 = vld [vmem:[%s4876] ss:$9 sm:$0xff]
    %s4878 = scalar_lea.vmem [#allocation1], 5
    %v4879 = vld [vmem:[%s4878] ss:$9 sm:$0xff]
    %v4880 = vperm.slane %v4877, 0
    %v4881 = vperm.slane %v4879, 0
    %4882 = vrot.lane.b32.xlu0 %v4880, 64
    %v4883 = vpop.permute.xlu0 %4882
    %4884 = vrot.lane.b32.xlu0 %v4881, 64
    %v4885 = vpop.permute.xlu0 %4884
    %v4888 = vmul.f32 %v4866, %v4883
    %v4889 = vmul.f32 %v4867, %v4883
    %v4890 = vmul.f32 %v4868, %v4883
    %v4891 = vmul.f32 %v4869, %v4883
    %v4892 = vmul.f32 %v4870, %v4885
    %v4893 = vmul.f32 %v4871, %v4885
    %v4894 = vmul.f32 %v4872, %v4885
    %v4895 = vmul.f32 %v4873, %v4885
    %v4896 = vsel %vm215, %v4888, 0.0
    %4897 = vadd.xlane.f32.xlu0 %v4896
    %v4898 = vpop.xlane.xlu0 %4897
    %v4899 = vsel %vm215, %v4889, 0.0
    %4900 = vadd.xlane.f32.xlu0 %v4899
    %v4901 = vpop.xlane.xlu0 %4900
    %v4902 = vsel %vm215, %v4890, 0.0
    %4903 = vadd.xlane.f32.xlu0 %v4902
    %v4904 = vpop.xlane.xlu0 %4903
    %v4905 = vsel %vm215, %v4891, 0.0
    %4906 = vadd.xlane.f32.xlu0 %v4905
    %v4907 = vpop.xlane.xlu0 %4906
    %v4908 = vsel %vm215, %v4892, 0.0
    %4909 = vadd.xlane.f32.xlu0 %v4908
    %v4910 = vpop.xlane.xlu0 %4909
    %v4911 = vsel %vm215, %v4893, 0.0
    %4912 = vadd.xlane.f32.xlu0 %v4911
    %v4913 = vpop.xlane.xlu0 %4912
    %v4914 = vsel %vm215, %v4894, 0.0
    %4915 = vadd.xlane.f32.xlu0 %v4914
    %v4916 = vpop.xlane.xlu0 %4915
    %v4917 = vsel %vm215, %v4895, 0.0
    %4918 = vadd.xlane.f32.xlu0 %v4917
    %v4919 = vpop.xlane.xlu0 %4918
    %v4928 = vperm.slane %v4898, %v916
    %v4929 = vperm.slane %v4901, %v918
    %v4930 = vsel %vm920, %v4929, %v4928
    %v4931 = vperm.slane %v4904, %v922
    %v4932 = vsel %vm924, %v4931, %v4930
    %v4933 = vperm.slane %v4907, %v926
    %v4934 = vsel %vm928, %v4933, %v4932
    %v4935 = vperm.slane %v4910, %v916
    %v4936 = vperm.slane %v4913, %v918
    %v4937 = vsel %vm920, %v4936, %v4935
    %v4938 = vperm.slane %v4916, %v922
    %v4939 = vsel %vm924, %v4938, %v4937
    %v4940 = vperm.slane %v4919, %v926
    %v4941 = vsel %vm928, %v4940, %v4939
    %v4942 = vsel %vm937, %v4941, %v4934
    %4944 = vst.msk [vmem:[#allocation9] sm:$0x3] %vm940, %v4942
    %4945 = vrot.lane.b32.xlu0 %v4717, 32
    %v4946 = vpop.permute.xlu0 %4945
    %4948 = vst.msk [vmem:[#allocation17 - $0x4] sm:$0x30] %vm2290, %v4946
    %4949 = vrot.lane.b32.xlu0 %v4733, 64
    %v4950 = vpop.permute.xlu0 %4949
    %4952 = vst.msk [vmem:[#allocation19 - $0x4] sm:$0x30] %vm2290, %v4950
    %v4953 = vld [vmem:[#allocation9] sm:$0x3]
    %v4954 = vld [vmem:[#allocation7] sm:$0x3]
    %v4955 = vld [vmem:[#allocation6 + $0x18] sm:$0xc0]
    %v4956 = vld [vmem:[#allocation6 + $0x20] sm:$0xc0]
    %v4957 = vld [vmem:[#allocation6 + $0x28] sm:$0xc0]
    %v4958 = vpack.c.bf16 %v4953, %v4953
    %v4959 = vld [vmem:[#allocation3] sm:$0xff]
    %v4960 = vld [vmem:[#allocation3 + $0x8] sm:$0xf]
    %v4961 = vld [vmem:[#allocation3 + $0xc] sm:$0xff]
    %v4962 = vld [vmem:[#allocation3 + $0x14] sm:$0xf]
    %v4963 = vld [vmem:[#allocation3 + $0x18] sm:$0xff]
    %v4964 = vld [vmem:[#allocation3 + $0x20] sm:$0xf]
    %v4965 = vld [vmem:[#allocation3 + $0x24] sm:$0xff]
    %v4966 = vld [vmem:[#allocation3 + $0x2c] sm:$0xf]
    %v4975 = vunpack.c.l.b16 %v4959
    %v4976 = vunpack.c.h.b16 %v4959
    %v4977 = vunpack.c.l.b16 %v4960
    %v4978 = vunpack.c.l.b16 %v4961
    %v4979 = vunpack.c.h.b16 %v4961
    %v4980 = vunpack.c.l.b16 %v4962
    %v4981 = vunpack.c.l.b16 %v4963
    %v4982 = vunpack.c.h.b16 %v4963
    %v4983 = vunpack.c.l.b16 %v4964
    %v4984 = vunpack.c.l.b16 %v4965
    %v4985 = vunpack.c.h.b16 %v4965
    %v4986 = vunpack.c.l.b16 %v4966
    %v4987 = vpack.c.b16 %v4978, %v4975
    %v4988 = vpack.c.b16 %v4979, %v4976
    %v4989 = vpack.c.b16 %v4980, %v4977
    %v4990 = vpack.c.b16 %v4984, %v4981
    %v4991 = vpack.c.b16 %v4985, %v4982
    %v4992 = vpack.c.b16 %v4986, %v4983
    %v5000 = vsel %vm215, %v4958, 0
    %5002 = vmatpush.bf16.msra.mxu0 0
    %5003 = vmatpush.bf16.msra.mxu0 0
    %5004 = vmatpush.bf16.msra.mxu0 0
    %5005 = vmatpush.bf16.msra.mxu0 0
    %5006 = vmatpush.bf16.msra.mxu0 0
    %5007 = vmatpush.bf16.msra.mxu0 0
    %5008 = vmatpush.bf16.msra.mxu0 %v4990
    %5009 = vmatpush.bf16.msra.mxu0 %v4987
    %5010 = vmatmul.bf16.gmra.mxu0 %v5000
    %v5011 = vpop.f32.mrf.mxu0
    %v5012 = vadd.f32 0.0, %v5011
    %v5013 = vpop.f32.mrf.mxu0
    %5014 = vdwg.mxu0
    %5015 = vmatpush.bf16.msra.mxu0 0
    %5016 = vmatpush.bf16.msra.mxu0 0
    %5017 = vmatpush.bf16.msra.mxu0 0
    %5018 = vmatpush.bf16.msra.mxu0 0
    %5019 = vmatpush.bf16.msra.mxu0 0
    %5020 = vmatpush.bf16.msra.mxu0 0
    %5021 = vmatpush.bf16.msra.mxu0 %v4991
    %5022 = vmatpush.bf16.msra.mxu0 %v4988
    %5023 = vmatmul.bf16.gmra.mxu0 %v5000
    %v5024 = vpop.f32.mrf.mxu0
    %v5025 = vadd.f32 0.0, %v5024
    %v5026 = vpop.f32.mrf.mxu0
    %5027 = vdwg.mxu0
    %5028 = vmatpush.bf16.msra.mxu0 0
    %5029 = vmatpush.bf16.msra.mxu0 0
    %5030 = vmatpush.bf16.msra.mxu0 0
    %5031 = vmatpush.bf16.msra.mxu0 0
    %5032 = vmatpush.bf16.msra.mxu0 0
    %5033 = vmatpush.bf16.msra.mxu0 0
    %5034 = vmatpush.bf16.msra.mxu0 %v4992
    %5035 = vmatpush.bf16.msra.mxu0 %v4989
    %5036 = vmatmul.bf16.gmra.mxu0 %v5000
    %v5037 = vpop.f32.mrf.mxu0
    %v5038 = vadd.f32 0.0, %v5037
    %v5039 = vpop.f32.mrf.mxu0
    %5040 = vdwg.mxu0
    %v5044 = vrot.slane %v5012, 2
    %v5045 = vrot.slane %v5025, 2
    %v5046 = vrot.slane %v5038, 2
    %v5050 = vadd.f32 %v4955, %v5044
    %v5051 = vadd.f32 %v4956, %v5045
    %v5052 = vadd.f32 %v4957, %v5046
    %v5053 = vpack.c.bf16 %v4954, %v4954
    %v5054 = vld [vmem:[#allocation4] sm:$0xff]
    %v5055 = vld [vmem:[#allocation4 + $0x8] sm:$0xf]
    %v5056 = vld [vmem:[#allocation4 + $0xc] sm:$0xff]
    %v5057 = vld [vmem:[#allocation4 + $0x14] sm:$0xf]
    %v5058 = vld [vmem:[#allocation4 + $0x18] sm:$0xff]
    %v5059 = vld [vmem:[#allocation4 + $0x20] sm:$0xf]
    %v5060 = vld [vmem:[#allocation4 + $0x24] sm:$0xff]
    %v5061 = vld [vmem:[#allocation4 + $0x2c] sm:$0xf]
    %v5062 = vld [vmem:[#allocation4 + $0x30] sm:$0xff]
    %v5063 = vld [vmem:[#allocation4 + $0x38] sm:$0xf]
    %v5064 = vld [vmem:[#allocation4 + $0x3c] sm:$0xff]
    %v5065 = vld [vmem:[#allocation4 + $0x44] sm:$0xf]
    %v5066 = vld [vmem:[#allocation4 + $0x48] sm:$0xff]
    %v5067 = vld [vmem:[#allocation4 + $0x50] sm:$0xf]
    %v5068 = vld [vmem:[#allocation4 + $0x54] sm:$0xff]
    %v5069 = vld [vmem:[#allocation4 + $0x5c] sm:$0xf]
    %v5070 = vld [vmem:[#allocation4 + $0x60] sm:$0xff]
    %v5071 = vld [vmem:[#allocation4 + $0x68] sm:$0xf]
    %v5072 = vld [vmem:[#allocation4 + $0x6c] sm:$0xff]
    %v5073 = vld [vmem:[#allocation4 + $0x74] sm:$0xf]
    %v5074 = vld [vmem:[#allocation4 + $0x78] sm:$0xff]
    %v5075 = vld [vmem:[#allocation4 + $0x80] sm:$0xf]
    %v5076 = vld [vmem:[#allocation4 + $0x84] sm:$0xff]
    %v5077 = vld [vmem:[#allocation4 + $0x8c] sm:$0xf]
    %v5102 = vunpack.c.l.b16 %v5054
    %v5103 = vunpack.c.h.b16 %v5054
    %v5104 = vunpack.c.l.b16 %v5055
    %v5105 = vunpack.c.l.b16 %v5056
    %v5106 = vunpack.c.h.b16 %v5056
    %v5107 = vunpack.c.l.b16 %v5057
    %v5108 = vunpack.c.l.b16 %v5058
    %v5109 = vunpack.c.h.b16 %v5058
    %v5110 = vunpack.c.l.b16 %v5059
    %v5111 = vunpack.c.l.b16 %v5060
    %v5112 = vunpack.c.h.b16 %v5060
    %v5113 = vunpack.c.l.b16 %v5061
    %v5114 = vunpack.c.l.b16 %v5062
    %v5115 = vunpack.c.h.b16 %v5062
    %v5116 = vunpack.c.l.b16 %v5063
    %v5117 = vunpack.c.l.b16 %v5064
    %v5118 = vunpack.c.h.b16 %v5064
    %v5119 = vunpack.c.l.b16 %v5065
    %v5120 = vunpack.c.l.b16 %v5066
    %v5121 = vunpack.c.h.b16 %v5066
    %v5122 = vunpack.c.l.b16 %v5067
    %v5123 = vunpack.c.l.b16 %v5068
    %v5124 = vunpack.c.h.b16 %v5068
    %v5125 = vunpack.c.l.b16 %v5069
    %v5126 = vunpack.c.l.b16 %v5070
    %v5127 = vunpack.c.h.b16 %v5070
    %v5128 = vunpack.c.l.b16 %v5071
    %v5129 = vunpack.c.l.b16 %v5072
    %v5130 = vunpack.c.h.b16 %v5072
    %v5131 = vunpack.c.l.b16 %v5073
    %v5132 = vunpack.c.l.b16 %v5074
    %v5133 = vunpack.c.h.b16 %v5074
    %v5134 = vunpack.c.l.b16 %v5075
    %v5135 = vunpack.c.l.b16 %v5076
    %v5136 = vunpack.c.h.b16 %v5076
    %v5137 = vunpack.c.l.b16 %v5077
    %v5138 = vpack.c.b16 %v5105, %v5102
    %v5139 = vpack.c.b16 %v5106, %v5103
    %v5140 = vpack.c.b16 %v5107, %v5104
    %v5141 = vpack.c.b16 %v5111, %v5108
    %v5142 = vpack.c.b16 %v5112, %v5109
    %v5143 = vpack.c.b16 %v5113, %v5110
    %v5144 = vpack.c.b16 %v5117, %v5114
    %v5145 = vpack.c.b16 %v5118, %v5115
    %v5146 = vpack.c.b16 %v5119, %v5116
    %v5147 = vpack.c.b16 %v5123, %v5120
    %v5148 = vpack.c.b16 %v5124, %v5121
    %v5149 = vpack.c.b16 %v5125, %v5122
    %v5150 = vpack.c.b16 %v5129, %v5126
    %v5151 = vpack.c.b16 %v5130, %v5127
    %v5152 = vpack.c.b16 %v5131, %v5128
    %v5153 = vpack.c.b16 %v5135, %v5132
    %v5154 = vpack.c.b16 %v5136, %v5133
    %v5155 = vpack.c.b16 %v5137, %v5134
    %v5175 = vsel %vm491, %v5053, 0
    %5177 = vmatpush.bf16.msra.mxu0 0
    %5178 = vmatpush.bf16.msra.mxu0 0
    %5179 = vmatpush.bf16.msra.mxu0 %v5153
    %5180 = vmatpush.bf16.msra.mxu0 %v5150
    %5181 = vmatpush.bf16.msra.mxu0 %v5147
    %5182 = vmatpush.bf16.msra.mxu0 %v5144
    %5183 = vmatpush.bf16.msra.mxu0 %v5141
    %5184 = vmatpush.bf16.msra.mxu0 %v5138
    %5185 = vmatmul.bf16.gmra.mxu0 %v5175
    %v5186 = vpop.f32.mrf.mxu0
    %v5187 = vadd.f32 %v269, %v5186
    %v5188 = vpop.f32.mrf.mxu0
    %5189 = vdwg.mxu0
    %5190 = vmatpush.bf16.msra.mxu0 0
    %5191 = vmatpush.bf16.msra.mxu0 0
    %5192 = vmatpush.bf16.msra.mxu0 %v5154
    %5193 = vmatpush.bf16.msra.mxu0 %v5151
    %5194 = vmatpush.bf16.msra.mxu0 %v5148
    %5195 = vmatpush.bf16.msra.mxu0 %v5145
    %5196 = vmatpush.bf16.msra.mxu0 %v5142
    %5197 = vmatpush.bf16.msra.mxu0 %v5139
    %5198 = vmatmul.bf16.gmra.mxu0 %v5175
    %v5199 = vpop.f32.mrf.mxu0
    %v5200 = vadd.f32 %v270, %v5199
    %v5201 = vpop.f32.mrf.mxu0
    %5202 = vdwg.mxu0
    %5203 = vmatpush.bf16.msra.mxu0 0
    %5204 = vmatpush.bf16.msra.mxu0 0
    %5205 = vmatpush.bf16.msra.mxu0 %v5155
    %5206 = vmatpush.bf16.msra.mxu0 %v5152
    %5207 = vmatpush.bf16.msra.mxu0 %v5149
    %5208 = vmatpush.bf16.msra.mxu0 %v5146
    %5209 = vmatpush.bf16.msra.mxu0 %v5143
    %5210 = vmatpush.bf16.msra.mxu0 %v5140
    %5211 = vmatmul.bf16.gmra.mxu0 %v5175
    %v5212 = vpop.f32.mrf.mxu0
    %v5213 = vadd.f32 %v271, %v5212
    %v5214 = vpop.f32.mrf.mxu0
    %5215 = vdwg.mxu0
    %v5217 = vrot.slane %v5187, 2
    %v5219 = vadd.f32 %v5050, %v5217
    %v5220 = vxor.u32 %v5219, 2147483648
    %v5221 = vmul.f32 %v5220, 1.442695
    %v5222 = vpow.pop %v5221
    %v5223 = vadd.f32 %v5222, 1.0
    %v5224 = vrcp.pop %v5223
    %v5225 = vmul.f32 %v5223, %v5224
    %v5226 = vsub.f32 1.0, %v5225
    %v5227 = vmul.f32 %v5224, %v5226
    %v5228 = vadd.f32 %v5224, %v5227
    %vm5229 = vweird.f32 %v5223
    %vm5230 = vweird.f32 %v5224
    %vm5231 = vmor %vm5229, %vm5230
    %v5232 = vsel %vm5231, %v5224, %v5228
    %v5233 = vand.u32 2147483647, %v5223
    %vm5234 = vcmp.eq.f32.partialorder %v5233, 8.507059e+37
    %v5235 = vand.u32 %v5223, 2147483648
    %v5236 = vor.u32 1.1754944e-38, %v5235
    %v5237 = vsel %vm5234, %v5236, %v5232
    %v5238 = vmul.f32 1.0, %v5237
    %v5240 = vrot.slane %v5200, 2
    %v5242 = vadd.f32 %v5051, %v5240
    %v5243 = vxor.u32 %v5242, 2147483648
    %v5244 = vmul.f32 %v5243, 1.442695
    %v5245 = vpow.pop %v5244
    %v5246 = vadd.f32 %v5245, 1.0
    %v5247 = vrcp.pop %v5246
    %v5248 = vmul.f32 %v5246, %v5247
    %v5249 = vsub.f32 1.0, %v5248
    %v5250 = vmul.f32 %v5247, %v5249
    %v5251 = vadd.f32 %v5247, %v5250
    %vm5252 = vweird.f32 %v5246
    %vm5253 = vweird.f32 %v5247
    %vm5254 = vmor %vm5252, %vm5253
    %v5255 = vsel %vm5254, %v5247, %v5251
    %v5256 = vand.u32 2147483647, %v5246
    %vm5257 = vcmp.eq.f32.partialorder %v5256, 8.507059e+37
    %v5258 = vand.u32 %v5246, 2147483648
    %v5259 = vor.u32 1.1754944e-38, %v5258
    %v5260 = vsel %vm5257, %v5259, %v5255
    %v5261 = vmul.f32 1.0, %v5260
    %v5263 = vrot.slane %v5213, 2
    %5264 = vrot.lane.b32.xlu0 %v5240, 64
    %v5265 = vpop.permute.xlu0 %5264
    %5266 = vrot.lane.b32.xlu0 %v5263, 64
    %v5267 = vpop.permute.xlu0 %5266
    %v5268 = vsel %vm580, %v5265, %v5267
    %v5270 = vmul.f32 %v5238, %v5268
    %5272 = vrot.lane.b32.xlu0 %v5270, 64
    %v5273 = vpop.permute.xlu0 %5272
    %v5275 = vadd.f32 %v5051, %v5273
    %v5276 = vadd.f32 %v5052, %v5273
    %v5277 = vtanh.pop %v5275
    %v5278 = vtanh.pop %v5276
    %v5281 = vrot.slane %v5277, 6
    %v5282 = vrot.slane %v5278, 6
    %5283 = vrot.lane.b32.xlu0 %v5281, 64
    %v5284 = vpop.permute.xlu0 %5283
    %5285 = vrot.lane.b32.xlu0 %v5282, 64
    %v5286 = vpop.permute.xlu0 %5285
    %v5287 = vsel %vm580, %v5284, %v5286
    %v5289 = vsub.f32 %v4954, %v5287
    %v5291 = vrot.slane %v5289, 2
    %5292 = vrot.lane.b32.xlu0 %v5291, 96
    %v5293 = vpop.permute.xlu0 %5292
    %v5295 = vmul.f32 %v5238, %v5293
    %v5296 = vmul.f32 %v5261, %v5293
    %5299 = vrot.lane.b32.xlu0 %v5295, 96
    %v5300 = vpop.permute.xlu0 %5299
    %5301 = vrot.lane.b32.xlu0 %v5296, 96
    %v5302 = vpop.permute.xlu0 %5301
    %v5303 = vsel %vm491, %v5300, %v5302
    %v5306 = vadd.f32 %v5277, %v5303
    %v5307 = vadd.f32 %v5278, %v5302
    %5310 = vrot.lane.b32.xlu0 %v5306, 64
    %v5311 = vpop.permute.xlu0 %5310
    %5312 = vrot.lane.b32.xlu0 %v5307, 64
    %v5313 = vpop.permute.xlu0 %5312
    %v5314 = vsel %vm580, %v5311, %v5313
    %5316 = vst.msk [vmem:[#allocation7 - $0x6] sm:$0xc0] %vm2659, %v5314
    %v5317 = vmul.f32 %v5306, %v5306
    %v5319 = vrot.slane %v5317, 6
    %5320 = vrot.lane.b32.xlu0 %v5319, 32
    %v5321 = vpop.permute.xlu0 %5320
    %v5322 = vsel %vm215, %v5321, 0
    %5324 = vmatpush.msra.mxu0 0.0
    %5325 = vmatpush.msra.mxu0 0.0
    %5326 = vmatpush.msra.mxu0 0.0
    %5327 = vmatpush.msra.mxu0 0.0
    %5328 = vmatpush.msra.mxu0 0.0
    %5329 = vmatpush.msra.mxu0 0.0
    %5330 = vmatpush.msra.mxu0 0.0
    %5331 = vmatpush.msra.mxu0 0.0
    %5332 = vmatpush.msra.mxu0 0.0
    %5333 = vmatpush.msra.mxu0 0.0
    %5334 = vmatpush.msra.mxu0 0.0
    %5335 = vmatpush.msra.mxu0 0.0
    %5336 = vmatpush.msra.mxu0 %v278
    %5337 = vmatpush.msra.mxu0 %v277
    %5338 = vmatpush.msra.mxu0 %v276
    %5339 = vmatpush.msra.mxu0 %v275
    %5340 = vmatmul.f32.gmra.mxu0 %v5322
    %v5341 = vpop.f32.mrf.mxu0
    %v5342 = vadd.f32 0.0, %v5341
    %5343 = vdwg.mxu0
    %5344 = vrot.lane.b32.xlu0 %v5319, 64
    %v5345 = vpop.permute.xlu0 %5344
    %v5346 = vsel %vm215, %v5345, 0
    %5348 = vmatpush.msra.mxu0 0.0
    %5349 = vmatpush.msra.mxu0 0.0
    %5350 = vmatpush.msra.mxu0 0.0
    %5351 = vmatpush.msra.mxu0 0.0
    %5352 = vmatpush.msra.mxu0 0.0
    %5353 = vmatpush.msra.mxu0 0.0
    %5354 = vmatpush.msra.mxu0 0.0
    %5355 = vmatpush.msra.mxu0 0.0
    %5356 = vmatpush.msra.mxu0 0.0
    %5357 = vmatpush.msra.mxu0 0.0
    %5358 = vmatpush.msra.mxu0 0.0
    %5359 = vmatpush.msra.mxu0 0.0
    %5360 = vmatpush.msra.mxu0 %v278
    %5361 = vmatpush.msra.mxu0 %v277
    %5362 = vmatpush.msra.mxu0 %v276
    %5363 = vmatpush.msra.mxu0 %v275
    %5364 = vmatmul.f32.gmra.mxu0 %v5346
    %v5365 = vpop.f32.mrf.mxu0
    %v5366 = vadd.f32 0.0, %v5365
    %5367 = vdwg.mxu0
    %v5368 = vrsqrt.pop %v5342
    %v5369 = vmul.f32 %v5368, %v5342
    %v5370 = vmul.f32 %v5369, %v5368
    %v5371 = vmul.f32 0.5, %v5370
    %v5372 = vsub.f32 1.5, %v5371
    %v5373 = vmul.f32 %v5368, %v5372
    %vm5374 = vweird.f32 %v5342
    %vm5375 = vweird.f32 %v5368
    %vm5376 = vmor %vm5374, %vm5375
    %v5377 = vsel %vm5376, %v5368, %v5373
    %v5379 = vrot.slane %v5377, 2
    %5380 = vrot.lane.b32.xlu0 %v5379, 96
    %v5381 = vpop.permute.xlu0 %5380
    %v5383 = vmul.f32 %v5306, %v5381
    %vm5384 = vcmp.gt.f32.partialorder %v5383, 0.0
    %v5385 = vmul.f32 %v5383, 1.442695
    %v5386 = vpow.pop %v5385
    %v5387 = vsub.f32 %v5386, 1.0
    %v5388 = vsel %vm5384, %v5383, %v5387
    %v5389 = vrsqrt.pop %v5366
    %v5390 = vmul.f32 %v5389, %v5366
    %v5391 = vmul.f32 %v5390, %v5389
    %v5392 = vmul.f32 0.5, %v5391
    %v5393 = vsub.f32 1.5, %v5392
    %v5394 = vmul.f32 %v5389, %v5393
    %vm5395 = vweird.f32 %v5366
    %vm5396 = vweird.f32 %v5389
    %vm5397 = vmor %vm5395, %vm5396
    %v5398 = vsel %vm5397, %v5389, %v5394
    %v5400 = vrot.slane %v5398, 2
    %5401 = vrot.lane.b32.xlu0 %v5400, 64
    %v5402 = vpop.permute.xlu0 %5401
    %v5404 = vmul.f32 %v5306, %v5402
    %v5405 = vld [vmem:[#allocation8] sm:$0xff]
    %v5406 = vld [vmem:[#allocation8 + $0x8] sm:$0xff]
    %v5407 = vld [vmem:[#allocation8 + $0x10] sm:$0xff]
    %v5408 = vld [vmem:[#allocation8 + $0x18] sm:$0xff]
    %v5409 = vld [vmem:[#allocation8 + $0x20] sm:$0xff]
    %v5410 = vld [vmem:[#allocation8 + $0x28] sm:$0xff]
    %v5411 = vld [vmem:[#allocation8 + $0x30] sm:$0xff]
    %v5412 = vld [vmem:[#allocation8 + $0x38] sm:$0xff]
    %v5413 = vperm.slane %v5307, 6
    %v5414 = vlaneseq
    %v5415 = vshrl.u32 %v5414, 7
    %5417 = vset.pattern.permute.xlu0 %v5415
    %5418 = vperm.xlu0 %5417, %v5413
    %v5419 = vpop.permute.xlu0 %5418
    %v5420 = vlaneseq
    %v5421 = vshrl.u32 %v5420, 7
    %v5422 = vadd.s32 %v5421, 8
    %5423 = vset.pattern.permute.xlu0 %v5422
    %5424 = vperm.xlu0 %5423, %v5413
    %v5425 = vpop.permute.xlu0 %5424
    %v5426 = vlaneseq
    %v5427 = vshrl.u32 %v5426, 7
    %v5428 = vadd.s32 %v5427, 16
    %5429 = vset.pattern.permute.xlu0 %v5428
    %5430 = vperm.xlu0 %5429, %v5413
    %v5431 = vpop.permute.xlu0 %5430
    %v5432 = vlaneseq
    %v5433 = vshrl.u32 %v5432, 7
    %v5434 = vadd.s32 %v5433, 24
    %5435 = vset.pattern.permute.xlu0 %v5434
    %5436 = vperm.xlu0 %5435, %v5413
    %v5437 = vpop.permute.xlu0 %5436
    %v5438 = vperm.slane %v5307, 7
    %v5439 = vlaneseq
    %v5440 = vshrl.u32 %v5439, 7
    %5442 = vset.pattern.permute.xlu0 %v5440
    %5443 = vperm.xlu0 %5442, %v5438
    %v5444 = vpop.permute.xlu0 %5443
    %v5445 = vlaneseq
    %v5446 = vshrl.u32 %v5445, 7
    %v5447 = vadd.s32 %v5446, 8
    %5448 = vset.pattern.permute.xlu0 %v5447
    %5449 = vperm.xlu0 %5448, %v5438
    %v5450 = vpop.permute.xlu0 %5449
    %v5451 = vlaneseq
    %v5452 = vshrl.u32 %v5451, 7
    %v5453 = vadd.s32 %v5452, 16
    %5454 = vset.pattern.permute.xlu0 %v5453
    %5455 = vperm.xlu0 %5454, %v5438
    %v5456 = vpop.permute.xlu0 %5455
    %v5457 = vlaneseq
    %v5458 = vshrl.u32 %v5457, 7
    %v5459 = vadd.s32 %v5458, 24
    %5460 = vset.pattern.permute.xlu0 %v5459
    %5461 = vperm.xlu0 %5460, %v5438
    %v5462 = vpop.permute.xlu0 %5461
    %5464 = vst [vmem:[#allocation1] sm:$0xff] %v5388
    %s5465 = scalar_lea.vmem [#allocation1], 6
    %v5466 = vld [vmem:[%s5465] ss:$9 sm:$0xff]
    %s5467 = scalar_lea.vmem [#allocation1], 7
    %v5468 = vld [vmem:[%s5467] ss:$9 sm:$0xff]
    %v5469 = vperm.slane %v5466, 0
    %v5470 = vperm.slane %v5468, 0
    %v5473 = vmul.f32 %v5419, %v5469
    %v5474 = vmul.f32 %v5425, %v5469
    %v5475 = vmul.f32 %v5431, %v5469
    %v5476 = vmul.f32 %v5437, %v5469
    %v5477 = vmul.f32 %v5444, %v5470
    %v5478 = vmul.f32 %v5450, %v5470
    %v5479 = vmul.f32 %v5456, %v5470
    %v5480 = vmul.f32 %v5462, %v5470
    %v5481 = vmul.f32 %v5473, %v790
    %v5482 = vmul.f32 %v5474, %v792
    %v5483 = vmul.f32 %v5475, %v794
    %v5484 = vmul.f32 %v5476, %v796
    %v5485 = vmul.f32 %v5477, %v790
    %v5486 = vmul.f32 %v5478, %v792
    %v5487 = vmul.f32 %v5479, %v794
    %v5488 = vmul.f32 %v5480, %v796
    %5497 = vrot.lane.b32.xlu0 %v5481, 32
    %v5498 = vpop.permute.xlu0 %5497
    %5499 = vrot.lane.b32.xlu0 %v5482, 32
    %v5500 = vpop.permute.xlu0 %5499
    %5501 = vrot.lane.b32.xlu0 %v5483, 32
    %v5502 = vpop.permute.xlu0 %5501
    %5503 = vrot.lane.b32.xlu0 %v5484, 32
    %v5504 = vpop.permute.xlu0 %5503
    %5505 = vrot.lane.b32.xlu0 %v5485, 32
    %v5506 = vpop.permute.xlu0 %5505
    %5507 = vrot.lane.b32.xlu0 %v5486, 32
    %v5508 = vpop.permute.xlu0 %5507
    %5509 = vrot.lane.b32.xlu0 %v5487, 32
    %v5510 = vpop.permute.xlu0 %5509
    %5511 = vrot.lane.b32.xlu0 %v5488, 32
    %v5512 = vpop.permute.xlu0 %5511
    %v5521 = vadd.f32 %v5405, %v5498
    %v5522 = vadd.f32 %v5406, %v5500
    %v5523 = vadd.f32 %v5407, %v5502
    %v5524 = vadd.f32 %v5408, %v5504
    %v5525 = vadd.f32 %v5409, %v5506
    %v5526 = vadd.f32 %v5410, %v5508
    %v5527 = vadd.f32 %v5411, %v5510
    %v5528 = vadd.f32 %v5412, %v5512
    %5529 = vst.msk [vmem:[#allocation8] sm:$0xff] %vm215, %v5521
    %5530 = vst.msk [vmem:[#allocation8 + $0x8] sm:$0xff] %vm215, %v5522
    %5531 = vst.msk [vmem:[#allocation8 + $0x10] sm:$0xff] %vm215, %v5523
    %5532 = vst.msk [vmem:[#allocation8 + $0x18] sm:$0xff] %vm215, %v5524
    %5533 = vst.msk [vmem:[#allocation8 + $0x20] sm:$0xff] %vm215, %v5525
    %5534 = vst.msk [vmem:[#allocation8 + $0x28] sm:$0xff] %vm215, %v5526
    %5535 = vst.msk [vmem:[#allocation8 + $0x30] sm:$0xff] %vm215, %v5527
    %5536 = vst.msk [vmem:[#allocation8 + $0x38] sm:$0xff] %vm215, %v5528
    %v5537 = vld [vmem:[#allocation8] sm:$0xff]
    %v5538 = vld [vmem:[#allocation8 + $0x8] sm:$0xff]
    %v5539 = vld [vmem:[#allocation8 + $0x10] sm:$0xff]
    %v5540 = vld [vmem:[#allocation8 + $0x18] sm:$0xff]
    %v5541 = vld [vmem:[#allocation8 + $0x20] sm:$0xff]
    %v5542 = vld [vmem:[#allocation8 + $0x28] sm:$0xff]
    %v5543 = vld [vmem:[#allocation8 + $0x30] sm:$0xff]
    %v5544 = vld [vmem:[#allocation8 + $0x38] sm:$0xff]
    %5546 = vst [vmem:[#allocation1] sm:$0xff] %v5404
    %s5547 = scalar_lea.vmem [#allocation1], 6
    %v5548 = vld [vmem:[%s5547] ss:$9 sm:$0xff]
    %s5549 = scalar_lea.vmem [#allocation1], 7
    %v5550 = vld [vmem:[%s5549] ss:$9 sm:$0xff]
    %v5551 = vperm.slane %v5548, 0
    %v5552 = vperm.slane %v5550, 0
    %5553 = vrot.lane.b32.xlu0 %v5551, 64
    %v5554 = vpop.permute.xlu0 %5553
    %5555 = vrot.lane.b32.xlu0 %v5552, 64
    %v5556 = vpop.permute.xlu0 %5555
    %v5559 = vmul.f32 %v5537, %v5554
    %v5560 = vmul.f32 %v5538, %v5554
    %v5561 = vmul.f32 %v5539, %v5554
    %v5562 = vmul.f32 %v5540, %v5554
    %v5563 = vmul.f32 %v5541, %v5556
    %v5564 = vmul.f32 %v5542, %v5556
    %v5565 = vmul.f32 %v5543, %v5556
    %v5566 = vmul.f32 %v5544, %v5556
    %v5567 = vsel %vm215, %v5559, 0.0
    %5568 = vadd.xlane.f32.xlu0 %v5567
    %v5569 = vpop.xlane.xlu0 %5568
    %v5570 = vsel %vm215, %v5560, 0.0
    %5571 = vadd.xlane.f32.xlu0 %v5570
    %v5572 = vpop.xlane.xlu0 %5571
    %v5573 = vsel %vm215, %v5561, 0.0
    %5574 = vadd.xlane.f32.xlu0 %v5573
    %v5575 = vpop.xlane.xlu0 %5574
    %v5576 = vsel %vm215, %v5562, 0.0
    %5577 = vadd.xlane.f32.xlu0 %v5576
    %v5578 = vpop.xlane.xlu0 %5577
    %v5579 = vsel %vm215, %v5563, 0.0
    %5580 = vadd.xlane.f32.xlu0 %v5579
    %v5581 = vpop.xlane.xlu0 %5580
    %v5582 = vsel %vm215, %v5564, 0.0
    %5583 = vadd.xlane.f32.xlu0 %v5582
    %v5584 = vpop.xlane.xlu0 %5583
    %v5585 = vsel %vm215, %v5565, 0.0
    %5586 = vadd.xlane.f32.xlu0 %v5585
    %v5587 = vpop.xlane.xlu0 %5586
    %v5588 = vsel %vm215, %v5566, 0.0
    %5589 = vadd.xlane.f32.xlu0 %v5588
    %v5590 = vpop.xlane.xlu0 %5589
    %v5599 = vperm.slane %v5569, %v916
    %v5600 = vperm.slane %v5572, %v918
    %v5601 = vsel %vm920, %v5600, %v5599
    %v5602 = vperm.slane %v5575, %v922
    %v5603 = vsel %vm924, %v5602, %v5601
    %v5604 = vperm.slane %v5578, %v926
    %v5605 = vsel %vm928, %v5604, %v5603
    %v5606 = vperm.slane %v5581, %v916
    %v5607 = vperm.slane %v5584, %v918
    %v5608 = vsel %vm920, %v5607, %v5606
    %v5609 = vperm.slane %v5587, %v922
    %v5610 = vsel %vm924, %v5609, %v5608
    %v5611 = vperm.slane %v5590, %v926
    %v5612 = vsel %vm928, %v5611, %v5610
    %v5613 = vsel %vm937, %v5612, %v5605
    %5615 = vst.msk [vmem:[#allocation9] sm:$0x3] %vm940, %v5613
    %5616 = vrot.lane.b32.xlu0 %v5388, 32
    %v5617 = vpop.permute.xlu0 %5616
    %5619 = vst.msk [vmem:[#allocation17 - $0x6] sm:$0xc0] %vm2963, %v5617
    %5620 = vrot.lane.b32.xlu0 %v5404, 64
    %v5621 = vpop.permute.xlu0 %5620
    %5623 = vst.msk [vmem:[#allocation19 - $0x6] sm:$0xc0] %vm2963, %v5621
    // Predicated region
    $region58: #{tpu_custom_call.1} parent=1 // pred_check
      %p5624 = pneg %p75
    $region59: #{tpu_custom_call.1} parent=1 // pred_check_branch
      %5626 = sbr.rel (%p5624) target = $region61
    $region60: #{tpu_custom_call.1} parent=1 // pred_region
      %v5627 = vld [vmem:[#allocation9] sm:$0x3]
      %v5628 = vpack.c.bf16 %v5627, %v5627
      %v5629 = vld [vmem:[#allocation5] sm:$0xf]
      %v5630 = vld [vmem:[#allocation5 + $0x4] sm:$0xf]
      %v5631 = vld [vmem:[#allocation5 + $0x8] sm:$0xf]
      %v5632 = vld [vmem:[#allocation5 + $0xc] sm:$0xf]
      %v5633 = vld [vmem:[%s7] sm:$0x1]
      %v5635 = vperm.slane %v5633, 0
      %v5641 = vunpack.c.l.b16 %v5629
      %v5642 = vunpack.c.l.b16 %v5630
      %v5643 = vunpack.c.l.b16 %v5631
      %v5644 = vunpack.c.l.b16 %v5632
      %v5645 = vpack.c.b16 %v5642, %v5641
      %v5646 = vpack.c.b16 %v5644, %v5643
      %v5650 = vsel %vm215, %v5628, 0
      %5652 = vmatpush.bf16.msra.mxu0 0
      %5653 = vmatpush.bf16.msra.mxu0 0
      %5654 = vmatpush.bf16.msra.mxu0 0
      %5655 = vmatpush.bf16.msra.mxu0 0
      %5656 = vmatpush.bf16.msra.mxu0 0
      %5657 = vmatpush.bf16.msra.mxu0 0
      %5658 = vmatpush.bf16.msra.mxu0 %v5646
      %5659 = vmatpush.bf16.msra.mxu0 %v5645
      %5660 = vmatmul.bf16.gmra.mxu0 %v5650
      %v5661 = vpop.f32.mrf.mxu0
      %v5662 = vadd.f32 %v5635, %v5661
      %v5663 = vpop.f32.mrf.mxu0
      %5664 = vdwg.mxu0
      %5665 = vst.msk [vmem:[#allocation16] sm:$0x3] %vm940, %v5662
    $region61: #{tpu_custom_call.1} parent=1 // pred_fallthru
      _
    // Predicated region
    $region62: #{tpu_custom_call.1} parent=1 // pred_check
      _
    $region63: #{tpu_custom_call.1} parent=1 // pred_check_branch
      %5667 = sbr.rel (0) target = $region65
    $region64: #{tpu_custom_call.1} parent=1 // pred_region
      %5669 = vsyncadd [#allocation12], 0
      %s5671 = sshll.u32 [#allocation16], 4
      %s5672 = int_to_ptr.vmem [resolvable:$true] %s5671
      %s5673 = sshll.u32 %s9, 4
      %s5674 = int_to_ptr.hbm [resolvable:$true] %s5673
      %5676 = dma.vmem_to_hbm [thread:$0]  %s5672, 32, %s5674, [#allocation12]
    $region65: #{tpu_custom_call.1} parent=1 // pred_fallthru
      _
    // Predicated region
    $region66: #{tpu_custom_call.1} parent=1 // pred_check
      _
    $region67: #{tpu_custom_call.1} parent=1 // pred_check_branch
      %5678 = sbr.rel (0) target = $region69
    $region68: #{tpu_custom_call.1} parent=1 // pred_region
      %5680 = vsyncadd [#allocation18], 0
      %s5682 = sshll.u32 [#allocation17], 4
      %s5683 = int_to_ptr.vmem [resolvable:$true] %s5682
      %s5684 = sshll.u32 %s10, 4
      %s5685 = int_to_ptr.hbm [resolvable:$true] %s5684
      %5687 = dma.vmem_to_hbm [thread:$0]  %s5683, 32, %s5685, [#allocation18]
    $region69: #{tpu_custom_call.1} parent=1 // pred_fallthru
      _
    // Predicated region
    $region70: #{tpu_custom_call.1} parent=1 // pred_check
      _
    $region71: #{tpu_custom_call.1} parent=1 // pred_check_branch
      %5689 = sbr.rel (0) target = $region73
    $region72: #{tpu_custom_call.1} parent=1 // pred_region
      %5691 = vsyncadd [#allocation18], 0
      %s5693 = sshll.u32 [#allocation19], 4
      %s5694 = int_to_ptr.vmem [resolvable:$true] %s5693
      %s5695 = sshll.u32 %s11, 4
      %s5696 = int_to_ptr.hbm [resolvable:$true] %s5695
      %5698 = dma.vmem_to_hbm [thread:$0]  %s5694, 32, %s5696, [#allocation18]
    $region73: #{tpu_custom_call.1} parent=1 // pred_fallthru
      _
    // Predicated region
    $region74: #{tpu_custom_call.1} parent=1 // pred_check
      _
    $region75: #{tpu_custom_call.1} parent=1 // pred_check_branch
      %5700 = sbr.rel (0) target = $region77
    $region76: #{tpu_custom_call.1} parent=1 // pred_region
      %5702 = dma.done [#allocation12], 32
    $region77: #{tpu_custom_call.1} parent=1 // pred_fallthru
      _
    // Predicated region
    $region78: #{tpu_custom_call.1} parent=1 // pred_check
      _
    $region79: #{tpu_custom_call.1} parent=1 // pred_check_branch
      %5704 = sbr.rel (0) target = $region81
    $region80: #{tpu_custom_call.1} parent=1 // pred_region
      %5706 = dma.done [#allocation18], 32
    $region81: #{tpu_custom_call.1} parent=1 // pred_fallthru
      _
    // Predicated region
    $region82: #{tpu_custom_call.1} parent=1 // pred_check
      _
    $region83: #{tpu_custom_call.1} parent=1 // pred_check_branch
      %5708 = sbr.rel (0) target = $region85
    $region84: #{tpu_custom_call.1} parent=1 // pred_region
      %5710 = dma.done [#allocation18], 32
    $region85: #{tpu_custom_call.1} parent=1 // pred_fallthru
      _
    %5711 = vsyncpa [#allocation11], 1
    %5712 = vsyncpa [#allocation14], 1
    %5713 = vsyncpa [#allocation12], 1
    %5714 = vsyncpa [#allocation18], 1

</llo_original>
